<compile_context>
chip_gen: v7x
topology: tpu7x:2x2x1
jax: 0.10.0
libtpu: 0.0.40
codegen_flags: <defaults>
</compile_context>

<pallas_src>
import jax
import jax.numpy as jnp
from jax import lax
from jax.experimental import pallas as pl
from jax.experimental.pallas import tpu as pltpu


def _pfld_kernel(x_ref, p_ref, w1_ref, s1_ref, b1_ref,
                 w2_ref, s2_ref, b2_ref, fcw_ref, fcb_ref, o_ref):
    # x_ref  : (Bt, H*W, Cin)    bf16  raw input (flattened spatial), pool branch 1
    # p_ref  : (P, Bt, 9*Cin)    bf16  im2col patches for conv1, position-major
    # w1_ref : (9*Cin, F0)       bf16  conv1 weight (im2col layout)
    # s1/b1  : (1, F0)           f32   folded BN1 scale / bias
    # w2_ref : (P, F0, F1)       f32   conv2 weight, one (F0,F1) tap per conv1 position
    # s2/b2  : (1, F1)           f32   folded BN2 scale / bias
    # fcw    : (Cin+F0+F1, nout) f32   fused fc weight (pre-transposed)
    # fcb    : (1, nout)         f32   fc bias
    # o_ref  : (Bt, nout)        f32
    f32 = jnp.float32
    P, Bt, KC = p_ref.shape
    F0 = w1_ref.shape[1]
    F1 = w2_ref.shape[2]

    # ---- branch 1: global average pool of the raw input -> (Bt, Cin)
    x1 = jnp.mean(x_ref[...].astype(f32), axis=1)

    # ---- conv1 (3x3, stride 2, pad 1) as one big MXU matmul + folded BN + ReLU
    pat = p_ref[...].reshape(P * Bt, KC)              # tile-aligned merge (Bt % 8 == 0)
    y1 = jnp.dot(pat, w1_ref[...], preferred_element_type=f32)      # (P*Bt, F0)
    y1 = jnp.maximum(y1 * s1_ref[...] + b1_ref[...], 0.0)
    y1 = y1.reshape(P, Bt, F0)                        # tile-aligned split

    # ---- branch 2: global average pool of the conv1 feature map -> (Bt, F0)
    x2 = jnp.mean(y1, axis=0)

    # ---- conv2 (7x7 valid on the 7x7 map -> 1x1) + folded BN + ReLU -> (Bt, F1)
    # One small MXU matmul per spatial tap, accumulated in f32.
    y2 = jnp.zeros((Bt, F1), f32)
    for p in range(P):
        y2 = y2 + jnp.dot(y1[p], w2_ref[p], preferred_element_type=f32)
    x3 = jnp.maximum(y2 * s2_ref[...] + b2_ref[...], 0.0)

    # ---- fused fc over concat([x1, x2, x3]) -> (Bt, nout)
    ms = jnp.concatenate([x1, x2, x3], axis=1)
    o_ref[...] = jnp.dot(ms, fcw_ref[...], preferred_element_type=f32) + fcb_ref[...]


def pfld_head_forward(x_nchw, params, block_b=128):
    """Pallas implementation of PFLDhead.forward. x_nchw: (B, Cin, H, W)."""
    B, Cin, H, W = x_nchw.shape
    conv1_w = params['conv1_w']            # (F0, Cin, 3, 3)
    conv2_w = params['conv2_w']            # (F1, F0, 7, 7)
    fc_w = params['fc_w']                  # (nout, Cin + F0 + F1)
    fc_b = params['fc_b']                  # (nout,)
    F0, F1 = conv1_w.shape[0], conv2_w.shape[0]
    nout = fc_w.shape[0]
    eps = 1e-5

    # conv1 output spatial size (3x3, stride 2, pad 1); conv2 (7x7 valid) must yield 1x1.
    OH = (H + 2 - 3) // 2 + 1
    OW = (W + 2 - 3) // 2 + 1
    assert (OH, OW) == (conv2_w.shape[2], conv2_w.shape[3]), \
        "conv2 must reduce the conv1 map to 1x1 (e.g. H=W=14)"
    P = OH * OW

    # ---- batch tiling: Bt is a multiple of 8 (sublane tile), capped at block_b
    assert block_b % 8 == 0
    b_pad8 = ((B + 7) // 8) * 8
    if b_pad8 <= block_b:
        Bt = B_pad = b_pad8
    else:
        Bt = block_b
        B_pad = ((B + Bt - 1) // Bt) * Bt

    def fold_bn(g, b, m, v):
        scale = g / jnp.sqrt(v + eps)
        bias = b - m * scale
        return (scale.reshape(1, -1).astype(jnp.float32),
                bias.reshape(1, -1).astype(jnp.float32))

    s1, b1 = fold_bn(params['bn1_gamma'], params['bn1_beta'],
                     params['bn1_mean'], params['bn1_var'])
    s2, b2 = fold_bn(params['bn2_gamma'], params['bn2_beta'],
                     params['bn2_mean'], params['bn2_var'])

    x_nhwc = jnp.transpose(x_nchw, (0, 2, 3, 1))                      # (B, H, W, Cin)
    x_flat = x_nhwc.reshape(B, H * W, Cin)
    if B_pad > B:
        x_flat = jnp.pad(x_flat, ((0, B_pad - B), (0, 0), (0, 0)))
    x_flat = x_flat.astype(jnp.bfloat16)

    # im2col (glue) for conv1: 3x3, stride 2, pad 1 -> position-major (P, B_pad, 9*Cin)
    x_padded = jnp.pad(x_nhwc, ((0, 0), (1, 1), (1, 1), (0, 0)))
    slabs = []
    for kh in range(3):
        for kw in range(3):
            slabs.append(x_padded[:, kh:kh + 2 * OH - 1:2, kw:kw + 2 * OW - 1:2, :])
    patches = jnp.stack(slabs, axis=3).reshape(B, P, 9 * Cin)         # (B, 49, 144)
    if B_pad > B:
        patches = jnp.pad(patches, ((0, B_pad - B), (0, 0), (0, 0)))
    patches = jnp.transpose(patches, (1, 0, 2)).astype(jnp.bfloat16)  # (P, B_pad, 144)

    # weights in matmul-friendly layouts
    w1 = jnp.transpose(conv1_w, (2, 3, 1, 0)).reshape(9 * Cin, F0).astype(jnp.bfloat16)
    w2 = jnp.transpose(conv2_w, (2, 3, 1, 0)).reshape(P, F0, F1).astype(jnp.float32)
    fcw = fc_w.T.astype(jnp.float32)                                  # (Cin+F0+F1, nout)
    fcb = fc_b.reshape(1, -1).astype(jnp.float32)

    out = pl.pallas_call(
        _pfld_kernel,
        out_shape=jax.ShapeDtypeStruct((B_pad, nout), jnp.float32),
        grid_spec=pltpu.PrefetchScalarGridSpec(
            num_scalar_prefetch=0,
            grid=(B_pad // Bt,),
            in_specs=[
                pl.BlockSpec((Bt, H * W, Cin), lambda b: (b, 0, 0)),
                pl.BlockSpec((P, Bt, 9 * Cin), lambda b: (0, b, 0)),
                pl.BlockSpec((9 * Cin, F0), lambda b: (0, 0)),
                pl.BlockSpec((1, F0), lambda b: (0, 0)),
                pl.BlockSpec((1, F0), lambda b: (0, 0)),
                pl.BlockSpec((P, F0, F1), lambda b: (0, 0, 0)),
                pl.BlockSpec((1, F1), lambda b: (0, 0)),
                pl.BlockSpec((1, F1), lambda b: (0, 0)),
                pl.BlockSpec((Cin + F0 + F1, nout), lambda b: (0, 0)),
                pl.BlockSpec((1, nout), lambda b: (0, 0)),
            ],
            out_specs=pl.BlockSpec((Bt, nout), lambda b: (b, 0)),
        ),
        compiler_params=pltpu.CompilerParams(
            dimension_semantics=("parallel",)),
    )(x_flat, patches, w1, s1, b1, w2, s2, b2, fcw, fcb)

    return out[:B]


def pfld_head_reference(x, params):
    """Pure-JAX f32 reference (NCHW), mirrors the PyTorch forward exactly."""
    eps = 1e-5

    def bn(y, g, b, m, v):
        g, b, m, v = (t[None, :, None, None] for t in (g, b, m, v))
        return (y - m) / jnp.sqrt(v + eps) * g + b

    x1 = jnp.mean(x, axis=(2, 3))
    y = lax.conv_general_dilated(x, params['conv1_w'], (2, 2), ((1, 1), (1, 1)),
                                 dimension_numbers=('NCHW', 'OIHW', 'NCHW'),
                                 precision=lax.Precision.HIGHEST)
    y = jax.nn.relu(bn(y, params['bn1_gamma'], params['bn1_beta'],
                       params['bn1_mean'], params['bn1_var']))
    x2 = jnp.mean(y, axis=(2, 3))
    z = lax.conv_general_dilated(y, params['conv2_w'], (1, 1), 'VALID',
                                 dimension_numbers=('NCHW', 'OIHW', 'NCHW'),
                                 precision=lax.Precision.HIGHEST)
    z = jax.nn.relu(bn(z, params['bn2_gamma'], params['bn2_beta'],
                       params['bn2_mean'], params['bn2_var']))
    x3 = z.reshape(z.shape[0], -1)
    ms = jnp.concatenate([x1, x2, x3], axis=1)
    return ms @ params['fc_w'].T + params['fc_b']


if __name__ == "__main__":
    key = jax.random.PRNGKey(0)
    B, Cin, H, W = 2, 16, 14, 14        # H=W=14 so conv2 (7x7 valid) yields 1x1
    feature_num = (32, 32)
    num_point = 1
    ks = jax.random.split(key, 13)

    params = {
        'conv1_w': 0.1 * jax.random.normal(ks[0], (feature_num[0], Cin, 3, 3), jnp.float32),
        'bn1_gamma': 1.0 + 0.1 * jax.random.normal(ks[1], (feature_num[0],), jnp.float32),
        'bn1_beta': 0.1 * jax.random.normal(ks[2], (feature_num[0],), jnp.float32),
        'bn1_mean': 0.1 * jax.random.normal(ks[3], (feature_num[0],), jnp.float32),
        'bn1_var': 0.5 + jax.random.uniform(ks[4], (feature_num[0],), jnp.float32),
        'conv2_w': 0.05 * jax.random.normal(ks[5], (feature_num[1], feature_num[0], 7, 7), jnp.float32),
        'bn2_gamma': 1.0 + 0.1 * jax.random.normal(ks[6], (feature_num[1],), jnp.float32),
        'bn2_beta': 0.1 * jax.random.normal(ks[7], (feature_num[1],), jnp.float32),
        'bn2_mean': 0.1 * jax.random.normal(ks[8], (feature_num[1],), jnp.float32),
        'bn2_var': 0.5 + jax.random.uniform(ks[9], (feature_num[1],), jnp.float32),
        'fc_w': 0.1 * jax.random.normal(ks[10], (num_point * 2, Cin + sum(feature_num)), jnp.float32),
        'fc_b': 0.1 * jax.random.normal(ks[11], (num_point * 2,), jnp.float32),
    }
    x = jax.random.normal(ks[12], (B, Cin, H, W), jnp.float32)

    out = jax.block_until_ready(pfld_head_forward(x, params))
    ref = jax.block_until_ready(pfld_head_reference(x, params))
    assert out.shape == (B, num_point * 2)
    # Default MXU precision / bf16-shipped activations round matmul operands to bf16
    # (f32 accumulation), so allow ~1e-2-scale slack vs the f32 HIGHEST-precision reference.
    if not jnp.allclose(out, ref, atol=2e-2, rtol=2e-2):
        raise AssertionError(f"mismatch:\n{out}\nvs\n{ref}")
    print("KERNEL_OK")
</pallas_src>

<mosaic_0001>
module attributes {stable_mosaic.version = 11 : i64} {
  func.func @_pfld_kernel(%arg0: i32, %arg1: memref<8x196x16xbf16, #tpu.memory_space<vmem>>, %arg2: memref<49x8x144xbf16, #tpu.memory_space<vmem>>, %arg3: memref<144x32xbf16, #tpu.memory_space<vmem>>, %arg4: memref<1x32xf32, #tpu.memory_space<vmem>>, %arg5: memref<1x32xf32, #tpu.memory_space<vmem>>, %arg6: memref<49x32x32xf32, #tpu.memory_space<vmem>>, %arg7: memref<1x32xf32, #tpu.memory_space<vmem>>, %arg8: memref<1x32xf32, #tpu.memory_space<vmem>>, %arg9: memref<80x2xf32, #tpu.memory_space<vmem>>, %arg10: memref<1x2xf32, #tpu.memory_space<vmem>>, %arg11: memref<8x2xf32, #tpu.memory_space<vmem>>) attributes {dimension_semantics = [#tpu.dimension_semantics<parallel>], iteration_bounds = array<i64: 1>, scalar_prefetch = 0 : i64, scratch_operands = 0 : i64, tpu.core_type = #tpu.core_type<tc>, window_params = [{transform_indices = @transform_0, window_bounds = array<i64: 8, 196, 16>}, {transform_indices = @transform_1, window_bounds = array<i64: 49, 8, 144>}, {pipeline_mode = #tpu.pipeline_mode<synchronous>, transform_indices = @transform_2, window_bounds = array<i64: 144, 32>}, {pipeline_mode = #tpu.pipeline_mode<synchronous>, transform_indices = @transform_3, window_bounds = array<i64: 1, 32>}, {pipeline_mode = #tpu.pipeline_mode<synchronous>, transform_indices = @transform_4, window_bounds = array<i64: 1, 32>}, {pipeline_mode = #tpu.pipeline_mode<synchronous>, transform_indices = @transform_5, window_bounds = array<i64: 49, 32, 32>}, {pipeline_mode = #tpu.pipeline_mode<synchronous>, transform_indices = @transform_6, window_bounds = array<i64: 1, 32>}, {pipeline_mode = #tpu.pipeline_mode<synchronous>, transform_indices = @transform_7, window_bounds = array<i64: 1, 32>}, {pipeline_mode = #tpu.pipeline_mode<synchronous>, transform_indices = @transform_8, window_bounds = array<i64: 80, 2>}, {pipeline_mode = #tpu.pipeline_mode<synchronous>, transform_indices = @transform_9, window_bounds = array<i64: 1, 2>}, {transform_indices = @transform_10, window_bounds = array<i64: 8, 2>}]} {
    %c0 = arith.constant 0 : index
    %c0_0 = arith.constant 0 : index
    %c0_1 = arith.constant 0 : index
    %0 = vector.load %arg1[%c0, %c0_0, %c0_1] : memref<8x196x16xbf16, #tpu.memory_space<vmem>>, vector<8x196x16xbf16>
    %1 = arith.extf %0 : vector<8x196x16xbf16> to vector<8x196x16xf32>
    %cst = arith.constant dense<0.000000e+00> : vector<8x16xf32>
    %2 = vector.multi_reduction <add>, %1, %cst [1] : vector<8x196x16xf32> to vector<8x16xf32>
    %cst_2 = arith.constant 1.960000e+02 : f32
    %3 = vector.broadcast %cst_2 : f32 to vector<8x16xf32>
    %4 = arith.divf %2, %3 : vector<8x16xf32>
    %c0_3 = arith.constant 0 : index
    %c0_4 = arith.constant 0 : index
    %c0_5 = arith.constant 0 : index
    %5 = vector.load %arg2[%c0_3, %c0_4, %c0_5] : memref<49x8x144xbf16, #tpu.memory_space<vmem>>, vector<49x8x144xbf16>
    %6 = vector.shape_cast %5 : vector<49x8x144xbf16> to vector<392x144xbf16>
    %c0_6 = arith.constant 0 : index
    %c0_7 = arith.constant 0 : index
    %7 = vector.load %arg3[%c0_6, %c0_7] : memref<144x32xbf16, #tpu.memory_space<vmem>>, vector<144x32xbf16>
    %cst_8 = arith.constant dense<0.000000e+00> : vector<392x32xf32>
    %8 = tpu.matmul %6, %7, %cst_8 {dimension_numbers = #tpu.dot_dimension_numbers<[1], [0], [0], [1], [0, 0, 1, 1], [], []>} : vector<392x144xbf16>, vector<144x32xbf16>, vector<392x32xf32> -> vector<392x32xf32>
    %c0_9 = arith.constant 0 : index
    %c0_10 = arith.constant 0 : index
    %9 = vector.load %arg4[%c0_9, %c0_10] : memref<1x32xf32, #tpu.memory_space<vmem>>, vector<1x32xf32>
    %10 = vector.broadcast %9 : vector<1x32xf32> to vector<392x32xf32>
    %11 = arith.mulf %8, %10 : vector<392x32xf32>
    %c0_11 = arith.constant 0 : index
    %c0_12 = arith.constant 0 : index
    %12 = vector.load %arg5[%c0_11, %c0_12] : memref<1x32xf32, #tpu.memory_space<vmem>>, vector<1x32xf32>
    %13 = vector.broadcast %12 : vector<1x32xf32> to vector<392x32xf32>
    %14 = arith.addf %11, %13 : vector<392x32xf32>
    %cst_13 = arith.constant 0.000000e+00 : f32
    %15 = vector.broadcast %cst_13 : f32 to vector<392x32xf32>
    %16 = arith.maximumf %14, %15 : vector<392x32xf32>
    %17 = vector.shape_cast %16 : vector<392x32xf32> to vector<49x8x32xf32>
    %cst_14 = arith.constant dense<0.000000e+00> : vector<8x32xf32>
    %18 = vector.multi_reduction <add>, %17, %cst_14 [0] : vector<49x8x32xf32> to vector<8x32xf32>
    %cst_15 = arith.constant 4.900000e+01 : f32
    %19 = vector.broadcast %cst_15 : f32 to vector<8x32xf32>
    %20 = arith.divf %18, %19 : vector<8x32xf32>
    %cst_16 = arith.constant 0.000000e+00 : f32
    %21 = vector.broadcast %cst_16 : f32 to vector<8x32xf32>
    %22 = vector.extract_strided_slice %17 {offsets = [0, 0, 0], sizes = [1, 8, 32], strides = [1, 1, 1]} : vector<49x8x32xf32> to vector<1x8x32xf32>
    %23 = vector.shape_cast %22 : vector<1x8x32xf32> to vector<8x32xf32>
    %c0_17 = arith.constant 0 : index
    %c0_18 = arith.constant 0 : index
    %c0_19 = arith.constant 0 : index
    %24 = vector.load %arg6[%c0_17, %c0_18, %c0_19] : memref<49x32x32xf32, #tpu.memory_space<vmem>>, vector<1x32x32xf32>
    %25 = vector.shape_cast %24 : vector<1x32x32xf32> to vector<32x32xf32>
    %cst_20 = arith.constant dense<0.000000e+00> : vector<8x32xf32>
    %26 = tpu.matmul %23, %25, %cst_20 {dimension_numbers = #tpu.dot_dimension_numbers<[1], [0], [0], [1], [0, 0, 1, 1], [], []>} : vector<8x32xf32>, vector<32x32xf32>, vector<8x32xf32> -> vector<8x32xf32>
    %27 = arith.addf %21, %26 : vector<8x32xf32>
    %28 = vector.extract_strided_slice %17 {offsets = [1, 0, 0], sizes = [1, 8, 32], strides = [1, 1, 1]} : vector<49x8x32xf32> to vector<1x8x32xf32>
    %29 = vector.shape_cast %28 : vector<1x8x32xf32> to vector<8x32xf32>
    %c1 = arith.constant 1 : index
    %c0_21 = arith.constant 0 : index
    %c0_22 = arith.constant 0 : index
    %30 = vector.load %arg6[%c1, %c0_21, %c0_22] : memref<49x32x32xf32, #tpu.memory_space<vmem>>, vector<1x32x32xf32>
    %31 = vector.shape_cast %30 : vector<1x32x32xf32> to vector<32x32xf32>
    %cst_23 = arith.constant dense<0.000000e+00> : vector<8x32xf32>
    %32 = tpu.matmul %29, %31, %cst_23 {dimension_numbers = #tpu.dot_dimension_numbers<[1], [0], [0], [1], [0, 0, 1, 1], [], []>} : vector<8x32xf32>, vector<32x32xf32>, vector<8x32xf32> -> vector<8x32xf32>
    %33 = arith.addf %27, %32 : vector<8x32xf32>
    %34 = vector.extract_strided_slice %17 {offsets = [2, 0, 0], sizes = [1, 8, 32], strides = [1, 1, 1]} : vector<49x8x32xf32> to vector<1x8x32xf32>
    %35 = vector.shape_cast %34 : vector<1x8x32xf32> to vector<8x32xf32>
    %c2 = arith.constant 2 : index
    %c0_24 = arith.constant 0 : index
    %c0_25 = arith.constant 0 : index
    %36 = vector.load %arg6[%c2, %c0_24, %c0_25] : memref<49x32x32xf32, #tpu.memory_space<vmem>>, vector<1x32x32xf32>
    %37 = vector.shape_cast %36 : vector<1x32x32xf32> to vector<32x32xf32>
    %cst_26 = arith.constant dense<0.000000e+00> : vector<8x32xf32>
    %38 = tpu.matmul %35, %37, %cst_26 {dimension_numbers = #tpu.dot_dimension_numbers<[1], [0], [0], [1], [0, 0, 1, 1], [], []>} : vector<8x32xf32>, vector<32x32xf32>, vector<8x32xf32> -> vector<8x32xf32>
    %39 = arith.addf %33, %38 : vector<8x32xf32>
    %40 = vector.extract_strided_slice %17 {offsets = [3, 0, 0], sizes = [1, 8, 32], strides = [1, 1, 1]} : vector<49x8x32xf32> to vector<1x8x32xf32>
    %41 = vector.shape_cast %40 : vector<1x8x32xf32> to vector<8x32xf32>
    %c3 = arith.constant 3 : index
    %c0_27 = arith.constant 0 : index
    %c0_28 = arith.constant 0 : index
    %42 = vector.load %arg6[%c3, %c0_27, %c0_28] : memref<49x32x32xf32, #tpu.memory_space<vmem>>, vector<1x32x32xf32>
    %43 = vector.shape_cast %42 : vector<1x32x32xf32> to vector<32x32xf32>
    %cst_29 = arith.constant dense<0.000000e+00> : vector<8x32xf32>
    %44 = tpu.matmul %41, %43, %cst_29 {dimension_numbers = #tpu.dot_dimension_numbers<[1], [0], [0], [1], [0, 0, 1, 1], [], []>} : vector<8x32xf32>, vector<32x32xf32>, vector<8x32xf32> -> vector<8x32xf32>
    %45 = arith.addf %39, %44 : vector<8x32xf32>
    %46 = vector.extract_strided_slice %17 {offsets = [4, 0, 0], sizes = [1, 8, 32], strides = [1, 1, 1]} : vector<49x8x32xf32> to vector<1x8x32xf32>
    %47 = vector.shape_cast %46 : vector<1x8x32xf32> to vector<8x32xf32>
    %c4 = arith.constant 4 : index
    %c0_30 = arith.constant 0 : index
    %c0_31 = arith.constant 0 : index
    %48 = vector.load %arg6[%c4, %c0_30, %c0_31] : memref<49x32x32xf32, #tpu.memory_space<vmem>>, vector<1x32x32xf32>
    %49 = vector.shape_cast %48 : vector<1x32x32xf32> to vector<32x32xf32>
    %cst_32 = arith.constant dense<0.000000e+00> : vector<8x32xf32>
    %50 = tpu.matmul %47, %49, %cst_32 {dimension_numbers = #tpu.dot_dimension_numbers<[1], [0], [0], [1], [0, 0, 1, 1], [], []>} : vector<8x32xf32>, vector<32x32xf32>, vector<8x32xf32> -> vector<8x32xf32>
    %51 = arith.addf %45, %50 : vector<8x32xf32>
    %52 = vector.extract_strided_slice %17 {offsets = [5, 0, 0], sizes = [1, 8, 32], strides = [1, 1, 1]} : vector<49x8x32xf32> to vector<1x8x32xf32>
    %53 = vector.shape_cast %52 : vector<1x8x32xf32> to vector<8x32xf32>
    %c5 = arith.constant 5 : index
    %c0_33 = arith.constant 0 : index
    %c0_34 = arith.constant 0 : index
    %54 = vector.load %arg6[%c5, %c0_33, %c0_34] : memref<49x32x32xf32, #tpu.memory_space<vmem>>, vector<1x32x32xf32>
    %55 = vector.shape_cast %54 : vector<1x32x32xf32> to vector<32x32xf32>
    %cst_35 = arith.constant dense<0.000000e+00> : vector<8x32xf32>
    %56 = tpu.matmul %53, %55, %cst_35 {dimension_numbers = #tpu.dot_dimension_numbers<[1], [0], [0], [1], [0, 0, 1, 1], [], []>} : vector<8x32xf32>, vector<32x32xf32>, vector<8x32xf32> -> vector<8x32xf32>
    %57 = arith.addf %51, %56 : vector<8x32xf32>
    %58 = vector.extract_strided_slice %17 {offsets = [6, 0, 0], sizes = [1, 8, 32], strides = [1, 1, 1]} : vector<49x8x32xf32> to vector<1x8x32xf32>
    %59 = vector.shape_cast %58 : vector<1x8x32xf32> to vector<8x32xf32>
    %c6 = arith.constant 6 : index
    %c0_36 = arith.constant 0 : index
    %c0_37 = arith.constant 0 : index
    %60 = vector.load %arg6[%c6, %c0_36, %c0_37] : memref<49x32x32xf32, #tpu.memory_space<vmem>>, vector<1x32x32xf32>
    %61 = vector.shape_cast %60 : vector<1x32x32xf32> to vector<32x32xf32>
    %cst_38 = arith.constant dense<0.000000e+00> : vector<8x32xf32>
    %62 = tpu.matmul %59, %61, %cst_38 {dimension_numbers = #tpu.dot_dimension_numbers<[1], [0], [0], [1], [0, 0, 1, 1], [], []>} : vector<8x32xf32>, vector<32x32xf32>, vector<8x32xf32> -> vector<8x32xf32>
    %63 = arith.addf %57, %62 : vector<8x32xf32>
    %64 = vector.extract_strided_slice %17 {offsets = [7, 0, 0], sizes = [1, 8, 32], strides = [1, 1, 1]} : vector<49x8x32xf32> to vector<1x8x32xf32>
    %65 = vector.shape_cast %64 : vector<1x8x32xf32> to vector<8x32xf32>
    %c7 = arith.constant 7 : index
    %c0_39 = arith.constant 0 : index
    %c0_40 = arith.constant 0 : index
    %66 = vector.load %arg6[%c7, %c0_39, %c0_40] : memref<49x32x32xf32, #tpu.memory_space<vmem>>, vector<1x32x32xf32>
    %67 = vector.shape_cast %66 : vector<1x32x32xf32> to vector<32x32xf32>
    %cst_41 = arith.constant dense<0.000000e+00> : vector<8x32xf32>
    %68 = tpu.matmul %65, %67, %cst_41 {dimension_numbers = #tpu.dot_dimension_numbers<[1], [0], [0], [1], [0, 0, 1, 1], [], []>} : vector<8x32xf32>, vector<32x32xf32>, vector<8x32xf32> -> vector<8x32xf32>
    %69 = arith.addf %63, %68 : vector<8x32xf32>
    %70 = vector.extract_strided_slice %17 {offsets = [8, 0, 0], sizes = [1, 8, 32], strides = [1, 1, 1]} : vector<49x8x32xf32> to vector<1x8x32xf32>
    %71 = vector.shape_cast %70 : vector<1x8x32xf32> to vector<8x32xf32>
    %c8 = arith.constant 8 : index
    %c0_42 = arith.constant 0 : index
    %c0_43 = arith.constant 0 : index
    %72 = vector.load %arg6[%c8, %c0_42, %c0_43] : memref<49x32x32xf32, #tpu.memory_space<vmem>>, vector<1x32x32xf32>
    %73 = vector.shape_cast %72 : vector<1x32x32xf32> to vector<32x32xf32>
    %cst_44 = arith.constant dense<0.000000e+00> : vector<8x32xf32>
    %74 = tpu.matmul %71, %73, %cst_44 {dimension_numbers = #tpu.dot_dimension_numbers<[1], [0], [0], [1], [0, 0, 1, 1], [], []>} : vector<8x32xf32>, vector<32x32xf32>, vector<8x32xf32> -> vector<8x32xf32>
    %75 = arith.addf %69, %74 : vector<8x32xf32>
    %76 = vector.extract_strided_slice %17 {offsets = [9, 0, 0], sizes = [1, 8, 32], strides = [1, 1, 1]} : vector<49x8x32xf32> to vector<1x8x32xf32>
    %77 = vector.shape_cast %76 : vector<1x8x32xf32> to vector<8x32xf32>
    %c9 = arith.constant 9 : index
    %c0_45 = arith.constant 0 : index
    %c0_46 = arith.constant 0 : index
    %78 = vector.load %arg6[%c9, %c0_45, %c0_46] : memref<49x32x32xf32, #tpu.memory_space<vmem>>, vector<1x32x32xf32>
    %79 = vector.shape_cast %78 : vector<1x32x32xf32> to vector<32x32xf32>
    %cst_47 = arith.constant dense<0.000000e+00> : vector<8x32xf32>
    %80 = tpu.matmul %77, %79, %cst_47 {dimension_numbers = #tpu.dot_dimension_numbers<[1], [0], [0], [1], [0, 0, 1, 1], [], []>} : vector<8x32xf32>, vector<32x32xf32>, vector<8x32xf32> -> vector<8x32xf32>
    %81 = arith.addf %75, %80 : vector<8x32xf32>
    %82 = vector.extract_strided_slice %17 {offsets = [10, 0, 0], sizes = [1, 8, 32], strides = [1, 1, 1]} : vector<49x8x32xf32> to vector<1x8x32xf32>
    %83 = vector.shape_cast %82 : vector<1x8x32xf32> to vector<8x32xf32>
    %c10 = arith.constant 10 : index
    %c0_48 = arith.constant 0 : index
    %c0_49 = arith.constant 0 : index
    %84 = vector.load %arg6[%c10, %c0_48, %c0_49] : memref<49x32x32xf32, #tpu.memory_space<vmem>>, vector<1x32x32xf32>
    %85 = vector.shape_cast %84 : vector<1x32x32xf32> to vector<32x32xf32>
    %cst_50 = arith.constant dense<0.000000e+00> : vector<8x32xf32>
    %86 = tpu.matmul %83, %85, %cst_50 {dimension_numbers = #tpu.dot_dimension_numbers<[1], [0], [0], [1], [0, 0, 1, 1], [], []>} : vector<8x32xf32>, vector<32x32xf32>, vector<8x32xf32> -> vector<8x32xf32>
    %87 = arith.addf %81, %86 : vector<8x32xf32>
    %88 = vector.extract_strided_slice %17 {offsets = [11, 0, 0], sizes = [1, 8, 32], strides = [1, 1, 1]} : vector<49x8x32xf32> to vector<1x8x32xf32>
    %89 = vector.shape_cast %88 : vector<1x8x32xf32> to vector<8x32xf32>
    %c11 = arith.constant 11 : index
    %c0_51 = arith.constant 0 : index
    %c0_52 = arith.constant 0 : index
    %90 = vector.load %arg6[%c11, %c0_51, %c0_52] : memref<49x32x32xf32, #tpu.memory_space<vmem>>, vector<1x32x32xf32>
    %91 = vector.shape_cast %90 : vector<1x32x32xf32> to vector<32x32xf32>
    %cst_53 = arith.constant dense<0.000000e+00> : vector<8x32xf32>
    %92 = tpu.matmul %89, %91, %cst_53 {dimension_numbers = #tpu.dot_dimension_numbers<[1], [0], [0], [1], [0, 0, 1, 1], [], []>} : vector<8x32xf32>, vector<32x32xf32>, vector<8x32xf32> -> vector<8x32xf32>
    %93 = arith.addf %87, %92 : vector<8x32xf32>
    %94 = vector.extract_strided_slice %17 {offsets = [12, 0, 0], sizes = [1, 8, 32], strides = [1, 1, 1]} : vector<49x8x32xf32> to vector<1x8x32xf32>
    %95 = vector.shape_cast %94 : vector<1x8x32xf32> to vector<8x32xf32>
    %c12 = arith.constant 12 : index
    %c0_54 = arith.constant 0 : index
    %c0_55 = arith.constant 0 : index
    %96 = vector.load %arg6[%c12, %c0_54, %c0_55] : memref<49x32x32xf32, #tpu.memory_space<vmem>>, vector<1x32x32xf32>
    %97 = vector.shape_cast %96 : vector<1x32x32xf32> to vector<32x32xf32>
    %cst_56 = arith.constant dense<0.000000e+00> : vector<8x32xf32>
    %98 = tpu.matmul %95, %97, %cst_56 {dimension_numbers = #tpu.dot_dimension_numbers<[1], [0], [0], [1], [0, 0, 1, 1], [], []>} : vector<8x32xf32>, vector<32x32xf32>, vector<8x32xf32> -> vector<8x32xf32>
    %99 = arith.addf %93, %98 : vector<8x32xf32>
    %100 = vector.extract_strided_slice %17 {offsets = [13, 0, 0], sizes = [1, 8, 32], strides = [1, 1, 1]} : vector<49x8x32xf32> to vector<1x8x32xf32>
    %101 = vector.shape_cast %100 : vector<1x8x32xf32> to vector<8x32xf32>
    %c13 = arith.constant 13 : index
    %c0_57 = arith.constant 0 : index
    %c0_58 = arith.constant 0 : index
    %102 = vector.load %arg6[%c13, %c0_57, %c0_58] : memref<49x32x32xf32, #tpu.memory_space<vmem>>, vector<1x32x32xf32>
    %103 = vector.shape_cast %102 : vector<1x32x32xf32> to vector<32x32xf32>
    %cst_59 = arith.constant dense<0.000000e+00> : vector<8x32xf32>
    %104 = tpu.matmul %101, %103, %cst_59 {dimension_numbers = #tpu.dot_dimension_numbers<[1], [0], [0], [1], [0, 0, 1, 1], [], []>} : vector<8x32xf32>, vector<32x32xf32>, vector<8x32xf32> -> vector<8x32xf32>
    %105 = arith.addf %99, %104 : vector<8x32xf32>
    %106 = vector.extract_strided_slice %17 {offsets = [14, 0, 0], sizes = [1, 8, 32], strides = [1, 1, 1]} : vector<49x8x32xf32> to vector<1x8x32xf32>
    %107 = vector.shape_cast %106 : vector<1x8x32xf32> to vector<8x32xf32>
    %c14 = arith.constant 14 : index
    %c0_60 = arith.constant 0 : index
    %c0_61 = arith.constant 0 : index
    %108 = vector.load %arg6[%c14, %c0_60, %c0_61] : memref<49x32x32xf32, #tpu.memory_space<vmem>>, vector<1x32x32xf32>
    %109 = vector.shape_cast %108 : vector<1x32x32xf32> to vector<32x32xf32>
    %cst_62 = arith.constant dense<0.000000e+00> : vector<8x32xf32>
    %110 = tpu.matmul %107, %109, %cst_62 {dimension_numbers = #tpu.dot_dimension_numbers<[1], [0], [0], [1], [0, 0, 1, 1], [], []>} : vector<8x32xf32>, vector<32x32xf32>, vector<8x32xf32> -> vector<8x32xf32>
    %111 = arith.addf %105, %110 : vector<8x32xf32>
    %112 = vector.extract_strided_slice %17 {offsets = [15, 0, 0], sizes = [1, 8, 32], strides = [1, 1, 1]} : vector<49x8x32xf32> to vector<1x8x32xf32>
    %113 = vector.shape_cast %112 : vector<1x8x32xf32> to vector<8x32xf32>
    %c15 = arith.constant 15 : index
    %c0_63 = arith.constant 0 : index
    %c0_64 = arith.constant 0 : index
    %114 = vector.load %arg6[%c15, %c0_63, %c0_64] : memref<49x32x32xf32, #tpu.memory_space<vmem>>, vector<1x32x32xf32>
    %115 = vector.shape_cast %114 : vector<1x32x32xf32> to vector<32x32xf32>
    %cst_65 = arith.constant dense<0.000000e+00> : vector<8x32xf32>
    %116 = tpu.matmul %113, %115, %cst_65 {dimension_numbers = #tpu.dot_dimension_numbers<[1], [0], [0], [1], [0, 0, 1, 1], [], []>} : vector<8x32xf32>, vector<32x32xf32>, vector<8x32xf32> -> vector<8x32xf32>
    %117 = arith.addf %111, %116 : vector<8x32xf32>
    %118 = vector.extract_strided_slice %17 {offsets = [16, 0, 0], sizes = [1, 8, 32], strides = [1, 1, 1]} : vector<49x8x32xf32> to vector<1x8x32xf32>
    %119 = vector.shape_cast %118 : vector<1x8x32xf32> to vector<8x32xf32>
    %c16 = arith.constant 16 : index
    %c0_66 = arith.constant 0 : index
    %c0_67 = arith.constant 0 : index
    %120 = vector.load %arg6[%c16, %c0_66, %c0_67] : memref<49x32x32xf32, #tpu.memory_space<vmem>>, vector<1x32x32xf32>
    %121 = vector.shape_cast %120 : vector<1x32x32xf32> to vector<32x32xf32>
    %cst_68 = arith.constant dense<0.000000e+00> : vector<8x32xf32>
    %122 = tpu.matmul %119, %121, %cst_68 {dimension_numbers = #tpu.dot_dimension_numbers<[1], [0], [0], [1], [0, 0, 1, 1], [], []>} : vector<8x32xf32>, vector<32x32xf32>, vector<8x32xf32> -> vector<8x32xf32>
    %123 = arith.addf %117, %122 : vector<8x32xf32>
    %124 = vector.extract_strided_slice %17 {offsets = [17, 0, 0], sizes = [1, 8, 32], strides = [1, 1, 1]} : vector<49x8x32xf32> to vector<1x8x32xf32>
    %125 = vector.shape_cast %124 : vector<1x8x32xf32> to vector<8x32xf32>
    %c17 = arith.constant 17 : index
    %c0_69 = arith.constant 0 : index
    %c0_70 = arith.constant 0 : index
    %126 = vector.load %arg6[%c17, %c0_69, %c0_70] : memref<49x32x32xf32, #tpu.memory_space<vmem>>, vector<1x32x32xf32>
    %127 = vector.shape_cast %126 : vector<1x32x32xf32> to vector<32x32xf32>
    %cst_71 = arith.constant dense<0.000000e+00> : vector<8x32xf32>
    %128 = tpu.matmul %125, %127, %cst_71 {dimension_numbers = #tpu.dot_dimension_numbers<[1], [0], [0], [1], [0, 0, 1, 1], [], []>} : vector<8x32xf32>, vector<32x32xf32>, vector<8x32xf32> -> vector<8x32xf32>
    %129 = arith.addf %123, %128 : vector<8x32xf32>
    %130 = vector.extract_strided_slice %17 {offsets = [18, 0, 0], sizes = [1, 8, 32], strides = [1, 1, 1]} : vector<49x8x32xf32> to vector<1x8x32xf32>
    %131 = vector.shape_cast %130 : vector<1x8x32xf32> to vector<8x32xf32>
    %c18 = arith.constant 18 : index
    %c0_72 = arith.constant 0 : index
    %c0_73 = arith.constant 0 : index
    %132 = vector.load %arg6[%c18, %c0_72, %c0_73] : memref<49x32x32xf32, #tpu.memory_space<vmem>>, vector<1x32x32xf32>
    %133 = vector.shape_cast %132 : vector<1x32x32xf32> to vector<32x32xf32>
    %cst_74 = arith.constant dense<0.000000e+00> : vector<8x32xf32>
    %134 = tpu.matmul %131, %133, %cst_74 {dimension_numbers = #tpu.dot_dimension_numbers<[1], [0], [0], [1], [0, 0, 1, 1], [], []>} : vector<8x32xf32>, vector<32x32xf32>, vector<8x32xf32> -> vector<8x32xf32>
    %135 = arith.addf %129, %134 : vector<8x32xf32>
    %136 = vector.extract_strided_slice %17 {offsets = [19, 0, 0], sizes = [1, 8, 32], strides = [1, 1, 1]} : vector<49x8x32xf32> to vector<1x8x32xf32>
    %137 = vector.shape_cast %136 : vector<1x8x32xf32> to vector<8x32xf32>
    %c19 = arith.constant 19 : index
    %c0_75 = arith.constant 0 : index
    %c0_76 = arith.constant 0 : index
    %138 = vector.load %arg6[%c19, %c0_75, %c0_76] : memref<49x32x32xf32, #tpu.memory_space<vmem>>, vector<1x32x32xf32>
    %139 = vector.shape_cast %138 : vector<1x32x32xf32> to vector<32x32xf32>
    %cst_77 = arith.constant dense<0.000000e+00> : vector<8x32xf32>
    %140 = tpu.matmul %137, %139, %cst_77 {dimension_numbers = #tpu.dot_dimension_numbers<[1], [0], [0], [1], [0, 0, 1, 1], [], []>} : vector<8x32xf32>, vector<32x32xf32>, vector<8x32xf32> -> vector<8x32xf32>
    %141 = arith.addf %135, %140 : vector<8x32xf32>
    %142 = vector.extract_strided_slice %17 {offsets = [20, 0, 0], sizes = [1, 8, 32], strides = [1, 1, 1]} : vector<49x8x32xf32> to vector<1x8x32xf32>
    %143 = vector.shape_cast %142 : vector<1x8x32xf32> to vector<8x32xf32>
    %c20 = arith.constant 20 : index
    %c0_78 = arith.constant 0 : index
    %c0_79 = arith.constant 0 : index
    %144 = vector.load %arg6[%c20, %c0_78, %c0_79] : memref<49x32x32xf32, #tpu.memory_space<vmem>>, vector<1x32x32xf32>
    %145 = vector.shape_cast %144 : vector<1x32x32xf32> to vector<32x32xf32>
    %cst_80 = arith.constant dense<0.000000e+00> : vector<8x32xf32>
    %146 = tpu.matmul %143, %145, %cst_80 {dimension_numbers = #tpu.dot_dimension_numbers<[1], [0], [0], [1], [0, 0, 1, 1], [], []>} : vector<8x32xf32>, vector<32x32xf32>, vector<8x32xf32> -> vector<8x32xf32>
    %147 = arith.addf %141, %146 : vector<8x32xf32>
    %148 = vector.extract_strided_slice %17 {offsets = [21, 0, 0], sizes = [1, 8, 32], strides = [1, 1, 1]} : vector<49x8x32xf32> to vector<1x8x32xf32>
    %149 = vector.shape_cast %148 : vector<1x8x32xf32> to vector<8x32xf32>
    %c21 = arith.constant 21 : index
    %c0_81 = arith.constant 0 : index
    %c0_82 = arith.constant 0 : index
    %150 = vector.load %arg6[%c21, %c0_81, %c0_82] : memref<49x32x32xf32, #tpu.memory_space<vmem>>, vector<1x32x32xf32>
    %151 = vector.shape_cast %150 : vector<1x32x32xf32> to vector<32x32xf32>
    %cst_83 = arith.constant dense<0.000000e+00> : vector<8x32xf32>
    %152 = tpu.matmul %149, %151, %cst_83 {dimension_numbers = #tpu.dot_dimension_numbers<[1], [0], [0], [1], [0, 0, 1, 1], [], []>} : vector<8x32xf32>, vector<32x32xf32>, vector<8x32xf32> -> vector<8x32xf32>
    %153 = arith.addf %147, %152 : vector<8x32xf32>
    %154 = vector.extract_strided_slice %17 {offsets = [22, 0, 0], sizes = [1, 8, 32], strides = [1, 1, 1]} : vector<49x8x32xf32> to vector<1x8x32xf32>
    %155 = vector.shape_cast %154 : vector<1x8x32xf32> to vector<8x32xf32>
    %c22 = arith.constant 22 : index
    %c0_84 = arith.constant 0 : index
    %c0_85 = arith.constant 0 : index
    %156 = vector.load %arg6[%c22, %c0_84, %c0_85] : memref<49x32x32xf32, #tpu.memory_space<vmem>>, vector<1x32x32xf32>
    %157 = vector.shape_cast %156 : vector<1x32x32xf32> to vector<32x32xf32>
    %cst_86 = arith.constant dense<0.000000e+00> : vector<8x32xf32>
    %158 = tpu.matmul %155, %157, %cst_86 {dimension_numbers = #tpu.dot_dimension_numbers<[1], [0], [0], [1], [0, 0, 1, 1], [], []>} : vector<8x32xf32>, vector<32x32xf32>, vector<8x32xf32> -> vector<8x32xf32>
    %159 = arith.addf %153, %158 : vector<8x32xf32>
    %160 = vector.extract_strided_slice %17 {offsets = [23, 0, 0], sizes = [1, 8, 32], strides = [1, 1, 1]} : vector<49x8x32xf32> to vector<1x8x32xf32>
    %161 = vector.shape_cast %160 : vector<1x8x32xf32> to vector<8x32xf32>
    %c23 = arith.constant 23 : index
    %c0_87 = arith.constant 0 : index
    %c0_88 = arith.constant 0 : index
    %162 = vector.load %arg6[%c23, %c0_87, %c0_88] : memref<49x32x32xf32, #tpu.memory_space<vmem>>, vector<1x32x32xf32>
    %163 = vector.shape_cast %162 : vector<1x32x32xf32> to vector<32x32xf32>
    %cst_89 = arith.constant dense<0.000000e+00> : vector<8x32xf32>
    %164 = tpu.matmul %161, %163, %cst_89 {dimension_numbers = #tpu.dot_dimension_numbers<[1], [0], [0], [1], [0, 0, 1, 1], [], []>} : vector<8x32xf32>, vector<32x32xf32>, vector<8x32xf32> -> vector<8x32xf32>
    %165 = arith.addf %159, %164 : vector<8x32xf32>
    %166 = vector.extract_strided_slice %17 {offsets = [24, 0, 0], sizes = [1, 8, 32], strides = [1, 1, 1]} : vector<49x8x32xf32> to vector<1x8x32xf32>
    %167 = vector.shape_cast %166 : vector<1x8x32xf32> to vector<8x32xf32>
    %c24 = arith.constant 24 : index
    %c0_90 = arith.constant 0 : index
    %c0_91 = arith.constant 0 : index
    %168 = vector.load %arg6[%c24, %c0_90, %c0_91] : memref<49x32x32xf32, #tpu.memory_space<vmem>>, vector<1x32x32xf32>
    %169 = vector.shape_cast %168 : vector<1x32x32xf32> to vector<32x32xf32>
    %cst_92 = arith.constant dense<0.000000e+00> : vector<8x32xf32>
    %170 = tpu.matmul %167, %169, %cst_92 {dimension_numbers = #tpu.dot_dimension_numbers<[1], [0], [0], [1], [0, 0, 1, 1], [], []>} : vector<8x32xf32>, vector<32x32xf32>, vector<8x32xf32> -> vector<8x32xf32>
    %171 = arith.addf %165, %170 : vector<8x32xf32>
    %172 = vector.extract_strided_slice %17 {offsets = [25, 0, 0], sizes = [1, 8, 32], strides = [1, 1, 1]} : vector<49x8x32xf32> to vector<1x8x32xf32>
    %173 = vector.shape_cast %172 : vector<1x8x32xf32> to vector<8x32xf32>
    %c25 = arith.constant 25 : index
    %c0_93 = arith.constant 0 : index
    %c0_94 = arith.constant 0 : index
    %174 = vector.load %arg6[%c25, %c0_93, %c0_94] : memref<49x32x32xf32, #tpu.memory_space<vmem>>, vector<1x32x32xf32>
    %175 = vector.shape_cast %174 : vector<1x32x32xf32> to vector<32x32xf32>
    %cst_95 = arith.constant dense<0.000000e+00> : vector<8x32xf32>
    %176 = tpu.matmul %173, %175, %cst_95 {dimension_numbers = #tpu.dot_dimension_numbers<[1], [0], [0], [1], [0, 0, 1, 1], [], []>} : vector<8x32xf32>, vector<32x32xf32>, vector<8x32xf32> -> vector<8x32xf32>
    %177 = arith.addf %171, %176 : vector<8x32xf32>
    %178 = vector.extract_strided_slice %17 {offsets = [26, 0, 0], sizes = [1, 8, 32], strides = [1, 1, 1]} : vector<49x8x32xf32> to vector<1x8x32xf32>
    %179 = vector.shape_cast %178 : vector<1x8x32xf32> to vector<8x32xf32>
    %c26 = arith.constant 26 : index
    %c0_96 = arith.constant 0 : index
    %c0_97 = arith.constant 0 : index
    %180 = vector.load %arg6[%c26, %c0_96, %c0_97] : memref<49x32x32xf32, #tpu.memory_space<vmem>>, vector<1x32x32xf32>
    %181 = vector.shape_cast %180 : vector<1x32x32xf32> to vector<32x32xf32>
    %cst_98 = arith.constant dense<0.000000e+00> : vector<8x32xf32>
    %182 = tpu.matmul %179, %181, %cst_98 {dimension_numbers = #tpu.dot_dimension_numbers<[1], [0], [0], [1], [0, 0, 1, 1], [], []>} : vector<8x32xf32>, vector<32x32xf32>, vector<8x32xf32> -> vector<8x32xf32>
    %183 = arith.addf %177, %182 : vector<8x32xf32>
    %184 = vector.extract_strided_slice %17 {offsets = [27, 0, 0], sizes = [1, 8, 32], strides = [1, 1, 1]} : vector<49x8x32xf32> to vector<1x8x32xf32>
    %185 = vector.shape_cast %184 : vector<1x8x32xf32> to vector<8x32xf32>
    %c27 = arith.constant 27 : index
    %c0_99 = arith.constant 0 : index
    %c0_100 = arith.constant 0 : index
    %186 = vector.load %arg6[%c27, %c0_99, %c0_100] : memref<49x32x32xf32, #tpu.memory_space<vmem>>, vector<1x32x32xf32>
    %187 = vector.shape_cast %186 : vector<1x32x32xf32> to vector<32x32xf32>
    %cst_101 = arith.constant dense<0.000000e+00> : vector<8x32xf32>
    %188 = tpu.matmul %185, %187, %cst_101 {dimension_numbers = #tpu.dot_dimension_numbers<[1], [0], [0], [1], [0, 0, 1, 1], [], []>} : vector<8x32xf32>, vector<32x32xf32>, vector<8x32xf32> -> vector<8x32xf32>
    %189 = arith.addf %183, %188 : vector<8x32xf32>
    %190 = vector.extract_strided_slice %17 {offsets = [28, 0, 0], sizes = [1, 8, 32], strides = [1, 1, 1]} : vector<49x8x32xf32> to vector<1x8x32xf32>
    %191 = vector.shape_cast %190 : vector<1x8x32xf32> to vector<8x32xf32>
    %c28 = arith.constant 28 : index
    %c0_102 = arith.constant 0 : index
    %c0_103 = arith.constant 0 : index
    %192 = vector.load %arg6[%c28, %c0_102, %c0_103] : memref<49x32x32xf32, #tpu.memory_space<vmem>>, vector<1x32x32xf32>
    %193 = vector.shape_cast %192 : vector<1x32x32xf32> to vector<32x32xf32>
    %cst_104 = arith.constant dense<0.000000e+00> : vector<8x32xf32>
    %194 = tpu.matmul %191, %193, %cst_104 {dimension_numbers = #tpu.dot_dimension_numbers<[1], [0], [0], [1], [0, 0, 1, 1], [], []>} : vector<8x32xf32>, vector<32x32xf32>, vector<8x32xf32> -> vector<8x32xf32>
    %195 = arith.addf %189, %194 : vector<8x32xf32>
    %196 = vector.extract_strided_slice %17 {offsets = [29, 0, 0], sizes = [1, 8, 32], strides = [1, 1, 1]} : vector<49x8x32xf32> to vector<1x8x32xf32>
    %197 = vector.shape_cast %196 : vector<1x8x32xf32> to vector<8x32xf32>
    %c29 = arith.constant 29 : index
    %c0_105 = arith.constant 0 : index
    %c0_106 = arith.constant 0 : index
    %198 = vector.load %arg6[%c29, %c0_105, %c0_106] : memref<49x32x32xf32, #tpu.memory_space<vmem>>, vector<1x32x32xf32>
    %199 = vector.shape_cast %198 : vector<1x32x32xf32> to vector<32x32xf32>
    %cst_107 = arith.constant dense<0.000000e+00> : vector<8x32xf32>
    %200 = tpu.matmul %197, %199, %cst_107 {dimension_numbers = #tpu.dot_dimension_numbers<[1], [0], [0], [1], [0, 0, 1, 1], [], []>} : vector<8x32xf32>, vector<32x32xf32>, vector<8x32xf32> -> vector<8x32xf32>
    %201 = arith.addf %195, %200 : vector<8x32xf32>
    %202 = vector.extract_strided_slice %17 {offsets = [30, 0, 0], sizes = [1, 8, 32], strides = [1, 1, 1]} : vector<49x8x32xf32> to vector<1x8x32xf32>
    %203 = vector.shape_cast %202 : vector<1x8x32xf32> to vector<8x32xf32>
    %c30 = arith.constant 30 : index
    %c0_108 = arith.constant 0 : index
    %c0_109 = arith.constant 0 : index
    %204 = vector.load %arg6[%c30, %c0_108, %c0_109] : memref<49x32x32xf32, #tpu.memory_space<vmem>>, vector<1x32x32xf32>
    %205 = vector.shape_cast %204 : vector<1x32x32xf32> to vector<32x32xf32>
    %cst_110 = arith.constant dense<0.000000e+00> : vector<8x32xf32>
    %206 = tpu.matmul %203, %205, %cst_110 {dimension_numbers = #tpu.dot_dimension_numbers<[1], [0], [0], [1], [0, 0, 1, 1], [], []>} : vector<8x32xf32>, vector<32x32xf32>, vector<8x32xf32> -> vector<8x32xf32>
    %207 = arith.addf %201, %206 : vector<8x32xf32>
    %208 = vector.extract_strided_slice %17 {offsets = [31, 0, 0], sizes = [1, 8, 32], strides = [1, 1, 1]} : vector<49x8x32xf32> to vector<1x8x32xf32>
    %209 = vector.shape_cast %208 : vector<1x8x32xf32> to vector<8x32xf32>
    %c31 = arith.constant 31 : index
    %c0_111 = arith.constant 0 : index
    %c0_112 = arith.constant 0 : index
    %210 = vector.load %arg6[%c31, %c0_111, %c0_112] : memref<49x32x32xf32, #tpu.memory_space<vmem>>, vector<1x32x32xf32>
    %211 = vector.shape_cast %210 : vector<1x32x32xf32> to vector<32x32xf32>
    %cst_113 = arith.constant dense<0.000000e+00> : vector<8x32xf32>
    %212 = tpu.matmul %209, %211, %cst_113 {dimension_numbers = #tpu.dot_dimension_numbers<[1], [0], [0], [1], [0, 0, 1, 1], [], []>} : vector<8x32xf32>, vector<32x32xf32>, vector<8x32xf32> -> vector<8x32xf32>
    %213 = arith.addf %207, %212 : vector<8x32xf32>
    %214 = vector.extract_strided_slice %17 {offsets = [32, 0, 0], sizes = [1, 8, 32], strides = [1, 1, 1]} : vector<49x8x32xf32> to vector<1x8x32xf32>
    %215 = vector.shape_cast %214 : vector<1x8x32xf32> to vector<8x32xf32>
    %c32 = arith.constant 32 : index
    %c0_114 = arith.constant 0 : index
    %c0_115 = arith.constant 0 : index
    %216 = vector.load %arg6[%c32, %c0_114, %c0_115] : memref<49x32x32xf32, #tpu.memory_space<vmem>>, vector<1x32x32xf32>
    %217 = vector.shape_cast %216 : vector<1x32x32xf32> to vector<32x32xf32>
    %cst_116 = arith.constant dense<0.000000e+00> : vector<8x32xf32>
    %218 = tpu.matmul %215, %217, %cst_116 {dimension_numbers = #tpu.dot_dimension_numbers<[1], [0], [0], [1], [0, 0, 1, 1], [], []>} : vector<8x32xf32>, vector<32x32xf32>, vector<8x32xf32> -> vector<8x32xf32>
    %219 = arith.addf %213, %218 : vector<8x32xf32>
    %220 = vector.extract_strided_slice %17 {offsets = [33, 0, 0], sizes = [1, 8, 32], strides = [1, 1, 1]} : vector<49x8x32xf32> to vector<1x8x32xf32>
    %221 = vector.shape_cast %220 : vector<1x8x32xf32> to vector<8x32xf32>
    %c33 = arith.constant 33 : index
    %c0_117 = arith.constant 0 : index
    %c0_118 = arith.constant 0 : index
    %222 = vector.load %arg6[%c33, %c0_117, %c0_118] : memref<49x32x32xf32, #tpu.memory_space<vmem>>, vector<1x32x32xf32>
    %223 = vector.shape_cast %222 : vector<1x32x32xf32> to vector<32x32xf32>
    %cst_119 = arith.constant dense<0.000000e+00> : vector<8x32xf32>
    %224 = tpu.matmul %221, %223, %cst_119 {dimension_numbers = #tpu.dot_dimension_numbers<[1], [0], [0], [1], [0, 0, 1, 1], [], []>} : vector<8x32xf32>, vector<32x32xf32>, vector<8x32xf32> -> vector<8x32xf32>
    %225 = arith.addf %219, %224 : vector<8x32xf32>
    %226 = vector.extract_strided_slice %17 {offsets = [34, 0, 0], sizes = [1, 8, 32], strides = [1, 1, 1]} : vector<49x8x32xf32> to vector<1x8x32xf32>
    %227 = vector.shape_cast %226 : vector<1x8x32xf32> to vector<8x32xf32>
    %c34 = arith.constant 34 : index
    %c0_120 = arith.constant 0 : index
    %c0_121 = arith.constant 0 : index
    %228 = vector.load %arg6[%c34, %c0_120, %c0_121] : memref<49x32x32xf32, #tpu.memory_space<vmem>>, vector<1x32x32xf32>
    %229 = vector.shape_cast %228 : vector<1x32x32xf32> to vector<32x32xf32>
    %cst_122 = arith.constant dense<0.000000e+00> : vector<8x32xf32>
    %230 = tpu.matmul %227, %229, %cst_122 {dimension_numbers = #tpu.dot_dimension_numbers<[1], [0], [0], [1], [0, 0, 1, 1], [], []>} : vector<8x32xf32>, vector<32x32xf32>, vector<8x32xf32> -> vector<8x32xf32>
    %231 = arith.addf %225, %230 : vector<8x32xf32>
    %232 = vector.extract_strided_slice %17 {offsets = [35, 0, 0], sizes = [1, 8, 32], strides = [1, 1, 1]} : vector<49x8x32xf32> to vector<1x8x32xf32>
    %233 = vector.shape_cast %232 : vector<1x8x32xf32> to vector<8x32xf32>
    %c35 = arith.constant 35 : index
    %c0_123 = arith.constant 0 : index
    %c0_124 = arith.constant 0 : index
    %234 = vector.load %arg6[%c35, %c0_123, %c0_124] : memref<49x32x32xf32, #tpu.memory_space<vmem>>, vector<1x32x32xf32>
    %235 = vector.shape_cast %234 : vector<1x32x32xf32> to vector<32x32xf32>
    %cst_125 = arith.constant dense<0.000000e+00> : vector<8x32xf32>
    %236 = tpu.matmul %233, %235, %cst_125 {dimension_numbers = #tpu.dot_dimension_numbers<[1], [0], [0], [1], [0, 0, 1, 1], [], []>} : vector<8x32xf32>, vector<32x32xf32>, vector<8x32xf32> -> vector<8x32xf32>
    %237 = arith.addf %231, %236 : vector<8x32xf32>
    %238 = vector.extract_strided_slice %17 {offsets = [36, 0, 0], sizes = [1, 8, 32], strides = [1, 1, 1]} : vector<49x8x32xf32> to vector<1x8x32xf32>
    %239 = vector.shape_cast %238 : vector<1x8x32xf32> to vector<8x32xf32>
    %c36 = arith.constant 36 : index
    %c0_126 = arith.constant 0 : index
    %c0_127 = arith.constant 0 : index
    %240 = vector.load %arg6[%c36, %c0_126, %c0_127] : memref<49x32x32xf32, #tpu.memory_space<vmem>>, vector<1x32x32xf32>
    %241 = vector.shape_cast %240 : vector<1x32x32xf32> to vector<32x32xf32>
    %cst_128 = arith.constant dense<0.000000e+00> : vector<8x32xf32>
    %242 = tpu.matmul %239, %241, %cst_128 {dimension_numbers = #tpu.dot_dimension_numbers<[1], [0], [0], [1], [0, 0, 1, 1], [], []>} : vector<8x32xf32>, vector<32x32xf32>, vector<8x32xf32> -> vector<8x32xf32>
    %243 = arith.addf %237, %242 : vector<8x32xf32>
    %244 = vector.extract_strided_slice %17 {offsets = [37, 0, 0], sizes = [1, 8, 32], strides = [1, 1, 1]} : vector<49x8x32xf32> to vector<1x8x32xf32>
    %245 = vector.shape_cast %244 : vector<1x8x32xf32> to vector<8x32xf32>
    %c37 = arith.constant 37 : index
    %c0_129 = arith.constant 0 : index
    %c0_130 = arith.constant 0 : index
    %246 = vector.load %arg6[%c37, %c0_129, %c0_130] : memref<49x32x32xf32, #tpu.memory_space<vmem>>, vector<1x32x32xf32>
    %247 = vector.shape_cast %246 : vector<1x32x32xf32> to vector<32x32xf32>
    %cst_131 = arith.constant dense<0.000000e+00> : vector<8x32xf32>
    %248 = tpu.matmul %245, %247, %cst_131 {dimension_numbers = #tpu.dot_dimension_numbers<[1], [0], [0], [1], [0, 0, 1, 1], [], []>} : vector<8x32xf32>, vector<32x32xf32>, vector<8x32xf32> -> vector<8x32xf32>
    %249 = arith.addf %243, %248 : vector<8x32xf32>
    %250 = vector.extract_strided_slice %17 {offsets = [38, 0, 0], sizes = [1, 8, 32], strides = [1, 1, 1]} : vector<49x8x32xf32> to vector<1x8x32xf32>
    %251 = vector.shape_cast %250 : vector<1x8x32xf32> to vector<8x32xf32>
    %c38 = arith.constant 38 : index
    %c0_132 = arith.constant 0 : index
    %c0_133 = arith.constant 0 : index
    %252 = vector.load %arg6[%c38, %c0_132, %c0_133] : memref<49x32x32xf32, #tpu.memory_space<vmem>>, vector<1x32x32xf32>
    %253 = vector.shape_cast %252 : vector<1x32x32xf32> to vector<32x32xf32>
    %cst_134 = arith.constant dense<0.000000e+00> : vector<8x32xf32>
    %254 = tpu.matmul %251, %253, %cst_134 {dimension_numbers = #tpu.dot_dimension_numbers<[1], [0], [0], [1], [0, 0, 1, 1], [], []>} : vector<8x32xf32>, vector<32x32xf32>, vector<8x32xf32> -> vector<8x32xf32>
    %255 = arith.addf %249, %254 : vector<8x32xf32>
    %256 = vector.extract_strided_slice %17 {offsets = [39, 0, 0], sizes = [1, 8, 32], strides = [1, 1, 1]} : vector<49x8x32xf32> to vector<1x8x32xf32>
    %257 = vector.shape_cast %256 : vector<1x8x32xf32> to vector<8x32xf32>
    %c39 = arith.constant 39 : index
    %c0_135 = arith.constant 0 : index
    %c0_136 = arith.constant 0 : index
    %258 = vector.load %arg6[%c39, %c0_135, %c0_136] : memref<49x32x32xf32, #tpu.memory_space<vmem>>, vector<1x32x32xf32>
    %259 = vector.shape_cast %258 : vector<1x32x32xf32> to vector<32x32xf32>
    %cst_137 = arith.constant dense<0.000000e+00> : vector<8x32xf32>
    %260 = tpu.matmul %257, %259, %cst_137 {dimension_numbers = #tpu.dot_dimension_numbers<[1], [0], [0], [1], [0, 0, 1, 1], [], []>} : vector<8x32xf32>, vector<32x32xf32>, vector<8x32xf32> -> vector<8x32xf32>
    %261 = arith.addf %255, %260 : vector<8x32xf32>
    %262 = vector.extract_strided_slice %17 {offsets = [40, 0, 0], sizes = [1, 8, 32], strides = [1, 1, 1]} : vector<49x8x32xf32> to vector<1x8x32xf32>
    %263 = vector.shape_cast %262 : vector<1x8x32xf32> to vector<8x32xf32>
    %c40 = arith.constant 40 : index
    %c0_138 = arith.constant 0 : index
    %c0_139 = arith.constant 0 : index
    %264 = vector.load %arg6[%c40, %c0_138, %c0_139] : memref<49x32x32xf32, #tpu.memory_space<vmem>>, vector<1x32x32xf32>
    %265 = vector.shape_cast %264 : vector<1x32x32xf32> to vector<32x32xf32>
    %cst_140 = arith.constant dense<0.000000e+00> : vector<8x32xf32>
    %266 = tpu.matmul %263, %265, %cst_140 {dimension_numbers = #tpu.dot_dimension_numbers<[1], [0], [0], [1], [0, 0, 1, 1], [], []>} : vector<8x32xf32>, vector<32x32xf32>, vector<8x32xf32> -> vector<8x32xf32>
    %267 = arith.addf %261, %266 : vector<8x32xf32>
    %268 = vector.extract_strided_slice %17 {offsets = [41, 0, 0], sizes = [1, 8, 32], strides = [1, 1, 1]} : vector<49x8x32xf32> to vector<1x8x32xf32>
    %269 = vector.shape_cast %268 : vector<1x8x32xf32> to vector<8x32xf32>
    %c41 = arith.constant 41 : index
    %c0_141 = arith.constant 0 : index
    %c0_142 = arith.constant 0 : index
    %270 = vector.load %arg6[%c41, %c0_141, %c0_142] : memref<49x32x32xf32, #tpu.memory_space<vmem>>, vector<1x32x32xf32>
    %271 = vector.shape_cast %270 : vector<1x32x32xf32> to vector<32x32xf32>
    %cst_143 = arith.constant dense<0.000000e+00> : vector<8x32xf32>
    %272 = tpu.matmul %269, %271, %cst_143 {dimension_numbers = #tpu.dot_dimension_numbers<[1], [0], [0], [1], [0, 0, 1, 1], [], []>} : vector<8x32xf32>, vector<32x32xf32>, vector<8x32xf32> -> vector<8x32xf32>
    %273 = arith.addf %267, %272 : vector<8x32xf32>
    %274 = vector.extract_strided_slice %17 {offsets = [42, 0, 0], sizes = [1, 8, 32], strides = [1, 1, 1]} : vector<49x8x32xf32> to vector<1x8x32xf32>
    %275 = vector.shape_cast %274 : vector<1x8x32xf32> to vector<8x32xf32>
    %c42 = arith.constant 42 : index
    %c0_144 = arith.constant 0 : index
    %c0_145 = arith.constant 0 : index
    %276 = vector.load %arg6[%c42, %c0_144, %c0_145] : memref<49x32x32xf32, #tpu.memory_space<vmem>>, vector<1x32x32xf32>
    %277 = vector.shape_cast %276 : vector<1x32x32xf32> to vector<32x32xf32>
    %cst_146 = arith.constant dense<0.000000e+00> : vector<8x32xf32>
    %278 = tpu.matmul %275, %277, %cst_146 {dimension_numbers = #tpu.dot_dimension_numbers<[1], [0], [0], [1], [0, 0, 1, 1], [], []>} : vector<8x32xf32>, vector<32x32xf32>, vector<8x32xf32> -> vector<8x32xf32>
    %279 = arith.addf %273, %278 : vector<8x32xf32>
    %280 = vector.extract_strided_slice %17 {offsets = [43, 0, 0], sizes = [1, 8, 32], strides = [1, 1, 1]} : vector<49x8x32xf32> to vector<1x8x32xf32>
    %281 = vector.shape_cast %280 : vector<1x8x32xf32> to vector<8x32xf32>
    %c43 = arith.constant 43 : index
    %c0_147 = arith.constant 0 : index
    %c0_148 = arith.constant 0 : index
    %282 = vector.load %arg6[%c43, %c0_147, %c0_148] : memref<49x32x32xf32, #tpu.memory_space<vmem>>, vector<1x32x32xf32>
    %283 = vector.shape_cast %282 : vector<1x32x32xf32> to vector<32x32xf32>
    %cst_149 = arith.constant dense<0.000000e+00> : vector<8x32xf32>
    %284 = tpu.matmul %281, %283, %cst_149 {dimension_numbers = #tpu.dot_dimension_numbers<[1], [0], [0], [1], [0, 0, 1, 1], [], []>} : vector<8x32xf32>, vector<32x32xf32>, vector<8x32xf32> -> vector<8x32xf32>
    %285 = arith.addf %279, %284 : vector<8x32xf32>
    %286 = vector.extract_strided_slice %17 {offsets = [44, 0, 0], sizes = [1, 8, 32], strides = [1, 1, 1]} : vector<49x8x32xf32> to vector<1x8x32xf32>
    %287 = vector.shape_cast %286 : vector<1x8x32xf32> to vector<8x32xf32>
    %c44 = arith.constant 44 : index
    %c0_150 = arith.constant 0 : index
    %c0_151 = arith.constant 0 : index
    %288 = vector.load %arg6[%c44, %c0_150, %c0_151] : memref<49x32x32xf32, #tpu.memory_space<vmem>>, vector<1x32x32xf32>
    %289 = vector.shape_cast %288 : vector<1x32x32xf32> to vector<32x32xf32>
    %cst_152 = arith.constant dense<0.000000e+00> : vector<8x32xf32>
    %290 = tpu.matmul %287, %289, %cst_152 {dimension_numbers = #tpu.dot_dimension_numbers<[1], [0], [0], [1], [0, 0, 1, 1], [], []>} : vector<8x32xf32>, vector<32x32xf32>, vector<8x32xf32> -> vector<8x32xf32>
    %291 = arith.addf %285, %290 : vector<8x32xf32>
    %292 = vector.extract_strided_slice %17 {offsets = [45, 0, 0], sizes = [1, 8, 32], strides = [1, 1, 1]} : vector<49x8x32xf32> to vector<1x8x32xf32>
    %293 = vector.shape_cast %292 : vector<1x8x32xf32> to vector<8x32xf32>
    %c45 = arith.constant 45 : index
    %c0_153 = arith.constant 0 : index
    %c0_154 = arith.constant 0 : index
    %294 = vector.load %arg6[%c45, %c0_153, %c0_154] : memref<49x32x32xf32, #tpu.memory_space<vmem>>, vector<1x32x32xf32>
    %295 = vector.shape_cast %294 : vector<1x32x32xf32> to vector<32x32xf32>
    %cst_155 = arith.constant dense<0.000000e+00> : vector<8x32xf32>
    %296 = tpu.matmul %293, %295, %cst_155 {dimension_numbers = #tpu.dot_dimension_numbers<[1], [0], [0], [1], [0, 0, 1, 1], [], []>} : vector<8x32xf32>, vector<32x32xf32>, vector<8x32xf32> -> vector<8x32xf32>
    %297 = arith.addf %291, %296 : vector<8x32xf32>
    %298 = vector.extract_strided_slice %17 {offsets = [46, 0, 0], sizes = [1, 8, 32], strides = [1, 1, 1]} : vector<49x8x32xf32> to vector<1x8x32xf32>
    %299 = vector.shape_cast %298 : vector<1x8x32xf32> to vector<8x32xf32>
    %c46 = arith.constant 46 : index
    %c0_156 = arith.constant 0 : index
    %c0_157 = arith.constant 0 : index
    %300 = vector.load %arg6[%c46, %c0_156, %c0_157] : memref<49x32x32xf32, #tpu.memory_space<vmem>>, vector<1x32x32xf32>
    %301 = vector.shape_cast %300 : vector<1x32x32xf32> to vector<32x32xf32>
    %cst_158 = arith.constant dense<0.000000e+00> : vector<8x32xf32>
    %302 = tpu.matmul %299, %301, %cst_158 {dimension_numbers = #tpu.dot_dimension_numbers<[1], [0], [0], [1], [0, 0, 1, 1], [], []>} : vector<8x32xf32>, vector<32x32xf32>, vector<8x32xf32> -> vector<8x32xf32>
    %303 = arith.addf %297, %302 : vector<8x32xf32>
    %304 = vector.extract_strided_slice %17 {offsets = [47, 0, 0], sizes = [1, 8, 32], strides = [1, 1, 1]} : vector<49x8x32xf32> to vector<1x8x32xf32>
    %305 = vector.shape_cast %304 : vector<1x8x32xf32> to vector<8x32xf32>
    %c47 = arith.constant 47 : index
    %c0_159 = arith.constant 0 : index
    %c0_160 = arith.constant 0 : index
    %306 = vector.load %arg6[%c47, %c0_159, %c0_160] : memref<49x32x32xf32, #tpu.memory_space<vmem>>, vector<1x32x32xf32>
    %307 = vector.shape_cast %306 : vector<1x32x32xf32> to vector<32x32xf32>
    %cst_161 = arith.constant dense<0.000000e+00> : vector<8x32xf32>
    %308 = tpu.matmul %305, %307, %cst_161 {dimension_numbers = #tpu.dot_dimension_numbers<[1], [0], [0], [1], [0, 0, 1, 1], [], []>} : vector<8x32xf32>, vector<32x32xf32>, vector<8x32xf32> -> vector<8x32xf32>
    %309 = arith.addf %303, %308 : vector<8x32xf32>
    %310 = vector.extract_strided_slice %17 {offsets = [48, 0, 0], sizes = [1, 8, 32], strides = [1, 1, 1]} : vector<49x8x32xf32> to vector<1x8x32xf32>
    %311 = vector.shape_cast %310 : vector<1x8x32xf32> to vector<8x32xf32>
    %c48 = arith.constant 48 : index
    %c0_162 = arith.constant 0 : index
    %c0_163 = arith.constant 0 : index
    %312 = vector.load %arg6[%c48, %c0_162, %c0_163] : memref<49x32x32xf32, #tpu.memory_space<vmem>>, vector<1x32x32xf32>
    %313 = vector.shape_cast %312 : vector<1x32x32xf32> to vector<32x32xf32>
    %cst_164 = arith.constant dense<0.000000e+00> : vector<8x32xf32>
    %314 = tpu.matmul %311, %313, %cst_164 {dimension_numbers = #tpu.dot_dimension_numbers<[1], [0], [0], [1], [0, 0, 1, 1], [], []>} : vector<8x32xf32>, vector<32x32xf32>, vector<8x32xf32> -> vector<8x32xf32>
    %315 = arith.addf %309, %314 : vector<8x32xf32>
    %c0_165 = arith.constant 0 : index
    %c0_166 = arith.constant 0 : index
    %316 = vector.load %arg7[%c0_165, %c0_166] : memref<1x32xf32, #tpu.memory_space<vmem>>, vector<1x32xf32>
    %317 = vector.broadcast %316 : vector<1x32xf32> to vector<8x32xf32>
    %318 = arith.mulf %315, %317 : vector<8x32xf32>
    %c0_167 = arith.constant 0 : index
    %c0_168 = arith.constant 0 : index
    %319 = vector.load %arg8[%c0_167, %c0_168] : memref<1x32xf32, #tpu.memory_space<vmem>>, vector<1x32xf32>
    %320 = vector.broadcast %319 : vector<1x32xf32> to vector<8x32xf32>
    %321 = arith.addf %318, %320 : vector<8x32xf32>
    %cst_169 = arith.constant 0.000000e+00 : f32
    %322 = vector.broadcast %cst_169 : f32 to vector<8x32xf32>
    %323 = arith.maximumf %321, %322 : vector<8x32xf32>
    %324 = tpu.concatenate %4, %20, %323 in 1 : vector<8x16xf32>, vector<8x32xf32>, vector<8x32xf32> -> vector<8x80xf32>
    %c0_170 = arith.constant 0 : index
    %c0_171 = arith.constant 0 : index
    %325 = vector.load %arg9[%c0_170, %c0_171] : memref<80x2xf32, #tpu.memory_space<vmem>>, vector<80x2xf32>
    %cst_172 = arith.constant dense<0.000000e+00> : vector<8x2xf32>
    %326 = tpu.matmul %324, %325, %cst_172 {dimension_numbers = #tpu.dot_dimension_numbers<[1], [0], [0], [1], [0, 0, 1, 1], [], []>} : vector<8x80xf32>, vector<80x2xf32>, vector<8x2xf32> -> vector<8x2xf32>
    %c0_173 = arith.constant 0 : index
    %c0_174 = arith.constant 0 : index
    %327 = vector.load %arg10[%c0_173, %c0_174] : memref<1x2xf32, #tpu.memory_space<vmem>>, vector<1x2xf32>
    %328 = vector.broadcast %327 : vector<1x2xf32> to vector<8x2xf32>
    %329 = arith.addf %326, %328 : vector<8x2xf32>
    %c0_175 = arith.constant 0 : index
    %c0_176 = arith.constant 0 : index
    %330 = vector.load %arg11[%c0_175, %c0_176] : memref<8x2xf32, #tpu.memory_space<vmem>>, vector<8x2xf32>
    tpu.vector_store %arg11[%c0_175, %c0_176], %329 {strides = array<i32>} : memref<8x2xf32, #tpu.memory_space<vmem>>, vector<8x2xf32>,
    return
  }
  func.func @transform_0(%arg0: i32) -> (i32, i32, i32) {
    %c0_i32 = arith.constant 0 : i32
    %c0_i32_0 = arith.constant 0 : i32
    %c0_i32_1 = arith.constant 0 : i32
    return %arg0, %c0_i32, %c0_i32_0 : i32, i32, i32
  }
  func.func @transform_1(%arg0: i32) -> (i32, i32, i32) {
    %c0_i32 = arith.constant 0 : i32
    %c0_i32_0 = arith.constant 0 : i32
    %c0_i32_1 = arith.constant 0 : i32
    return %c0_i32, %arg0, %c0_i32_0 : i32, i32, i32
  }
  func.func @transform_2(%arg0: i32) -> (i32, i32) {
    %c0_i32 = arith.constant 0 : i32
    %c0_i32_0 = arith.constant 0 : i32
    %c0_i32_1 = arith.constant 0 : i32
    return %c0_i32, %c0_i32_0 : i32, i32
  }
  func.func @transform_3(%arg0: i32) -> (i32, i32) {
    %c0_i32 = arith.constant 0 : i32
    %c0_i32_0 = arith.constant 0 : i32
    %c0_i32_1 = arith.constant 0 : i32
    return %c0_i32, %c0_i32_0 : i32, i32
  }
  func.func @transform_4(%arg0: i32) -> (i32, i32) {
    %c0_i32 = arith.constant 0 : i32
    %c0_i32_0 = arith.constant 0 : i32
    %c0_i32_1 = arith.constant 0 : i32
    return %c0_i32, %c0_i32_0 : i32, i32
  }
  func.func @transform_5(%arg0: i32) -> (i32, i32, i32) {
    %c0_i32 = arith.constant 0 : i32
    %c0_i32_0 = arith.constant 0 : i32
    %c0_i32_1 = arith.constant 0 : i32
    %c0_i32_2 = arith.constant 0 : i32
    return %c0_i32, %c0_i32_0, %c0_i32_1 : i32, i32, i32
  }
  func.func @transform_6(%arg0: i32) -> (i32, i32) {
    %c0_i32 = arith.constant 0 : i32
    %c0_i32_0 = arith.constant 0 : i32
    %c0_i32_1 = arith.constant 0 : i32
    return %c0_i32, %c0_i32_0 : i32, i32
  }
  func.func @transform_7(%arg0: i32) -> (i32, i32) {
    %c0_i32 = arith.constant 0 : i32
    %c0_i32_0 = arith.constant 0 : i32
    %c0_i32_1 = arith.constant 0 : i32
    return %c0_i32, %c0_i32_0 : i32, i32
  }
  func.func @transform_8(%arg0: i32) -> (i32, i32) {
    %c0_i32 = arith.constant 0 : i32
    %c0_i32_0 = arith.constant 0 : i32
    %c0_i32_1 = arith.constant 0 : i32
    return %c0_i32, %c0_i32_0 : i32, i32
  }
  func.func @transform_9(%arg0: i32) -> (i32, i32) {
    %c0_i32 = arith.constant 0 : i32
    %c0_i32_0 = arith.constant 0 : i32
    %c0_i32_1 = arith.constant 0 : i32
    return %c0_i32, %c0_i32_0 : i32, i32
  }
  func.func @transform_10(%arg0: i32) -> (i32, i32) {
    %c0_i32 = arith.constant 0 : i32
    %c0_i32_0 = arith.constant 0 : i32
    return %arg0, %c0_i32 : i32, i32
  }
}

</mosaic_0001>

<llo_original>
// kernel: tpu_custom_call.1
$region0: #{tpu_custom_call.1}
  #allocation0 [shape = 'u32[]', space=smem, size = 0x4, offset = 0x4, fixed_abs, tag = 'smem constant byte address 0x4 - core index']
  #allocation1 [shape = 'u32[144,128]{1,0:T(1,128)}', space=vmem, size = 0x12000, scoped, tag = 'internal scratch']
  %s0 = inlined_call_operand.vmem [shape: bf16[8,196,16], index: 0, kind: input, shape index: {}]
  %s1 = inlined_call_operand.vmem [shape: bf16[49,8,144], index: 1, kind: input, shape index: {}]
  %s2 = inlined_call_operand.vmem [shape: bf16[144,32], index: 2, kind: input, shape index: {}]
  %s3 = inlined_call_operand.vmem [shape: f32[1,32], index: 3, kind: input, shape index: {}]
  %s4 = inlined_call_operand.vmem [shape: f32[1,32], index: 4, kind: input, shape index: {}]
  %s5 = inlined_call_operand.vmem [shape: f32[49,32,32], index: 5, kind: input, shape index: {}]
  %s6 = inlined_call_operand.vmem [shape: f32[1,32], index: 6, kind: input, shape index: {}]
  %s7 = inlined_call_operand.vmem [shape: f32[1,32], index: 7, kind: input, shape index: {}]
  %s8 = inlined_call_operand.vmem [shape: f32[80,2], index: 8, kind: input, shape index: {}]
  %s9 = inlined_call_operand.vmem [shape: f32[1,2], index: 9, kind: input, shape index: {}]
  %s10 = inlined_call_operand.vmem [shape: f32[8,2], index: 10, kind: output, shape index: {}]
  %s11 = sld [smem:[#allocation0]]
  $region50: #{tpu_custom_call.1} parent=0
    _
  %s13 = ssub.s32 1, %s11
  %s14 = scalar_select 0, %s13, %s11
  // Predicated region
  $region2: #{tpu_custom_call.1} parent=0 // pred_check
    _
  $region3: #{tpu_custom_call.1} parent=0 // pred_check_branch
    %16 = sbr.rel (0) target = $region5
  $region4: #{tpu_custom_call.1} parent=0 // pred_region
    _
  $region5: #{tpu_custom_call.1} parent=0 // pred_fallthru
    _
  // Predicated region
  $region6: #{tpu_custom_call.1} parent=0 // pred_check
    _
  $region7: #{tpu_custom_call.1} parent=0 // pred_check_branch
    %18 = sbr.rel (0) target = $region9
  $region8: #{tpu_custom_call.1} parent=0 // pred_region
    _
  $region9: #{tpu_custom_call.1} parent=0 // pred_fallthru
    _
  // Predicated region
  $region10: #{tpu_custom_call.1} parent=0 // pred_check
    _
  $region11: #{tpu_custom_call.1} parent=0 // pred_check_branch
    %20 = sbr.rel (0) target = $region13
  $region12: #{tpu_custom_call.1} parent=0 // pred_region
    _
  $region13: #{tpu_custom_call.1} parent=0 // pred_fallthru
    _
  // Predicated region
  $region14: #{tpu_custom_call.1} parent=0 // pred_check
    _
  $region15: #{tpu_custom_call.1} parent=0 // pred_check_branch
    %22 = sbr.rel (0) target = $region17
  $region16: #{tpu_custom_call.1} parent=0 // pred_region
    _
  $region17: #{tpu_custom_call.1} parent=0 // pred_fallthru
    _
  // Predicated region
  $region18: #{tpu_custom_call.1} parent=0 // pred_check
    _
  $region19: #{tpu_custom_call.1} parent=0 // pred_check_branch
    %24 = sbr.rel (0) target = $region21
  $region20: #{tpu_custom_call.1} parent=0 // pred_region
    _
  $region21: #{tpu_custom_call.1} parent=0 // pred_fallthru
    _
  // Predicated region
  $region22: #{tpu_custom_call.1} parent=0 // pred_check
    _
  $region23: #{tpu_custom_call.1} parent=0 // pred_check_branch
    %26 = sbr.rel (0) target = $region25
  $region24: #{tpu_custom_call.1} parent=0 // pred_region
    _
  $region25: #{tpu_custom_call.1} parent=0 // pred_fallthru
    _
  // Predicated region
  $region26: #{tpu_custom_call.1} parent=0 // pred_check
    _
  $region27: #{tpu_custom_call.1} parent=0 // pred_check_branch
    %28 = sbr.rel (0) target = $region29
  $region28: #{tpu_custom_call.1} parent=0 // pred_region
    _
  $region29: #{tpu_custom_call.1} parent=0 // pred_fallthru
    _
  // Predicated region
  $region30: #{tpu_custom_call.1} parent=0 // pred_check
    _
  $region31: #{tpu_custom_call.1} parent=0 // pred_check_branch
    %30 = sbr.rel (0) target = $region33
  $region32: #{tpu_custom_call.1} parent=0 // pred_region
    _
  $region33: #{tpu_custom_call.1} parent=0 // pred_fallthru
    _
  // Predicated region
  $region34: #{tpu_custom_call.1} parent=0 // pred_check
    _
  $region35: #{tpu_custom_call.1} parent=0 // pred_check_branch
    %32 = sbr.rel (0) target = $region37
  $region36: #{tpu_custom_call.1} parent=0 // pred_region
    _
  $region37: #{tpu_custom_call.1} parent=0 // pred_fallthru
    _
  // Predicated region
  $region38: #{tpu_custom_call.1} parent=0 // pred_check
    _
  $region39: #{tpu_custom_call.1} parent=0 // pred_check_branch
    %34 = sbr.rel (0) target = $region41
  $region40: #{tpu_custom_call.1} parent=0 // pred_region
    _
  $region41: #{tpu_custom_call.1} parent=0 // pred_fallthru
    _
  %v36 = vld [vmem:[%s0] sm:$0xf]
  %v37 = vld [vmem:[%s0 + $0x4] sm:$0xf]
  %v38 = vld [vmem:[%s0 + $0x8] sm:$0xf]
  %v39 = vld [vmem:[%s0 + $0xc] sm:$0xf]
  %v40 = vld [vmem:[%s0 + $0x10] sm:$0xf]
  %v41 = vld [vmem:[%s0 + $0x14] sm:$0xf]
  %v42 = vld [vmem:[%s0 + $0x18] sm:$0xf]
  %v43 = vld [vmem:[%s0 + $0x1c] sm:$0xf]
  %v44 = vld [vmem:[%s0 + $0x20] sm:$0xf]
  %v45 = vld [vmem:[%s0 + $0x24] sm:$0xf]
  %v46 = vld [vmem:[%s0 + $0x28] sm:$0xf]
  %v47 = vld [vmem:[%s0 + $0x2c] sm:$0xf]
  %v48 = vld [vmem:[%s0 + $0x30] sm:$0xf]
  %v49 = vld [vmem:[%s0 + $0x34] sm:$0xf]
  %v50 = vld [vmem:[%s0 + $0x38] sm:$0xf]
  %v51 = vld [vmem:[%s0 + $0x3c] sm:$0xf]
  %v52 = vld [vmem:[%s0 + $0x40] sm:$0xf]
  %v53 = vld [vmem:[%s0 + $0x44] sm:$0xf]
  %v54 = vld [vmem:[%s0 + $0x48] sm:$0xf]
  %v55 = vld [vmem:[%s0 + $0x4c] sm:$0xf]
  %v56 = vld [vmem:[%s0 + $0x50] sm:$0xf]
  %v57 = vld [vmem:[%s0 + $0x54] sm:$0xf]
  %v58 = vld [vmem:[%s0 + $0x58] sm:$0xf]
  %v59 = vld [vmem:[%s0 + $0x5c] sm:$0xf]
  %v60 = vld [vmem:[%s0 + $0x60] sm:$0x3]
  %v61 = vld [vmem:[%s0 + $0x64] sm:$0xf]
  %v62 = vld [vmem:[%s0 + $0x68] sm:$0xf]
  %v63 = vld [vmem:[%s0 + $0x6c] sm:$0xf]
  %v64 = vld [vmem:[%s0 + $0x70] sm:$0xf]
  %v65 = vld [vmem:[%s0 + $0x74] sm:$0xf]
  %v66 = vld [vmem:[%s0 + $0x78] sm:$0xf]
  %v67 = vld [vmem:[%s0 + $0x7c] sm:$0xf]
  %v68 = vld [vmem:[%s0 + $0x80] sm:$0xf]
  %v69 = vld [vmem:[%s0 + $0x84] sm:$0xf]
  %v70 = vld [vmem:[%s0 + $0x88] sm:$0xf]
  %v71 = vld [vmem:[%s0 + $0x8c] sm:$0xf]
  %v72 = vld [vmem:[%s0 + $0x90] sm:$0xf]
  %v73 = vld [vmem:[%s0 + $0x94] sm:$0xf]
  %v74 = vld [vmem:[%s0 + $0x98] sm:$0xf]
  %v75 = vld [vmem:[%s0 + $0x9c] sm:$0xf]
  %v76 = vld [vmem:[%s0 + $0xa0] sm:$0xf]
  %v77 = vld [vmem:[%s0 + $0xa4] sm:$0xf]
  %v78 = vld [vmem:[%s0 + $0xa8] sm:$0xf]
  %v79 = vld [vmem:[%s0 + $0xac] sm:$0xf]
  %v80 = vld [vmem:[%s0 + $0xb0] sm:$0xf]
  %v81 = vld [vmem:[%s0 + $0xb4] sm:$0xf]
  %v82 = vld [vmem:[%s0 + $0xb8] sm:$0xf]
  %v83 = vld [vmem:[%s0 + $0xbc] sm:$0xf]
  %v84 = vld [vmem:[%s0 + $0xc0] sm:$0xf]
  %v85 = vld [vmem:[%s0 + $0xc4] sm:$0x3]
  %v86 = vld [vmem:[%s0 + $0xc8] sm:$0xf]
  %v87 = vld [vmem:[%s0 + $0xcc] sm:$0xf]
  %v88 = vld [vmem:[%s0 + $0xd0] sm:$0xf]
  %v89 = vld [vmem:[%s0 + $0xd4] sm:$0xf]
  %v90 = vld [vmem:[%s0 + $0xd8] sm:$0xf]
  %v91 = vld [vmem:[%s0 + $0xdc] sm:$0xf]
  %v92 = vld [vmem:[%s0 + $0xe0] sm:$0xf]
  %v93 = vld [vmem:[%s0 + $0xe4] sm:$0xf]
  %v94 = vld [vmem:[%s0 + $0xe8] sm:$0xf]
  %v95 = vld [vmem:[%s0 + $0xec] sm:$0xf]
  %v96 = vld [vmem:[%s0 + $0xf0] sm:$0xf]
  %v97 = vld [vmem:[%s0 + $0xf4] sm:$0xf]
  %v98 = vld [vmem:[%s0 + $0xf8] sm:$0xf]
  %v99 = vld [vmem:[%s0 + $0xfc] sm:$0xf]
  %v100 = vld [vmem:[%s0 + $0x100] sm:$0xf]
  %v101 = vld [vmem:[%s0 + $0x104] sm:$0xf]
  %v102 = vld [vmem:[%s0 + $0x108] sm:$0xf]
  %v103 = vld [vmem:[%s0 + $0x10c] sm:$0xf]
  %v104 = vld [vmem:[%s0 + $0x110] sm:$0xf]
  %v105 = vld [vmem:[%s0 + $0x114] sm:$0xf]
  %v106 = vld [vmem:[%s0 + $0x118] sm:$0xf]
  %v107 = vld [vmem:[%s0 + $0x11c] sm:$0xf]
  %v108 = vld [vmem:[%s0 + $0x120] sm:$0xf]
  %v109 = vld [vmem:[%s0 + $0x124] sm:$0xf]
  %v110 = vld [vmem:[%s0 + $0x128] sm:$0x3]
  %v111 = vld [vmem:[%s0 + $0x12c] sm:$0xf]
  %v112 = vld [vmem:[%s0 + $0x130] sm:$0xf]
  %v113 = vld [vmem:[%s0 + $0x134] sm:$0xf]
  %v114 = vld [vmem:[%s0 + $0x138] sm:$0xf]
  %v115 = vld [vmem:[%s0 + $0x13c] sm:$0xf]
  %v116 = vld [vmem:[%s0 + $0x140] sm:$0xf]
  %v117 = vld [vmem:[%s0 + $0x144] sm:$0xf]
  %v118 = vld [vmem:[%s0 + $0x148] sm:$0xf]
  %v119 = vld [vmem:[%s0 + $0x14c] sm:$0xf]
  %v120 = vld [vmem:[%s0 + $0x150] sm:$0xf]
  %v121 = vld [vmem:[%s0 + $0x154] sm:$0xf]
  %v122 = vld [vmem:[%s0 + $0x158] sm:$0xf]
  %v123 = vld [vmem:[%s0 + $0x15c] sm:$0xf]
  %v124 = vld [vmem:[%s0 + $0x160] sm:$0xf]
  %v125 = vld [vmem:[%s0 + $0x164] sm:$0xf]
  %v126 = vld [vmem:[%s0 + $0x168] sm:$0xf]
  %v127 = vld [vmem:[%s0 + $0x16c] sm:$0xf]
  %v128 = vld [vmem:[%s0 + $0x170] sm:$0xf]
  %v129 = vld [vmem:[%s0 + $0x174] sm:$0xf]
  %v130 = vld [vmem:[%s0 + $0x178] sm:$0xf]
  %v131 = vld [vmem:[%s0 + $0x17c] sm:$0xf]
  %v132 = vld [vmem:[%s0 + $0x180] sm:$0xf]
  %v133 = vld [vmem:[%s0 + $0x184] sm:$0xf]
  %v134 = vld [vmem:[%s0 + $0x188] sm:$0xf]
  %v135 = vld [vmem:[%s0 + $0x18c] sm:$0x3]
  %v136 = vld [vmem:[%s0 + $0x190] sm:$0xf]
  %v137 = vld [vmem:[%s0 + $0x194] sm:$0xf]
  %v138 = vld [vmem:[%s0 + $0x198] sm:$0xf]
  %v139 = vld [vmem:[%s0 + $0x19c] sm:$0xf]
  %v140 = vld [vmem:[%s0 + $0x1a0] sm:$0xf]
  %v141 = vld [vmem:[%s0 + $0x1a4] sm:$0xf]
  %v142 = vld [vmem:[%s0 + $0x1a8] sm:$0xf]
  %v143 = vld [vmem:[%s0 + $0x1ac] sm:$0xf]
  %v144 = vld [vmem:[%s0 + $0x1b0] sm:$0xf]
  %v145 = vld [vmem:[%s0 + $0x1b4] sm:$0xf]
  %v146 = vld [vmem:[%s0 + $0x1b8] sm:$0xf]
  %v147 = vld [vmem:[%s0 + $0x1bc] sm:$0xf]
  %v148 = vld [vmem:[%s0 + $0x1c0] sm:$0xf]
  %v149 = vld [vmem:[%s0 + $0x1c4] sm:$0xf]
  %v150 = vld [vmem:[%s0 + $0x1c8] sm:$0xf]
  %v151 = vld [vmem:[%s0 + $0x1cc] sm:$0xf]
  %v152 = vld [vmem:[%s0 + $0x1d0] sm:$0xf]
  %v153 = vld [vmem:[%s0 + $0x1d4] sm:$0xf]
  %v154 = vld [vmem:[%s0 + $0x1d8] sm:$0xf]
  %v155 = vld [vmem:[%s0 + $0x1dc] sm:$0xf]
  %v156 = vld [vmem:[%s0 + $0x1e0] sm:$0xf]
  %v157 = vld [vmem:[%s0 + $0x1e4] sm:$0xf]
  %v158 = vld [vmem:[%s0 + $0x1e8] sm:$0xf]
  %v159 = vld [vmem:[%s0 + $0x1ec] sm:$0xf]
  %v160 = vld [vmem:[%s0 + $0x1f0] sm:$0x3]
  %v161 = vld [vmem:[%s0 + $0x1f4] sm:$0xf]
  %v162 = vld [vmem:[%s0 + $0x1f8] sm:$0xf]
  %v163 = vld [vmem:[%s0 + $0x1fc] sm:$0xf]
  %v164 = vld [vmem:[%s0 + $0x200] sm:$0xf]
  %v165 = vld [vmem:[%s0 + $0x204] sm:$0xf]
  %v166 = vld [vmem:[%s0 + $0x208] sm:$0xf]
  %v167 = vld [vmem:[%s0 + $0x20c] sm:$0xf]
  %v168 = vld [vmem:[%s0 + $0x210] sm:$0xf]
  %v169 = vld [vmem:[%s0 + $0x214] sm:$0xf]
  %v170 = vld [vmem:[%s0 + $0x218] sm:$0xf]
  %v171 = vld [vmem:[%s0 + $0x21c] sm:$0xf]
  %v172 = vld [vmem:[%s0 + $0x220] sm:$0xf]
  %v173 = vld [vmem:[%s0 + $0x224] sm:$0xf]
  %v174 = vld [vmem:[%s0 + $0x228] sm:$0xf]
  %v175 = vld [vmem:[%s0 + $0x22c] sm:$0xf]
  %v176 = vld [vmem:[%s0 + $0x230] sm:$0xf]
  %v177 = vld [vmem:[%s0 + $0x234] sm:$0xf]
  %v178 = vld [vmem:[%s0 + $0x238] sm:$0xf]
  %v179 = vld [vmem:[%s0 + $0x23c] sm:$0xf]
  %v180 = vld [vmem:[%s0 + $0x240] sm:$0xf]
  %v181 = vld [vmem:[%s0 + $0x244] sm:$0xf]
  %v182 = vld [vmem:[%s0 + $0x248] sm:$0xf]
  %v183 = vld [vmem:[%s0 + $0x24c] sm:$0xf]
  %v184 = vld [vmem:[%s0 + $0x250] sm:$0xf]
  %v185 = vld [vmem:[%s0 + $0x254] sm:$0x3]
  %v186 = vld [vmem:[%s0 + $0x258] sm:$0xf]
  %v187 = vld [vmem:[%s0 + $0x25c] sm:$0xf]
  %v188 = vld [vmem:[%s0 + $0x260] sm:$0xf]
  %v189 = vld [vmem:[%s0 + $0x264] sm:$0xf]
  %v190 = vld [vmem:[%s0 + $0x268] sm:$0xf]
  %v191 = vld [vmem:[%s0 + $0x26c] sm:$0xf]
  %v192 = vld [vmem:[%s0 + $0x270] sm:$0xf]
  %v193 = vld [vmem:[%s0 + $0x274] sm:$0xf]
  %v194 = vld [vmem:[%s0 + $0x278] sm:$0xf]
  %v195 = vld [vmem:[%s0 + $0x27c] sm:$0xf]
  %v196 = vld [vmem:[%s0 + $0x280] sm:$0xf]
  %v197 = vld [vmem:[%s0 + $0x284] sm:$0xf]
  %v198 = vld [vmem:[%s0 + $0x288] sm:$0xf]
  %v199 = vld [vmem:[%s0 + $0x28c] sm:$0xf]
  %v200 = vld [vmem:[%s0 + $0x290] sm:$0xf]
  %v201 = vld [vmem:[%s0 + $0x294] sm:$0xf]
  %v202 = vld [vmem:[%s0 + $0x298] sm:$0xf]
  %v203 = vld [vmem:[%s0 + $0x29c] sm:$0xf]
  %v204 = vld [vmem:[%s0 + $0x2a0] sm:$0xf]
  %v205 = vld [vmem:[%s0 + $0x2a4] sm:$0xf]
  %v206 = vld [vmem:[%s0 + $0x2a8] sm:$0xf]
  %v207 = vld [vmem:[%s0 + $0x2ac] sm:$0xf]
  %v208 = vld [vmem:[%s0 + $0x2b0] sm:$0xf]
  %v209 = vld [vmem:[%s0 + $0x2b4] sm:$0xf]
  %v210 = vld [vmem:[%s0 + $0x2b8] sm:$0x3]
  %v211 = vld [vmem:[%s0 + $0x2bc] sm:$0xf]
  %v212 = vld [vmem:[%s0 + $0x2c0] sm:$0xf]
  %v213 = vld [vmem:[%s0 + $0x2c4] sm:$0xf]
  %v214 = vld [vmem:[%s0 + $0x2c8] sm:$0xf]
  %v215 = vld [vmem:[%s0 + $0x2cc] sm:$0xf]
  %v216 = vld [vmem:[%s0 + $0x2d0] sm:$0xf]
  %v217 = vld [vmem:[%s0 + $0x2d4] sm:$0xf]
  %v218 = vld [vmem:[%s0 + $0x2d8] sm:$0xf]
  %v219 = vld [vmem:[%s0 + $0x2dc] sm:$0xf]
  %v220 = vld [vmem:[%s0 + $0x2e0] sm:$0xf]
  %v221 = vld [vmem:[%s0 + $0x2e4] sm:$0xf]
  %v222 = vld [vmem:[%s0 + $0x2e8] sm:$0xf]
  %v223 = vld [vmem:[%s0 + $0x2ec] sm:$0xf]
  %v224 = vld [vmem:[%s0 + $0x2f0] sm:$0xf]
  %v225 = vld [vmem:[%s0 + $0x2f4] sm:$0xf]
  %v226 = vld [vmem:[%s0 + $0x2f8] sm:$0xf]
  %v227 = vld [vmem:[%s0 + $0x2fc] sm:$0xf]
  %v228 = vld [vmem:[%s0 + $0x300] sm:$0xf]
  %v229 = vld [vmem:[%s0 + $0x304] sm:$0xf]
  %v230 = vld [vmem:[%s0 + $0x308] sm:$0xf]
  %v231 = vld [vmem:[%s0 + $0x30c] sm:$0xf]
  %v232 = vld [vmem:[%s0 + $0x310] sm:$0xf]
  %v233 = vld [vmem:[%s0 + $0x314] sm:$0xf]
  %v234 = vld [vmem:[%s0 + $0x318] sm:$0xf]
  %v235 = vld [vmem:[%s0 + $0x31c] sm:$0x3]
  %v236 = vunpack.c.l.bf16 %v36
  %v237 = vunpack.c.l.bf16 %v37
  %v238 = vunpack.c.l.bf16 %v38
  %v239 = vunpack.c.l.bf16 %v39
  %v240 = vunpack.c.l.bf16 %v40
  %v241 = vunpack.c.l.bf16 %v41
  %v242 = vunpack.c.l.bf16 %v42
  %v243 = vunpack.c.l.bf16 %v43
  %v244 = vunpack.c.l.bf16 %v44
  %v245 = vunpack.c.l.bf16 %v45
  %v246 = vunpack.c.l.bf16 %v46
  %v247 = vunpack.c.l.bf16 %v47
  %v248 = vunpack.c.l.bf16 %v48
  %v249 = vunpack.c.l.bf16 %v49
  %v250 = vunpack.c.l.bf16 %v50
  %v251 = vunpack.c.l.bf16 %v51
  %v252 = vunpack.c.l.bf16 %v52
  %v253 = vunpack.c.l.bf16 %v53
  %v254 = vunpack.c.l.bf16 %v54
  %v255 = vunpack.c.l.bf16 %v55
  %v256 = vunpack.c.l.bf16 %v56
  %v257 = vunpack.c.l.bf16 %v57
  %v258 = vunpack.c.l.bf16 %v58
  %v259 = vunpack.c.l.bf16 %v59
  %v260 = vunpack.c.l.bf16 %v60
  %v261 = vunpack.c.l.bf16 %v61
  %v262 = vunpack.c.l.bf16 %v62
  %v263 = vunpack.c.l.bf16 %v63
  %v264 = vunpack.c.l.bf16 %v64
  %v265 = vunpack.c.l.bf16 %v65
  %v266 = vunpack.c.l.bf16 %v66
  %v267 = vunpack.c.l.bf16 %v67
  %v268 = vunpack.c.l.bf16 %v68
  %v269 = vunpack.c.l.bf16 %v69
  %v270 = vunpack.c.l.bf16 %v70
  %v271 = vunpack.c.l.bf16 %v71
  %v272 = vunpack.c.l.bf16 %v72
  %v273 = vunpack.c.l.bf16 %v73
  %v274 = vunpack.c.l.bf16 %v74
  %v275 = vunpack.c.l.bf16 %v75
  %v276 = vunpack.c.l.bf16 %v76
  %v277 = vunpack.c.l.bf16 %v77
  %v278 = vunpack.c.l.bf16 %v78
  %v279 = vunpack.c.l.bf16 %v79
  %v280 = vunpack.c.l.bf16 %v80
  %v281 = vunpack.c.l.bf16 %v81
  %v282 = vunpack.c.l.bf16 %v82
  %v283 = vunpack.c.l.bf16 %v83
  %v284 = vunpack.c.l.bf16 %v84
  %v285 = vunpack.c.l.bf16 %v85
  %v286 = vunpack.c.l.bf16 %v86
  %v287 = vunpack.c.l.bf16 %v87
  %v288 = vunpack.c.l.bf16 %v88
  %v289 = vunpack.c.l.bf16 %v89
  %v290 = vunpack.c.l.bf16 %v90
  %v291 = vunpack.c.l.bf16 %v91
  %v292 = vunpack.c.l.bf16 %v92
  %v293 = vunpack.c.l.bf16 %v93
  %v294 = vunpack.c.l.bf16 %v94
  %v295 = vunpack.c.l.bf16 %v95
  %v296 = vunpack.c.l.bf16 %v96
  %v297 = vunpack.c.l.bf16 %v97
  %v298 = vunpack.c.l.bf16 %v98
  %v299 = vunpack.c.l.bf16 %v99
  %v300 = vunpack.c.l.bf16 %v100
  %v301 = vunpack.c.l.bf16 %v101
  %v302 = vunpack.c.l.bf16 %v102
  %v303 = vunpack.c.l.bf16 %v103
  %v304 = vunpack.c.l.bf16 %v104
  %v305 = vunpack.c.l.bf16 %v105
  %v306 = vunpack.c.l.bf16 %v106
  %v307 = vunpack.c.l.bf16 %v107
  %v308 = vunpack.c.l.bf16 %v108
  %v309 = vunpack.c.l.bf16 %v109
  %v310 = vunpack.c.l.bf16 %v110
  %v311 = vunpack.c.l.bf16 %v111
  %v312 = vunpack.c.l.bf16 %v112
  %v313 = vunpack.c.l.bf16 %v113
  %v314 = vunpack.c.l.bf16 %v114
  %v315 = vunpack.c.l.bf16 %v115
  %v316 = vunpack.c.l.bf16 %v116
  %v317 = vunpack.c.l.bf16 %v117
  %v318 = vunpack.c.l.bf16 %v118
  %v319 = vunpack.c.l.bf16 %v119
  %v320 = vunpack.c.l.bf16 %v120
  %v321 = vunpack.c.l.bf16 %v121
  %v322 = vunpack.c.l.bf16 %v122
  %v323 = vunpack.c.l.bf16 %v123
  %v324 = vunpack.c.l.bf16 %v124
  %v325 = vunpack.c.l.bf16 %v125
  %v326 = vunpack.c.l.bf16 %v126
  %v327 = vunpack.c.l.bf16 %v127
  %v328 = vunpack.c.l.bf16 %v128
  %v329 = vunpack.c.l.bf16 %v129
  %v330 = vunpack.c.l.bf16 %v130
  %v331 = vunpack.c.l.bf16 %v131
  %v332 = vunpack.c.l.bf16 %v132
  %v333 = vunpack.c.l.bf16 %v133
  %v334 = vunpack.c.l.bf16 %v134
  %v335 = vunpack.c.l.bf16 %v135
  %v336 = vunpack.c.l.bf16 %v136
  %v337 = vunpack.c.l.bf16 %v137
  %v338 = vunpack.c.l.bf16 %v138
  %v339 = vunpack.c.l.bf16 %v139
  %v340 = vunpack.c.l.bf16 %v140
  %v341 = vunpack.c.l.bf16 %v141
  %v342 = vunpack.c.l.bf16 %v142
  %v343 = vunpack.c.l.bf16 %v143
  %v344 = vunpack.c.l.bf16 %v144
  %v345 = vunpack.c.l.bf16 %v145
  %v346 = vunpack.c.l.bf16 %v146
  %v347 = vunpack.c.l.bf16 %v147
  %v348 = vunpack.c.l.bf16 %v148
  %v349 = vunpack.c.l.bf16 %v149
  %v350 = vunpack.c.l.bf16 %v150
  %v351 = vunpack.c.l.bf16 %v151
  %v352 = vunpack.c.l.bf16 %v152
  %v353 = vunpack.c.l.bf16 %v153
  %v354 = vunpack.c.l.bf16 %v154
  %v355 = vunpack.c.l.bf16 %v155
  %v356 = vunpack.c.l.bf16 %v156
  %v357 = vunpack.c.l.bf16 %v157
  %v358 = vunpack.c.l.bf16 %v158
  %v359 = vunpack.c.l.bf16 %v159
  %v360 = vunpack.c.l.bf16 %v160
  %v361 = vunpack.c.l.bf16 %v161
  %v362 = vunpack.c.l.bf16 %v162
  %v363 = vunpack.c.l.bf16 %v163
  %v364 = vunpack.c.l.bf16 %v164
  %v365 = vunpack.c.l.bf16 %v165
  %v366 = vunpack.c.l.bf16 %v166
  %v367 = vunpack.c.l.bf16 %v167
  %v368 = vunpack.c.l.bf16 %v168
  %v369 = vunpack.c.l.bf16 %v169
  %v370 = vunpack.c.l.bf16 %v170
  %v371 = vunpack.c.l.bf16 %v171
  %v372 = vunpack.c.l.bf16 %v172
  %v373 = vunpack.c.l.bf16 %v173
  %v374 = vunpack.c.l.bf16 %v174
  %v375 = vunpack.c.l.bf16 %v175
  %v376 = vunpack.c.l.bf16 %v176
  %v377 = vunpack.c.l.bf16 %v177
  %v378 = vunpack.c.l.bf16 %v178
  %v379 = vunpack.c.l.bf16 %v179
  %v380 = vunpack.c.l.bf16 %v180
  %v381 = vunpack.c.l.bf16 %v181
  %v382 = vunpack.c.l.bf16 %v182
  %v383 = vunpack.c.l.bf16 %v183
  %v384 = vunpack.c.l.bf16 %v184
  %v385 = vunpack.c.l.bf16 %v185
  %v386 = vunpack.c.l.bf16 %v186
  %v387 = vunpack.c.l.bf16 %v187
  %v388 = vunpack.c.l.bf16 %v188
  %v389 = vunpack.c.l.bf16 %v189
  %v390 = vunpack.c.l.bf16 %v190
  %v391 = vunpack.c.l.bf16 %v191
  %v392 = vunpack.c.l.bf16 %v192
  %v393 = vunpack.c.l.bf16 %v193
  %v394 = vunpack.c.l.bf16 %v194
  %v395 = vunpack.c.l.bf16 %v195
  %v396 = vunpack.c.l.bf16 %v196
  %v397 = vunpack.c.l.bf16 %v197
  %v398 = vunpack.c.l.bf16 %v198
  %v399 = vunpack.c.l.bf16 %v199
  %v400 = vunpack.c.l.bf16 %v200
  %v401 = vunpack.c.l.bf16 %v201
  %v402 = vunpack.c.l.bf16 %v202
  %v403 = vunpack.c.l.bf16 %v203
  %v404 = vunpack.c.l.bf16 %v204
  %v405 = vunpack.c.l.bf16 %v205
  %v406 = vunpack.c.l.bf16 %v206
  %v407 = vunpack.c.l.bf16 %v207
  %v408 = vunpack.c.l.bf16 %v208
  %v409 = vunpack.c.l.bf16 %v209
  %v410 = vunpack.c.l.bf16 %v210
  %v411 = vunpack.c.l.bf16 %v211
  %v412 = vunpack.c.l.bf16 %v212
  %v413 = vunpack.c.l.bf16 %v213
  %v414 = vunpack.c.l.bf16 %v214
  %v415 = vunpack.c.l.bf16 %v215
  %v416 = vunpack.c.l.bf16 %v216
  %v417 = vunpack.c.l.bf16 %v217
  %v418 = vunpack.c.l.bf16 %v218
  %v419 = vunpack.c.l.bf16 %v219
  %v420 = vunpack.c.l.bf16 %v220
  %v421 = vunpack.c.l.bf16 %v221
  %v422 = vunpack.c.l.bf16 %v222
  %v423 = vunpack.c.l.bf16 %v223
  %v424 = vunpack.c.l.bf16 %v224
  %v425 = vunpack.c.l.bf16 %v225
  %v426 = vunpack.c.l.bf16 %v226
  %v427 = vunpack.c.l.bf16 %v227
  %v428 = vunpack.c.l.bf16 %v228
  %v429 = vunpack.c.l.bf16 %v229
  %v430 = vunpack.c.l.bf16 %v230
  %v431 = vunpack.c.l.bf16 %v231
  %v432 = vunpack.c.l.bf16 %v232
  %v433 = vunpack.c.l.bf16 %v233
  %v434 = vunpack.c.l.bf16 %v234
  %v435 = vunpack.c.l.bf16 %v235
  %vm436 = vcmask 130048
  %v437 = vsel %vm436, %v236, 0.0
  %v438 = vsel %vm436, %v237, 0.0
  %v439 = vadd.f32 %v437, %v438
  %v440 = vsel %vm436, %v238, 0.0
  %v441 = vadd.f32 %v439, %v440
  %v442 = vsel %vm436, %v239, 0.0
  %v443 = vadd.f32 %v441, %v442
  %v444 = vsel %vm436, %v240, 0.0
  %v445 = vadd.f32 %v443, %v444
  %v446 = vsel %vm436, %v241, 0.0
  %v447 = vadd.f32 %v445, %v446
  %v448 = vsel %vm436, %v242, 0.0
  %v449 = vadd.f32 %v447, %v448
  %v450 = vsel %vm436, %v243, 0.0
  %v451 = vadd.f32 %v449, %v450
  %v452 = vsel %vm436, %v244, 0.0
  %v453 = vadd.f32 %v451, %v452
  %v454 = vsel %vm436, %v245, 0.0
  %v455 = vadd.f32 %v453, %v454
  %v456 = vsel %vm436, %v246, 0.0
  %v457 = vadd.f32 %v455, %v456
  %v458 = vsel %vm436, %v247, 0.0
  %v459 = vadd.f32 %v457, %v458
  %v460 = vsel %vm436, %v248, 0.0
  %v461 = vadd.f32 %v459, %v460
  %v462 = vsel %vm436, %v249, 0.0
  %v463 = vadd.f32 %v461, %v462
  %v464 = vsel %vm436, %v250, 0.0
  %v465 = vadd.f32 %v463, %v464
  %v466 = vsel %vm436, %v251, 0.0
  %v467 = vadd.f32 %v465, %v466
  %v468 = vsel %vm436, %v252, 0.0
  %v469 = vadd.f32 %v467, %v468
  %v470 = vsel %vm436, %v253, 0.0
  %v471 = vadd.f32 %v469, %v470
  %v472 = vsel %vm436, %v254, 0.0
  %v473 = vadd.f32 %v471, %v472
  %v474 = vsel %vm436, %v255, 0.0
  %v475 = vadd.f32 %v473, %v474
  %v476 = vsel %vm436, %v256, 0.0
  %v477 = vadd.f32 %v475, %v476
  %v478 = vsel %vm436, %v257, 0.0
  %v479 = vadd.f32 %v477, %v478
  %v480 = vsel %vm436, %v258, 0.0
  %v481 = vadd.f32 %v479, %v480
  %v482 = vsel %vm436, %v259, 0.0
  %v483 = vadd.f32 %v481, %v482
  %vm484 = vcmask 125952
  %v485 = vsel %vm484, %v260, 0.0
  %v486 = vadd.f32 %v483, %v485
  %v487 = vrot.slane %v486, 4
  %v488 = vadd.f32 %v486, %v487
  %v489 = vrot.slane %v488, 2
  %v490 = vadd.f32 %v488, %v489
  %v491 = vrot.slane %v490, 1
  %v492 = vadd.f32 %v490, %v491
  %v493 = vsel %vm436, %v261, 0.0
  %v494 = vsel %vm436, %v262, 0.0
  %v495 = vadd.f32 %v493, %v494
  %v496 = vsel %vm436, %v263, 0.0
  %v497 = vadd.f32 %v495, %v496
  %v498 = vsel %vm436, %v264, 0.0
  %v499 = vadd.f32 %v497, %v498
  %v500 = vsel %vm436, %v265, 0.0
  %v501 = vadd.f32 %v499, %v500
  %v502 = vsel %vm436, %v266, 0.0
  %v503 = vadd.f32 %v501, %v502
  %v504 = vsel %vm436, %v267, 0.0
  %v505 = vadd.f32 %v503, %v504
  %v506 = vsel %vm436, %v268, 0.0
  %v507 = vadd.f32 %v505, %v506
  %v508 = vsel %vm436, %v269, 0.0
  %v509 = vadd.f32 %v507, %v508
  %v510 = vsel %vm436, %v270, 0.0
  %v511 = vadd.f32 %v509, %v510
  %v512 = vsel %vm436, %v271, 0.0
  %v513 = vadd.f32 %v511, %v512
  %v514 = vsel %vm436, %v272, 0.0
  %v515 = vadd.f32 %v513, %v514
  %v516 = vsel %vm436, %v273, 0.0
  %v517 = vadd.f32 %v515, %v516
  %v518 = vsel %vm436, %v274, 0.0
  %v519 = vadd.f32 %v517, %v518
  %v520 = vsel %vm436, %v275, 0.0
  %v521 = vadd.f32 %v519, %v520
  %v522 = vsel %vm436, %v276, 0.0
  %v523 = vadd.f32 %v521, %v522
  %v524 = vsel %vm436, %v277, 0.0
  %v525 = vadd.f32 %v523, %v524
  %v526 = vsel %vm436, %v278, 0.0
  %v527 = vadd.f32 %v525, %v526
  %v528 = vsel %vm436, %v279, 0.0
  %v529 = vadd.f32 %v527, %v528
  %v530 = vsel %vm436, %v280, 0.0
  %v531 = vadd.f32 %v529, %v530
  %v532 = vsel %vm436, %v281, 0.0
  %v533 = vadd.f32 %v531, %v532
  %v534 = vsel %vm436, %v282, 0.0
  %v535 = vadd.f32 %v533, %v534
  %v536 = vsel %vm436, %v283, 0.0
  %v537 = vadd.f32 %v535, %v536
  %v538 = vsel %vm436, %v284, 0.0
  %v539 = vadd.f32 %v537, %v538
  %v540 = vsel %vm484, %v285, 0.0
  %v541 = vadd.f32 %v539, %v540
  %v542 = vrot.slane %v541, 4
  %v543 = vadd.f32 %v541, %v542
  %v544 = vrot.slane %v543, 2
  %v545 = vadd.f32 %v543, %v544
  %v546 = vrot.slane %v545, 1
  %v547 = vadd.f32 %v545, %v546
  %v548 = vsel %vm436, %v286, 0.0
  %v549 = vsel %vm436, %v287, 0.0
  %v550 = vadd.f32 %v548, %v549
  %v551 = vsel %vm436, %v288, 0.0
  %v552 = vadd.f32 %v550, %v551
  %v553 = vsel %vm436, %v289, 0.0
  %v554 = vadd.f32 %v552, %v553
  %v555 = vsel %vm436, %v290, 0.0
  %v556 = vadd.f32 %v554, %v555
  %v557 = vsel %vm436, %v291, 0.0
  %v558 = vadd.f32 %v556, %v557
  %v559 = vsel %vm436, %v292, 0.0
  %v560 = vadd.f32 %v558, %v559
  %v561 = vsel %vm436, %v293, 0.0
  %v562 = vadd.f32 %v560, %v561
  %v563 = vsel %vm436, %v294, 0.0
  %v564 = vadd.f32 %v562, %v563
  %v565 = vsel %vm436, %v295, 0.0
  %v566 = vadd.f32 %v564, %v565
  %v567 = vsel %vm436, %v296, 0.0
  %v568 = vadd.f32 %v566, %v567
  %v569 = vsel %vm436, %v297, 0.0
  %v570 = vadd.f32 %v568, %v569
  %v571 = vsel %vm436, %v298, 0.0
  %v572 = vadd.f32 %v570, %v571
  %v573 = vsel %vm436, %v299, 0.0
  %v574 = vadd.f32 %v572, %v573
  %v575 = vsel %vm436, %v300, 0.0
  %v576 = vadd.f32 %v574, %v575
  %v577 = vsel %vm436, %v301, 0.0
  %v578 = vadd.f32 %v576, %v577
  %v579 = vsel %vm436, %v302, 0.0
  %v580 = vadd.f32 %v578, %v579
  %v581 = vsel %vm436, %v303, 0.0
  %v582 = vadd.f32 %v580, %v581
  %v583 = vsel %vm436, %v304, 0.0
  %v584 = vadd.f32 %v582, %v583
  %v585 = vsel %vm436, %v305, 0.0
  %v586 = vadd.f32 %v584, %v585
  %v587 = vsel %vm436, %v306, 0.0
  %v588 = vadd.f32 %v586, %v587
  %v589 = vsel %vm436, %v307, 0.0
  %v590 = vadd.f32 %v588, %v589
  %v591 = vsel %vm436, %v308, 0.0
  %v592 = vadd.f32 %v590, %v591
  %v593 = vsel %vm436, %v309, 0.0
  %v594 = vadd.f32 %v592, %v593
  %v595 = vsel %vm484, %v310, 0.0
  %v596 = vadd.f32 %v594, %v595
  %v597 = vrot.slane %v596, 4
  %v598 = vadd.f32 %v596, %v597
  %v599 = vrot.slane %v598, 2
  %v600 = vadd.f32 %v598, %v599
  %v601 = vrot.slane %v600, 1
  %v602 = vadd.f32 %v600, %v601
  %v603 = vsel %vm436, %v311, 0.0
  %v604 = vsel %vm436, %v312, 0.0
  %v605 = vadd.f32 %v603, %v604
  %v606 = vsel %vm436, %v313, 0.0
  %v607 = vadd.f32 %v605, %v606
  %v608 = vsel %vm436, %v314, 0.0
  %v609 = vadd.f32 %v607, %v608
  %v610 = vsel %vm436, %v315, 0.0
  %v611 = vadd.f32 %v609, %v610
  %v612 = vsel %vm436, %v316, 0.0
  %v613 = vadd.f32 %v611, %v612
  %v614 = vsel %vm436, %v317, 0.0
  %v615 = vadd.f32 %v613, %v614
  %v616 = vsel %vm436, %v318, 0.0
  %v617 = vadd.f32 %v615, %v616
  %v618 = vsel %vm436, %v319, 0.0
  %v619 = vadd.f32 %v617, %v618
  %v620 = vsel %vm436, %v320, 0.0
  %v621 = vadd.f32 %v619, %v620
  %v622 = vsel %vm436, %v321, 0.0
  %v623 = vadd.f32 %v621, %v622
  %v624 = vsel %vm436, %v322, 0.0
  %v625 = vadd.f32 %v623, %v624
  %v626 = vsel %vm436, %v323, 0.0
  %v627 = vadd.f32 %v625, %v626
  %v628 = vsel %vm436, %v324, 0.0
  %v629 = vadd.f32 %v627, %v628
  %v630 = vsel %vm436, %v325, 0.0
  %v631 = vadd.f32 %v629, %v630
  %v632 = vsel %vm436, %v326, 0.0
  %v633 = vadd.f32 %v631, %v632
  %v634 = vsel %vm436, %v327, 0.0
  %v635 = vadd.f32 %v633, %v634
  %v636 = vsel %vm436, %v328, 0.0
  %v637 = vadd.f32 %v635, %v636
  %v638 = vsel %vm436, %v329, 0.0
  %v639 = vadd.f32 %v637, %v638
  %v640 = vsel %vm436, %v330, 0.0
  %v641 = vadd.f32 %v639, %v640
  %v642 = vsel %vm436, %v331, 0.0
  %v643 = vadd.f32 %v641, %v642
  %v644 = vsel %vm436, %v332, 0.0
  %v645 = vadd.f32 %v643, %v644
  %v646 = vsel %vm436, %v333, 0.0
  %v647 = vadd.f32 %v645, %v646
  %v648 = vsel %vm436, %v334, 0.0
  %v649 = vadd.f32 %v647, %v648
  %v650 = vsel %vm484, %v335, 0.0
  %v651 = vadd.f32 %v649, %v650
  %v652 = vrot.slane %v651, 4
  %v653 = vadd.f32 %v651, %v652
  %v654 = vrot.slane %v653, 2
  %v655 = vadd.f32 %v653, %v654
  %v656 = vrot.slane %v655, 1
  %v657 = vadd.f32 %v655, %v656
  %v658 = vsel %vm436, %v336, 0.0
  %v659 = vsel %vm436, %v337, 0.0
  %v660 = vadd.f32 %v658, %v659
  %v661 = vsel %vm436, %v338, 0.0
  %v662 = vadd.f32 %v660, %v661
  %v663 = vsel %vm436, %v339, 0.0
  %v664 = vadd.f32 %v662, %v663
  %v665 = vsel %vm436, %v340, 0.0
  %v666 = vadd.f32 %v664, %v665
  %v667 = vsel %vm436, %v341, 0.0
  %v668 = vadd.f32 %v666, %v667
  %v669 = vsel %vm436, %v342, 0.0
  %v670 = vadd.f32 %v668, %v669
  %v671 = vsel %vm436, %v343, 0.0
  %v672 = vadd.f32 %v670, %v671
  %v673 = vsel %vm436, %v344, 0.0
  %v674 = vadd.f32 %v672, %v673
  %v675 = vsel %vm436, %v345, 0.0
  %v676 = vadd.f32 %v674, %v675
  %v677 = vsel %vm436, %v346, 0.0
  %v678 = vadd.f32 %v676, %v677
  %v679 = vsel %vm436, %v347, 0.0
  %v680 = vadd.f32 %v678, %v679
  %v681 = vsel %vm436, %v348, 0.0
  %v682 = vadd.f32 %v680, %v681
  %v683 = vsel %vm436, %v349, 0.0
  %v684 = vadd.f32 %v682, %v683
  %v685 = vsel %vm436, %v350, 0.0
  %v686 = vadd.f32 %v684, %v685
  %v687 = vsel %vm436, %v351, 0.0
  %v688 = vadd.f32 %v686, %v687
  %v689 = vsel %vm436, %v352, 0.0
  %v690 = vadd.f32 %v688, %v689
  %v691 = vsel %vm436, %v353, 0.0
  %v692 = vadd.f32 %v690, %v691
  %v693 = vsel %vm436, %v354, 0.0
  %v694 = vadd.f32 %v692, %v693
  %v695 = vsel %vm436, %v355, 0.0
  %v696 = vadd.f32 %v694, %v695
  %v697 = vsel %vm436, %v356, 0.0
  %v698 = vadd.f32 %v696, %v697
  %v699 = vsel %vm436, %v357, 0.0
  %v700 = vadd.f32 %v698, %v699
  %v701 = vsel %vm436, %v358, 0.0
  %v702 = vadd.f32 %v700, %v701
  %v703 = vsel %vm436, %v359, 0.0
  %v704 = vadd.f32 %v702, %v703
  %v705 = vsel %vm484, %v360, 0.0
  %v706 = vadd.f32 %v704, %v705
  %v707 = vrot.slane %v706, 4
  %v708 = vadd.f32 %v706, %v707
  %v709 = vrot.slane %v708, 2
  %v710 = vadd.f32 %v708, %v709
  %v711 = vrot.slane %v710, 1
  %v712 = vadd.f32 %v710, %v711
  %v713 = vsel %vm436, %v361, 0.0
  %v714 = vsel %vm436, %v362, 0.0
  %v715 = vadd.f32 %v713, %v714
  %v716 = vsel %vm436, %v363, 0.0
  %v717 = vadd.f32 %v715, %v716
  %v718 = vsel %vm436, %v364, 0.0
  %v719 = vadd.f32 %v717, %v718
  %v720 = vsel %vm436, %v365, 0.0
  %v721 = vadd.f32 %v719, %v720
  %v722 = vsel %vm436, %v366, 0.0
  %v723 = vadd.f32 %v721, %v722
  %v724 = vsel %vm436, %v367, 0.0
  %v725 = vadd.f32 %v723, %v724
  %v726 = vsel %vm436, %v368, 0.0
  %v727 = vadd.f32 %v725, %v726
  %v728 = vsel %vm436, %v369, 0.0
  %v729 = vadd.f32 %v727, %v728
  %v730 = vsel %vm436, %v370, 0.0
  %v731 = vadd.f32 %v729, %v730
  %v732 = vsel %vm436, %v371, 0.0
  %v733 = vadd.f32 %v731, %v732
  %v734 = vsel %vm436, %v372, 0.0
  %v735 = vadd.f32 %v733, %v734
  %v736 = vsel %vm436, %v373, 0.0
  %v737 = vadd.f32 %v735, %v736
  %v738 = vsel %vm436, %v374, 0.0
  %v739 = vadd.f32 %v737, %v738
  %v740 = vsel %vm436, %v375, 0.0
  %v741 = vadd.f32 %v739, %v740
  %v742 = vsel %vm436, %v376, 0.0
  %v743 = vadd.f32 %v741, %v742
  %v744 = vsel %vm436, %v377, 0.0
  %v745 = vadd.f32 %v743, %v744
  %v746 = vsel %vm436, %v378, 0.0
  %v747 = vadd.f32 %v745, %v746
  %v748 = vsel %vm436, %v379, 0.0
  %v749 = vadd.f32 %v747, %v748
  %v750 = vsel %vm436, %v380, 0.0
  %v751 = vadd.f32 %v749, %v750
  %v752 = vsel %vm436, %v381, 0.0
  %v753 = vadd.f32 %v751, %v752
  %v754 = vsel %vm436, %v382, 0.0
  %v755 = vadd.f32 %v753, %v754
  %v756 = vsel %vm436, %v383, 0.0
  %v757 = vadd.f32 %v755, %v756
  %v758 = vsel %vm436, %v384, 0.0
  %v759 = vadd.f32 %v757, %v758
  %v760 = vsel %vm484, %v385, 0.0
  %v761 = vadd.f32 %v759, %v760
  %v762 = vrot.slane %v761, 4
  %v763 = vadd.f32 %v761, %v762
  %v764 = vrot.slane %v763, 2
  %v765 = vadd.f32 %v763, %v764
  %v766 = vrot.slane %v765, 1
  %v767 = vadd.f32 %v765, %v766
  %v768 = vsel %vm436, %v386, 0.0
  %v769 = vsel %vm436, %v387, 0.0
  %v770 = vadd.f32 %v768, %v769
  %v771 = vsel %vm436, %v388, 0.0
  %v772 = vadd.f32 %v770, %v771
  %v773 = vsel %vm436, %v389, 0.0
  %v774 = vadd.f32 %v772, %v773
  %v775 = vsel %vm436, %v390, 0.0
  %v776 = vadd.f32 %v774, %v775
  %v777 = vsel %vm436, %v391, 0.0
  %v778 = vadd.f32 %v776, %v777
  %v779 = vsel %vm436, %v392, 0.0
  %v780 = vadd.f32 %v778, %v779
  %v781 = vsel %vm436, %v393, 0.0
  %v782 = vadd.f32 %v780, %v781
  %v783 = vsel %vm436, %v394, 0.0
  %v784 = vadd.f32 %v782, %v783
  %v785 = vsel %vm436, %v395, 0.0
  %v786 = vadd.f32 %v784, %v785
  %v787 = vsel %vm436, %v396, 0.0
  %v788 = vadd.f32 %v786, %v787
  %v789 = vsel %vm436, %v397, 0.0
  %v790 = vadd.f32 %v788, %v789
  %v791 = vsel %vm436, %v398, 0.0
  %v792 = vadd.f32 %v790, %v791
  %v793 = vsel %vm436, %v399, 0.0
  %v794 = vadd.f32 %v792, %v793
  %v795 = vsel %vm436, %v400, 0.0
  %v796 = vadd.f32 %v794, %v795
  %v797 = vsel %vm436, %v401, 0.0
  %v798 = vadd.f32 %v796, %v797
  %v799 = vsel %vm436, %v402, 0.0
  %v800 = vadd.f32 %v798, %v799
  %v801 = vsel %vm436, %v403, 0.0
  %v802 = vadd.f32 %v800, %v801
  %v803 = vsel %vm436, %v404, 0.0
  %v804 = vadd.f32 %v802, %v803
  %v805 = vsel %vm436, %v405, 0.0
  %v806 = vadd.f32 %v804, %v805
  %v807 = vsel %vm436, %v406, 0.0
  %v808 = vadd.f32 %v806, %v807
  %v809 = vsel %vm436, %v407, 0.0
  %v810 = vadd.f32 %v808, %v809
  %v811 = vsel %vm436, %v408, 0.0
  %v812 = vadd.f32 %v810, %v811
  %v813 = vsel %vm436, %v409, 0.0
  %v814 = vadd.f32 %v812, %v813
  %v815 = vsel %vm484, %v410, 0.0
  %v816 = vadd.f32 %v814, %v815
  %v817 = vrot.slane %v816, 4
  %v818 = vadd.f32 %v816, %v817
  %v819 = vrot.slane %v818, 2
  %v820 = vadd.f32 %v818, %v819
  %v821 = vrot.slane %v820, 1
  %v822 = vadd.f32 %v820, %v821
  %v823 = vsel %vm436, %v411, 0.0
  %v824 = vsel %vm436, %v412, 0.0
  %v825 = vadd.f32 %v823, %v824
  %v826 = vsel %vm436, %v413, 0.0
  %v827 = vadd.f32 %v825, %v826
  %v828 = vsel %vm436, %v414, 0.0
  %v829 = vadd.f32 %v827, %v828
  %v830 = vsel %vm436, %v415, 0.0
  %v831 = vadd.f32 %v829, %v830
  %v832 = vsel %vm436, %v416, 0.0
  %v833 = vadd.f32 %v831, %v832
  %v834 = vsel %vm436, %v417, 0.0
  %v835 = vadd.f32 %v833, %v834
  %v836 = vsel %vm436, %v418, 0.0
  %v837 = vadd.f32 %v835, %v836
  %v838 = vsel %vm436, %v419, 0.0
  %v839 = vadd.f32 %v837, %v838
  %v840 = vsel %vm436, %v420, 0.0
  %v841 = vadd.f32 %v839, %v840
  %v842 = vsel %vm436, %v421, 0.0
  %v843 = vadd.f32 %v841, %v842
  %v844 = vsel %vm436, %v422, 0.0
  %v845 = vadd.f32 %v843, %v844
  %v846 = vsel %vm436, %v423, 0.0
  %v847 = vadd.f32 %v845, %v846
  %v848 = vsel %vm436, %v424, 0.0
  %v849 = vadd.f32 %v847, %v848
  %v850 = vsel %vm436, %v425, 0.0
  %v851 = vadd.f32 %v849, %v850
  %v852 = vsel %vm436, %v426, 0.0
  %v853 = vadd.f32 %v851, %v852
  %v854 = vsel %vm436, %v427, 0.0
  %v855 = vadd.f32 %v853, %v854
  %v856 = vsel %vm436, %v428, 0.0
  %v857 = vadd.f32 %v855, %v856
  %v858 = vsel %vm436, %v429, 0.0
  %v859 = vadd.f32 %v857, %v858
  %v860 = vsel %vm436, %v430, 0.0
  %v861 = vadd.f32 %v859, %v860
  %v862 = vsel %vm436, %v431, 0.0
  %v863 = vadd.f32 %v861, %v862
  %v864 = vsel %vm436, %v432, 0.0
  %v865 = vadd.f32 %v863, %v864
  %v866 = vsel %vm436, %v433, 0.0
  %v867 = vadd.f32 %v865, %v866
  %v868 = vsel %vm436, %v434, 0.0
  %v869 = vadd.f32 %v867, %v868
  %v870 = vsel %vm484, %v435, 0.0
  %v871 = vadd.f32 %v869, %v870
  %v872 = vrot.slane %v871, 4
  %v873 = vadd.f32 %v871, %v872
  %v874 = vrot.slane %v873, 2
  %v875 = vadd.f32 %v873, %v874
  %v876 = vrot.slane %v875, 1
  %v877 = vadd.f32 %v875, %v876
  %v878 = vrcp.pop 196.0
  %v879 = vmul.f32 %v492, %v878
  %v880 = vmul.f32 %v547, %v878
  %v881 = vmul.f32 %v602, %v878
  %v882 = vmul.f32 %v657, %v878
  %v883 = vmul.f32 %v712, %v878
  %v884 = vmul.f32 %v767, %v878
  %v885 = vmul.f32 %v822, %v878
  %v886 = vmul.f32 %v877, %v878
  %v887 = vld [vmem:[%s1] sm:$0xff]
  %v888 = vld [vmem:[%s1 + $0x8] sm:$0xff]
  %v889 = vld [vmem:[%s1 + $0x10] sm:$0xff]
  %v890 = vld [vmem:[%s1 + $0x18] sm:$0xff]
  %v891 = vld [vmem:[%s1 + $0x20] sm:$0xff]
  %v892 = vld [vmem:[%s1 + $0x28] sm:$0xff]
  %v893 = vld [vmem:[%s1 + $0x30] sm:$0xff]
  %v894 = vld [vmem:[%s1 + $0x38] sm:$0xff]
  %v895 = vld [vmem:[%s1 + $0x40] sm:$0xff]
  %v896 = vld [vmem:[%s1 + $0x48] sm:$0xff]
  %v897 = vld [vmem:[%s1 + $0x50] sm:$0xff]
  %v898 = vld [vmem:[%s1 + $0x58] sm:$0xff]
  %v899 = vld [vmem:[%s1 + $0x60] sm:$0xff]
  %v900 = vld [vmem:[%s1 + $0x68] sm:$0xff]
  %v901 = vld [vmem:[%s1 + $0x70] sm:$0xff]
  %v902 = vld [vmem:[%s1 + $0x78] sm:$0xff]
  %v903 = vld [vmem:[%s1 + $0x80] sm:$0xff]
  %v904 = vld [vmem:[%s1 + $0x88] sm:$0xff]
  %v905 = vld [vmem:[%s1 + $0x90] sm:$0xff]
  %v906 = vld [vmem:[%s1 + $0x98] sm:$0xff]
  %v907 = vld [vmem:[%s1 + $0xa0] sm:$0xff]
  %v908 = vld [vmem:[%s1 + $0xa8] sm:$0xff]
  %v909 = vld [vmem:[%s1 + $0xb0] sm:$0xff]
  %v910 = vld [vmem:[%s1 + $0xb8] sm:$0xff]
  %v911 = vld [vmem:[%s1 + $0xc0] sm:$0xff]
  %v912 = vld [vmem:[%s1 + $0xc8] sm:$0xff]
  %v913 = vld [vmem:[%s1 + $0xd0] sm:$0xff]
  %v914 = vld [vmem:[%s1 + $0xd8] sm:$0xff]
  %v915 = vld [vmem:[%s1 + $0xe0] sm:$0xff]
  %v916 = vld [vmem:[%s1 + $0xe8] sm:$0xff]
  %v917 = vld [vmem:[%s1 + $0xf0] sm:$0xff]
  %v918 = vld [vmem:[%s1 + $0xf8] sm:$0xff]
  %v919 = vld [vmem:[%s1 + $0x100] sm:$0xff]
  %v920 = vld [vmem:[%s1 + $0x108] sm:$0xff]
  %v921 = vld [vmem:[%s1 + $0x110] sm:$0xff]
  %v922 = vld [vmem:[%s1 + $0x118] sm:$0xff]
  %v923 = vld [vmem:[%s1 + $0x120] sm:$0xff]
  %v924 = vld [vmem:[%s1 + $0x128] sm:$0xff]
  %v925 = vld [vmem:[%s1 + $0x130] sm:$0xff]
  %v926 = vld [vmem:[%s1 + $0x138] sm:$0xff]
  %v927 = vld [vmem:[%s1 + $0x140] sm:$0xff]
  %v928 = vld [vmem:[%s1 + $0x148] sm:$0xff]
  %v929 = vld [vmem:[%s1 + $0x150] sm:$0xff]
  %v930 = vld [vmem:[%s1 + $0x158] sm:$0xff]
  %v931 = vld [vmem:[%s1 + $0x160] sm:$0xff]
  %v932 = vld [vmem:[%s1 + $0x168] sm:$0xff]
  %v933 = vld [vmem:[%s1 + $0x170] sm:$0xff]
  %v934 = vld [vmem:[%s1 + $0x178] sm:$0xff]
  %v935 = vld [vmem:[%s1 + $0x180] sm:$0xff]
  %v936 = vld [vmem:[%s2] sm:$0xf]
  %v937 = vld [vmem:[%s2 + $0x4] sm:$0xf]
  %v938 = vld [vmem:[%s2 + $0x8] sm:$0xf]
  %v939 = vld [vmem:[%s2 + $0xc] sm:$0xf]
  %v940 = vld [vmem:[%s2 + $0x10] sm:$0xf]
  %v941 = vld [vmem:[%s2 + $0x14] sm:$0xf]
  %v942 = vld [vmem:[%s2 + $0x18] sm:$0xf]
  %v943 = vld [vmem:[%s2 + $0x1c] sm:$0xf]
  %v944 = vld [vmem:[%s2 + $0x20] sm:$0xf]
  %v945 = vld [vmem:[%s2 + $0x24] sm:$0xf]
  %v946 = vld [vmem:[%s2 + $0x28] sm:$0xf]
  %v947 = vld [vmem:[%s2 + $0x2c] sm:$0xf]
  %v948 = vld [vmem:[%s2 + $0x30] sm:$0xf]
  %v949 = vld [vmem:[%s2 + $0x34] sm:$0xf]
  %v950 = vld [vmem:[%s2 + $0x38] sm:$0xf]
  %v951 = vld [vmem:[%s2 + $0x3c] sm:$0xf]
  %v952 = vld [vmem:[%s2 + $0x40] sm:$0xf]
  %v953 = vld [vmem:[%s2 + $0x44] sm:$0xf]
  %v1003 = vunpack.c.l.b16 %v887
  %v1004 = vunpack.c.h.b16 %v887
  %v1005 = vunpack.c.l.b16 %v888
  %v1006 = vunpack.c.h.b16 %v888
  %v1007 = vunpack.c.l.b16 %v889
  %v1008 = vunpack.c.h.b16 %v889
  %v1009 = vunpack.c.l.b16 %v890
  %v1010 = vunpack.c.h.b16 %v890
  %v1011 = vunpack.c.l.b16 %v891
  %v1012 = vunpack.c.h.b16 %v891
  %v1013 = vunpack.c.l.b16 %v892
  %v1014 = vunpack.c.h.b16 %v892
  %v1015 = vunpack.c.l.b16 %v893
  %v1016 = vunpack.c.h.b16 %v893
  %v1017 = vunpack.c.l.b16 %v894
  %v1018 = vunpack.c.h.b16 %v894
  %v1019 = vunpack.c.l.b16 %v895
  %v1020 = vunpack.c.h.b16 %v895
  %v1021 = vunpack.c.l.b16 %v896
  %v1022 = vunpack.c.h.b16 %v896
  %v1023 = vunpack.c.l.b16 %v897
  %v1024 = vunpack.c.h.b16 %v897
  %v1025 = vunpack.c.l.b16 %v898
  %v1026 = vunpack.c.h.b16 %v898
  %v1027 = vunpack.c.l.b16 %v899
  %v1028 = vunpack.c.h.b16 %v899
  %v1029 = vunpack.c.l.b16 %v900
  %v1030 = vunpack.c.h.b16 %v900
  %v1031 = vunpack.c.l.b16 %v901
  %v1032 = vunpack.c.h.b16 %v901
  %v1033 = vunpack.c.l.b16 %v902
  %v1034 = vunpack.c.h.b16 %v902
  %v1035 = vunpack.c.l.b16 %v903
  %v1036 = vunpack.c.h.b16 %v903
  %v1037 = vunpack.c.l.b16 %v904
  %v1038 = vunpack.c.h.b16 %v904
  %v1039 = vunpack.c.l.b16 %v905
  %v1040 = vunpack.c.h.b16 %v905
  %v1041 = vunpack.c.l.b16 %v906
  %v1042 = vunpack.c.h.b16 %v906
  %v1043 = vunpack.c.l.b16 %v907
  %v1044 = vunpack.c.h.b16 %v907
  %v1045 = vunpack.c.l.b16 %v908
  %v1046 = vunpack.c.h.b16 %v908
  %v1047 = vunpack.c.l.b16 %v909
  %v1048 = vunpack.c.h.b16 %v909
  %v1049 = vunpack.c.l.b16 %v910
  %v1050 = vunpack.c.h.b16 %v910
  %v1051 = vunpack.c.l.b16 %v911
  %v1052 = vunpack.c.h.b16 %v911
  %v1053 = vunpack.c.l.b16 %v912
  %v1054 = vunpack.c.h.b16 %v912
  %v1055 = vunpack.c.l.b16 %v913
  %v1056 = vunpack.c.h.b16 %v913
  %v1057 = vunpack.c.l.b16 %v914
  %v1058 = vunpack.c.h.b16 %v914
  %v1059 = vunpack.c.l.b16 %v915
  %v1060 = vunpack.c.h.b16 %v915
  %v1061 = vunpack.c.l.b16 %v916
  %v1062 = vunpack.c.h.b16 %v916
  %v1063 = vunpack.c.l.b16 %v917
  %v1064 = vunpack.c.h.b16 %v917
  %v1065 = vunpack.c.l.b16 %v918
  %v1066 = vunpack.c.h.b16 %v918
  %v1067 = vunpack.c.l.b16 %v919
  %v1068 = vunpack.c.h.b16 %v919
  %v1069 = vunpack.c.l.b16 %v920
  %v1070 = vunpack.c.h.b16 %v920
  %v1071 = vunpack.c.l.b16 %v921
  %v1072 = vunpack.c.h.b16 %v921
  %v1073 = vunpack.c.l.b16 %v922
  %v1074 = vunpack.c.h.b16 %v922
  %v1075 = vunpack.c.l.b16 %v923
  %v1076 = vunpack.c.h.b16 %v923
  %v1077 = vunpack.c.l.b16 %v924
  %v1078 = vunpack.c.h.b16 %v924
  %v1079 = vunpack.c.l.b16 %v925
  %v1080 = vunpack.c.h.b16 %v925
  %v1081 = vunpack.c.l.b16 %v926
  %v1082 = vunpack.c.h.b16 %v926
  %v1083 = vunpack.c.l.b16 %v927
  %v1084 = vunpack.c.h.b16 %v927
  %v1085 = vunpack.c.l.b16 %v928
  %v1086 = vunpack.c.h.b16 %v928
  %v1087 = vunpack.c.l.b16 %v929
  %v1088 = vunpack.c.h.b16 %v929
  %v1089 = vunpack.c.l.b16 %v930
  %v1090 = vunpack.c.h.b16 %v930
  %v1091 = vunpack.c.l.b16 %v931
  %v1092 = vunpack.c.h.b16 %v931
  %v1093 = vunpack.c.l.b16 %v932
  %v1094 = vunpack.c.h.b16 %v932
  %v1095 = vunpack.c.l.b16 %v933
  %v1096 = vunpack.c.h.b16 %v933
  %v1097 = vunpack.c.l.b16 %v934
  %v1098 = vunpack.c.h.b16 %v934
  %v1099 = vunpack.c.l.b16 %v935
  %v1100 = vunpack.c.h.b16 %v935
  %v1101 = vpack.c.b16 %v1005, %v1003
  %v1102 = vpack.c.b16 %v1006, %v1004
  %v1103 = vpack.c.b16 %v1009, %v1007
  %v1104 = vpack.c.b16 %v1010, %v1008
  %v1105 = vpack.c.b16 %v1013, %v1011
  %v1106 = vpack.c.b16 %v1014, %v1012
  %v1107 = vpack.c.b16 %v1017, %v1015
  %v1108 = vpack.c.b16 %v1018, %v1016
  %v1109 = vpack.c.b16 %v1021, %v1019
  %v1110 = vpack.c.b16 %v1022, %v1020
  %v1111 = vpack.c.b16 %v1025, %v1023
  %v1112 = vpack.c.b16 %v1026, %v1024
  %v1113 = vpack.c.b16 %v1029, %v1027
  %v1114 = vpack.c.b16 %v1030, %v1028
  %v1115 = vpack.c.b16 %v1033, %v1031
  %v1116 = vpack.c.b16 %v1034, %v1032
  %v1117 = vpack.c.b16 %v1037, %v1035
  %v1118 = vpack.c.b16 %v1038, %v1036
  %v1119 = vpack.c.b16 %v1041, %v1039
  %v1120 = vpack.c.b16 %v1042, %v1040
  %v1121 = vpack.c.b16 %v1045, %v1043
  %v1122 = vpack.c.b16 %v1046, %v1044
  %v1123 = vpack.c.b16 %v1049, %v1047
  %v1124 = vpack.c.b16 %v1050, %v1048
  %v1125 = vpack.c.b16 %v1053, %v1051
  %v1126 = vpack.c.b16 %v1054, %v1052
  %v1127 = vpack.c.b16 %v1057, %v1055
  %v1128 = vpack.c.b16 %v1058, %v1056
  %v1129 = vpack.c.b16 %v1061, %v1059
  %v1130 = vpack.c.b16 %v1062, %v1060
  %v1131 = vpack.c.b16 %v1065, %v1063
  %v1132 = vpack.c.b16 %v1066, %v1064
  %v1133 = vpack.c.b16 %v1069, %v1067
  %v1134 = vpack.c.b16 %v1070, %v1068
  %v1135 = vpack.c.b16 %v1073, %v1071
  %v1136 = vpack.c.b16 %v1074, %v1072
  %v1137 = vpack.c.b16 %v1077, %v1075
  %v1138 = vpack.c.b16 %v1078, %v1076
  %v1139 = vpack.c.b16 %v1081, %v1079
  %v1140 = vpack.c.b16 %v1082, %v1080
  %v1141 = vpack.c.b16 %v1085, %v1083
  %v1142 = vpack.c.b16 %v1086, %v1084
  %v1143 = vpack.c.b16 %v1089, %v1087
  %v1144 = vpack.c.b16 %v1090, %v1088
  %v1145 = vpack.c.b16 %v1093, %v1091
  %v1146 = vpack.c.b16 %v1094, %v1092
  %v1147 = vpack.c.b16 %v1097, %v1095
  %v1148 = vpack.c.b16 %v1098, %v1096
  %v1149 = vpack.c.b16 %v1099, %v1099
  %v1150 = vpack.c.b16 %v1100, %v1100
  %v1194 = vunpack.c.l.b16 %v936
  %v1195 = vunpack.c.l.b16 %v937
  %v1196 = vunpack.c.l.b16 %v938
  %v1197 = vunpack.c.l.b16 %v939
  %v1198 = vunpack.c.l.b16 %v940
  %v1199 = vunpack.c.l.b16 %v941
  %v1200 = vunpack.c.l.b16 %v942
  %v1201 = vunpack.c.l.b16 %v943
  %v1202 = vunpack.c.l.b16 %v944
  %v1203 = vunpack.c.l.b16 %v945
  %v1204 = vunpack.c.l.b16 %v946
  %v1205 = vunpack.c.l.b16 %v947
  %v1206 = vunpack.c.l.b16 %v948
  %v1207 = vunpack.c.l.b16 %v949
  %v1208 = vunpack.c.l.b16 %v950
  %v1209 = vunpack.c.l.b16 %v951
  %v1210 = vunpack.c.l.b16 %v952
  %v1211 = vunpack.c.l.b16 %v953
  %v1212 = vpack.c.b16 %v1195, %v1194
  %v1213 = vpack.c.b16 %v1197, %v1196
  %v1214 = vpack.c.b16 %v1199, %v1198
  %v1215 = vpack.c.b16 %v1201, %v1200
  %v1216 = vpack.c.b16 %v1203, %v1202
  %v1217 = vpack.c.b16 %v1205, %v1204
  %v1218 = vpack.c.b16 %v1207, %v1206
  %v1219 = vpack.c.b16 %v1209, %v1208
  %v1220 = vpack.c.b16 %v1211, %v1210
  %v1231 = vsel %vm436, %v1102, 0
  %v1234 = vsel %vm436, %v1104, 0
  %v1237 = vsel %vm436, %v1106, 0
  %v1240 = vsel %vm436, %v1108, 0
  %v1243 = vsel %vm436, %v1110, 0
  %v1246 = vsel %vm436, %v1112, 0
  %v1249 = vsel %vm436, %v1114, 0
  %v1252 = vsel %vm436, %v1116, 0
  %v1255 = vsel %vm436, %v1118, 0
  %v1258 = vsel %vm436, %v1120, 0
  %v1261 = vsel %vm436, %v1122, 0
  %v1264 = vsel %vm436, %v1124, 0
  %v1267 = vsel %vm436, %v1126, 0
  %v1270 = vsel %vm436, %v1128, 0
  %v1273 = vsel %vm436, %v1130, 0
  %v1276 = vsel %vm436, %v1132, 0
  %v1279 = vsel %vm436, %v1134, 0
  %v1282 = vsel %vm436, %v1136, 0
  %v1285 = vsel %vm436, %v1138, 0
  %v1288 = vsel %vm436, %v1140, 0
  %v1291 = vsel %vm436, %v1142, 0
  %v1294 = vsel %vm436, %v1144, 0
  %v1297 = vsel %vm436, %v1146, 0
  %v1300 = vsel %vm436, %v1148, 0
  %v1303 = vsel %vm436, %v1150, 0
  %1305 = vmatprep.subr.bf16.mxu0 0
  %1306 = vmatpush1.bf16.msra.mxu0 %v1212
  %1307 = vmatprep.subr.bf16.mxu0 0
  %1308 = vmatpush1.bf16.msra.mxu0 %v1213
  %1309 = vmatprep.subr.bf16.mxu0 0
  %1310 = vmatpush1.bf16.msra.mxu0 %v1214
  %1311 = vmatprep.subr.bf16.mxu0 0
  %1312 = vmatpush1.bf16.msra.mxu0 %v1215
  %1313 = vmatprep.subr.bf16.mxu0 0
  %1314 = vmatpush1.bf16.msra.mxu0 %v1216
  %1315 = vmatprep.subr.bf16.mxu0 0
  %1316 = vmatpush1.bf16.msra.mxu0 %v1217
  %1317 = vmatprep.subr.bf16.mxu0 0
  %1318 = vmatpush1.bf16.msra.mxu0 %v1218
  %1319 = vmatprep.subr.bf16.mxu0 0
  %1320 = vmatpush1.bf16.msra.mxu0 %v1219
  %1321 = vmatprep.subr.bf16.mxu0 0
  %1322 = vmatpush1.bf16.msra.mxu0 %v1220
  %1323 = vmatprep.subr.bf16.mxu0 0
  %1324 = vmatpush1.bf16.msra.mxu0 0
  %1325 = vmatprep.subr.bf16.mxu0 0
  %1326 = vmatpush1.bf16.msra.mxu0 0
  %1327 = vmatprep.subr.bf16.mxu0 0
  %1328 = vmatpush1.bf16.msra.mxu0 0
  %1329 = vmatprep.subr.bf16.mxu0 0
  %1330 = vmatpush1.bf16.msra.mxu0 0
  %1331 = vmatprep.subr.bf16.mxu0 0
  %1332 = vmatpush1.bf16.msra.mxu0 0
  %1333 = vmatprep.subr.bf16.mxu0 0
  %1334 = vmatpush1.bf16.msra.mxu0 0
  %1335 = vmatprep.subr.bf16.mxu0 0
  %1336 = vmatpush1.bf16.msra.mxu0 0
  %1337 = vmatprep.mubr.bf16.mxu0 %v1231
  %1338 = vmatmul.mubr.bf16.gmra.mrb[0].mxu0 %v1101
  %v1339 = vpop.f32.mrb[0].mxu0
  %v1340 = vadd.f32 0.0, %v1339
  %v1341 = vpop.f32.mrb[0].mxu0
  %v1342 = vpop.f32.mrb[0].mxu0
  %v1343 = vadd.f32 0.0, %v1342
  %v1344 = vpop.f32.mrb[0].mxu0
  %1345 = vmatprep.mubr.bf16.mxu0 %v1234
  %1346 = vmatmul.mubr.bf16.gmra.mrb[0].mxu0 %v1103
  %v1347 = vpop.f32.mrb[0].mxu0
  %v1348 = vadd.f32 0.0, %v1347
  %v1349 = vpop.f32.mrb[0].mxu0
  %v1350 = vpop.f32.mrb[0].mxu0
  %v1351 = vadd.f32 0.0, %v1350
  %v1352 = vpop.f32.mrb[0].mxu0
  %1353 = vmatprep.mubr.bf16.mxu0 %v1237
  %1354 = vmatmul.mubr.bf16.gmra.mrb[0].mxu0 %v1105
  %v1355 = vpop.f32.mrb[0].mxu0
  %v1356 = vadd.f32 0.0, %v1355
  %v1357 = vpop.f32.mrb[0].mxu0
  %v1358 = vpop.f32.mrb[0].mxu0
  %v1359 = vadd.f32 0.0, %v1358
  %v1360 = vpop.f32.mrb[0].mxu0
  %1361 = vmatprep.mubr.bf16.mxu0 %v1240
  %1362 = vmatmul.mubr.bf16.gmra.mrb[0].mxu0 %v1107
  %v1363 = vpop.f32.mrb[0].mxu0
  %v1364 = vadd.f32 0.0, %v1363
  %v1365 = vpop.f32.mrb[0].mxu0
  %v1366 = vpop.f32.mrb[0].mxu0
  %v1367 = vadd.f32 0.0, %v1366
  %v1368 = vpop.f32.mrb[0].mxu0
  %1369 = vmatprep.mubr.bf16.mxu0 %v1243
  %1370 = vmatmul.mubr.bf16.gmra.mrb[0].mxu0 %v1109
  %v1371 = vpop.f32.mrb[0].mxu0
  %v1372 = vadd.f32 0.0, %v1371
  %v1373 = vpop.f32.mrb[0].mxu0
  %v1374 = vpop.f32.mrb[0].mxu0
  %v1375 = vadd.f32 0.0, %v1374
  %v1376 = vpop.f32.mrb[0].mxu0
  %1377 = vmatprep.mubr.bf16.mxu0 %v1246
  %1378 = vmatmul.mubr.bf16.gmra.mrb[0].mxu0 %v1111
  %v1379 = vpop.f32.mrb[0].mxu0
  %v1380 = vadd.f32 0.0, %v1379
  %v1381 = vpop.f32.mrb[0].mxu0
  %v1382 = vpop.f32.mrb[0].mxu0
  %v1383 = vadd.f32 0.0, %v1382
  %v1384 = vpop.f32.mrb[0].mxu0
  %1385 = vmatprep.mubr.bf16.mxu0 %v1249
  %1386 = vmatmul.mubr.bf16.gmra.mrb[0].mxu0 %v1113
  %v1387 = vpop.f32.mrb[0].mxu0
  %v1388 = vadd.f32 0.0, %v1387
  %v1389 = vpop.f32.mrb[0].mxu0
  %v1390 = vpop.f32.mrb[0].mxu0
  %v1391 = vadd.f32 0.0, %v1390
  %v1392 = vpop.f32.mrb[0].mxu0
  %1393 = vmatprep.mubr.bf16.mxu0 %v1252
  %1394 = vmatmul.mubr.bf16.gmra.mrb[0].mxu0 %v1115
  %v1395 = vpop.f32.mrb[0].mxu0
  %v1396 = vadd.f32 0.0, %v1395
  %v1397 = vpop.f32.mrb[0].mxu0
  %v1398 = vpop.f32.mrb[0].mxu0
  %v1399 = vadd.f32 0.0, %v1398
  %v1400 = vpop.f32.mrb[0].mxu0
  %1401 = vmatprep.mubr.bf16.mxu0 %v1255
  %1402 = vmatmul.mubr.bf16.gmra.mrb[0].mxu0 %v1117
  %v1403 = vpop.f32.mrb[0].mxu0
  %v1404 = vadd.f32 0.0, %v1403
  %v1405 = vpop.f32.mrb[0].mxu0
  %v1406 = vpop.f32.mrb[0].mxu0
  %v1407 = vadd.f32 0.0, %v1406
  %v1408 = vpop.f32.mrb[0].mxu0
  %1409 = vmatprep.mubr.bf16.mxu0 %v1258
  %1410 = vmatmul.mubr.bf16.gmra.mrb[0].mxu0 %v1119
  %v1411 = vpop.f32.mrb[0].mxu0
  %v1412 = vadd.f32 0.0, %v1411
  %v1413 = vpop.f32.mrb[0].mxu0
  %v1414 = vpop.f32.mrb[0].mxu0
  %v1415 = vadd.f32 0.0, %v1414
  %v1416 = vpop.f32.mrb[0].mxu0
  %1417 = vmatprep.mubr.bf16.mxu0 %v1261
  %1418 = vmatmul.mubr.bf16.gmra.mrb[0].mxu0 %v1121
  %v1419 = vpop.f32.mrb[0].mxu0
  %v1420 = vadd.f32 0.0, %v1419
  %v1421 = vpop.f32.mrb[0].mxu0
  %v1422 = vpop.f32.mrb[0].mxu0
  %v1423 = vadd.f32 0.0, %v1422
  %v1424 = vpop.f32.mrb[0].mxu0
  %1425 = vmatprep.mubr.bf16.mxu0 %v1264
  %1426 = vmatmul.mubr.bf16.gmra.mrb[0].mxu0 %v1123
  %v1427 = vpop.f32.mrb[0].mxu0
  %v1428 = vadd.f32 0.0, %v1427
  %v1429 = vpop.f32.mrb[0].mxu0
  %v1430 = vpop.f32.mrb[0].mxu0
  %v1431 = vadd.f32 0.0, %v1430
  %v1432 = vpop.f32.mrb[0].mxu0
  %1433 = vmatprep.mubr.bf16.mxu0 %v1267
  %1434 = vmatmul.mubr.bf16.gmra.mrb[0].mxu0 %v1125
  %v1435 = vpop.f32.mrb[0].mxu0
  %v1436 = vadd.f32 0.0, %v1435
  %v1437 = vpop.f32.mrb[0].mxu0
  %v1438 = vpop.f32.mrb[0].mxu0
  %v1439 = vadd.f32 0.0, %v1438
  %v1440 = vpop.f32.mrb[0].mxu0
  %1441 = vmatprep.mubr.bf16.mxu0 %v1270
  %1442 = vmatmul.mubr.bf16.gmra.mrb[0].mxu0 %v1127
  %v1443 = vpop.f32.mrb[0].mxu0
  %v1444 = vadd.f32 0.0, %v1443
  %v1445 = vpop.f32.mrb[0].mxu0
  %v1446 = vpop.f32.mrb[0].mxu0
  %v1447 = vadd.f32 0.0, %v1446
  %v1448 = vpop.f32.mrb[0].mxu0
  %1449 = vmatprep.mubr.bf16.mxu0 %v1273
  %1450 = vmatmul.mubr.bf16.gmra.mrb[0].mxu0 %v1129
  %v1451 = vpop.f32.mrb[0].mxu0
  %v1452 = vadd.f32 0.0, %v1451
  %v1453 = vpop.f32.mrb[0].mxu0
  %v1454 = vpop.f32.mrb[0].mxu0
  %v1455 = vadd.f32 0.0, %v1454
  %v1456 = vpop.f32.mrb[0].mxu0
  %1457 = vmatprep.mubr.bf16.mxu0 %v1276
  %1458 = vmatmul.mubr.bf16.gmra.mrb[0].mxu0 %v1131
  %v1459 = vpop.f32.mrb[0].mxu0
  %v1460 = vadd.f32 0.0, %v1459
  %v1461 = vpop.f32.mrb[0].mxu0
  %v1462 = vpop.f32.mrb[0].mxu0
  %v1463 = vadd.f32 0.0, %v1462
  %v1464 = vpop.f32.mrb[0].mxu0
  %1465 = vmatprep.mubr.bf16.mxu0 %v1279
  %1466 = vmatmul.mubr.bf16.gmra.mrb[0].mxu0 %v1133
  %v1467 = vpop.f32.mrb[0].mxu0
  %v1468 = vadd.f32 0.0, %v1467
  %v1469 = vpop.f32.mrb[0].mxu0
  %v1470 = vpop.f32.mrb[0].mxu0
  %v1471 = vadd.f32 0.0, %v1470
  %v1472 = vpop.f32.mrb[0].mxu0
  %1473 = vmatprep.mubr.bf16.mxu0 %v1282
  %1474 = vmatmul.mubr.bf16.gmra.mrb[0].mxu0 %v1135
  %v1475 = vpop.f32.mrb[0].mxu0
  %v1476 = vadd.f32 0.0, %v1475
  %v1477 = vpop.f32.mrb[0].mxu0
  %v1478 = vpop.f32.mrb[0].mxu0
  %v1479 = vadd.f32 0.0, %v1478
  %v1480 = vpop.f32.mrb[0].mxu0
  %1481 = vmatprep.mubr.bf16.mxu0 %v1285
  %1482 = vmatmul.mubr.bf16.gmra.mrb[0].mxu0 %v1137
  %v1483 = vpop.f32.mrb[0].mxu0
  %v1484 = vadd.f32 0.0, %v1483
  %v1485 = vpop.f32.mrb[0].mxu0
  %v1486 = vpop.f32.mrb[0].mxu0
  %v1487 = vadd.f32 0.0, %v1486
  %v1488 = vpop.f32.mrb[0].mxu0
  %1489 = vmatprep.mubr.bf16.mxu0 %v1288
  %1490 = vmatmul.mubr.bf16.gmra.mrb[0].mxu0 %v1139
  %v1491 = vpop.f32.mrb[0].mxu0
  %v1492 = vadd.f32 0.0, %v1491
  %v1493 = vpop.f32.mrb[0].mxu0
  %v1494 = vpop.f32.mrb[0].mxu0
  %v1495 = vadd.f32 0.0, %v1494
  %v1496 = vpop.f32.mrb[0].mxu0
  %1497 = vmatprep.mubr.bf16.mxu0 %v1291
  %1498 = vmatmul.mubr.bf16.gmra.mrb[0].mxu0 %v1141
  %v1499 = vpop.f32.mrb[0].mxu0
  %v1500 = vadd.f32 0.0, %v1499
  %v1501 = vpop.f32.mrb[0].mxu0
  %v1502 = vpop.f32.mrb[0].mxu0
  %v1503 = vadd.f32 0.0, %v1502
  %v1504 = vpop.f32.mrb[0].mxu0
  %1505 = vmatprep.mubr.bf16.mxu0 %v1294
  %1506 = vmatmul.mubr.bf16.gmra.mrb[0].mxu0 %v1143
  %v1507 = vpop.f32.mrb[0].mxu0
  %v1508 = vadd.f32 0.0, %v1507
  %v1509 = vpop.f32.mrb[0].mxu0
  %v1510 = vpop.f32.mrb[0].mxu0
  %v1511 = vadd.f32 0.0, %v1510
  %v1512 = vpop.f32.mrb[0].mxu0
  %1513 = vmatprep.mubr.bf16.mxu0 %v1297
  %1514 = vmatmul.mubr.bf16.gmra.mrb[0].mxu0 %v1145
  %v1515 = vpop.f32.mrb[0].mxu0
  %v1516 = vadd.f32 0.0, %v1515
  %v1517 = vpop.f32.mrb[0].mxu0
  %v1518 = vpop.f32.mrb[0].mxu0
  %v1519 = vadd.f32 0.0, %v1518
  %v1520 = vpop.f32.mrb[0].mxu0
  %1521 = vmatprep.mubr.bf16.mxu0 %v1300
  %1522 = vmatmul.mubr.bf16.gmra.mrb[0].mxu0 %v1147
  %v1523 = vpop.f32.mrb[0].mxu0
  %v1524 = vadd.f32 0.0, %v1523
  %v1525 = vpop.f32.mrb[0].mxu0
  %v1526 = vpop.f32.mrb[0].mxu0
  %v1527 = vadd.f32 0.0, %v1526
  %v1528 = vpop.f32.mrb[0].mxu0
  %1529 = vmatprep.mubr.bf16.mxu0 %v1303
  %1530 = vmatmul.mubr.bf16.gmra.mrb[0].mxu0 %v1149
  %v1531 = vpop.f32.mrb[0].mxu0
  %v1532 = vadd.f32 0.0, %v1531
  %v1533 = vpop.f32.mrb[0].mxu0
  %v1534 = vpop.f32.mrb[0].mxu0
  %v1535 = vpop.f32.mrb[0].mxu0
  %1536 = vdwg.mxu0
  %v1537 = vld [vmem:[%s3] sm:$0x1]
  %v1539 = vlaneseq
  %v1540 = vshrl.u32 %v1539, 7
  %v1541 = vsub.s32 0, %v1540
  %v1542 = vrot.slane %v1537, %v1541
  %v1544 = vmul.f32 %v1340, %v1542
  %v1545 = vmul.f32 %v1343, %v1542
  %v1546 = vmul.f32 %v1348, %v1542
  %v1547 = vmul.f32 %v1351, %v1542
  %v1548 = vmul.f32 %v1356, %v1542
  %v1549 = vmul.f32 %v1359, %v1542
  %v1550 = vmul.f32 %v1364, %v1542
  %v1551 = vmul.f32 %v1367, %v1542
  %v1552 = vmul.f32 %v1372, %v1542
  %v1553 = vmul.f32 %v1375, %v1542
  %v1554 = vmul.f32 %v1380, %v1542
  %v1555 = vmul.f32 %v1383, %v1542
  %v1556 = vmul.f32 %v1388, %v1542
  %v1557 = vmul.f32 %v1391, %v1542
  %v1558 = vmul.f32 %v1396, %v1542
  %v1559 = vmul.f32 %v1399, %v1542
  %v1560 = vmul.f32 %v1404, %v1542
  %v1561 = vmul.f32 %v1407, %v1542
  %v1562 = vmul.f32 %v1412, %v1542
  %v1563 = vmul.f32 %v1415, %v1542
  %v1564 = vmul.f32 %v1420, %v1542
  %v1565 = vmul.f32 %v1423, %v1542
  %v1566 = vmul.f32 %v1428, %v1542
  %v1567 = vmul.f32 %v1431, %v1542
  %v1568 = vmul.f32 %v1436, %v1542
  %v1569 = vmul.f32 %v1439, %v1542
  %v1570 = vmul.f32 %v1444, %v1542
  %v1571 = vmul.f32 %v1447, %v1542
  %v1572 = vmul.f32 %v1452, %v1542
  %v1573 = vmul.f32 %v1455, %v1542
  %v1574 = vmul.f32 %v1460, %v1542
  %v1575 = vmul.f32 %v1463, %v1542
  %v1576 = vmul.f32 %v1468, %v1542
  %v1577 = vmul.f32 %v1471, %v1542
  %v1578 = vmul.f32 %v1476, %v1542
  %v1579 = vmul.f32 %v1479, %v1542
  %v1580 = vmul.f32 %v1484, %v1542
  %v1581 = vmul.f32 %v1487, %v1542
  %v1582 = vmul.f32 %v1492, %v1542
  %v1583 = vmul.f32 %v1495, %v1542
  %v1584 = vmul.f32 %v1500, %v1542
  %v1585 = vmul.f32 %v1503, %v1542
  %v1586 = vmul.f32 %v1508, %v1542
  %v1587 = vmul.f32 %v1511, %v1542
  %v1588 = vmul.f32 %v1516, %v1542
  %v1589 = vmul.f32 %v1519, %v1542
  %v1590 = vmul.f32 %v1524, %v1542
  %v1591 = vmul.f32 %v1527, %v1542
  %v1592 = vmul.f32 %v1532, %v1542
  %v1593 = vld [vmem:[%s4] sm:$0x1]
  %v1595 = vlaneseq
  %v1596 = vshrl.u32 %v1595, 7
  %v1597 = vsub.s32 0, %v1596
  %v1598 = vrot.slane %v1593, %v1597
  %v1600 = vadd.f32 %v1544, %v1598
  %v1601 = vadd.f32 %v1545, %v1598
  %v1602 = vadd.f32 %v1546, %v1598
  %v1603 = vadd.f32 %v1547, %v1598
  %v1604 = vadd.f32 %v1548, %v1598
  %v1605 = vadd.f32 %v1549, %v1598
  %v1606 = vadd.f32 %v1550, %v1598
  %v1607 = vadd.f32 %v1551, %v1598
  %v1608 = vadd.f32 %v1552, %v1598
  %v1609 = vadd.f32 %v1553, %v1598
  %v1610 = vadd.f32 %v1554, %v1598
  %v1611 = vadd.f32 %v1555, %v1598
  %v1612 = vadd.f32 %v1556, %v1598
  %v1613 = vadd.f32 %v1557, %v1598
  %v1614 = vadd.f32 %v1558, %v1598
  %v1615 = vadd.f32 %v1559, %v1598
  %v1616 = vadd.f32 %v1560, %v1598
  %v1617 = vadd.f32 %v1561, %v1598
  %v1618 = vadd.f32 %v1562, %v1598
  %v1619 = vadd.f32 %v1563, %v1598
  %v1620 = vadd.f32 %v1564, %v1598
  %v1621 = vadd.f32 %v1565, %v1598
  %v1622 = vadd.f32 %v1566, %v1598
  %v1623 = vadd.f32 %v1567, %v1598
  %v1624 = vadd.f32 %v1568, %v1598
  %v1625 = vadd.f32 %v1569, %v1598
  %v1626 = vadd.f32 %v1570, %v1598
  %v1627 = vadd.f32 %v1571, %v1598
  %v1628 = vadd.f32 %v1572, %v1598
  %v1629 = vadd.f32 %v1573, %v1598
  %v1630 = vadd.f32 %v1574, %v1598
  %v1631 = vadd.f32 %v1575, %v1598
  %v1632 = vadd.f32 %v1576, %v1598
  %v1633 = vadd.f32 %v1577, %v1598
  %v1634 = vadd.f32 %v1578, %v1598
  %v1635 = vadd.f32 %v1579, %v1598
  %v1636 = vadd.f32 %v1580, %v1598
  %v1637 = vadd.f32 %v1581, %v1598
  %v1638 = vadd.f32 %v1582, %v1598
  %v1639 = vadd.f32 %v1583, %v1598
  %v1640 = vadd.f32 %v1584, %v1598
  %v1641 = vadd.f32 %v1585, %v1598
  %v1642 = vadd.f32 %v1586, %v1598
  %v1643 = vadd.f32 %v1587, %v1598
  %v1644 = vadd.f32 %v1588, %v1598
  %v1645 = vadd.f32 %v1589, %v1598
  %v1646 = vadd.f32 %v1590, %v1598
  %v1647 = vadd.f32 %v1591, %v1598
  %v1648 = vadd.f32 %v1592, %v1598
  %v1649 = vmax.f32 %v1600, 0.0
  %v1650 = vmax.f32 %v1601, 0.0
  %v1651 = vmax.f32 %v1602, 0.0
  %v1652 = vmax.f32 %v1603, 0.0
  %v1653 = vmax.f32 %v1604, 0.0
  %v1654 = vmax.f32 %v1605, 0.0
  %v1655 = vmax.f32 %v1606, 0.0
  %v1656 = vmax.f32 %v1607, 0.0
  %v1657 = vmax.f32 %v1608, 0.0
  %v1658 = vmax.f32 %v1609, 0.0
  %v1659 = vmax.f32 %v1610, 0.0
  %v1660 = vmax.f32 %v1611, 0.0
  %v1661 = vmax.f32 %v1612, 0.0
  %v1662 = vmax.f32 %v1613, 0.0
  %v1663 = vmax.f32 %v1614, 0.0
  %v1664 = vmax.f32 %v1615, 0.0
  %v1665 = vmax.f32 %v1616, 0.0
  %v1666 = vmax.f32 %v1617, 0.0
  %v1667 = vmax.f32 %v1618, 0.0
  %v1668 = vmax.f32 %v1619, 0.0
  %v1669 = vmax.f32 %v1620, 0.0
  %v1670 = vmax.f32 %v1621, 0.0
  %v1671 = vmax.f32 %v1622, 0.0
  %v1672 = vmax.f32 %v1623, 0.0
  %v1673 = vmax.f32 %v1624, 0.0
  %v1674 = vmax.f32 %v1625, 0.0
  %v1675 = vmax.f32 %v1626, 0.0
  %v1676 = vmax.f32 %v1627, 0.0
  %v1677 = vmax.f32 %v1628, 0.0
  %v1678 = vmax.f32 %v1629, 0.0
  %v1679 = vmax.f32 %v1630, 0.0
  %v1680 = vmax.f32 %v1631, 0.0
  %v1681 = vmax.f32 %v1632, 0.0
  %v1682 = vmax.f32 %v1633, 0.0
  %v1683 = vmax.f32 %v1634, 0.0
  %v1684 = vmax.f32 %v1635, 0.0
  %v1685 = vmax.f32 %v1636, 0.0
  %v1686 = vmax.f32 %v1637, 0.0
  %v1687 = vmax.f32 %v1638, 0.0
  %v1688 = vmax.f32 %v1639, 0.0
  %v1689 = vmax.f32 %v1640, 0.0
  %v1690 = vmax.f32 %v1641, 0.0
  %v1691 = vmax.f32 %v1642, 0.0
  %v1692 = vmax.f32 %v1643, 0.0
  %v1693 = vmax.f32 %v1644, 0.0
  %v1694 = vmax.f32 %v1645, 0.0
  %v1695 = vmax.f32 %v1646, 0.0
  %v1696 = vmax.f32 %v1647, 0.0
  %v1697 = vmax.f32 %v1648, 0.0
  %vm1698 = vcmask 261120
  %v1699 = vsel %vm1698, %v1649, 0.0
  %v1700 = vsel %vm1698, %v1650, 0.0
  %v1701 = vadd.f32 %v1699, %v1700
  %v1702 = vsel %vm1698, %v1651, 0.0
  %v1703 = vadd.f32 %v1701, %v1702
  %v1704 = vsel %vm1698, %v1652, 0.0
  %v1705 = vadd.f32 %v1703, %v1704
  %v1706 = vsel %vm1698, %v1653, 0.0
  %v1707 = vadd.f32 %v1705, %v1706
  %v1708 = vsel %vm1698, %v1654, 0.0
  %v1709 = vadd.f32 %v1707, %v1708
  %v1710 = vsel %vm1698, %v1655, 0.0
  %v1711 = vadd.f32 %v1709, %v1710
  %v1712 = vsel %vm1698, %v1656, 0.0
  %v1713 = vadd.f32 %v1711, %v1712
  %v1714 = vsel %vm1698, %v1657, 0.0
  %v1715 = vadd.f32 %v1713, %v1714
  %v1716 = vsel %vm1698, %v1658, 0.0
  %v1717 = vadd.f32 %v1715, %v1716
  %v1718 = vsel %vm1698, %v1659, 0.0
  %v1719 = vadd.f32 %v1717, %v1718
  %v1720 = vsel %vm1698, %v1660, 0.0
  %v1721 = vadd.f32 %v1719, %v1720
  %v1722 = vsel %vm1698, %v1661, 0.0
  %v1723 = vadd.f32 %v1721, %v1722
  %v1724 = vsel %vm1698, %v1662, 0.0
  %v1725 = vadd.f32 %v1723, %v1724
  %v1726 = vsel %vm1698, %v1663, 0.0
  %v1727 = vadd.f32 %v1725, %v1726
  %v1728 = vsel %vm1698, %v1664, 0.0
  %v1729 = vadd.f32 %v1727, %v1728
  %v1730 = vsel %vm1698, %v1665, 0.0
  %v1731 = vadd.f32 %v1729, %v1730
  %v1732 = vsel %vm1698, %v1666, 0.0
  %v1733 = vadd.f32 %v1731, %v1732
  %v1734 = vsel %vm1698, %v1667, 0.0
  %v1735 = vadd.f32 %v1733, %v1734
  %v1736 = vsel %vm1698, %v1668, 0.0
  %v1737 = vadd.f32 %v1735, %v1736
  %v1738 = vsel %vm1698, %v1669, 0.0
  %v1739 = vadd.f32 %v1737, %v1738
  %v1740 = vsel %vm1698, %v1670, 0.0
  %v1741 = vadd.f32 %v1739, %v1740
  %v1742 = vsel %vm1698, %v1671, 0.0
  %v1743 = vadd.f32 %v1741, %v1742
  %v1744 = vsel %vm1698, %v1672, 0.0
  %v1745 = vadd.f32 %v1743, %v1744
  %v1746 = vsel %vm1698, %v1673, 0.0
  %v1747 = vadd.f32 %v1745, %v1746
  %v1748 = vsel %vm1698, %v1674, 0.0
  %v1749 = vadd.f32 %v1747, %v1748
  %v1750 = vsel %vm1698, %v1675, 0.0
  %v1751 = vadd.f32 %v1749, %v1750
  %v1752 = vsel %vm1698, %v1676, 0.0
  %v1753 = vadd.f32 %v1751, %v1752
  %v1754 = vsel %vm1698, %v1677, 0.0
  %v1755 = vadd.f32 %v1753, %v1754
  %v1756 = vsel %vm1698, %v1678, 0.0
  %v1757 = vadd.f32 %v1755, %v1756
  %v1758 = vsel %vm1698, %v1679, 0.0
  %v1759 = vadd.f32 %v1757, %v1758
  %v1760 = vsel %vm1698, %v1680, 0.0
  %v1761 = vadd.f32 %v1759, %v1760
  %v1762 = vsel %vm1698, %v1681, 0.0
  %v1763 = vadd.f32 %v1761, %v1762
  %v1764 = vsel %vm1698, %v1682, 0.0
  %v1765 = vadd.f32 %v1763, %v1764
  %v1766 = vsel %vm1698, %v1683, 0.0
  %v1767 = vadd.f32 %v1765, %v1766
  %v1768 = vsel %vm1698, %v1684, 0.0
  %v1769 = vadd.f32 %v1767, %v1768
  %v1770 = vsel %vm1698, %v1685, 0.0
  %v1771 = vadd.f32 %v1769, %v1770
  %v1772 = vsel %vm1698, %v1686, 0.0
  %v1773 = vadd.f32 %v1771, %v1772
  %v1774 = vsel %vm1698, %v1687, 0.0
  %v1775 = vadd.f32 %v1773, %v1774
  %v1776 = vsel %vm1698, %v1688, 0.0
  %v1777 = vadd.f32 %v1775, %v1776
  %v1778 = vsel %vm1698, %v1689, 0.0
  %v1779 = vadd.f32 %v1777, %v1778
  %v1780 = vsel %vm1698, %v1690, 0.0
  %v1781 = vadd.f32 %v1779, %v1780
  %v1782 = vsel %vm1698, %v1691, 0.0
  %v1783 = vadd.f32 %v1781, %v1782
  %v1784 = vsel %vm1698, %v1692, 0.0
  %v1785 = vadd.f32 %v1783, %v1784
  %v1786 = vsel %vm1698, %v1693, 0.0
  %v1787 = vadd.f32 %v1785, %v1786
  %v1788 = vsel %vm1698, %v1694, 0.0
  %v1789 = vadd.f32 %v1787, %v1788
  %v1790 = vsel %vm1698, %v1695, 0.0
  %v1791 = vadd.f32 %v1789, %v1790
  %v1792 = vsel %vm1698, %v1696, 0.0
  %v1793 = vadd.f32 %v1791, %v1792
  %v1794 = vsel %vm1698, %v1697, 0.0
  %v1795 = vadd.f32 %v1793, %v1794
  %v1796 = vrcp.pop 49.0
  %v1797 = vmul.f32 %v1795, %v1796
  %v1798 = vld [vmem:[%s5] sm:$0xff]
  %v1799 = vld [vmem:[%s5 + $0x8] sm:$0xff]
  %v1800 = vld [vmem:[%s5 + $0x10] sm:$0xff]
  %v1801 = vld [vmem:[%s5 + $0x18] sm:$0xff]
  %s1802 = scalar_lea.vmem %s5, 32
  %v1803 = vld [vmem:[%s1802] sm:$0xff]
  %v1804 = vld [vmem:[%s1802 + $0x8] sm:$0xff]
  %v1805 = vld [vmem:[%s1802 + $0x10] sm:$0xff]
  %v1806 = vld [vmem:[%s1802 + $0x18] sm:$0xff]
  %v1808 = vsel %vm1698, %v1650, 0
  %1810 = vmatprep.subr.mxu0 0.0
  %1811 = vmatpush1.msra.mxu0 %v1803
  %1812 = vmatprep.subr.mxu0 0.0
  %1813 = vmatpush1.msra.mxu0 %v1804
  %1814 = vmatprep.subr.mxu0 0.0
  %1815 = vmatpush1.msra.mxu0 %v1805
  %1816 = vmatprep.subr.mxu0 0.0
  %1817 = vmatpush1.msra.mxu0 %v1806
  %1818 = vmatprep.subr.mxu0 0.0
  %1819 = vmatpush1.msra.mxu0 0.0
  %1820 = vmatprep.subr.mxu0 0.0
  %1821 = vmatpush1.msra.mxu0 0.0
  %1822 = vmatprep.subr.mxu0 0.0
  %1823 = vmatpush1.msra.mxu0 0.0
  %1824 = vmatprep.subr.mxu0 0.0
  %1825 = vmatpush1.msra.mxu0 0.0
  %1826 = vmatprep.subr.mxu0 0.0
  %1827 = vmatpush1.msra.mxu0 0.0
  %1828 = vmatprep.subr.mxu0 0.0
  %1829 = vmatpush1.msra.mxu0 0.0
  %1830 = vmatprep.subr.mxu0 0.0
  %1831 = vmatpush1.msra.mxu0 0.0
  %1832 = vmatprep.subr.mxu0 0.0
  %1833 = vmatpush1.msra.mxu0 0.0
  %1834 = vmatprep.subr.mxu0 0.0
  %1835 = vmatpush1.msra.mxu0 0.0
  %1836 = vmatprep.subr.mxu0 0.0
  %1837 = vmatpush1.msra.mxu0 0.0
  %1838 = vmatprep.subr.mxu0 0.0
  %1839 = vmatpush1.msra.mxu0 0.0
  %1840 = vmatprep.subr.mxu0 0.0
  %1841 = vmatpush1.msra.mxu0 0.0
  %1842 = vmatprep.subr.mxu0 0.0
  %1843 = vmatpush1.msra.mxu0 0.0
  %1844 = vmatprep.subr.mxu0 0.0
  %1845 = vmatpush1.msra.mxu0 0.0
  %1846 = vmatprep.subr.mxu0 0.0
  %1847 = vmatpush1.msra.mxu0 0.0
  %1848 = vmatprep.subr.mxu0 0.0
  %1849 = vmatpush1.msra.mxu0 0.0
  %1850 = vmatprep.subr.mxu0 0.0
  %1851 = vmatpush1.msra.mxu0 0.0
  %1852 = vmatprep.subr.mxu0 0.0
  %1853 = vmatpush1.msra.mxu0 0.0
  %1854 = vmatprep.subr.mxu0 0.0
  %1855 = vmatpush1.msra.mxu0 0.0
  %1856 = vmatprep.subr.mxu0 0.0
  %1857 = vmatpush1.msra.mxu0 0.0
  %1858 = vmatprep.subr.mxu0 0.0
  %1859 = vmatpush1.msra.mxu0 0.0
  %1860 = vmatprep.subr.mxu0 0.0
  %1861 = vmatpush1.msra.mxu0 0.0
  %1862 = vmatprep.subr.mxu0 0.0
  %1863 = vmatpush1.msra.mxu0 0.0
  %1864 = vmatprep.subr.mxu0 0.0
  %1865 = vmatpush1.msra.mxu0 0.0
  %1866 = vmatprep.subr.mxu0 0.0
  %1867 = vmatpush1.msra.mxu0 0.0
  %1868 = vmatprep.subr.mxu0 0.0
  %1869 = vmatpush1.msra.mxu0 0.0
  %1870 = vmatprep.subr.mxu0 0.0
  %1871 = vmatpush1.msra.mxu0 0.0
  %1872 = vmatprep.subr.mxu0 0.0
  %1873 = vmatpush1.msra.mxu0 0.0
  %1874 = vmatprep.mubr.f32.mxu0 0.0
  %1875 = vmatmul.mubr.f32.gmra.mrb[0].mxu0 %v1808
  %v1876 = vpop.f32.mrb[0].mxu0
  %v1877 = vadd.f32 0.0, %v1876
  %v1878 = vpop.f32.mrb[0].mxu0
  %1879 = vdwg.mxu0
  %v1881 = vsel %vm1698, %v1649, 0
  %1883 = vmatprep.subr.mxu0 0.0
  %1884 = vmatpush1.msra.mxu0 %v1798
  %1885 = vmatprep.subr.mxu0 0.0
  %1886 = vmatpush1.msra.mxu0 %v1799
  %1887 = vmatprep.subr.mxu0 0.0
  %1888 = vmatpush1.msra.mxu0 %v1800
  %1889 = vmatprep.subr.mxu0 0.0
  %1890 = vmatpush1.msra.mxu0 %v1801
  %1891 = vmatprep.subr.mxu0 0.0
  %1892 = vmatpush1.msra.mxu0 0.0
  %1893 = vmatprep.subr.mxu0 0.0
  %1894 = vmatpush1.msra.mxu0 0.0
  %1895 = vmatprep.subr.mxu0 0.0
  %1896 = vmatpush1.msra.mxu0 0.0
  %1897 = vmatprep.subr.mxu0 0.0
  %1898 = vmatpush1.msra.mxu0 0.0
  %1899 = vmatprep.subr.mxu0 0.0
  %1900 = vmatpush1.msra.mxu0 0.0
  %1901 = vmatprep.subr.mxu0 0.0
  %1902 = vmatpush1.msra.mxu0 0.0
  %1903 = vmatprep.subr.mxu0 0.0
  %1904 = vmatpush1.msra.mxu0 0.0
  %1905 = vmatprep.subr.mxu0 0.0
  %1906 = vmatpush1.msra.mxu0 0.0
  %1907 = vmatprep.subr.mxu0 0.0
  %1908 = vmatpush1.msra.mxu0 0.0
  %1909 = vmatprep.subr.mxu0 0.0
  %1910 = vmatpush1.msra.mxu0 0.0
  %1911 = vmatprep.subr.mxu0 0.0
  %1912 = vmatpush1.msra.mxu0 0.0
  %1913 = vmatprep.subr.mxu0 0.0
  %1914 = vmatpush1.msra.mxu0 0.0
  %1915 = vmatprep.subr.mxu0 0.0
  %1916 = vmatpush1.msra.mxu0 0.0
  %1917 = vmatprep.subr.mxu0 0.0
  %1918 = vmatpush1.msra.mxu0 0.0
  %1919 = vmatprep.subr.mxu0 0.0
  %1920 = vmatpush1.msra.mxu0 0.0
  %1921 = vmatprep.subr.mxu0 0.0
  %1922 = vmatpush1.msra.mxu0 0.0
  %1923 = vmatprep.subr.mxu0 0.0
  %1924 = vmatpush1.msra.mxu0 0.0
  %1925 = vmatprep.subr.mxu0 0.0
  %1926 = vmatpush1.msra.mxu0 0.0
  %1927 = vmatprep.subr.mxu0 0.0
  %1928 = vmatpush1.msra.mxu0 0.0
  %1929 = vmatprep.subr.mxu0 0.0
  %1930 = vmatpush1.msra.mxu0 0.0
  %1931 = vmatprep.subr.mxu0 0.0
  %1932 = vmatpush1.msra.mxu0 0.0
  %1933 = vmatprep.subr.mxu0 0.0
  %1934 = vmatpush1.msra.mxu0 0.0
  %1935 = vmatprep.subr.mxu0 0.0
  %1936 = vmatpush1.msra.mxu0 0.0
  %1937 = vmatprep.subr.mxu0 0.0
  %1938 = vmatpush1.msra.mxu0 0.0
  %1939 = vmatprep.subr.mxu0 0.0
  %1940 = vmatpush1.msra.mxu0 0.0
  %1941 = vmatprep.subr.mxu0 0.0
  %1942 = vmatpush1.msra.mxu0 0.0
  %1943 = vmatprep.subr.mxu0 0.0
  %1944 = vmatpush1.msra.mxu0 0.0
  %1945 = vmatprep.subr.mxu0 0.0
  %1946 = vmatpush1.msra.mxu0 0.0
  %1947 = vmatprep.mubr.f32.mxu0 0.0
  %1948 = vmatmul.mubr.f32.gmra.mrb[0].mxu0 %v1881
  %v1949 = vpop.f32.mrb[0].mxu0
  %v1950 = vadd.f32 %v1877, %v1949
  %v1951 = vpop.f32.mrb[0].mxu0
  %1952 = vdwg.mxu0
  %s1953 = scalar_lea.vmem %s5, 64
  %v1954 = vld [vmem:[%s1953] sm:$0xff]
  %v1955 = vld [vmem:[%s1953 + $0x8] sm:$0xff]
  %v1956 = vld [vmem:[%s1953 + $0x10] sm:$0xff]
  %v1957 = vld [vmem:[%s1953 + $0x18] sm:$0xff]
  %v1959 = vsel %vm1698, %v1651, 0
  %1961 = vmatprep.subr.mxu0 0.0
  %1962 = vmatpush1.msra.mxu0 %v1954
  %1963 = vmatprep.subr.mxu0 0.0
  %1964 = vmatpush1.msra.mxu0 %v1955
  %1965 = vmatprep.subr.mxu0 0.0
  %1966 = vmatpush1.msra.mxu0 %v1956
  %1967 = vmatprep.subr.mxu0 0.0
  %1968 = vmatpush1.msra.mxu0 %v1957
  %1969 = vmatprep.subr.mxu0 0.0
  %1970 = vmatpush1.msra.mxu0 0.0
  %1971 = vmatprep.subr.mxu0 0.0
  %1972 = vmatpush1.msra.mxu0 0.0
  %1973 = vmatprep.subr.mxu0 0.0
  %1974 = vmatpush1.msra.mxu0 0.0
  %1975 = vmatprep.subr.mxu0 0.0
  %1976 = vmatpush1.msra.mxu0 0.0
  %1977 = vmatprep.subr.mxu0 0.0
  %1978 = vmatpush1.msra.mxu0 0.0
  %1979 = vmatprep.subr.mxu0 0.0
  %1980 = vmatpush1.msra.mxu0 0.0
  %1981 = vmatprep.subr.mxu0 0.0
  %1982 = vmatpush1.msra.mxu0 0.0
  %1983 = vmatprep.subr.mxu0 0.0
  %1984 = vmatpush1.msra.mxu0 0.0
  %1985 = vmatprep.subr.mxu0 0.0
  %1986 = vmatpush1.msra.mxu0 0.0
  %1987 = vmatprep.subr.mxu0 0.0
  %1988 = vmatpush1.msra.mxu0 0.0
  %1989 = vmatprep.subr.mxu0 0.0
  %1990 = vmatpush1.msra.mxu0 0.0
  %1991 = vmatprep.subr.mxu0 0.0
  %1992 = vmatpush1.msra.mxu0 0.0
  %1993 = vmatprep.subr.mxu0 0.0
  %1994 = vmatpush1.msra.mxu0 0.0
  %1995 = vmatprep.subr.mxu0 0.0
  %1996 = vmatpush1.msra.mxu0 0.0
  %1997 = vmatprep.subr.mxu0 0.0
  %1998 = vmatpush1.msra.mxu0 0.0
  %1999 = vmatprep.subr.mxu0 0.0
  %2000 = vmatpush1.msra.mxu0 0.0
  %2001 = vmatprep.subr.mxu0 0.0
  %2002 = vmatpush1.msra.mxu0 0.0
  %2003 = vmatprep.subr.mxu0 0.0
  %2004 = vmatpush1.msra.mxu0 0.0
  %2005 = vmatprep.subr.mxu0 0.0
  %2006 = vmatpush1.msra.mxu0 0.0
  %2007 = vmatprep.subr.mxu0 0.0
  %2008 = vmatpush1.msra.mxu0 0.0
  %2009 = vmatprep.subr.mxu0 0.0
  %2010 = vmatpush1.msra.mxu0 0.0
  %2011 = vmatprep.subr.mxu0 0.0
  %2012 = vmatpush1.msra.mxu0 0.0
  %2013 = vmatprep.subr.mxu0 0.0
  %2014 = vmatpush1.msra.mxu0 0.0
  %2015 = vmatprep.subr.mxu0 0.0
  %2016 = vmatpush1.msra.mxu0 0.0
  %2017 = vmatprep.subr.mxu0 0.0
  %2018 = vmatpush1.msra.mxu0 0.0
  %2019 = vmatprep.subr.mxu0 0.0
  %2020 = vmatpush1.msra.mxu0 0.0
  %2021 = vmatprep.subr.mxu0 0.0
  %2022 = vmatpush1.msra.mxu0 0.0
  %2023 = vmatprep.subr.mxu0 0.0
  %2024 = vmatpush1.msra.mxu0 0.0
  %2025 = vmatprep.mubr.f32.mxu0 0.0
  %2026 = vmatmul.mubr.f32.gmra.mrb[0].mxu0 %v1959
  %v2027 = vpop.f32.mrb[0].mxu0
  %v2028 = vadd.f32 0.0, %v2027
  %v2029 = vpop.f32.mrb[0].mxu0
  %2030 = vdwg.mxu0
  %v2031 = vadd.f32 %v1950, %v2028
  %s2032 = scalar_lea.vmem %s5, 96
  %v2033 = vld [vmem:[%s2032] sm:$0xff]
  %v2034 = vld [vmem:[%s2032 + $0x8] sm:$0xff]
  %v2035 = vld [vmem:[%s2032 + $0x10] sm:$0xff]
  %v2036 = vld [vmem:[%s2032 + $0x18] sm:$0xff]
  %v2038 = vsel %vm1698, %v1652, 0
  %2040 = vmatprep.subr.mxu0 0.0
  %2041 = vmatpush1.msra.mxu0 %v2033
  %2042 = vmatprep.subr.mxu0 0.0
  %2043 = vmatpush1.msra.mxu0 %v2034
  %2044 = vmatprep.subr.mxu0 0.0
  %2045 = vmatpush1.msra.mxu0 %v2035
  %2046 = vmatprep.subr.mxu0 0.0
  %2047 = vmatpush1.msra.mxu0 %v2036
  %2048 = vmatprep.subr.mxu0 0.0
  %2049 = vmatpush1.msra.mxu0 0.0
  %2050 = vmatprep.subr.mxu0 0.0
  %2051 = vmatpush1.msra.mxu0 0.0
  %2052 = vmatprep.subr.mxu0 0.0
  %2053 = vmatpush1.msra.mxu0 0.0
  %2054 = vmatprep.subr.mxu0 0.0
  %2055 = vmatpush1.msra.mxu0 0.0
  %2056 = vmatprep.subr.mxu0 0.0
  %2057 = vmatpush1.msra.mxu0 0.0
  %2058 = vmatprep.subr.mxu0 0.0
  %2059 = vmatpush1.msra.mxu0 0.0
  %2060 = vmatprep.subr.mxu0 0.0
  %2061 = vmatpush1.msra.mxu0 0.0
  %2062 = vmatprep.subr.mxu0 0.0
  %2063 = vmatpush1.msra.mxu0 0.0
  %2064 = vmatprep.subr.mxu0 0.0
  %2065 = vmatpush1.msra.mxu0 0.0
  %2066 = vmatprep.subr.mxu0 0.0
  %2067 = vmatpush1.msra.mxu0 0.0
  %2068 = vmatprep.subr.mxu0 0.0
  %2069 = vmatpush1.msra.mxu0 0.0
  %2070 = vmatprep.subr.mxu0 0.0
  %2071 = vmatpush1.msra.mxu0 0.0
  %2072 = vmatprep.subr.mxu0 0.0
  %2073 = vmatpush1.msra.mxu0 0.0
  %2074 = vmatprep.subr.mxu0 0.0
  %2075 = vmatpush1.msra.mxu0 0.0
  %2076 = vmatprep.subr.mxu0 0.0
  %2077 = vmatpush1.msra.mxu0 0.0
  %2078 = vmatprep.subr.mxu0 0.0
  %2079 = vmatpush1.msra.mxu0 0.0
  %2080 = vmatprep.subr.mxu0 0.0
  %2081 = vmatpush1.msra.mxu0 0.0
  %2082 = vmatprep.subr.mxu0 0.0
  %2083 = vmatpush1.msra.mxu0 0.0
  %2084 = vmatprep.subr.mxu0 0.0
  %2085 = vmatpush1.msra.mxu0 0.0
  %2086 = vmatprep.subr.mxu0 0.0
  %2087 = vmatpush1.msra.mxu0 0.0
  %2088 = vmatprep.subr.mxu0 0.0
  %2089 = vmatpush1.msra.mxu0 0.0
  %2090 = vmatprep.subr.mxu0 0.0
  %2091 = vmatpush1.msra.mxu0 0.0
  %2092 = vmatprep.subr.mxu0 0.0
  %2093 = vmatpush1.msra.mxu0 0.0
  %2094 = vmatprep.subr.mxu0 0.0
  %2095 = vmatpush1.msra.mxu0 0.0
  %2096 = vmatprep.subr.mxu0 0.0
  %2097 = vmatpush1.msra.mxu0 0.0
  %2098 = vmatprep.subr.mxu0 0.0
  %2099 = vmatpush1.msra.mxu0 0.0
  %2100 = vmatprep.subr.mxu0 0.0
  %2101 = vmatpush1.msra.mxu0 0.0
  %2102 = vmatprep.subr.mxu0 0.0
  %2103 = vmatpush1.msra.mxu0 0.0
  %2104 = vmatprep.mubr.f32.mxu0 0.0
  %2105 = vmatmul.mubr.f32.gmra.mrb[0].mxu0 %v2038
  %v2106 = vpop.f32.mrb[0].mxu0
  %v2107 = vadd.f32 0.0, %v2106
  %v2108 = vpop.f32.mrb[0].mxu0
  %2109 = vdwg.mxu0
  %v2110 = vadd.f32 %v2031, %v2107
  %s2111 = scalar_lea.vmem %s5, 128
  %v2112 = vld [vmem:[%s2111] sm:$0xff]
  %v2113 = vld [vmem:[%s2111 + $0x8] sm:$0xff]
  %v2114 = vld [vmem:[%s2111 + $0x10] sm:$0xff]
  %v2115 = vld [vmem:[%s2111 + $0x18] sm:$0xff]
  %v2117 = vsel %vm1698, %v1653, 0
  %2119 = vmatprep.subr.mxu0 0.0
  %2120 = vmatpush1.msra.mxu0 %v2112
  %2121 = vmatprep.subr.mxu0 0.0
  %2122 = vmatpush1.msra.mxu0 %v2113
  %2123 = vmatprep.subr.mxu0 0.0
  %2124 = vmatpush1.msra.mxu0 %v2114
  %2125 = vmatprep.subr.mxu0 0.0
  %2126 = vmatpush1.msra.mxu0 %v2115
  %2127 = vmatprep.subr.mxu0 0.0
  %2128 = vmatpush1.msra.mxu0 0.0
  %2129 = vmatprep.subr.mxu0 0.0
  %2130 = vmatpush1.msra.mxu0 0.0
  %2131 = vmatprep.subr.mxu0 0.0
  %2132 = vmatpush1.msra.mxu0 0.0
  %2133 = vmatprep.subr.mxu0 0.0
  %2134 = vmatpush1.msra.mxu0 0.0
  %2135 = vmatprep.subr.mxu0 0.0
  %2136 = vmatpush1.msra.mxu0 0.0
  %2137 = vmatprep.subr.mxu0 0.0
  %2138 = vmatpush1.msra.mxu0 0.0
  %2139 = vmatprep.subr.mxu0 0.0
  %2140 = vmatpush1.msra.mxu0 0.0
  %2141 = vmatprep.subr.mxu0 0.0
  %2142 = vmatpush1.msra.mxu0 0.0
  %2143 = vmatprep.subr.mxu0 0.0
  %2144 = vmatpush1.msra.mxu0 0.0
  %2145 = vmatprep.subr.mxu0 0.0
  %2146 = vmatpush1.msra.mxu0 0.0
  %2147 = vmatprep.subr.mxu0 0.0
  %2148 = vmatpush1.msra.mxu0 0.0
  %2149 = vmatprep.subr.mxu0 0.0
  %2150 = vmatpush1.msra.mxu0 0.0
  %2151 = vmatprep.subr.mxu0 0.0
  %2152 = vmatpush1.msra.mxu0 0.0
  %2153 = vmatprep.subr.mxu0 0.0
  %2154 = vmatpush1.msra.mxu0 0.0
  %2155 = vmatprep.subr.mxu0 0.0
  %2156 = vmatpush1.msra.mxu0 0.0
  %2157 = vmatprep.subr.mxu0 0.0
  %2158 = vmatpush1.msra.mxu0 0.0
  %2159 = vmatprep.subr.mxu0 0.0
  %2160 = vmatpush1.msra.mxu0 0.0
  %2161 = vmatprep.subr.mxu0 0.0
  %2162 = vmatpush1.msra.mxu0 0.0
  %2163 = vmatprep.subr.mxu0 0.0
  %2164 = vmatpush1.msra.mxu0 0.0
  %2165 = vmatprep.subr.mxu0 0.0
  %2166 = vmatpush1.msra.mxu0 0.0
  %2167 = vmatprep.subr.mxu0 0.0
  %2168 = vmatpush1.msra.mxu0 0.0
  %2169 = vmatprep.subr.mxu0 0.0
  %2170 = vmatpush1.msra.mxu0 0.0
  %2171 = vmatprep.subr.mxu0 0.0
  %2172 = vmatpush1.msra.mxu0 0.0
  %2173 = vmatprep.subr.mxu0 0.0
  %2174 = vmatpush1.msra.mxu0 0.0
  %2175 = vmatprep.subr.mxu0 0.0
  %2176 = vmatpush1.msra.mxu0 0.0
  %2177 = vmatprep.subr.mxu0 0.0
  %2178 = vmatpush1.msra.mxu0 0.0
  %2179 = vmatprep.subr.mxu0 0.0
  %2180 = vmatpush1.msra.mxu0 0.0
  %2181 = vmatprep.subr.mxu0 0.0
  %2182 = vmatpush1.msra.mxu0 0.0
  %2183 = vmatprep.mubr.f32.mxu0 0.0
  %2184 = vmatmul.mubr.f32.gmra.mrb[0].mxu0 %v2117
  %v2185 = vpop.f32.mrb[0].mxu0
  %v2186 = vadd.f32 0.0, %v2185
  %v2187 = vpop.f32.mrb[0].mxu0
  %2188 = vdwg.mxu0
  %v2189 = vadd.f32 %v2110, %v2186
  %s2190 = scalar_lea.vmem %s5, 160
  %v2191 = vld [vmem:[%s2190] sm:$0xff]
  %v2192 = vld [vmem:[%s2190 + $0x8] sm:$0xff]
  %v2193 = vld [vmem:[%s2190 + $0x10] sm:$0xff]
  %v2194 = vld [vmem:[%s2190 + $0x18] sm:$0xff]
  %v2196 = vsel %vm1698, %v1654, 0
  %2198 = vmatprep.subr.mxu0 0.0
  %2199 = vmatpush1.msra.mxu0 %v2191
  %2200 = vmatprep.subr.mxu0 0.0
  %2201 = vmatpush1.msra.mxu0 %v2192
  %2202 = vmatprep.subr.mxu0 0.0
  %2203 = vmatpush1.msra.mxu0 %v2193
  %2204 = vmatprep.subr.mxu0 0.0
  %2205 = vmatpush1.msra.mxu0 %v2194
  %2206 = vmatprep.subr.mxu0 0.0
  %2207 = vmatpush1.msra.mxu0 0.0
  %2208 = vmatprep.subr.mxu0 0.0
  %2209 = vmatpush1.msra.mxu0 0.0
  %2210 = vmatprep.subr.mxu0 0.0
  %2211 = vmatpush1.msra.mxu0 0.0
  %2212 = vmatprep.subr.mxu0 0.0
  %2213 = vmatpush1.msra.mxu0 0.0
  %2214 = vmatprep.subr.mxu0 0.0
  %2215 = vmatpush1.msra.mxu0 0.0
  %2216 = vmatprep.subr.mxu0 0.0
  %2217 = vmatpush1.msra.mxu0 0.0
  %2218 = vmatprep.subr.mxu0 0.0
  %2219 = vmatpush1.msra.mxu0 0.0
  %2220 = vmatprep.subr.mxu0 0.0
  %2221 = vmatpush1.msra.mxu0 0.0
  %2222 = vmatprep.subr.mxu0 0.0
  %2223 = vmatpush1.msra.mxu0 0.0
  %2224 = vmatprep.subr.mxu0 0.0
  %2225 = vmatpush1.msra.mxu0 0.0
  %2226 = vmatprep.subr.mxu0 0.0
  %2227 = vmatpush1.msra.mxu0 0.0
  %2228 = vmatprep.subr.mxu0 0.0
  %2229 = vmatpush1.msra.mxu0 0.0
  %2230 = vmatprep.subr.mxu0 0.0
  %2231 = vmatpush1.msra.mxu0 0.0
  %2232 = vmatprep.subr.mxu0 0.0
  %2233 = vmatpush1.msra.mxu0 0.0
  %2234 = vmatprep.subr.mxu0 0.0
  %2235 = vmatpush1.msra.mxu0 0.0
  %2236 = vmatprep.subr.mxu0 0.0
  %2237 = vmatpush1.msra.mxu0 0.0
  %2238 = vmatprep.subr.mxu0 0.0
  %2239 = vmatpush1.msra.mxu0 0.0
  %2240 = vmatprep.subr.mxu0 0.0
  %2241 = vmatpush1.msra.mxu0 0.0
  %2242 = vmatprep.subr.mxu0 0.0
  %2243 = vmatpush1.msra.mxu0 0.0
  %2244 = vmatprep.subr.mxu0 0.0
  %2245 = vmatpush1.msra.mxu0 0.0
  %2246 = vmatprep.subr.mxu0 0.0
  %2247 = vmatpush1.msra.mxu0 0.0
  %2248 = vmatprep.subr.mxu0 0.0
  %2249 = vmatpush1.msra.mxu0 0.0
  %2250 = vmatprep.subr.mxu0 0.0
  %2251 = vmatpush1.msra.mxu0 0.0
  %2252 = vmatprep.subr.mxu0 0.0
  %2253 = vmatpush1.msra.mxu0 0.0
  %2254 = vmatprep.subr.mxu0 0.0
  %2255 = vmatpush1.msra.mxu0 0.0
  %2256 = vmatprep.subr.mxu0 0.0
  %2257 = vmatpush1.msra.mxu0 0.0
  %2258 = vmatprep.subr.mxu0 0.0
  %2259 = vmatpush1.msra.mxu0 0.0
  %2260 = vmatprep.subr.mxu0 0.0
  %2261 = vmatpush1.msra.mxu0 0.0
  %2262 = vmatprep.mubr.f32.mxu0 0.0
  %2263 = vmatmul.mubr.f32.gmra.mrb[0].mxu0 %v2196
  %v2264 = vpop.f32.mrb[0].mxu0
  %v2265 = vadd.f32 0.0, %v2264
  %v2266 = vpop.f32.mrb[0].mxu0
  %2267 = vdwg.mxu0
  %v2268 = vadd.f32 %v2189, %v2265
  %s2269 = scalar_lea.vmem %s5, 192
  %v2270 = vld [vmem:[%s2269] sm:$0xff]
  %v2271 = vld [vmem:[%s2269 + $0x8] sm:$0xff]
  %v2272 = vld [vmem:[%s2269 + $0x10] sm:$0xff]
  %v2273 = vld [vmem:[%s2269 + $0x18] sm:$0xff]
  %v2275 = vsel %vm1698, %v1655, 0
  %2277 = vmatprep.subr.mxu0 0.0
  %2278 = vmatpush1.msra.mxu0 %v2270
  %2279 = vmatprep.subr.mxu0 0.0
  %2280 = vmatpush1.msra.mxu0 %v2271
  %2281 = vmatprep.subr.mxu0 0.0
  %2282 = vmatpush1.msra.mxu0 %v2272
  %2283 = vmatprep.subr.mxu0 0.0
  %2284 = vmatpush1.msra.mxu0 %v2273
  %2285 = vmatprep.subr.mxu0 0.0
  %2286 = vmatpush1.msra.mxu0 0.0
  %2287 = vmatprep.subr.mxu0 0.0
  %2288 = vmatpush1.msra.mxu0 0.0
  %2289 = vmatprep.subr.mxu0 0.0
  %2290 = vmatpush1.msra.mxu0 0.0
  %2291 = vmatprep.subr.mxu0 0.0
  %2292 = vmatpush1.msra.mxu0 0.0
  %2293 = vmatprep.subr.mxu0 0.0
  %2294 = vmatpush1.msra.mxu0 0.0
  %2295 = vmatprep.subr.mxu0 0.0
  %2296 = vmatpush1.msra.mxu0 0.0
  %2297 = vmatprep.subr.mxu0 0.0
  %2298 = vmatpush1.msra.mxu0 0.0
  %2299 = vmatprep.subr.mxu0 0.0
  %2300 = vmatpush1.msra.mxu0 0.0
  %2301 = vmatprep.subr.mxu0 0.0
  %2302 = vmatpush1.msra.mxu0 0.0
  %2303 = vmatprep.subr.mxu0 0.0
  %2304 = vmatpush1.msra.mxu0 0.0
  %2305 = vmatprep.subr.mxu0 0.0
  %2306 = vmatpush1.msra.mxu0 0.0
  %2307 = vmatprep.subr.mxu0 0.0
  %2308 = vmatpush1.msra.mxu0 0.0
  %2309 = vmatprep.subr.mxu0 0.0
  %2310 = vmatpush1.msra.mxu0 0.0
  %2311 = vmatprep.subr.mxu0 0.0
  %2312 = vmatpush1.msra.mxu0 0.0
  %2313 = vmatprep.subr.mxu0 0.0
  %2314 = vmatpush1.msra.mxu0 0.0
  %2315 = vmatprep.subr.mxu0 0.0
  %2316 = vmatpush1.msra.mxu0 0.0
  %2317 = vmatprep.subr.mxu0 0.0
  %2318 = vmatpush1.msra.mxu0 0.0
  %2319 = vmatprep.subr.mxu0 0.0
  %2320 = vmatpush1.msra.mxu0 0.0
  %2321 = vmatprep.subr.mxu0 0.0
  %2322 = vmatpush1.msra.mxu0 0.0
  %2323 = vmatprep.subr.mxu0 0.0
  %2324 = vmatpush1.msra.mxu0 0.0
  %2325 = vmatprep.subr.mxu0 0.0
  %2326 = vmatpush1.msra.mxu0 0.0
  %2327 = vmatprep.subr.mxu0 0.0
  %2328 = vmatpush1.msra.mxu0 0.0
  %2329 = vmatprep.subr.mxu0 0.0
  %2330 = vmatpush1.msra.mxu0 0.0
  %2331 = vmatprep.subr.mxu0 0.0
  %2332 = vmatpush1.msra.mxu0 0.0
  %2333 = vmatprep.subr.mxu0 0.0
  %2334 = vmatpush1.msra.mxu0 0.0
  %2335 = vmatprep.subr.mxu0 0.0
  %2336 = vmatpush1.msra.mxu0 0.0
  %2337 = vmatprep.subr.mxu0 0.0
  %2338 = vmatpush1.msra.mxu0 0.0
  %2339 = vmatprep.subr.mxu0 0.0
  %2340 = vmatpush1.msra.mxu0 0.0
  %2341 = vmatprep.mubr.f32.mxu0 0.0
  %2342 = vmatmul.mubr.f32.gmra.mrb[0].mxu0 %v2275
  %v2343 = vpop.f32.mrb[0].mxu0
  %v2344 = vadd.f32 0.0, %v2343
  %v2345 = vpop.f32.mrb[0].mxu0
  %2346 = vdwg.mxu0
  %v2347 = vadd.f32 %v2268, %v2344
  %s2348 = scalar_lea.vmem %s5, 224
  %v2349 = vld [vmem:[%s2348] sm:$0xff]
  %v2350 = vld [vmem:[%s2348 + $0x8] sm:$0xff]
  %v2351 = vld [vmem:[%s2348 + $0x10] sm:$0xff]
  %v2352 = vld [vmem:[%s2348 + $0x18] sm:$0xff]
  %v2354 = vsel %vm1698, %v1656, 0
  %2356 = vmatprep.subr.mxu0 0.0
  %2357 = vmatpush1.msra.mxu0 %v2349
  %2358 = vmatprep.subr.mxu0 0.0
  %2359 = vmatpush1.msra.mxu0 %v2350
  %2360 = vmatprep.subr.mxu0 0.0
  %2361 = vmatpush1.msra.mxu0 %v2351
  %2362 = vmatprep.subr.mxu0 0.0
  %2363 = vmatpush1.msra.mxu0 %v2352
  %2364 = vmatprep.subr.mxu0 0.0
  %2365 = vmatpush1.msra.mxu0 0.0
  %2366 = vmatprep.subr.mxu0 0.0
  %2367 = vmatpush1.msra.mxu0 0.0
  %2368 = vmatprep.subr.mxu0 0.0
  %2369 = vmatpush1.msra.mxu0 0.0
  %2370 = vmatprep.subr.mxu0 0.0
  %2371 = vmatpush1.msra.mxu0 0.0
  %2372 = vmatprep.subr.mxu0 0.0
  %2373 = vmatpush1.msra.mxu0 0.0
  %2374 = vmatprep.subr.mxu0 0.0
  %2375 = vmatpush1.msra.mxu0 0.0
  %2376 = vmatprep.subr.mxu0 0.0
  %2377 = vmatpush1.msra.mxu0 0.0
  %2378 = vmatprep.subr.mxu0 0.0
  %2379 = vmatpush1.msra.mxu0 0.0
  %2380 = vmatprep.subr.mxu0 0.0
  %2381 = vmatpush1.msra.mxu0 0.0
  %2382 = vmatprep.subr.mxu0 0.0
  %2383 = vmatpush1.msra.mxu0 0.0
  %2384 = vmatprep.subr.mxu0 0.0
  %2385 = vmatpush1.msra.mxu0 0.0
  %2386 = vmatprep.subr.mxu0 0.0
  %2387 = vmatpush1.msra.mxu0 0.0
  %2388 = vmatprep.subr.mxu0 0.0
  %2389 = vmatpush1.msra.mxu0 0.0
  %2390 = vmatprep.subr.mxu0 0.0
  %2391 = vmatpush1.msra.mxu0 0.0
  %2392 = vmatprep.subr.mxu0 0.0
  %2393 = vmatpush1.msra.mxu0 0.0
  %2394 = vmatprep.subr.mxu0 0.0
  %2395 = vmatpush1.msra.mxu0 0.0
  %2396 = vmatprep.subr.mxu0 0.0
  %2397 = vmatpush1.msra.mxu0 0.0
  %2398 = vmatprep.subr.mxu0 0.0
  %2399 = vmatpush1.msra.mxu0 0.0
  %2400 = vmatprep.subr.mxu0 0.0
  %2401 = vmatpush1.msra.mxu0 0.0
  %2402 = vmatprep.subr.mxu0 0.0
  %2403 = vmatpush1.msra.mxu0 0.0
  %2404 = vmatprep.subr.mxu0 0.0
  %2405 = vmatpush1.msra.mxu0 0.0
  %2406 = vmatprep.subr.mxu0 0.0
  %2407 = vmatpush1.msra.mxu0 0.0
  %2408 = vmatprep.subr.mxu0 0.0
  %2409 = vmatpush1.msra.mxu0 0.0
  %2410 = vmatprep.subr.mxu0 0.0
  %2411 = vmatpush1.msra.mxu0 0.0
  %2412 = vmatprep.subr.mxu0 0.0
  %2413 = vmatpush1.msra.mxu0 0.0
  %2414 = vmatprep.subr.mxu0 0.0
  %2415 = vmatpush1.msra.mxu0 0.0
  %2416 = vmatprep.subr.mxu0 0.0
  %2417 = vmatpush1.msra.mxu0 0.0
  %2418 = vmatprep.subr.mxu0 0.0
  %2419 = vmatpush1.msra.mxu0 0.0
  %2420 = vmatprep.mubr.f32.mxu0 0.0
  %2421 = vmatmul.mubr.f32.gmra.mrb[0].mxu0 %v2354
  %v2422 = vpop.f32.mrb[0].mxu0
  %v2423 = vadd.f32 0.0, %v2422
  %v2424 = vpop.f32.mrb[0].mxu0
  %2425 = vdwg.mxu0
  %v2426 = vadd.f32 %v2347, %v2423
  %s2427 = scalar_lea.vmem %s5, 256
  %v2428 = vld [vmem:[%s2427] sm:$0xff]
  %v2429 = vld [vmem:[%s2427 + $0x8] sm:$0xff]
  %v2430 = vld [vmem:[%s2427 + $0x10] sm:$0xff]
  %v2431 = vld [vmem:[%s2427 + $0x18] sm:$0xff]
  %v2433 = vsel %vm1698, %v1657, 0
  %2435 = vmatprep.subr.mxu0 0.0
  %2436 = vmatpush1.msra.mxu0 %v2428
  %2437 = vmatprep.subr.mxu0 0.0
  %2438 = vmatpush1.msra.mxu0 %v2429
  %2439 = vmatprep.subr.mxu0 0.0
  %2440 = vmatpush1.msra.mxu0 %v2430
  %2441 = vmatprep.subr.mxu0 0.0
  %2442 = vmatpush1.msra.mxu0 %v2431
  %2443 = vmatprep.subr.mxu0 0.0
  %2444 = vmatpush1.msra.mxu0 0.0
  %2445 = vmatprep.subr.mxu0 0.0
  %2446 = vmatpush1.msra.mxu0 0.0
  %2447 = vmatprep.subr.mxu0 0.0
  %2448 = vmatpush1.msra.mxu0 0.0
  %2449 = vmatprep.subr.mxu0 0.0
  %2450 = vmatpush1.msra.mxu0 0.0
  %2451 = vmatprep.subr.mxu0 0.0
  %2452 = vmatpush1.msra.mxu0 0.0
  %2453 = vmatprep.subr.mxu0 0.0
  %2454 = vmatpush1.msra.mxu0 0.0
  %2455 = vmatprep.subr.mxu0 0.0
  %2456 = vmatpush1.msra.mxu0 0.0
  %2457 = vmatprep.subr.mxu0 0.0
  %2458 = vmatpush1.msra.mxu0 0.0
  %2459 = vmatprep.subr.mxu0 0.0
  %2460 = vmatpush1.msra.mxu0 0.0
  %2461 = vmatprep.subr.mxu0 0.0
  %2462 = vmatpush1.msra.mxu0 0.0
  %2463 = vmatprep.subr.mxu0 0.0
  %2464 = vmatpush1.msra.mxu0 0.0
  %2465 = vmatprep.subr.mxu0 0.0
  %2466 = vmatpush1.msra.mxu0 0.0
  %2467 = vmatprep.subr.mxu0 0.0
  %2468 = vmatpush1.msra.mxu0 0.0
  %2469 = vmatprep.subr.mxu0 0.0
  %2470 = vmatpush1.msra.mxu0 0.0
  %2471 = vmatprep.subr.mxu0 0.0
  %2472 = vmatpush1.msra.mxu0 0.0
  %2473 = vmatprep.subr.mxu0 0.0
  %2474 = vmatpush1.msra.mxu0 0.0
  %2475 = vmatprep.subr.mxu0 0.0
  %2476 = vmatpush1.msra.mxu0 0.0
  %2477 = vmatprep.subr.mxu0 0.0
  %2478 = vmatpush1.msra.mxu0 0.0
  %2479 = vmatprep.subr.mxu0 0.0
  %2480 = vmatpush1.msra.mxu0 0.0
  %2481 = vmatprep.subr.mxu0 0.0
  %2482 = vmatpush1.msra.mxu0 0.0
  %2483 = vmatprep.subr.mxu0 0.0
  %2484 = vmatpush1.msra.mxu0 0.0
  %2485 = vmatprep.subr.mxu0 0.0
  %2486 = vmatpush1.msra.mxu0 0.0
  %2487 = vmatprep.subr.mxu0 0.0
  %2488 = vmatpush1.msra.mxu0 0.0
  %2489 = vmatprep.subr.mxu0 0.0
  %2490 = vmatpush1.msra.mxu0 0.0
  %2491 = vmatprep.subr.mxu0 0.0
  %2492 = vmatpush1.msra.mxu0 0.0
  %2493 = vmatprep.subr.mxu0 0.0
  %2494 = vmatpush1.msra.mxu0 0.0
  %2495 = vmatprep.subr.mxu0 0.0
  %2496 = vmatpush1.msra.mxu0 0.0
  %2497 = vmatprep.subr.mxu0 0.0
  %2498 = vmatpush1.msra.mxu0 0.0
  %2499 = vmatprep.mubr.f32.mxu0 0.0
  %2500 = vmatmul.mubr.f32.gmra.mrb[0].mxu0 %v2433
  %v2501 = vpop.f32.mrb[0].mxu0
  %v2502 = vadd.f32 0.0, %v2501
  %v2503 = vpop.f32.mrb[0].mxu0
  %2504 = vdwg.mxu0
  %v2505 = vadd.f32 %v2426, %v2502
  %s2506 = scalar_lea.vmem %s5, 288
  %v2507 = vld [vmem:[%s2506] sm:$0xff]
  %v2508 = vld [vmem:[%s2506 + $0x8] sm:$0xff]
  %v2509 = vld [vmem:[%s2506 + $0x10] sm:$0xff]
  %v2510 = vld [vmem:[%s2506 + $0x18] sm:$0xff]
  %v2512 = vsel %vm1698, %v1658, 0
  %2514 = vmatprep.subr.mxu0 0.0
  %2515 = vmatpush1.msra.mxu0 %v2507
  %2516 = vmatprep.subr.mxu0 0.0
  %2517 = vmatpush1.msra.mxu0 %v2508
  %2518 = vmatprep.subr.mxu0 0.0
  %2519 = vmatpush1.msra.mxu0 %v2509
  %2520 = vmatprep.subr.mxu0 0.0
  %2521 = vmatpush1.msra.mxu0 %v2510
  %2522 = vmatprep.subr.mxu0 0.0
  %2523 = vmatpush1.msra.mxu0 0.0
  %2524 = vmatprep.subr.mxu0 0.0
  %2525 = vmatpush1.msra.mxu0 0.0
  %2526 = vmatprep.subr.mxu0 0.0
  %2527 = vmatpush1.msra.mxu0 0.0
  %2528 = vmatprep.subr.mxu0 0.0
  %2529 = vmatpush1.msra.mxu0 0.0
  %2530 = vmatprep.subr.mxu0 0.0
  %2531 = vmatpush1.msra.mxu0 0.0
  %2532 = vmatprep.subr.mxu0 0.0
  %2533 = vmatpush1.msra.mxu0 0.0
  %2534 = vmatprep.subr.mxu0 0.0
  %2535 = vmatpush1.msra.mxu0 0.0
  %2536 = vmatprep.subr.mxu0 0.0
  %2537 = vmatpush1.msra.mxu0 0.0
  %2538 = vmatprep.subr.mxu0 0.0
  %2539 = vmatpush1.msra.mxu0 0.0
  %2540 = vmatprep.subr.mxu0 0.0
  %2541 = vmatpush1.msra.mxu0 0.0
  %2542 = vmatprep.subr.mxu0 0.0
  %2543 = vmatpush1.msra.mxu0 0.0
  %2544 = vmatprep.subr.mxu0 0.0
  %2545 = vmatpush1.msra.mxu0 0.0
  %2546 = vmatprep.subr.mxu0 0.0
  %2547 = vmatpush1.msra.mxu0 0.0
  %2548 = vmatprep.subr.mxu0 0.0
  %2549 = vmatpush1.msra.mxu0 0.0
  %2550 = vmatprep.subr.mxu0 0.0
  %2551 = vmatpush1.msra.mxu0 0.0
  %2552 = vmatprep.subr.mxu0 0.0
  %2553 = vmatpush1.msra.mxu0 0.0
  %2554 = vmatprep.subr.mxu0 0.0
  %2555 = vmatpush1.msra.mxu0 0.0
  %2556 = vmatprep.subr.mxu0 0.0
  %2557 = vmatpush1.msra.mxu0 0.0
  %2558 = vmatprep.subr.mxu0 0.0
  %2559 = vmatpush1.msra.mxu0 0.0
  %2560 = vmatprep.subr.mxu0 0.0
  %2561 = vmatpush1.msra.mxu0 0.0
  %2562 = vmatprep.subr.mxu0 0.0
  %2563 = vmatpush1.msra.mxu0 0.0
  %2564 = vmatprep.subr.mxu0 0.0
  %2565 = vmatpush1.msra.mxu0 0.0
  %2566 = vmatprep.subr.mxu0 0.0
  %2567 = vmatpush1.msra.mxu0 0.0
  %2568 = vmatprep.subr.mxu0 0.0
  %2569 = vmatpush1.msra.mxu0 0.0
  %2570 = vmatprep.subr.mxu0 0.0
  %2571 = vmatpush1.msra.mxu0 0.0
  %2572 = vmatprep.subr.mxu0 0.0
  %2573 = vmatpush1.msra.mxu0 0.0
  %2574 = vmatprep.subr.mxu0 0.0
  %2575 = vmatpush1.msra.mxu0 0.0
  %2576 = vmatprep.subr.mxu0 0.0
  %2577 = vmatpush1.msra.mxu0 0.0
  %2578 = vmatprep.mubr.f32.mxu0 0.0
  %2579 = vmatmul.mubr.f32.gmra.mrb[0].mxu0 %v2512
  %v2580 = vpop.f32.mrb[0].mxu0
  %v2581 = vadd.f32 0.0, %v2580
  %v2582 = vpop.f32.mrb[0].mxu0
  %2583 = vdwg.mxu0
  %v2584 = vadd.f32 %v2505, %v2581
  %s2585 = scalar_lea.vmem %s5, 320
  %v2586 = vld [vmem:[%s2585] sm:$0xff]
  %v2587 = vld [vmem:[%s2585 + $0x8] sm:$0xff]
  %v2588 = vld [vmem:[%s2585 + $0x10] sm:$0xff]
  %v2589 = vld [vmem:[%s2585 + $0x18] sm:$0xff]
  %v2591 = vsel %vm1698, %v1659, 0
  %2593 = vmatprep.subr.mxu0 0.0
  %2594 = vmatpush1.msra.mxu0 %v2586
  %2595 = vmatprep.subr.mxu0 0.0
  %2596 = vmatpush1.msra.mxu0 %v2587
  %2597 = vmatprep.subr.mxu0 0.0
  %2598 = vmatpush1.msra.mxu0 %v2588
  %2599 = vmatprep.subr.mxu0 0.0
  %2600 = vmatpush1.msra.mxu0 %v2589
  %2601 = vmatprep.subr.mxu0 0.0
  %2602 = vmatpush1.msra.mxu0 0.0
  %2603 = vmatprep.subr.mxu0 0.0
  %2604 = vmatpush1.msra.mxu0 0.0
  %2605 = vmatprep.subr.mxu0 0.0
  %2606 = vmatpush1.msra.mxu0 0.0
  %2607 = vmatprep.subr.mxu0 0.0
  %2608 = vmatpush1.msra.mxu0 0.0
  %2609 = vmatprep.subr.mxu0 0.0
  %2610 = vmatpush1.msra.mxu0 0.0
  %2611 = vmatprep.subr.mxu0 0.0
  %2612 = vmatpush1.msra.mxu0 0.0
  %2613 = vmatprep.subr.mxu0 0.0
  %2614 = vmatpush1.msra.mxu0 0.0
  %2615 = vmatprep.subr.mxu0 0.0
  %2616 = vmatpush1.msra.mxu0 0.0
  %2617 = vmatprep.subr.mxu0 0.0
  %2618 = vmatpush1.msra.mxu0 0.0
  %2619 = vmatprep.subr.mxu0 0.0
  %2620 = vmatpush1.msra.mxu0 0.0
  %2621 = vmatprep.subr.mxu0 0.0
  %2622 = vmatpush1.msra.mxu0 0.0
  %2623 = vmatprep.subr.mxu0 0.0
  %2624 = vmatpush1.msra.mxu0 0.0
  %2625 = vmatprep.subr.mxu0 0.0
  %2626 = vmatpush1.msra.mxu0 0.0
  %2627 = vmatprep.subr.mxu0 0.0
  %2628 = vmatpush1.msra.mxu0 0.0
  %2629 = vmatprep.subr.mxu0 0.0
  %2630 = vmatpush1.msra.mxu0 0.0
  %2631 = vmatprep.subr.mxu0 0.0
  %2632 = vmatpush1.msra.mxu0 0.0
  %2633 = vmatprep.subr.mxu0 0.0
  %2634 = vmatpush1.msra.mxu0 0.0
  %2635 = vmatprep.subr.mxu0 0.0
  %2636 = vmatpush1.msra.mxu0 0.0
  %2637 = vmatprep.subr.mxu0 0.0
  %2638 = vmatpush1.msra.mxu0 0.0
  %2639 = vmatprep.subr.mxu0 0.0
  %2640 = vmatpush1.msra.mxu0 0.0
  %2641 = vmatprep.subr.mxu0 0.0
  %2642 = vmatpush1.msra.mxu0 0.0
  %2643 = vmatprep.subr.mxu0 0.0
  %2644 = vmatpush1.msra.mxu0 0.0
  %2645 = vmatprep.subr.mxu0 0.0
  %2646 = vmatpush1.msra.mxu0 0.0
  %2647 = vmatprep.subr.mxu0 0.0
  %2648 = vmatpush1.msra.mxu0 0.0
  %2649 = vmatprep.subr.mxu0 0.0
  %2650 = vmatpush1.msra.mxu0 0.0
  %2651 = vmatprep.subr.mxu0 0.0
  %2652 = vmatpush1.msra.mxu0 0.0
  %2653 = vmatprep.subr.mxu0 0.0
  %2654 = vmatpush1.msra.mxu0 0.0
  %2655 = vmatprep.subr.mxu0 0.0
  %2656 = vmatpush1.msra.mxu0 0.0
  %2657 = vmatprep.mubr.f32.mxu0 0.0
  %2658 = vmatmul.mubr.f32.gmra.mrb[0].mxu0 %v2591
  %v2659 = vpop.f32.mrb[0].mxu0
  %v2660 = vadd.f32 0.0, %v2659
  %v2661 = vpop.f32.mrb[0].mxu0
  %2662 = vdwg.mxu0
  %v2663 = vadd.f32 %v2584, %v2660
  %s2664 = scalar_lea.vmem %s5, 352
  %v2665 = vld [vmem:[%s2664] sm:$0xff]
  %v2666 = vld [vmem:[%s2664 + $0x8] sm:$0xff]
  %v2667 = vld [vmem:[%s2664 + $0x10] sm:$0xff]
  %v2668 = vld [vmem:[%s2664 + $0x18] sm:$0xff]
  %v2670 = vsel %vm1698, %v1660, 0
  %2672 = vmatprep.subr.mxu0 0.0
  %2673 = vmatpush1.msra.mxu0 %v2665
  %2674 = vmatprep.subr.mxu0 0.0
  %2675 = vmatpush1.msra.mxu0 %v2666
  %2676 = vmatprep.subr.mxu0 0.0
  %2677 = vmatpush1.msra.mxu0 %v2667
  %2678 = vmatprep.subr.mxu0 0.0
  %2679 = vmatpush1.msra.mxu0 %v2668
  %2680 = vmatprep.subr.mxu0 0.0
  %2681 = vmatpush1.msra.mxu0 0.0
  %2682 = vmatprep.subr.mxu0 0.0
  %2683 = vmatpush1.msra.mxu0 0.0
  %2684 = vmatprep.subr.mxu0 0.0
  %2685 = vmatpush1.msra.mxu0 0.0
  %2686 = vmatprep.subr.mxu0 0.0
  %2687 = vmatpush1.msra.mxu0 0.0
  %2688 = vmatprep.subr.mxu0 0.0
  %2689 = vmatpush1.msra.mxu0 0.0
  %2690 = vmatprep.subr.mxu0 0.0
  %2691 = vmatpush1.msra.mxu0 0.0
  %2692 = vmatprep.subr.mxu0 0.0
  %2693 = vmatpush1.msra.mxu0 0.0
  %2694 = vmatprep.subr.mxu0 0.0
  %2695 = vmatpush1.msra.mxu0 0.0
  %2696 = vmatprep.subr.mxu0 0.0
  %2697 = vmatpush1.msra.mxu0 0.0
  %2698 = vmatprep.subr.mxu0 0.0
  %2699 = vmatpush1.msra.mxu0 0.0
  %2700 = vmatprep.subr.mxu0 0.0
  %2701 = vmatpush1.msra.mxu0 0.0
  %2702 = vmatprep.subr.mxu0 0.0
  %2703 = vmatpush1.msra.mxu0 0.0
  %2704 = vmatprep.subr.mxu0 0.0
  %2705 = vmatpush1.msra.mxu0 0.0
  %2706 = vmatprep.subr.mxu0 0.0
  %2707 = vmatpush1.msra.mxu0 0.0
  %2708 = vmatprep.subr.mxu0 0.0
  %2709 = vmatpush1.msra.mxu0 0.0
  %2710 = vmatprep.subr.mxu0 0.0
  %2711 = vmatpush1.msra.mxu0 0.0
  %2712 = vmatprep.subr.mxu0 0.0
  %2713 = vmatpush1.msra.mxu0 0.0
  %2714 = vmatprep.subr.mxu0 0.0
  %2715 = vmatpush1.msra.mxu0 0.0
  %2716 = vmatprep.subr.mxu0 0.0
  %2717 = vmatpush1.msra.mxu0 0.0
  %2718 = vmatprep.subr.mxu0 0.0
  %2719 = vmatpush1.msra.mxu0 0.0
  %2720 = vmatprep.subr.mxu0 0.0
  %2721 = vmatpush1.msra.mxu0 0.0
  %2722 = vmatprep.subr.mxu0 0.0
  %2723 = vmatpush1.msra.mxu0 0.0
  %2724 = vmatprep.subr.mxu0 0.0
  %2725 = vmatpush1.msra.mxu0 0.0
  %2726 = vmatprep.subr.mxu0 0.0
  %2727 = vmatpush1.msra.mxu0 0.0
  %2728 = vmatprep.subr.mxu0 0.0
  %2729 = vmatpush1.msra.mxu0 0.0
  %2730 = vmatprep.subr.mxu0 0.0
  %2731 = vmatpush1.msra.mxu0 0.0
  %2732 = vmatprep.subr.mxu0 0.0
  %2733 = vmatpush1.msra.mxu0 0.0
  %2734 = vmatprep.subr.mxu0 0.0
  %2735 = vmatpush1.msra.mxu0 0.0
  %2736 = vmatprep.mubr.f32.mxu0 0.0
  %2737 = vmatmul.mubr.f32.gmra.mrb[0].mxu0 %v2670
  %v2738 = vpop.f32.mrb[0].mxu0
  %v2739 = vadd.f32 0.0, %v2738
  %v2740 = vpop.f32.mrb[0].mxu0
  %2741 = vdwg.mxu0
  %v2742 = vadd.f32 %v2663, %v2739
  %s2743 = scalar_lea.vmem %s5, 384
  %v2744 = vld [vmem:[%s2743] sm:$0xff]
  %v2745 = vld [vmem:[%s2743 + $0x8] sm:$0xff]
  %v2746 = vld [vmem:[%s2743 + $0x10] sm:$0xff]
  %v2747 = vld [vmem:[%s2743 + $0x18] sm:$0xff]
  %v2749 = vsel %vm1698, %v1661, 0
  %2751 = vmatprep.subr.mxu0 0.0
  %2752 = vmatpush1.msra.mxu0 %v2744
  %2753 = vmatprep.subr.mxu0 0.0
  %2754 = vmatpush1.msra.mxu0 %v2745
  %2755 = vmatprep.subr.mxu0 0.0
  %2756 = vmatpush1.msra.mxu0 %v2746
  %2757 = vmatprep.subr.mxu0 0.0
  %2758 = vmatpush1.msra.mxu0 %v2747
  %2759 = vmatprep.subr.mxu0 0.0
  %2760 = vmatpush1.msra.mxu0 0.0
  %2761 = vmatprep.subr.mxu0 0.0
  %2762 = vmatpush1.msra.mxu0 0.0
  %2763 = vmatprep.subr.mxu0 0.0
  %2764 = vmatpush1.msra.mxu0 0.0
  %2765 = vmatprep.subr.mxu0 0.0
  %2766 = vmatpush1.msra.mxu0 0.0
  %2767 = vmatprep.subr.mxu0 0.0
  %2768 = vmatpush1.msra.mxu0 0.0
  %2769 = vmatprep.subr.mxu0 0.0
  %2770 = vmatpush1.msra.mxu0 0.0
  %2771 = vmatprep.subr.mxu0 0.0
  %2772 = vmatpush1.msra.mxu0 0.0
  %2773 = vmatprep.subr.mxu0 0.0
  %2774 = vmatpush1.msra.mxu0 0.0
  %2775 = vmatprep.subr.mxu0 0.0
  %2776 = vmatpush1.msra.mxu0 0.0
  %2777 = vmatprep.subr.mxu0 0.0
  %2778 = vmatpush1.msra.mxu0 0.0
  %2779 = vmatprep.subr.mxu0 0.0
  %2780 = vmatpush1.msra.mxu0 0.0
  %2781 = vmatprep.subr.mxu0 0.0
  %2782 = vmatpush1.msra.mxu0 0.0
  %2783 = vmatprep.subr.mxu0 0.0
  %2784 = vmatpush1.msra.mxu0 0.0
  %2785 = vmatprep.subr.mxu0 0.0
  %2786 = vmatpush1.msra.mxu0 0.0
  %2787 = vmatprep.subr.mxu0 0.0
  %2788 = vmatpush1.msra.mxu0 0.0
  %2789 = vmatprep.subr.mxu0 0.0
  %2790 = vmatpush1.msra.mxu0 0.0
  %2791 = vmatprep.subr.mxu0 0.0
  %2792 = vmatpush1.msra.mxu0 0.0
  %2793 = vmatprep.subr.mxu0 0.0
  %2794 = vmatpush1.msra.mxu0 0.0
  %2795 = vmatprep.subr.mxu0 0.0
  %2796 = vmatpush1.msra.mxu0 0.0
  %2797 = vmatprep.subr.mxu0 0.0
  %2798 = vmatpush1.msra.mxu0 0.0
  %2799 = vmatprep.subr.mxu0 0.0
  %2800 = vmatpush1.msra.mxu0 0.0
  %2801 = vmatprep.subr.mxu0 0.0
  %2802 = vmatpush1.msra.mxu0 0.0
  %2803 = vmatprep.subr.mxu0 0.0
  %2804 = vmatpush1.msra.mxu0 0.0
  %2805 = vmatprep.subr.mxu0 0.0
  %2806 = vmatpush1.msra.mxu0 0.0
  %2807 = vmatprep.subr.mxu0 0.0
  %2808 = vmatpush1.msra.mxu0 0.0
  %2809 = vmatprep.subr.mxu0 0.0
  %2810 = vmatpush1.msra.mxu0 0.0
  %2811 = vmatprep.subr.mxu0 0.0
  %2812 = vmatpush1.msra.mxu0 0.0
  %2813 = vmatprep.subr.mxu0 0.0
  %2814 = vmatpush1.msra.mxu0 0.0
  %2815 = vmatprep.mubr.f32.mxu0 0.0
  %2816 = vmatmul.mubr.f32.gmra.mrb[0].mxu0 %v2749
  %v2817 = vpop.f32.mrb[0].mxu0
  %v2818 = vadd.f32 0.0, %v2817
  %v2819 = vpop.f32.mrb[0].mxu0
  %2820 = vdwg.mxu0
  %v2821 = vadd.f32 %v2742, %v2818
  %s2822 = scalar_lea.vmem %s5, 416
  %v2823 = vld [vmem:[%s2822] sm:$0xff]
  %v2824 = vld [vmem:[%s2822 + $0x8] sm:$0xff]
  %v2825 = vld [vmem:[%s2822 + $0x10] sm:$0xff]
  %v2826 = vld [vmem:[%s2822 + $0x18] sm:$0xff]
  %v2828 = vsel %vm1698, %v1662, 0
  %2830 = vmatprep.subr.mxu0 0.0
  %2831 = vmatpush1.msra.mxu0 %v2823
  %2832 = vmatprep.subr.mxu0 0.0
  %2833 = vmatpush1.msra.mxu0 %v2824
  %2834 = vmatprep.subr.mxu0 0.0
  %2835 = vmatpush1.msra.mxu0 %v2825
  %2836 = vmatprep.subr.mxu0 0.0
  %2837 = vmatpush1.msra.mxu0 %v2826
  %2838 = vmatprep.subr.mxu0 0.0
  %2839 = vmatpush1.msra.mxu0 0.0
  %2840 = vmatprep.subr.mxu0 0.0
  %2841 = vmatpush1.msra.mxu0 0.0
  %2842 = vmatprep.subr.mxu0 0.0
  %2843 = vmatpush1.msra.mxu0 0.0
  %2844 = vmatprep.subr.mxu0 0.0
  %2845 = vmatpush1.msra.mxu0 0.0
  %2846 = vmatprep.subr.mxu0 0.0
  %2847 = vmatpush1.msra.mxu0 0.0
  %2848 = vmatprep.subr.mxu0 0.0
  %2849 = vmatpush1.msra.mxu0 0.0
  %2850 = vmatprep.subr.mxu0 0.0
  %2851 = vmatpush1.msra.mxu0 0.0
  %2852 = vmatprep.subr.mxu0 0.0
  %2853 = vmatpush1.msra.mxu0 0.0
  %2854 = vmatprep.subr.mxu0 0.0
  %2855 = vmatpush1.msra.mxu0 0.0
  %2856 = vmatprep.subr.mxu0 0.0
  %2857 = vmatpush1.msra.mxu0 0.0
  %2858 = vmatprep.subr.mxu0 0.0
  %2859 = vmatpush1.msra.mxu0 0.0
  %2860 = vmatprep.subr.mxu0 0.0
  %2861 = vmatpush1.msra.mxu0 0.0
  %2862 = vmatprep.subr.mxu0 0.0
  %2863 = vmatpush1.msra.mxu0 0.0
  %2864 = vmatprep.subr.mxu0 0.0
  %2865 = vmatpush1.msra.mxu0 0.0
  %2866 = vmatprep.subr.mxu0 0.0
  %2867 = vmatpush1.msra.mxu0 0.0
  %2868 = vmatprep.subr.mxu0 0.0
  %2869 = vmatpush1.msra.mxu0 0.0
  %2870 = vmatprep.subr.mxu0 0.0
  %2871 = vmatpush1.msra.mxu0 0.0
  %2872 = vmatprep.subr.mxu0 0.0
  %2873 = vmatpush1.msra.mxu0 0.0
  %2874 = vmatprep.subr.mxu0 0.0
  %2875 = vmatpush1.msra.mxu0 0.0
  %2876 = vmatprep.subr.mxu0 0.0
  %2877 = vmatpush1.msra.mxu0 0.0
  %2878 = vmatprep.subr.mxu0 0.0
  %2879 = vmatpush1.msra.mxu0 0.0
  %2880 = vmatprep.subr.mxu0 0.0
  %2881 = vmatpush1.msra.mxu0 0.0
  %2882 = vmatprep.subr.mxu0 0.0
  %2883 = vmatpush1.msra.mxu0 0.0
  %2884 = vmatprep.subr.mxu0 0.0
  %2885 = vmatpush1.msra.mxu0 0.0
  %2886 = vmatprep.subr.mxu0 0.0
  %2887 = vmatpush1.msra.mxu0 0.0
  %2888 = vmatprep.subr.mxu0 0.0
  %2889 = vmatpush1.msra.mxu0 0.0
  %2890 = vmatprep.subr.mxu0 0.0
  %2891 = vmatpush1.msra.mxu0 0.0
  %2892 = vmatprep.subr.mxu0 0.0
  %2893 = vmatpush1.msra.mxu0 0.0
  %2894 = vmatprep.mubr.f32.mxu0 0.0
  %2895 = vmatmul.mubr.f32.gmra.mrb[0].mxu0 %v2828
  %v2896 = vpop.f32.mrb[0].mxu0
  %v2897 = vadd.f32 0.0, %v2896
  %v2898 = vpop.f32.mrb[0].mxu0
  %2899 = vdwg.mxu0
  %v2900 = vadd.f32 %v2821, %v2897
  %s2901 = scalar_lea.vmem %s5, 448
  %v2902 = vld [vmem:[%s2901] sm:$0xff]
  %v2903 = vld [vmem:[%s2901 + $0x8] sm:$0xff]
  %v2904 = vld [vmem:[%s2901 + $0x10] sm:$0xff]
  %v2905 = vld [vmem:[%s2901 + $0x18] sm:$0xff]
  %v2907 = vsel %vm1698, %v1663, 0
  %2909 = vmatprep.subr.mxu0 0.0
  %2910 = vmatpush1.msra.mxu0 %v2902
  %2911 = vmatprep.subr.mxu0 0.0
  %2912 = vmatpush1.msra.mxu0 %v2903
  %2913 = vmatprep.subr.mxu0 0.0
  %2914 = vmatpush1.msra.mxu0 %v2904
  %2915 = vmatprep.subr.mxu0 0.0
  %2916 = vmatpush1.msra.mxu0 %v2905
  %2917 = vmatprep.subr.mxu0 0.0
  %2918 = vmatpush1.msra.mxu0 0.0
  %2919 = vmatprep.subr.mxu0 0.0
  %2920 = vmatpush1.msra.mxu0 0.0
  %2921 = vmatprep.subr.mxu0 0.0
  %2922 = vmatpush1.msra.mxu0 0.0
  %2923 = vmatprep.subr.mxu0 0.0
  %2924 = vmatpush1.msra.mxu0 0.0
  %2925 = vmatprep.subr.mxu0 0.0
  %2926 = vmatpush1.msra.mxu0 0.0
  %2927 = vmatprep.subr.mxu0 0.0
  %2928 = vmatpush1.msra.mxu0 0.0
  %2929 = vmatprep.subr.mxu0 0.0
  %2930 = vmatpush1.msra.mxu0 0.0
  %2931 = vmatprep.subr.mxu0 0.0
  %2932 = vmatpush1.msra.mxu0 0.0
  %2933 = vmatprep.subr.mxu0 0.0
  %2934 = vmatpush1.msra.mxu0 0.0
  %2935 = vmatprep.subr.mxu0 0.0
  %2936 = vmatpush1.msra.mxu0 0.0
  %2937 = vmatprep.subr.mxu0 0.0
  %2938 = vmatpush1.msra.mxu0 0.0
  %2939 = vmatprep.subr.mxu0 0.0
  %2940 = vmatpush1.msra.mxu0 0.0
  %2941 = vmatprep.subr.mxu0 0.0
  %2942 = vmatpush1.msra.mxu0 0.0
  %2943 = vmatprep.subr.mxu0 0.0
  %2944 = vmatpush1.msra.mxu0 0.0
  %2945 = vmatprep.subr.mxu0 0.0
  %2946 = vmatpush1.msra.mxu0 0.0
  %2947 = vmatprep.subr.mxu0 0.0
  %2948 = vmatpush1.msra.mxu0 0.0
  %2949 = vmatprep.subr.mxu0 0.0
  %2950 = vmatpush1.msra.mxu0 0.0
  %2951 = vmatprep.subr.mxu0 0.0
  %2952 = vmatpush1.msra.mxu0 0.0
  %2953 = vmatprep.subr.mxu0 0.0
  %2954 = vmatpush1.msra.mxu0 0.0
  %2955 = vmatprep.subr.mxu0 0.0
  %2956 = vmatpush1.msra.mxu0 0.0
  %2957 = vmatprep.subr.mxu0 0.0
  %2958 = vmatpush1.msra.mxu0 0.0
  %2959 = vmatprep.subr.mxu0 0.0
  %2960 = vmatpush1.msra.mxu0 0.0
  %2961 = vmatprep.subr.mxu0 0.0
  %2962 = vmatpush1.msra.mxu0 0.0
  %2963 = vmatprep.subr.mxu0 0.0
  %2964 = vmatpush1.msra.mxu0 0.0
  %2965 = vmatprep.subr.mxu0 0.0
  %2966 = vmatpush1.msra.mxu0 0.0
  %2967 = vmatprep.subr.mxu0 0.0
  %2968 = vmatpush1.msra.mxu0 0.0
  %2969 = vmatprep.subr.mxu0 0.0
  %2970 = vmatpush1.msra.mxu0 0.0
  %2971 = vmatprep.subr.mxu0 0.0
  %2972 = vmatpush1.msra.mxu0 0.0
  %2973 = vmatprep.mubr.f32.mxu0 0.0
  %2974 = vmatmul.mubr.f32.gmra.mrb[0].mxu0 %v2907
  %v2975 = vpop.f32.mrb[0].mxu0
  %v2976 = vadd.f32 0.0, %v2975
  %v2977 = vpop.f32.mrb[0].mxu0
  %2978 = vdwg.mxu0
  %v2979 = vadd.f32 %v2900, %v2976
  %s2980 = scalar_lea.vmem %s5, 480
  %v2981 = vld [vmem:[%s2980] sm:$0xff]
  %v2982 = vld [vmem:[%s2980 + $0x8] sm:$0xff]
  %v2983 = vld [vmem:[%s2980 + $0x10] sm:$0xff]
  %v2984 = vld [vmem:[%s2980 + $0x18] sm:$0xff]
  %v2986 = vsel %vm1698, %v1664, 0
  %2988 = vmatprep.subr.mxu0 0.0
  %2989 = vmatpush1.msra.mxu0 %v2981
  %2990 = vmatprep.subr.mxu0 0.0
  %2991 = vmatpush1.msra.mxu0 %v2982
  %2992 = vmatprep.subr.mxu0 0.0
  %2993 = vmatpush1.msra.mxu0 %v2983
  %2994 = vmatprep.subr.mxu0 0.0
  %2995 = vmatpush1.msra.mxu0 %v2984
  %2996 = vmatprep.subr.mxu0 0.0
  %2997 = vmatpush1.msra.mxu0 0.0
  %2998 = vmatprep.subr.mxu0 0.0
  %2999 = vmatpush1.msra.mxu0 0.0
  %3000 = vmatprep.subr.mxu0 0.0
  %3001 = vmatpush1.msra.mxu0 0.0
  %3002 = vmatprep.subr.mxu0 0.0
  %3003 = vmatpush1.msra.mxu0 0.0
  %3004 = vmatprep.subr.mxu0 0.0
  %3005 = vmatpush1.msra.mxu0 0.0
  %3006 = vmatprep.subr.mxu0 0.0
  %3007 = vmatpush1.msra.mxu0 0.0
  %3008 = vmatprep.subr.mxu0 0.0
  %3009 = vmatpush1.msra.mxu0 0.0
  %3010 = vmatprep.subr.mxu0 0.0
  %3011 = vmatpush1.msra.mxu0 0.0
  %3012 = vmatprep.subr.mxu0 0.0
  %3013 = vmatpush1.msra.mxu0 0.0
  %3014 = vmatprep.subr.mxu0 0.0
  %3015 = vmatpush1.msra.mxu0 0.0
  %3016 = vmatprep.subr.mxu0 0.0
  %3017 = vmatpush1.msra.mxu0 0.0
  %3018 = vmatprep.subr.mxu0 0.0
  %3019 = vmatpush1.msra.mxu0 0.0
  %3020 = vmatprep.subr.mxu0 0.0
  %3021 = vmatpush1.msra.mxu0 0.0
  %3022 = vmatprep.subr.mxu0 0.0
  %3023 = vmatpush1.msra.mxu0 0.0
  %3024 = vmatprep.subr.mxu0 0.0
  %3025 = vmatpush1.msra.mxu0 0.0
  %3026 = vmatprep.subr.mxu0 0.0
  %3027 = vmatpush1.msra.mxu0 0.0
  %3028 = vmatprep.subr.mxu0 0.0
  %3029 = vmatpush1.msra.mxu0 0.0
  %3030 = vmatprep.subr.mxu0 0.0
  %3031 = vmatpush1.msra.mxu0 0.0
  %3032 = vmatprep.subr.mxu0 0.0
  %3033 = vmatpush1.msra.mxu0 0.0
  %3034 = vmatprep.subr.mxu0 0.0
  %3035 = vmatpush1.msra.mxu0 0.0
  %3036 = vmatprep.subr.mxu0 0.0
  %3037 = vmatpush1.msra.mxu0 0.0
  %3038 = vmatprep.subr.mxu0 0.0
  %3039 = vmatpush1.msra.mxu0 0.0
  %3040 = vmatprep.subr.mxu0 0.0
  %3041 = vmatpush1.msra.mxu0 0.0
  %3042 = vmatprep.subr.mxu0 0.0
  %3043 = vmatpush1.msra.mxu0 0.0
  %3044 = vmatprep.subr.mxu0 0.0
  %3045 = vmatpush1.msra.mxu0 0.0
  %3046 = vmatprep.subr.mxu0 0.0
  %3047 = vmatpush1.msra.mxu0 0.0
  %3048 = vmatprep.subr.mxu0 0.0
  %3049 = vmatpush1.msra.mxu0 0.0
  %3050 = vmatprep.subr.mxu0 0.0
  %3051 = vmatpush1.msra.mxu0 0.0
  %3052 = vmatprep.mubr.f32.mxu0 0.0
  %3053 = vmatmul.mubr.f32.gmra.mrb[0].mxu0 %v2986
  %v3054 = vpop.f32.mrb[0].mxu0
  %v3055 = vadd.f32 0.0, %v3054
  %v3056 = vpop.f32.mrb[0].mxu0
  %3057 = vdwg.mxu0
  %v3058 = vadd.f32 %v2979, %v3055
  %s3059 = scalar_lea.vmem %s5, 512
  %v3060 = vld [vmem:[%s3059] sm:$0xff]
  %v3061 = vld [vmem:[%s3059 + $0x8] sm:$0xff]
  %v3062 = vld [vmem:[%s3059 + $0x10] sm:$0xff]
  %v3063 = vld [vmem:[%s3059 + $0x18] sm:$0xff]
  %v3065 = vsel %vm1698, %v1665, 0
  %3067 = vmatprep.subr.mxu0 0.0
  %3068 = vmatpush1.msra.mxu0 %v3060
  %3069 = vmatprep.subr.mxu0 0.0
  %3070 = vmatpush1.msra.mxu0 %v3061
  %3071 = vmatprep.subr.mxu0 0.0
  %3072 = vmatpush1.msra.mxu0 %v3062
  %3073 = vmatprep.subr.mxu0 0.0
  %3074 = vmatpush1.msra.mxu0 %v3063
  %3075 = vmatprep.subr.mxu0 0.0
  %3076 = vmatpush1.msra.mxu0 0.0
  %3077 = vmatprep.subr.mxu0 0.0
  %3078 = vmatpush1.msra.mxu0 0.0
  %3079 = vmatprep.subr.mxu0 0.0
  %3080 = vmatpush1.msra.mxu0 0.0
  %3081 = vmatprep.subr.mxu0 0.0
  %3082 = vmatpush1.msra.mxu0 0.0
  %3083 = vmatprep.subr.mxu0 0.0
  %3084 = vmatpush1.msra.mxu0 0.0
  %3085 = vmatprep.subr.mxu0 0.0
  %3086 = vmatpush1.msra.mxu0 0.0
  %3087 = vmatprep.subr.mxu0 0.0
  %3088 = vmatpush1.msra.mxu0 0.0
  %3089 = vmatprep.subr.mxu0 0.0
  %3090 = vmatpush1.msra.mxu0 0.0
  %3091 = vmatprep.subr.mxu0 0.0
  %3092 = vmatpush1.msra.mxu0 0.0
  %3093 = vmatprep.subr.mxu0 0.0
  %3094 = vmatpush1.msra.mxu0 0.0
  %3095 = vmatprep.subr.mxu0 0.0
  %3096 = vmatpush1.msra.mxu0 0.0
  %3097 = vmatprep.subr.mxu0 0.0
  %3098 = vmatpush1.msra.mxu0 0.0
  %3099 = vmatprep.subr.mxu0 0.0
  %3100 = vmatpush1.msra.mxu0 0.0
  %3101 = vmatprep.subr.mxu0 0.0
  %3102 = vmatpush1.msra.mxu0 0.0
  %3103 = vmatprep.subr.mxu0 0.0
  %3104 = vmatpush1.msra.mxu0 0.0
  %3105 = vmatprep.subr.mxu0 0.0
  %3106 = vmatpush1.msra.mxu0 0.0
  %3107 = vmatprep.subr.mxu0 0.0
  %3108 = vmatpush1.msra.mxu0 0.0
  %3109 = vmatprep.subr.mxu0 0.0
  %3110 = vmatpush1.msra.mxu0 0.0
  %3111 = vmatprep.subr.mxu0 0.0
  %3112 = vmatpush1.msra.mxu0 0.0
  %3113 = vmatprep.subr.mxu0 0.0
  %3114 = vmatpush1.msra.mxu0 0.0
  %3115 = vmatprep.subr.mxu0 0.0
  %3116 = vmatpush1.msra.mxu0 0.0
  %3117 = vmatprep.subr.mxu0 0.0
  %3118 = vmatpush1.msra.mxu0 0.0
  %3119 = vmatprep.subr.mxu0 0.0
  %3120 = vmatpush1.msra.mxu0 0.0
  %3121 = vmatprep.subr.mxu0 0.0
  %3122 = vmatpush1.msra.mxu0 0.0
  %3123 = vmatprep.subr.mxu0 0.0
  %3124 = vmatpush1.msra.mxu0 0.0
  %3125 = vmatprep.subr.mxu0 0.0
  %3126 = vmatpush1.msra.mxu0 0.0
  %3127 = vmatprep.subr.mxu0 0.0
  %3128 = vmatpush1.msra.mxu0 0.0
  %3129 = vmatprep.subr.mxu0 0.0
  %3130 = vmatpush1.msra.mxu0 0.0
  %3131 = vmatprep.mubr.f32.mxu0 0.0
  %3132 = vmatmul.mubr.f32.gmra.mrb[0].mxu0 %v3065
  %v3133 = vpop.f32.mrb[0].mxu0
  %v3134 = vadd.f32 0.0, %v3133
  %v3135 = vpop.f32.mrb[0].mxu0
  %3136 = vdwg.mxu0
  %v3137 = vadd.f32 %v3058, %v3134
  %s3138 = scalar_lea.vmem %s5, 544
  %v3139 = vld [vmem:[%s3138] sm:$0xff]
  %v3140 = vld [vmem:[%s3138 + $0x8] sm:$0xff]
  %v3141 = vld [vmem:[%s3138 + $0x10] sm:$0xff]
  %v3142 = vld [vmem:[%s3138 + $0x18] sm:$0xff]
  %v3144 = vsel %vm1698, %v1666, 0
  %3146 = vmatprep.subr.mxu0 0.0
  %3147 = vmatpush1.msra.mxu0 %v3139
  %3148 = vmatprep.subr.mxu0 0.0
  %3149 = vmatpush1.msra.mxu0 %v3140
  %3150 = vmatprep.subr.mxu0 0.0
  %3151 = vmatpush1.msra.mxu0 %v3141
  %3152 = vmatprep.subr.mxu0 0.0
  %3153 = vmatpush1.msra.mxu0 %v3142
  %3154 = vmatprep.subr.mxu0 0.0
  %3155 = vmatpush1.msra.mxu0 0.0
  %3156 = vmatprep.subr.mxu0 0.0
  %3157 = vmatpush1.msra.mxu0 0.0
  %3158 = vmatprep.subr.mxu0 0.0
  %3159 = vmatpush1.msra.mxu0 0.0
  %3160 = vmatprep.subr.mxu0 0.0
  %3161 = vmatpush1.msra.mxu0 0.0
  %3162 = vmatprep.subr.mxu0 0.0
  %3163 = vmatpush1.msra.mxu0 0.0
  %3164 = vmatprep.subr.mxu0 0.0
  %3165 = vmatpush1.msra.mxu0 0.0
  %3166 = vmatprep.subr.mxu0 0.0
  %3167 = vmatpush1.msra.mxu0 0.0
  %3168 = vmatprep.subr.mxu0 0.0
  %3169 = vmatpush1.msra.mxu0 0.0
  %3170 = vmatprep.subr.mxu0 0.0
  %3171 = vmatpush1.msra.mxu0 0.0
  %3172 = vmatprep.subr.mxu0 0.0
  %3173 = vmatpush1.msra.mxu0 0.0
  %3174 = vmatprep.subr.mxu0 0.0
  %3175 = vmatpush1.msra.mxu0 0.0
  %3176 = vmatprep.subr.mxu0 0.0
  %3177 = vmatpush1.msra.mxu0 0.0
  %3178 = vmatprep.subr.mxu0 0.0
  %3179 = vmatpush1.msra.mxu0 0.0
  %3180 = vmatprep.subr.mxu0 0.0
  %3181 = vmatpush1.msra.mxu0 0.0
  %3182 = vmatprep.subr.mxu0 0.0
  %3183 = vmatpush1.msra.mxu0 0.0
  %3184 = vmatprep.subr.mxu0 0.0
  %3185 = vmatpush1.msra.mxu0 0.0
  %3186 = vmatprep.subr.mxu0 0.0
  %3187 = vmatpush1.msra.mxu0 0.0
  %3188 = vmatprep.subr.mxu0 0.0
  %3189 = vmatpush1.msra.mxu0 0.0
  %3190 = vmatprep.subr.mxu0 0.0
  %3191 = vmatpush1.msra.mxu0 0.0
  %3192 = vmatprep.subr.mxu0 0.0
  %3193 = vmatpush1.msra.mxu0 0.0
  %3194 = vmatprep.subr.mxu0 0.0
  %3195 = vmatpush1.msra.mxu0 0.0
  %3196 = vmatprep.subr.mxu0 0.0
  %3197 = vmatpush1.msra.mxu0 0.0
  %3198 = vmatprep.subr.mxu0 0.0
  %3199 = vmatpush1.msra.mxu0 0.0
  %3200 = vmatprep.subr.mxu0 0.0
  %3201 = vmatpush1.msra.mxu0 0.0
  %3202 = vmatprep.subr.mxu0 0.0
  %3203 = vmatpush1.msra.mxu0 0.0
  %3204 = vmatprep.subr.mxu0 0.0
  %3205 = vmatpush1.msra.mxu0 0.0
  %3206 = vmatprep.subr.mxu0 0.0
  %3207 = vmatpush1.msra.mxu0 0.0
  %3208 = vmatprep.subr.mxu0 0.0
  %3209 = vmatpush1.msra.mxu0 0.0
  %3210 = vmatprep.mubr.f32.mxu0 0.0
  %3211 = vmatmul.mubr.f32.gmra.mrb[0].mxu0 %v3144
  %v3212 = vpop.f32.mrb[0].mxu0
  %v3213 = vadd.f32 0.0, %v3212
  %v3214 = vpop.f32.mrb[0].mxu0
  %3215 = vdwg.mxu0
  %v3216 = vadd.f32 %v3137, %v3213
  %s3217 = scalar_lea.vmem %s5, 576
  %v3218 = vld [vmem:[%s3217] sm:$0xff]
  %v3219 = vld [vmem:[%s3217 + $0x8] sm:$0xff]
  %v3220 = vld [vmem:[%s3217 + $0x10] sm:$0xff]
  %v3221 = vld [vmem:[%s3217 + $0x18] sm:$0xff]
  %v3223 = vsel %vm1698, %v1667, 0
  %3225 = vmatprep.subr.mxu0 0.0
  %3226 = vmatpush1.msra.mxu0 %v3218
  %3227 = vmatprep.subr.mxu0 0.0
  %3228 = vmatpush1.msra.mxu0 %v3219
  %3229 = vmatprep.subr.mxu0 0.0
  %3230 = vmatpush1.msra.mxu0 %v3220
  %3231 = vmatprep.subr.mxu0 0.0
  %3232 = vmatpush1.msra.mxu0 %v3221
  %3233 = vmatprep.subr.mxu0 0.0
  %3234 = vmatpush1.msra.mxu0 0.0
  %3235 = vmatprep.subr.mxu0 0.0
  %3236 = vmatpush1.msra.mxu0 0.0
  %3237 = vmatprep.subr.mxu0 0.0
  %3238 = vmatpush1.msra.mxu0 0.0
  %3239 = vmatprep.subr.mxu0 0.0
  %3240 = vmatpush1.msra.mxu0 0.0
  %3241 = vmatprep.subr.mxu0 0.0
  %3242 = vmatpush1.msra.mxu0 0.0
  %3243 = vmatprep.subr.mxu0 0.0
  %3244 = vmatpush1.msra.mxu0 0.0
  %3245 = vmatprep.subr.mxu0 0.0
  %3246 = vmatpush1.msra.mxu0 0.0
  %3247 = vmatprep.subr.mxu0 0.0
  %3248 = vmatpush1.msra.mxu0 0.0
  %3249 = vmatprep.subr.mxu0 0.0
  %3250 = vmatpush1.msra.mxu0 0.0
  %3251 = vmatprep.subr.mxu0 0.0
  %3252 = vmatpush1.msra.mxu0 0.0
  %3253 = vmatprep.subr.mxu0 0.0
  %3254 = vmatpush1.msra.mxu0 0.0
  %3255 = vmatprep.subr.mxu0 0.0
  %3256 = vmatpush1.msra.mxu0 0.0
  %3257 = vmatprep.subr.mxu0 0.0
  %3258 = vmatpush1.msra.mxu0 0.0
  %3259 = vmatprep.subr.mxu0 0.0
  %3260 = vmatpush1.msra.mxu0 0.0
  %3261 = vmatprep.subr.mxu0 0.0
  %3262 = vmatpush1.msra.mxu0 0.0
  %3263 = vmatprep.subr.mxu0 0.0
  %3264 = vmatpush1.msra.mxu0 0.0
  %3265 = vmatprep.subr.mxu0 0.0
  %3266 = vmatpush1.msra.mxu0 0.0
  %3267 = vmatprep.subr.mxu0 0.0
  %3268 = vmatpush1.msra.mxu0 0.0
  %3269 = vmatprep.subr.mxu0 0.0
  %3270 = vmatpush1.msra.mxu0 0.0
  %3271 = vmatprep.subr.mxu0 0.0
  %3272 = vmatpush1.msra.mxu0 0.0
  %3273 = vmatprep.subr.mxu0 0.0
  %3274 = vmatpush1.msra.mxu0 0.0
  %3275 = vmatprep.subr.mxu0 0.0
  %3276 = vmatpush1.msra.mxu0 0.0
  %3277 = vmatprep.subr.mxu0 0.0
  %3278 = vmatpush1.msra.mxu0 0.0
  %3279 = vmatprep.subr.mxu0 0.0
  %3280 = vmatpush1.msra.mxu0 0.0
  %3281 = vmatprep.subr.mxu0 0.0
  %3282 = vmatpush1.msra.mxu0 0.0
  %3283 = vmatprep.subr.mxu0 0.0
  %3284 = vmatpush1.msra.mxu0 0.0
  %3285 = vmatprep.subr.mxu0 0.0
  %3286 = vmatpush1.msra.mxu0 0.0
  %3287 = vmatprep.subr.mxu0 0.0
  %3288 = vmatpush1.msra.mxu0 0.0
  %3289 = vmatprep.mubr.f32.mxu0 0.0
  %3290 = vmatmul.mubr.f32.gmra.mrb[0].mxu0 %v3223
  %v3291 = vpop.f32.mrb[0].mxu0
  %v3292 = vadd.f32 0.0, %v3291
  %v3293 = vpop.f32.mrb[0].mxu0
  %3294 = vdwg.mxu0
  %v3295 = vadd.f32 %v3216, %v3292
  %s3296 = scalar_lea.vmem %s5, 608
  %v3297 = vld [vmem:[%s3296] sm:$0xff]
  %v3298 = vld [vmem:[%s3296 + $0x8] sm:$0xff]
  %v3299 = vld [vmem:[%s3296 + $0x10] sm:$0xff]
  %v3300 = vld [vmem:[%s3296 + $0x18] sm:$0xff]
  %v3302 = vsel %vm1698, %v1668, 0
  %3304 = vmatprep.subr.mxu0 0.0
  %3305 = vmatpush1.msra.mxu0 %v3297
  %3306 = vmatprep.subr.mxu0 0.0
  %3307 = vmatpush1.msra.mxu0 %v3298
  %3308 = vmatprep.subr.mxu0 0.0
  %3309 = vmatpush1.msra.mxu0 %v3299
  %3310 = vmatprep.subr.mxu0 0.0
  %3311 = vmatpush1.msra.mxu0 %v3300
  %3312 = vmatprep.subr.mxu0 0.0
  %3313 = vmatpush1.msra.mxu0 0.0
  %3314 = vmatprep.subr.mxu0 0.0
  %3315 = vmatpush1.msra.mxu0 0.0
  %3316 = vmatprep.subr.mxu0 0.0
  %3317 = vmatpush1.msra.mxu0 0.0
  %3318 = vmatprep.subr.mxu0 0.0
  %3319 = vmatpush1.msra.mxu0 0.0
  %3320 = vmatprep.subr.mxu0 0.0
  %3321 = vmatpush1.msra.mxu0 0.0
  %3322 = vmatprep.subr.mxu0 0.0
  %3323 = vmatpush1.msra.mxu0 0.0
  %3324 = vmatprep.subr.mxu0 0.0
  %3325 = vmatpush1.msra.mxu0 0.0
  %3326 = vmatprep.subr.mxu0 0.0
  %3327 = vmatpush1.msra.mxu0 0.0
  %3328 = vmatprep.subr.mxu0 0.0
  %3329 = vmatpush1.msra.mxu0 0.0
  %3330 = vmatprep.subr.mxu0 0.0
  %3331 = vmatpush1.msra.mxu0 0.0
  %3332 = vmatprep.subr.mxu0 0.0
  %3333 = vmatpush1.msra.mxu0 0.0
  %3334 = vmatprep.subr.mxu0 0.0
  %3335 = vmatpush1.msra.mxu0 0.0
  %3336 = vmatprep.subr.mxu0 0.0
  %3337 = vmatpush1.msra.mxu0 0.0
  %3338 = vmatprep.subr.mxu0 0.0
  %3339 = vmatpush1.msra.mxu0 0.0
  %3340 = vmatprep.subr.mxu0 0.0
  %3341 = vmatpush1.msra.mxu0 0.0
  %3342 = vmatprep.subr.mxu0 0.0
  %3343 = vmatpush1.msra.mxu0 0.0
  %3344 = vmatprep.subr.mxu0 0.0
  %3345 = vmatpush1.msra.mxu0 0.0
  %3346 = vmatprep.subr.mxu0 0.0
  %3347 = vmatpush1.msra.mxu0 0.0
  %3348 = vmatprep.subr.mxu0 0.0
  %3349 = vmatpush1.msra.mxu0 0.0
  %3350 = vmatprep.subr.mxu0 0.0
  %3351 = vmatpush1.msra.mxu0 0.0
  %3352 = vmatprep.subr.mxu0 0.0
  %3353 = vmatpush1.msra.mxu0 0.0
  %3354 = vmatprep.subr.mxu0 0.0
  %3355 = vmatpush1.msra.mxu0 0.0
  %3356 = vmatprep.subr.mxu0 0.0
  %3357 = vmatpush1.msra.mxu0 0.0
  %3358 = vmatprep.subr.mxu0 0.0
  %3359 = vmatpush1.msra.mxu0 0.0
  %3360 = vmatprep.subr.mxu0 0.0
  %3361 = vmatpush1.msra.mxu0 0.0
  %3362 = vmatprep.subr.mxu0 0.0
  %3363 = vmatpush1.msra.mxu0 0.0
  %3364 = vmatprep.subr.mxu0 0.0
  %3365 = vmatpush1.msra.mxu0 0.0
  %3366 = vmatprep.subr.mxu0 0.0
  %3367 = vmatpush1.msra.mxu0 0.0
  %3368 = vmatprep.mubr.f32.mxu0 0.0
  %3369 = vmatmul.mubr.f32.gmra.mrb[0].mxu0 %v3302
  %v3370 = vpop.f32.mrb[0].mxu0
  %v3371 = vadd.f32 0.0, %v3370
  %v3372 = vpop.f32.mrb[0].mxu0
  %3373 = vdwg.mxu0
  %v3374 = vadd.f32 %v3295, %v3371
  %s3375 = scalar_lea.vmem %s5, 640
  %v3376 = vld [vmem:[%s3375] sm:$0xff]
  %v3377 = vld [vmem:[%s3375 + $0x8] sm:$0xff]
  %v3378 = vld [vmem:[%s3375 + $0x10] sm:$0xff]
  %v3379 = vld [vmem:[%s3375 + $0x18] sm:$0xff]
  %v3381 = vsel %vm1698, %v1669, 0
  %3383 = vmatprep.subr.mxu0 0.0
  %3384 = vmatpush1.msra.mxu0 %v3376
  %3385 = vmatprep.subr.mxu0 0.0
  %3386 = vmatpush1.msra.mxu0 %v3377
  %3387 = vmatprep.subr.mxu0 0.0
  %3388 = vmatpush1.msra.mxu0 %v3378
  %3389 = vmatprep.subr.mxu0 0.0
  %3390 = vmatpush1.msra.mxu0 %v3379
  %3391 = vmatprep.subr.mxu0 0.0
  %3392 = vmatpush1.msra.mxu0 0.0
  %3393 = vmatprep.subr.mxu0 0.0
  %3394 = vmatpush1.msra.mxu0 0.0
  %3395 = vmatprep.subr.mxu0 0.0
  %3396 = vmatpush1.msra.mxu0 0.0
  %3397 = vmatprep.subr.mxu0 0.0
  %3398 = vmatpush1.msra.mxu0 0.0
  %3399 = vmatprep.subr.mxu0 0.0
  %3400 = vmatpush1.msra.mxu0 0.0
  %3401 = vmatprep.subr.mxu0 0.0
  %3402 = vmatpush1.msra.mxu0 0.0
  %3403 = vmatprep.subr.mxu0 0.0
  %3404 = vmatpush1.msra.mxu0 0.0
  %3405 = vmatprep.subr.mxu0 0.0
  %3406 = vmatpush1.msra.mxu0 0.0
  %3407 = vmatprep.subr.mxu0 0.0
  %3408 = vmatpush1.msra.mxu0 0.0
  %3409 = vmatprep.subr.mxu0 0.0
  %3410 = vmatpush1.msra.mxu0 0.0
  %3411 = vmatprep.subr.mxu0 0.0
  %3412 = vmatpush1.msra.mxu0 0.0
  %3413 = vmatprep.subr.mxu0 0.0
  %3414 = vmatpush1.msra.mxu0 0.0
  %3415 = vmatprep.subr.mxu0 0.0
  %3416 = vmatpush1.msra.mxu0 0.0
  %3417 = vmatprep.subr.mxu0 0.0
  %3418 = vmatpush1.msra.mxu0 0.0
  %3419 = vmatprep.subr.mxu0 0.0
  %3420 = vmatpush1.msra.mxu0 0.0
  %3421 = vmatprep.subr.mxu0 0.0
  %3422 = vmatpush1.msra.mxu0 0.0
  %3423 = vmatprep.subr.mxu0 0.0
  %3424 = vmatpush1.msra.mxu0 0.0
  %3425 = vmatprep.subr.mxu0 0.0
  %3426 = vmatpush1.msra.mxu0 0.0
  %3427 = vmatprep.subr.mxu0 0.0
  %3428 = vmatpush1.msra.mxu0 0.0
  %3429 = vmatprep.subr.mxu0 0.0
  %3430 = vmatpush1.msra.mxu0 0.0
  %3431 = vmatprep.subr.mxu0 0.0
  %3432 = vmatpush1.msra.mxu0 0.0
  %3433 = vmatprep.subr.mxu0 0.0
  %3434 = vmatpush1.msra.mxu0 0.0
  %3435 = vmatprep.subr.mxu0 0.0
  %3436 = vmatpush1.msra.mxu0 0.0
  %3437 = vmatprep.subr.mxu0 0.0
  %3438 = vmatpush1.msra.mxu0 0.0
  %3439 = vmatprep.subr.mxu0 0.0
  %3440 = vmatpush1.msra.mxu0 0.0
  %3441 = vmatprep.subr.mxu0 0.0
  %3442 = vmatpush1.msra.mxu0 0.0
  %3443 = vmatprep.subr.mxu0 0.0
  %3444 = vmatpush1.msra.mxu0 0.0
  %3445 = vmatprep.subr.mxu0 0.0
  %3446 = vmatpush1.msra.mxu0 0.0
  %3447 = vmatprep.mubr.f32.mxu0 0.0
  %3448 = vmatmul.mubr.f32.gmra.mrb[0].mxu0 %v3381
  %v3449 = vpop.f32.mrb[0].mxu0
  %v3450 = vadd.f32 0.0, %v3449
  %v3451 = vpop.f32.mrb[0].mxu0
  %3452 = vdwg.mxu0
  %v3453 = vadd.f32 %v3374, %v3450
  %s3454 = scalar_lea.vmem %s5, 672
  %v3455 = vld [vmem:[%s3454] sm:$0xff]
  %v3456 = vld [vmem:[%s3454 + $0x8] sm:$0xff]
  %v3457 = vld [vmem:[%s3454 + $0x10] sm:$0xff]
  %v3458 = vld [vmem:[%s3454 + $0x18] sm:$0xff]
  %v3460 = vsel %vm1698, %v1670, 0
  %3462 = vmatprep.subr.mxu0 0.0
  %3463 = vmatpush1.msra.mxu0 %v3455
  %3464 = vmatprep.subr.mxu0 0.0
  %3465 = vmatpush1.msra.mxu0 %v3456
  %3466 = vmatprep.subr.mxu0 0.0
  %3467 = vmatpush1.msra.mxu0 %v3457
  %3468 = vmatprep.subr.mxu0 0.0
  %3469 = vmatpush1.msra.mxu0 %v3458
  %3470 = vmatprep.subr.mxu0 0.0
  %3471 = vmatpush1.msra.mxu0 0.0
  %3472 = vmatprep.subr.mxu0 0.0
  %3473 = vmatpush1.msra.mxu0 0.0
  %3474 = vmatprep.subr.mxu0 0.0
  %3475 = vmatpush1.msra.mxu0 0.0
  %3476 = vmatprep.subr.mxu0 0.0
  %3477 = vmatpush1.msra.mxu0 0.0
  %3478 = vmatprep.subr.mxu0 0.0
  %3479 = vmatpush1.msra.mxu0 0.0
  %3480 = vmatprep.subr.mxu0 0.0
  %3481 = vmatpush1.msra.mxu0 0.0
  %3482 = vmatprep.subr.mxu0 0.0
  %3483 = vmatpush1.msra.mxu0 0.0
  %3484 = vmatprep.subr.mxu0 0.0
  %3485 = vmatpush1.msra.mxu0 0.0
  %3486 = vmatprep.subr.mxu0 0.0
  %3487 = vmatpush1.msra.mxu0 0.0
  %3488 = vmatprep.subr.mxu0 0.0
  %3489 = vmatpush1.msra.mxu0 0.0
  %3490 = vmatprep.subr.mxu0 0.0
  %3491 = vmatpush1.msra.mxu0 0.0
  %3492 = vmatprep.subr.mxu0 0.0
  %3493 = vmatpush1.msra.mxu0 0.0
  %3494 = vmatprep.subr.mxu0 0.0
  %3495 = vmatpush1.msra.mxu0 0.0
  %3496 = vmatprep.subr.mxu0 0.0
  %3497 = vmatpush1.msra.mxu0 0.0
  %3498 = vmatprep.subr.mxu0 0.0
  %3499 = vmatpush1.msra.mxu0 0.0
  %3500 = vmatprep.subr.mxu0 0.0
  %3501 = vmatpush1.msra.mxu0 0.0
  %3502 = vmatprep.subr.mxu0 0.0
  %3503 = vmatpush1.msra.mxu0 0.0
  %3504 = vmatprep.subr.mxu0 0.0
  %3505 = vmatpush1.msra.mxu0 0.0
  %3506 = vmatprep.subr.mxu0 0.0
  %3507 = vmatpush1.msra.mxu0 0.0
  %3508 = vmatprep.subr.mxu0 0.0
  %3509 = vmatpush1.msra.mxu0 0.0
  %3510 = vmatprep.subr.mxu0 0.0
  %3511 = vmatpush1.msra.mxu0 0.0
  %3512 = vmatprep.subr.mxu0 0.0
  %3513 = vmatpush1.msra.mxu0 0.0
  %3514 = vmatprep.subr.mxu0 0.0
  %3515 = vmatpush1.msra.mxu0 0.0
  %3516 = vmatprep.subr.mxu0 0.0
  %3517 = vmatpush1.msra.mxu0 0.0
  %3518 = vmatprep.subr.mxu0 0.0
  %3519 = vmatpush1.msra.mxu0 0.0
  %3520 = vmatprep.subr.mxu0 0.0
  %3521 = vmatpush1.msra.mxu0 0.0
  %3522 = vmatprep.subr.mxu0 0.0
  %3523 = vmatpush1.msra.mxu0 0.0
  %3524 = vmatprep.subr.mxu0 0.0
  %3525 = vmatpush1.msra.mxu0 0.0
  %3526 = vmatprep.mubr.f32.mxu0 0.0
  %3527 = vmatmul.mubr.f32.gmra.mrb[0].mxu0 %v3460
  %v3528 = vpop.f32.mrb[0].mxu0
  %v3529 = vadd.f32 0.0, %v3528
  %v3530 = vpop.f32.mrb[0].mxu0
  %3531 = vdwg.mxu0
  %v3532 = vadd.f32 %v3453, %v3529
  %s3533 = scalar_lea.vmem %s5, 704
  %v3534 = vld [vmem:[%s3533] sm:$0xff]
  %v3535 = vld [vmem:[%s3533 + $0x8] sm:$0xff]
  %v3536 = vld [vmem:[%s3533 + $0x10] sm:$0xff]
  %v3537 = vld [vmem:[%s3533 + $0x18] sm:$0xff]
  %v3539 = vsel %vm1698, %v1671, 0
  %3541 = vmatprep.subr.mxu0 0.0
  %3542 = vmatpush1.msra.mxu0 %v3534
  %3543 = vmatprep.subr.mxu0 0.0
  %3544 = vmatpush1.msra.mxu0 %v3535
  %3545 = vmatprep.subr.mxu0 0.0
  %3546 = vmatpush1.msra.mxu0 %v3536
  %3547 = vmatprep.subr.mxu0 0.0
  %3548 = vmatpush1.msra.mxu0 %v3537
  %3549 = vmatprep.subr.mxu0 0.0
  %3550 = vmatpush1.msra.mxu0 0.0
  %3551 = vmatprep.subr.mxu0 0.0
  %3552 = vmatpush1.msra.mxu0 0.0
  %3553 = vmatprep.subr.mxu0 0.0
  %3554 = vmatpush1.msra.mxu0 0.0
  %3555 = vmatprep.subr.mxu0 0.0
  %3556 = vmatpush1.msra.mxu0 0.0
  %3557 = vmatprep.subr.mxu0 0.0
  %3558 = vmatpush1.msra.mxu0 0.0
  %3559 = vmatprep.subr.mxu0 0.0
  %3560 = vmatpush1.msra.mxu0 0.0
  %3561 = vmatprep.subr.mxu0 0.0
  %3562 = vmatpush1.msra.mxu0 0.0
  %3563 = vmatprep.subr.mxu0 0.0
  %3564 = vmatpush1.msra.mxu0 0.0
  %3565 = vmatprep.subr.mxu0 0.0
  %3566 = vmatpush1.msra.mxu0 0.0
  %3567 = vmatprep.subr.mxu0 0.0
  %3568 = vmatpush1.msra.mxu0 0.0
  %3569 = vmatprep.subr.mxu0 0.0
  %3570 = vmatpush1.msra.mxu0 0.0
  %3571 = vmatprep.subr.mxu0 0.0
  %3572 = vmatpush1.msra.mxu0 0.0
  %3573 = vmatprep.subr.mxu0 0.0
  %3574 = vmatpush1.msra.mxu0 0.0
  %3575 = vmatprep.subr.mxu0 0.0
  %3576 = vmatpush1.msra.mxu0 0.0
  %3577 = vmatprep.subr.mxu0 0.0
  %3578 = vmatpush1.msra.mxu0 0.0
  %3579 = vmatprep.subr.mxu0 0.0
  %3580 = vmatpush1.msra.mxu0 0.0
  %3581 = vmatprep.subr.mxu0 0.0
  %3582 = vmatpush1.msra.mxu0 0.0
  %3583 = vmatprep.subr.mxu0 0.0
  %3584 = vmatpush1.msra.mxu0 0.0
  %3585 = vmatprep.subr.mxu0 0.0
  %3586 = vmatpush1.msra.mxu0 0.0
  %3587 = vmatprep.subr.mxu0 0.0
  %3588 = vmatpush1.msra.mxu0 0.0
  %3589 = vmatprep.subr.mxu0 0.0
  %3590 = vmatpush1.msra.mxu0 0.0
  %3591 = vmatprep.subr.mxu0 0.0
  %3592 = vmatpush1.msra.mxu0 0.0
  %3593 = vmatprep.subr.mxu0 0.0
  %3594 = vmatpush1.msra.mxu0 0.0
  %3595 = vmatprep.subr.mxu0 0.0
  %3596 = vmatpush1.msra.mxu0 0.0
  %3597 = vmatprep.subr.mxu0 0.0
  %3598 = vmatpush1.msra.mxu0 0.0
  %3599 = vmatprep.subr.mxu0 0.0
  %3600 = vmatpush1.msra.mxu0 0.0
  %3601 = vmatprep.subr.mxu0 0.0
  %3602 = vmatpush1.msra.mxu0 0.0
  %3603 = vmatprep.subr.mxu0 0.0
  %3604 = vmatpush1.msra.mxu0 0.0
  %3605 = vmatprep.mubr.f32.mxu0 0.0
  %3606 = vmatmul.mubr.f32.gmra.mrb[0].mxu0 %v3539
  %v3607 = vpop.f32.mrb[0].mxu0
  %v3608 = vadd.f32 0.0, %v3607
  %v3609 = vpop.f32.mrb[0].mxu0
  %3610 = vdwg.mxu0
  %v3611 = vadd.f32 %v3532, %v3608
  %s3612 = scalar_lea.vmem %s5, 736
  %v3613 = vld [vmem:[%s3612] sm:$0xff]
  %v3614 = vld [vmem:[%s3612 + $0x8] sm:$0xff]
  %v3615 = vld [vmem:[%s3612 + $0x10] sm:$0xff]
  %v3616 = vld [vmem:[%s3612 + $0x18] sm:$0xff]
  %v3618 = vsel %vm1698, %v1672, 0
  %3620 = vmatprep.subr.mxu0 0.0
  %3621 = vmatpush1.msra.mxu0 %v3613
  %3622 = vmatprep.subr.mxu0 0.0
  %3623 = vmatpush1.msra.mxu0 %v3614
  %3624 = vmatprep.subr.mxu0 0.0
  %3625 = vmatpush1.msra.mxu0 %v3615
  %3626 = vmatprep.subr.mxu0 0.0
  %3627 = vmatpush1.msra.mxu0 %v3616
  %3628 = vmatprep.subr.mxu0 0.0
  %3629 = vmatpush1.msra.mxu0 0.0
  %3630 = vmatprep.subr.mxu0 0.0
  %3631 = vmatpush1.msra.mxu0 0.0
  %3632 = vmatprep.subr.mxu0 0.0
  %3633 = vmatpush1.msra.mxu0 0.0
  %3634 = vmatprep.subr.mxu0 0.0
  %3635 = vmatpush1.msra.mxu0 0.0
  %3636 = vmatprep.subr.mxu0 0.0
  %3637 = vmatpush1.msra.mxu0 0.0
  %3638 = vmatprep.subr.mxu0 0.0
  %3639 = vmatpush1.msra.mxu0 0.0
  %3640 = vmatprep.subr.mxu0 0.0
  %3641 = vmatpush1.msra.mxu0 0.0
  %3642 = vmatprep.subr.mxu0 0.0
  %3643 = vmatpush1.msra.mxu0 0.0
  %3644 = vmatprep.subr.mxu0 0.0
  %3645 = vmatpush1.msra.mxu0 0.0
  %3646 = vmatprep.subr.mxu0 0.0
  %3647 = vmatpush1.msra.mxu0 0.0
  %3648 = vmatprep.subr.mxu0 0.0
  %3649 = vmatpush1.msra.mxu0 0.0
  %3650 = vmatprep.subr.mxu0 0.0
  %3651 = vmatpush1.msra.mxu0 0.0
  %3652 = vmatprep.subr.mxu0 0.0
  %3653 = vmatpush1.msra.mxu0 0.0
  %3654 = vmatprep.subr.mxu0 0.0
  %3655 = vmatpush1.msra.mxu0 0.0
  %3656 = vmatprep.subr.mxu0 0.0
  %3657 = vmatpush1.msra.mxu0 0.0
  %3658 = vmatprep.subr.mxu0 0.0
  %3659 = vmatpush1.msra.mxu0 0.0
  %3660 = vmatprep.subr.mxu0 0.0
  %3661 = vmatpush1.msra.mxu0 0.0
  %3662 = vmatprep.subr.mxu0 0.0
  %3663 = vmatpush1.msra.mxu0 0.0
  %3664 = vmatprep.subr.mxu0 0.0
  %3665 = vmatpush1.msra.mxu0 0.0
  %3666 = vmatprep.subr.mxu0 0.0
  %3667 = vmatpush1.msra.mxu0 0.0
  %3668 = vmatprep.subr.mxu0 0.0
  %3669 = vmatpush1.msra.mxu0 0.0
  %3670 = vmatprep.subr.mxu0 0.0
  %3671 = vmatpush1.msra.mxu0 0.0
  %3672 = vmatprep.subr.mxu0 0.0
  %3673 = vmatpush1.msra.mxu0 0.0
  %3674 = vmatprep.subr.mxu0 0.0
  %3675 = vmatpush1.msra.mxu0 0.0
  %3676 = vmatprep.subr.mxu0 0.0
  %3677 = vmatpush1.msra.mxu0 0.0
  %3678 = vmatprep.subr.mxu0 0.0
  %3679 = vmatpush1.msra.mxu0 0.0
  %3680 = vmatprep.subr.mxu0 0.0
  %3681 = vmatpush1.msra.mxu0 0.0
  %3682 = vmatprep.subr.mxu0 0.0
  %3683 = vmatpush1.msra.mxu0 0.0
  %3684 = vmatprep.mubr.f32.mxu0 0.0
  %3685 = vmatmul.mubr.f32.gmra.mrb[0].mxu0 %v3618
  %v3686 = vpop.f32.mrb[0].mxu0
  %v3687 = vadd.f32 0.0, %v3686
  %v3688 = vpop.f32.mrb[0].mxu0
  %3689 = vdwg.mxu0
  %v3690 = vadd.f32 %v3611, %v3687
  %s3691 = scalar_lea.vmem %s5, 768
  %v3692 = vld [vmem:[%s3691] sm:$0xff]
  %v3693 = vld [vmem:[%s3691 + $0x8] sm:$0xff]
  %v3694 = vld [vmem:[%s3691 + $0x10] sm:$0xff]
  %v3695 = vld [vmem:[%s3691 + $0x18] sm:$0xff]
  %v3697 = vsel %vm1698, %v1673, 0
  %3699 = vmatprep.subr.mxu0 0.0
  %3700 = vmatpush1.msra.mxu0 %v3692
  %3701 = vmatprep.subr.mxu0 0.0
  %3702 = vmatpush1.msra.mxu0 %v3693
  %3703 = vmatprep.subr.mxu0 0.0
  %3704 = vmatpush1.msra.mxu0 %v3694
  %3705 = vmatprep.subr.mxu0 0.0
  %3706 = vmatpush1.msra.mxu0 %v3695
  %3707 = vmatprep.subr.mxu0 0.0
  %3708 = vmatpush1.msra.mxu0 0.0
  %3709 = vmatprep.subr.mxu0 0.0
  %3710 = vmatpush1.msra.mxu0 0.0
  %3711 = vmatprep.subr.mxu0 0.0
  %3712 = vmatpush1.msra.mxu0 0.0
  %3713 = vmatprep.subr.mxu0 0.0
  %3714 = vmatpush1.msra.mxu0 0.0
  %3715 = vmatprep.subr.mxu0 0.0
  %3716 = vmatpush1.msra.mxu0 0.0
  %3717 = vmatprep.subr.mxu0 0.0
  %3718 = vmatpush1.msra.mxu0 0.0
  %3719 = vmatprep.subr.mxu0 0.0
  %3720 = vmatpush1.msra.mxu0 0.0
  %3721 = vmatprep.subr.mxu0 0.0
  %3722 = vmatpush1.msra.mxu0 0.0
  %3723 = vmatprep.subr.mxu0 0.0
  %3724 = vmatpush1.msra.mxu0 0.0
  %3725 = vmatprep.subr.mxu0 0.0
  %3726 = vmatpush1.msra.mxu0 0.0
  %3727 = vmatprep.subr.mxu0 0.0
  %3728 = vmatpush1.msra.mxu0 0.0
  %3729 = vmatprep.subr.mxu0 0.0
  %3730 = vmatpush1.msra.mxu0 0.0
  %3731 = vmatprep.subr.mxu0 0.0
  %3732 = vmatpush1.msra.mxu0 0.0
  %3733 = vmatprep.subr.mxu0 0.0
  %3734 = vmatpush1.msra.mxu0 0.0
  %3735 = vmatprep.subr.mxu0 0.0
  %3736 = vmatpush1.msra.mxu0 0.0
  %3737 = vmatprep.subr.mxu0 0.0
  %3738 = vmatpush1.msra.mxu0 0.0
  %3739 = vmatprep.subr.mxu0 0.0
  %3740 = vmatpush1.msra.mxu0 0.0
  %3741 = vmatprep.subr.mxu0 0.0
  %3742 = vmatpush1.msra.mxu0 0.0
  %3743 = vmatprep.subr.mxu0 0.0
  %3744 = vmatpush1.msra.mxu0 0.0
  %3745 = vmatprep.subr.mxu0 0.0
  %3746 = vmatpush1.msra.mxu0 0.0
  %3747 = vmatprep.subr.mxu0 0.0
  %3748 = vmatpush1.msra.mxu0 0.0
  %3749 = vmatprep.subr.mxu0 0.0
  %3750 = vmatpush1.msra.mxu0 0.0
  %3751 = vmatprep.subr.mxu0 0.0
  %3752 = vmatpush1.msra.mxu0 0.0
  %3753 = vmatprep.subr.mxu0 0.0
  %3754 = vmatpush1.msra.mxu0 0.0
  %3755 = vmatprep.subr.mxu0 0.0
  %3756 = vmatpush1.msra.mxu0 0.0
  %3757 = vmatprep.subr.mxu0 0.0
  %3758 = vmatpush1.msra.mxu0 0.0
  %3759 = vmatprep.subr.mxu0 0.0
  %3760 = vmatpush1.msra.mxu0 0.0
  %3761 = vmatprep.subr.mxu0 0.0
  %3762 = vmatpush1.msra.mxu0 0.0
  %3763 = vmatprep.mubr.f32.mxu0 0.0
  %3764 = vmatmul.mubr.f32.gmra.mrb[0].mxu0 %v3697
  %v3765 = vpop.f32.mrb[0].mxu0
  %v3766 = vadd.f32 0.0, %v3765
  %v3767 = vpop.f32.mrb[0].mxu0
  %3768 = vdwg.mxu0
  %v3769 = vadd.f32 %v3690, %v3766
  %s3770 = scalar_lea.vmem %s5, 800
  %v3771 = vld [vmem:[%s3770] sm:$0xff]
  %v3772 = vld [vmem:[%s3770 + $0x8] sm:$0xff]
  %v3773 = vld [vmem:[%s3770 + $0x10] sm:$0xff]
  %v3774 = vld [vmem:[%s3770 + $0x18] sm:$0xff]
  %v3776 = vsel %vm1698, %v1674, 0
  %3778 = vmatprep.subr.mxu0 0.0
  %3779 = vmatpush1.msra.mxu0 %v3771
  %3780 = vmatprep.subr.mxu0 0.0
  %3781 = vmatpush1.msra.mxu0 %v3772
  %3782 = vmatprep.subr.mxu0 0.0
  %3783 = vmatpush1.msra.mxu0 %v3773
  %3784 = vmatprep.subr.mxu0 0.0
  %3785 = vmatpush1.msra.mxu0 %v3774
  %3786 = vmatprep.subr.mxu0 0.0
  %3787 = vmatpush1.msra.mxu0 0.0
  %3788 = vmatprep.subr.mxu0 0.0
  %3789 = vmatpush1.msra.mxu0 0.0
  %3790 = vmatprep.subr.mxu0 0.0
  %3791 = vmatpush1.msra.mxu0 0.0
  %3792 = vmatprep.subr.mxu0 0.0
  %3793 = vmatpush1.msra.mxu0 0.0
  %3794 = vmatprep.subr.mxu0 0.0
  %3795 = vmatpush1.msra.mxu0 0.0
  %3796 = vmatprep.subr.mxu0 0.0
  %3797 = vmatpush1.msra.mxu0 0.0
  %3798 = vmatprep.subr.mxu0 0.0
  %3799 = vmatpush1.msra.mxu0 0.0
  %3800 = vmatprep.subr.mxu0 0.0
  %3801 = vmatpush1.msra.mxu0 0.0
  %3802 = vmatprep.subr.mxu0 0.0
  %3803 = vmatpush1.msra.mxu0 0.0
  %3804 = vmatprep.subr.mxu0 0.0
  %3805 = vmatpush1.msra.mxu0 0.0
  %3806 = vmatprep.subr.mxu0 0.0
  %3807 = vmatpush1.msra.mxu0 0.0
  %3808 = vmatprep.subr.mxu0 0.0
  %3809 = vmatpush1.msra.mxu0 0.0
  %3810 = vmatprep.subr.mxu0 0.0
  %3811 = vmatpush1.msra.mxu0 0.0
  %3812 = vmatprep.subr.mxu0 0.0
  %3813 = vmatpush1.msra.mxu0 0.0
  %3814 = vmatprep.subr.mxu0 0.0
  %3815 = vmatpush1.msra.mxu0 0.0
  %3816 = vmatprep.subr.mxu0 0.0
  %3817 = vmatpush1.msra.mxu0 0.0
  %3818 = vmatprep.subr.mxu0 0.0
  %3819 = vmatpush1.msra.mxu0 0.0
  %3820 = vmatprep.subr.mxu0 0.0
  %3821 = vmatpush1.msra.mxu0 0.0
  %3822 = vmatprep.subr.mxu0 0.0
  %3823 = vmatpush1.msra.mxu0 0.0
  %3824 = vmatprep.subr.mxu0 0.0
  %3825 = vmatpush1.msra.mxu0 0.0
  %3826 = vmatprep.subr.mxu0 0.0
  %3827 = vmatpush1.msra.mxu0 0.0
  %3828 = vmatprep.subr.mxu0 0.0
  %3829 = vmatpush1.msra.mxu0 0.0
  %3830 = vmatprep.subr.mxu0 0.0
  %3831 = vmatpush1.msra.mxu0 0.0
  %3832 = vmatprep.subr.mxu0 0.0
  %3833 = vmatpush1.msra.mxu0 0.0
  %3834 = vmatprep.subr.mxu0 0.0
  %3835 = vmatpush1.msra.mxu0 0.0
  %3836 = vmatprep.subr.mxu0 0.0
  %3837 = vmatpush1.msra.mxu0 0.0
  %3838 = vmatprep.subr.mxu0 0.0
  %3839 = vmatpush1.msra.mxu0 0.0
  %3840 = vmatprep.subr.mxu0 0.0
  %3841 = vmatpush1.msra.mxu0 0.0
  %3842 = vmatprep.mubr.f32.mxu0 0.0
  %3843 = vmatmul.mubr.f32.gmra.mrb[0].mxu0 %v3776
  %v3844 = vpop.f32.mrb[0].mxu0
  %v3845 = vadd.f32 0.0, %v3844
  %v3846 = vpop.f32.mrb[0].mxu0
  %3847 = vdwg.mxu0
  %v3848 = vadd.f32 %v3769, %v3845
  %s3849 = scalar_lea.vmem %s5, 832
  %v3850 = vld [vmem:[%s3849] sm:$0xff]
  %v3851 = vld [vmem:[%s3849 + $0x8] sm:$0xff]
  %v3852 = vld [vmem:[%s3849 + $0x10] sm:$0xff]
  %v3853 = vld [vmem:[%s3849 + $0x18] sm:$0xff]
  %v3855 = vsel %vm1698, %v1675, 0
  %3857 = vmatprep.subr.mxu0 0.0
  %3858 = vmatpush1.msra.mxu0 %v3850
  %3859 = vmatprep.subr.mxu0 0.0
  %3860 = vmatpush1.msra.mxu0 %v3851
  %3861 = vmatprep.subr.mxu0 0.0
  %3862 = vmatpush1.msra.mxu0 %v3852
  %3863 = vmatprep.subr.mxu0 0.0
  %3864 = vmatpush1.msra.mxu0 %v3853
  %3865 = vmatprep.subr.mxu0 0.0
  %3866 = vmatpush1.msra.mxu0 0.0
  %3867 = vmatprep.subr.mxu0 0.0
  %3868 = vmatpush1.msra.mxu0 0.0
  %3869 = vmatprep.subr.mxu0 0.0
  %3870 = vmatpush1.msra.mxu0 0.0
  %3871 = vmatprep.subr.mxu0 0.0
  %3872 = vmatpush1.msra.mxu0 0.0
  %3873 = vmatprep.subr.mxu0 0.0
  %3874 = vmatpush1.msra.mxu0 0.0
  %3875 = vmatprep.subr.mxu0 0.0
  %3876 = vmatpush1.msra.mxu0 0.0
  %3877 = vmatprep.subr.mxu0 0.0
  %3878 = vmatpush1.msra.mxu0 0.0
  %3879 = vmatprep.subr.mxu0 0.0
  %3880 = vmatpush1.msra.mxu0 0.0
  %3881 = vmatprep.subr.mxu0 0.0
  %3882 = vmatpush1.msra.mxu0 0.0
  %3883 = vmatprep.subr.mxu0 0.0
  %3884 = vmatpush1.msra.mxu0 0.0
  %3885 = vmatprep.subr.mxu0 0.0
  %3886 = vmatpush1.msra.mxu0 0.0
  %3887 = vmatprep.subr.mxu0 0.0
  %3888 = vmatpush1.msra.mxu0 0.0
  %3889 = vmatprep.subr.mxu0 0.0
  %3890 = vmatpush1.msra.mxu0 0.0
  %3891 = vmatprep.subr.mxu0 0.0
  %3892 = vmatpush1.msra.mxu0 0.0
  %3893 = vmatprep.subr.mxu0 0.0
  %3894 = vmatpush1.msra.mxu0 0.0
  %3895 = vmatprep.subr.mxu0 0.0
  %3896 = vmatpush1.msra.mxu0 0.0
  %3897 = vmatprep.subr.mxu0 0.0
  %3898 = vmatpush1.msra.mxu0 0.0
  %3899 = vmatprep.subr.mxu0 0.0
  %3900 = vmatpush1.msra.mxu0 0.0
  %3901 = vmatprep.subr.mxu0 0.0
  %3902 = vmatpush1.msra.mxu0 0.0
  %3903 = vmatprep.subr.mxu0 0.0
  %3904 = vmatpush1.msra.mxu0 0.0
  %3905 = vmatprep.subr.mxu0 0.0
  %3906 = vmatpush1.msra.mxu0 0.0
  %3907 = vmatprep.subr.mxu0 0.0
  %3908 = vmatpush1.msra.mxu0 0.0
  %3909 = vmatprep.subr.mxu0 0.0
  %3910 = vmatpush1.msra.mxu0 0.0
  %3911 = vmatprep.subr.mxu0 0.0
  %3912 = vmatpush1.msra.mxu0 0.0
  %3913 = vmatprep.subr.mxu0 0.0
  %3914 = vmatpush1.msra.mxu0 0.0
  %3915 = vmatprep.subr.mxu0 0.0
  %3916 = vmatpush1.msra.mxu0 0.0
  %3917 = vmatprep.subr.mxu0 0.0
  %3918 = vmatpush1.msra.mxu0 0.0
  %3919 = vmatprep.subr.mxu0 0.0
  %3920 = vmatpush1.msra.mxu0 0.0
  %3921 = vmatprep.mubr.f32.mxu0 0.0
  %3922 = vmatmul.mubr.f32.gmra.mrb[0].mxu0 %v3855
  %v3923 = vpop.f32.mrb[0].mxu0
  %v3924 = vadd.f32 0.0, %v3923
  %v3925 = vpop.f32.mrb[0].mxu0
  %3926 = vdwg.mxu0
  %v3927 = vadd.f32 %v3848, %v3924
  %s3928 = scalar_lea.vmem %s5, 864
  %v3929 = vld [vmem:[%s3928] sm:$0xff]
  %v3930 = vld [vmem:[%s3928 + $0x8] sm:$0xff]
  %v3931 = vld [vmem:[%s3928 + $0x10] sm:$0xff]
  %v3932 = vld [vmem:[%s3928 + $0x18] sm:$0xff]
  %v3934 = vsel %vm1698, %v1676, 0
  %3936 = vmatprep.subr.mxu0 0.0
  %3937 = vmatpush1.msra.mxu0 %v3929
  %3938 = vmatprep.subr.mxu0 0.0
  %3939 = vmatpush1.msra.mxu0 %v3930
  %3940 = vmatprep.subr.mxu0 0.0
  %3941 = vmatpush1.msra.mxu0 %v3931
  %3942 = vmatprep.subr.mxu0 0.0
  %3943 = vmatpush1.msra.mxu0 %v3932
  %3944 = vmatprep.subr.mxu0 0.0
  %3945 = vmatpush1.msra.mxu0 0.0
  %3946 = vmatprep.subr.mxu0 0.0
  %3947 = vmatpush1.msra.mxu0 0.0
  %3948 = vmatprep.subr.mxu0 0.0
  %3949 = vmatpush1.msra.mxu0 0.0
  %3950 = vmatprep.subr.mxu0 0.0
  %3951 = vmatpush1.msra.mxu0 0.0
  %3952 = vmatprep.subr.mxu0 0.0
  %3953 = vmatpush1.msra.mxu0 0.0
  %3954 = vmatprep.subr.mxu0 0.0
  %3955 = vmatpush1.msra.mxu0 0.0
  %3956 = vmatprep.subr.mxu0 0.0
  %3957 = vmatpush1.msra.mxu0 0.0
  %3958 = vmatprep.subr.mxu0 0.0
  %3959 = vmatpush1.msra.mxu0 0.0
  %3960 = vmatprep.subr.mxu0 0.0
  %3961 = vmatpush1.msra.mxu0 0.0
  %3962 = vmatprep.subr.mxu0 0.0
  %3963 = vmatpush1.msra.mxu0 0.0
  %3964 = vmatprep.subr.mxu0 0.0
  %3965 = vmatpush1.msra.mxu0 0.0
  %3966 = vmatprep.subr.mxu0 0.0
  %3967 = vmatpush1.msra.mxu0 0.0
  %3968 = vmatprep.subr.mxu0 0.0
  %3969 = vmatpush1.msra.mxu0 0.0
  %3970 = vmatprep.subr.mxu0 0.0
  %3971 = vmatpush1.msra.mxu0 0.0
  %3972 = vmatprep.subr.mxu0 0.0
  %3973 = vmatpush1.msra.mxu0 0.0
  %3974 = vmatprep.subr.mxu0 0.0
  %3975 = vmatpush1.msra.mxu0 0.0
  %3976 = vmatprep.subr.mxu0 0.0
  %3977 = vmatpush1.msra.mxu0 0.0
  %3978 = vmatprep.subr.mxu0 0.0
  %3979 = vmatpush1.msra.mxu0 0.0
  %3980 = vmatprep.subr.mxu0 0.0
  %3981 = vmatpush1.msra.mxu0 0.0
  %3982 = vmatprep.subr.mxu0 0.0
  %3983 = vmatpush1.msra.mxu0 0.0
  %3984 = vmatprep.subr.mxu0 0.0
  %3985 = vmatpush1.msra.mxu0 0.0
  %3986 = vmatprep.subr.mxu0 0.0
  %3987 = vmatpush1.msra.mxu0 0.0
  %3988 = vmatprep.subr.mxu0 0.0
  %3989 = vmatpush1.msra.mxu0 0.0
  %3990 = vmatprep.subr.mxu0 0.0
  %3991 = vmatpush1.msra.mxu0 0.0
  %3992 = vmatprep.subr.mxu0 0.0
  %3993 = vmatpush1.msra.mxu0 0.0
  %3994 = vmatprep.subr.mxu0 0.0
  %3995 = vmatpush1.msra.mxu0 0.0
  %3996 = vmatprep.subr.mxu0 0.0
  %3997 = vmatpush1.msra.mxu0 0.0
  %3998 = vmatprep.subr.mxu0 0.0
  %3999 = vmatpush1.msra.mxu0 0.0
  %4000 = vmatprep.mubr.f32.mxu0 0.0
  %4001 = vmatmul.mubr.f32.gmra.mrb[0].mxu0 %v3934
  %v4002 = vpop.f32.mrb[0].mxu0
  %v4003 = vadd.f32 0.0, %v4002
  %v4004 = vpop.f32.mrb[0].mxu0
  %4005 = vdwg.mxu0
  %v4006 = vadd.f32 %v3927, %v4003
  %s4007 = scalar_lea.vmem %s5, 896
  %v4008 = vld [vmem:[%s4007] sm:$0xff]
  %v4009 = vld [vmem:[%s4007 + $0x8] sm:$0xff]
  %v4010 = vld [vmem:[%s4007 + $0x10] sm:$0xff]
  %v4011 = vld [vmem:[%s4007 + $0x18] sm:$0xff]
  %v4013 = vsel %vm1698, %v1677, 0
  %4015 = vmatprep.subr.mxu0 0.0
  %4016 = vmatpush1.msra.mxu0 %v4008
  %4017 = vmatprep.subr.mxu0 0.0
  %4018 = vmatpush1.msra.mxu0 %v4009
  %4019 = vmatprep.subr.mxu0 0.0
  %4020 = vmatpush1.msra.mxu0 %v4010
  %4021 = vmatprep.subr.mxu0 0.0
  %4022 = vmatpush1.msra.mxu0 %v4011
  %4023 = vmatprep.subr.mxu0 0.0
  %4024 = vmatpush1.msra.mxu0 0.0
  %4025 = vmatprep.subr.mxu0 0.0
  %4026 = vmatpush1.msra.mxu0 0.0
  %4027 = vmatprep.subr.mxu0 0.0
  %4028 = vmatpush1.msra.mxu0 0.0
  %4029 = vmatprep.subr.mxu0 0.0
  %4030 = vmatpush1.msra.mxu0 0.0
  %4031 = vmatprep.subr.mxu0 0.0
  %4032 = vmatpush1.msra.mxu0 0.0
  %4033 = vmatprep.subr.mxu0 0.0
  %4034 = vmatpush1.msra.mxu0 0.0
  %4035 = vmatprep.subr.mxu0 0.0
  %4036 = vmatpush1.msra.mxu0 0.0
  %4037 = vmatprep.subr.mxu0 0.0
  %4038 = vmatpush1.msra.mxu0 0.0
  %4039 = vmatprep.subr.mxu0 0.0
  %4040 = vmatpush1.msra.mxu0 0.0
  %4041 = vmatprep.subr.mxu0 0.0
  %4042 = vmatpush1.msra.mxu0 0.0
  %4043 = vmatprep.subr.mxu0 0.0
  %4044 = vmatpush1.msra.mxu0 0.0
  %4045 = vmatprep.subr.mxu0 0.0
  %4046 = vmatpush1.msra.mxu0 0.0
  %4047 = vmatprep.subr.mxu0 0.0
  %4048 = vmatpush1.msra.mxu0 0.0
  %4049 = vmatprep.subr.mxu0 0.0
  %4050 = vmatpush1.msra.mxu0 0.0
  %4051 = vmatprep.subr.mxu0 0.0
  %4052 = vmatpush1.msra.mxu0 0.0
  %4053 = vmatprep.subr.mxu0 0.0
  %4054 = vmatpush1.msra.mxu0 0.0
  %4055 = vmatprep.subr.mxu0 0.0
  %4056 = vmatpush1.msra.mxu0 0.0
  %4057 = vmatprep.subr.mxu0 0.0
  %4058 = vmatpush1.msra.mxu0 0.0
  %4059 = vmatprep.subr.mxu0 0.0
  %4060 = vmatpush1.msra.mxu0 0.0
  %4061 = vmatprep.subr.mxu0 0.0
  %4062 = vmatpush1.msra.mxu0 0.0
  %4063 = vmatprep.subr.mxu0 0.0
  %4064 = vmatpush1.msra.mxu0 0.0
  %4065 = vmatprep.subr.mxu0 0.0
  %4066 = vmatpush1.msra.mxu0 0.0
  %4067 = vmatprep.subr.mxu0 0.0
  %4068 = vmatpush1.msra.mxu0 0.0
  %4069 = vmatprep.subr.mxu0 0.0
  %4070 = vmatpush1.msra.mxu0 0.0
  %4071 = vmatprep.subr.mxu0 0.0
  %4072 = vmatpush1.msra.mxu0 0.0
  %4073 = vmatprep.subr.mxu0 0.0
  %4074 = vmatpush1.msra.mxu0 0.0
  %4075 = vmatprep.subr.mxu0 0.0
  %4076 = vmatpush1.msra.mxu0 0.0
  %4077 = vmatprep.subr.mxu0 0.0
  %4078 = vmatpush1.msra.mxu0 0.0
  %4079 = vmatprep.mubr.f32.mxu0 0.0
  %4080 = vmatmul.mubr.f32.gmra.mrb[0].mxu0 %v4013
  %v4081 = vpop.f32.mrb[0].mxu0
  %v4082 = vadd.f32 0.0, %v4081
  %v4083 = vpop.f32.mrb[0].mxu0
  %4084 = vdwg.mxu0
  %v4085 = vadd.f32 %v4006, %v4082
  %s4086 = scalar_lea.vmem %s5, 928
  %v4087 = vld [vmem:[%s4086] sm:$0xff]
  %v4088 = vld [vmem:[%s4086 + $0x8] sm:$0xff]
  %v4089 = vld [vmem:[%s4086 + $0x10] sm:$0xff]
  %v4090 = vld [vmem:[%s4086 + $0x18] sm:$0xff]
  %v4092 = vsel %vm1698, %v1678, 0
  %4094 = vmatprep.subr.mxu0 0.0
  %4095 = vmatpush1.msra.mxu0 %v4087
  %4096 = vmatprep.subr.mxu0 0.0
  %4097 = vmatpush1.msra.mxu0 %v4088
  %4098 = vmatprep.subr.mxu0 0.0
  %4099 = vmatpush1.msra.mxu0 %v4089
  %4100 = vmatprep.subr.mxu0 0.0
  %4101 = vmatpush1.msra.mxu0 %v4090
  %4102 = vmatprep.subr.mxu0 0.0
  %4103 = vmatpush1.msra.mxu0 0.0
  %4104 = vmatprep.subr.mxu0 0.0
  %4105 = vmatpush1.msra.mxu0 0.0
  %4106 = vmatprep.subr.mxu0 0.0
  %4107 = vmatpush1.msra.mxu0 0.0
  %4108 = vmatprep.subr.mxu0 0.0
  %4109 = vmatpush1.msra.mxu0 0.0
  %4110 = vmatprep.subr.mxu0 0.0
  %4111 = vmatpush1.msra.mxu0 0.0
  %4112 = vmatprep.subr.mxu0 0.0
  %4113 = vmatpush1.msra.mxu0 0.0
  %4114 = vmatprep.subr.mxu0 0.0
  %4115 = vmatpush1.msra.mxu0 0.0
  %4116 = vmatprep.subr.mxu0 0.0
  %4117 = vmatpush1.msra.mxu0 0.0
  %4118 = vmatprep.subr.mxu0 0.0
  %4119 = vmatpush1.msra.mxu0 0.0
  %4120 = vmatprep.subr.mxu0 0.0
  %4121 = vmatpush1.msra.mxu0 0.0
  %4122 = vmatprep.subr.mxu0 0.0
  %4123 = vmatpush1.msra.mxu0 0.0
  %4124 = vmatprep.subr.mxu0 0.0
  %4125 = vmatpush1.msra.mxu0 0.0
  %4126 = vmatprep.subr.mxu0 0.0
  %4127 = vmatpush1.msra.mxu0 0.0
  %4128 = vmatprep.subr.mxu0 0.0
  %4129 = vmatpush1.msra.mxu0 0.0
  %4130 = vmatprep.subr.mxu0 0.0
  %4131 = vmatpush1.msra.mxu0 0.0
  %4132 = vmatprep.subr.mxu0 0.0
  %4133 = vmatpush1.msra.mxu0 0.0
  %4134 = vmatprep.subr.mxu0 0.0
  %4135 = vmatpush1.msra.mxu0 0.0
  %4136 = vmatprep.subr.mxu0 0.0
  %4137 = vmatpush1.msra.mxu0 0.0
  %4138 = vmatprep.subr.mxu0 0.0
  %4139 = vmatpush1.msra.mxu0 0.0
  %4140 = vmatprep.subr.mxu0 0.0
  %4141 = vmatpush1.msra.mxu0 0.0
  %4142 = vmatprep.subr.mxu0 0.0
  %4143 = vmatpush1.msra.mxu0 0.0
  %4144 = vmatprep.subr.mxu0 0.0
  %4145 = vmatpush1.msra.mxu0 0.0
  %4146 = vmatprep.subr.mxu0 0.0
  %4147 = vmatpush1.msra.mxu0 0.0
  %4148 = vmatprep.subr.mxu0 0.0
  %4149 = vmatpush1.msra.mxu0 0.0
  %4150 = vmatprep.subr.mxu0 0.0
  %4151 = vmatpush1.msra.mxu0 0.0
  %4152 = vmatprep.subr.mxu0 0.0
  %4153 = vmatpush1.msra.mxu0 0.0
  %4154 = vmatprep.subr.mxu0 0.0
  %4155 = vmatpush1.msra.mxu0 0.0
  %4156 = vmatprep.subr.mxu0 0.0
  %4157 = vmatpush1.msra.mxu0 0.0
  %4158 = vmatprep.mubr.f32.mxu0 0.0
  %4159 = vmatmul.mubr.f32.gmra.mrb[0].mxu0 %v4092
  %v4160 = vpop.f32.mrb[0].mxu0
  %v4161 = vadd.f32 0.0, %v4160
  %v4162 = vpop.f32.mrb[0].mxu0
  %4163 = vdwg.mxu0
  %v4164 = vadd.f32 %v4085, %v4161
  %s4165 = scalar_lea.vmem %s5, 960
  %v4166 = vld [vmem:[%s4165] sm:$0xff]
  %v4167 = vld [vmem:[%s4165 + $0x8] sm:$0xff]
  %v4168 = vld [vmem:[%s4165 + $0x10] sm:$0xff]
  %v4169 = vld [vmem:[%s4165 + $0x18] sm:$0xff]
  %v4171 = vsel %vm1698, %v1679, 0
  %4173 = vmatprep.subr.mxu0 0.0
  %4174 = vmatpush1.msra.mxu0 %v4166
  %4175 = vmatprep.subr.mxu0 0.0
  %4176 = vmatpush1.msra.mxu0 %v4167
  %4177 = vmatprep.subr.mxu0 0.0
  %4178 = vmatpush1.msra.mxu0 %v4168
  %4179 = vmatprep.subr.mxu0 0.0
  %4180 = vmatpush1.msra.mxu0 %v4169
  %4181 = vmatprep.subr.mxu0 0.0
  %4182 = vmatpush1.msra.mxu0 0.0
  %4183 = vmatprep.subr.mxu0 0.0
  %4184 = vmatpush1.msra.mxu0 0.0
  %4185 = vmatprep.subr.mxu0 0.0
  %4186 = vmatpush1.msra.mxu0 0.0
  %4187 = vmatprep.subr.mxu0 0.0
  %4188 = vmatpush1.msra.mxu0 0.0
  %4189 = vmatprep.subr.mxu0 0.0
  %4190 = vmatpush1.msra.mxu0 0.0
  %4191 = vmatprep.subr.mxu0 0.0
  %4192 = vmatpush1.msra.mxu0 0.0
  %4193 = vmatprep.subr.mxu0 0.0
  %4194 = vmatpush1.msra.mxu0 0.0
  %4195 = vmatprep.subr.mxu0 0.0
  %4196 = vmatpush1.msra.mxu0 0.0
  %4197 = vmatprep.subr.mxu0 0.0
  %4198 = vmatpush1.msra.mxu0 0.0
  %4199 = vmatprep.subr.mxu0 0.0
  %4200 = vmatpush1.msra.mxu0 0.0
  %4201 = vmatprep.subr.mxu0 0.0
  %4202 = vmatpush1.msra.mxu0 0.0
  %4203 = vmatprep.subr.mxu0 0.0
  %4204 = vmatpush1.msra.mxu0 0.0
  %4205 = vmatprep.subr.mxu0 0.0
  %4206 = vmatpush1.msra.mxu0 0.0
  %4207 = vmatprep.subr.mxu0 0.0
  %4208 = vmatpush1.msra.mxu0 0.0
  %4209 = vmatprep.subr.mxu0 0.0
  %4210 = vmatpush1.msra.mxu0 0.0
  %4211 = vmatprep.subr.mxu0 0.0
  %4212 = vmatpush1.msra.mxu0 0.0
  %4213 = vmatprep.subr.mxu0 0.0
  %4214 = vmatpush1.msra.mxu0 0.0
  %4215 = vmatprep.subr.mxu0 0.0
  %4216 = vmatpush1.msra.mxu0 0.0
  %4217 = vmatprep.subr.mxu0 0.0
  %4218 = vmatpush1.msra.mxu0 0.0
  %4219 = vmatprep.subr.mxu0 0.0
  %4220 = vmatpush1.msra.mxu0 0.0
  %4221 = vmatprep.subr.mxu0 0.0
  %4222 = vmatpush1.msra.mxu0 0.0
  %4223 = vmatprep.subr.mxu0 0.0
  %4224 = vmatpush1.msra.mxu0 0.0
  %4225 = vmatprep.subr.mxu0 0.0
  %4226 = vmatpush1.msra.mxu0 0.0
  %4227 = vmatprep.subr.mxu0 0.0
  %4228 = vmatpush1.msra.mxu0 0.0
  %4229 = vmatprep.subr.mxu0 0.0
  %4230 = vmatpush1.msra.mxu0 0.0
  %4231 = vmatprep.subr.mxu0 0.0
  %4232 = vmatpush1.msra.mxu0 0.0
  %4233 = vmatprep.subr.mxu0 0.0
  %4234 = vmatpush1.msra.mxu0 0.0
  %4235 = vmatprep.subr.mxu0 0.0
  %4236 = vmatpush1.msra.mxu0 0.0
  %4237 = vmatprep.mubr.f32.mxu0 0.0
  %4238 = vmatmul.mubr.f32.gmra.mrb[0].mxu0 %v4171
  %v4239 = vpop.f32.mrb[0].mxu0
  %v4240 = vadd.f32 0.0, %v4239
  %v4241 = vpop.f32.mrb[0].mxu0
  %4242 = vdwg.mxu0
  %v4243 = vadd.f32 %v4164, %v4240
  %s4244 = scalar_lea.vmem %s5, 992
  %v4245 = vld [vmem:[%s4244] sm:$0xff]
  %v4246 = vld [vmem:[%s4244 + $0x8] sm:$0xff]
  %v4247 = vld [vmem:[%s4244 + $0x10] sm:$0xff]
  %v4248 = vld [vmem:[%s4244 + $0x18] sm:$0xff]
  %v4250 = vsel %vm1698, %v1680, 0
  %4252 = vmatprep.subr.mxu0 0.0
  %4253 = vmatpush1.msra.mxu0 %v4245
  %4254 = vmatprep.subr.mxu0 0.0
  %4255 = vmatpush1.msra.mxu0 %v4246
  %4256 = vmatprep.subr.mxu0 0.0
  %4257 = vmatpush1.msra.mxu0 %v4247
  %4258 = vmatprep.subr.mxu0 0.0
  %4259 = vmatpush1.msra.mxu0 %v4248
  %4260 = vmatprep.subr.mxu0 0.0
  %4261 = vmatpush1.msra.mxu0 0.0
  %4262 = vmatprep.subr.mxu0 0.0
  %4263 = vmatpush1.msra.mxu0 0.0
  %4264 = vmatprep.subr.mxu0 0.0
  %4265 = vmatpush1.msra.mxu0 0.0
  %4266 = vmatprep.subr.mxu0 0.0
  %4267 = vmatpush1.msra.mxu0 0.0
  %4268 = vmatprep.subr.mxu0 0.0
  %4269 = vmatpush1.msra.mxu0 0.0
  %4270 = vmatprep.subr.mxu0 0.0
  %4271 = vmatpush1.msra.mxu0 0.0
  %4272 = vmatprep.subr.mxu0 0.0
  %4273 = vmatpush1.msra.mxu0 0.0
  %4274 = vmatprep.subr.mxu0 0.0
  %4275 = vmatpush1.msra.mxu0 0.0
  %4276 = vmatprep.subr.mxu0 0.0
  %4277 = vmatpush1.msra.mxu0 0.0
  %4278 = vmatprep.subr.mxu0 0.0
  %4279 = vmatpush1.msra.mxu0 0.0
  %4280 = vmatprep.subr.mxu0 0.0
  %4281 = vmatpush1.msra.mxu0 0.0
  %4282 = vmatprep.subr.mxu0 0.0
  %4283 = vmatpush1.msra.mxu0 0.0
  %4284 = vmatprep.subr.mxu0 0.0
  %4285 = vmatpush1.msra.mxu0 0.0
  %4286 = vmatprep.subr.mxu0 0.0
  %4287 = vmatpush1.msra.mxu0 0.0
  %4288 = vmatprep.subr.mxu0 0.0
  %4289 = vmatpush1.msra.mxu0 0.0
  %4290 = vmatprep.subr.mxu0 0.0
  %4291 = vmatpush1.msra.mxu0 0.0
  %4292 = vmatprep.subr.mxu0 0.0
  %4293 = vmatpush1.msra.mxu0 0.0
  %4294 = vmatprep.subr.mxu0 0.0
  %4295 = vmatpush1.msra.mxu0 0.0
  %4296 = vmatprep.subr.mxu0 0.0
  %4297 = vmatpush1.msra.mxu0 0.0
  %4298 = vmatprep.subr.mxu0 0.0
  %4299 = vmatpush1.msra.mxu0 0.0
  %4300 = vmatprep.subr.mxu0 0.0
  %4301 = vmatpush1.msra.mxu0 0.0
  %4302 = vmatprep.subr.mxu0 0.0
  %4303 = vmatpush1.msra.mxu0 0.0
  %4304 = vmatprep.subr.mxu0 0.0
  %4305 = vmatpush1.msra.mxu0 0.0
  %4306 = vmatprep.subr.mxu0 0.0
  %4307 = vmatpush1.msra.mxu0 0.0
  %4308 = vmatprep.subr.mxu0 0.0
  %4309 = vmatpush1.msra.mxu0 0.0
  %4310 = vmatprep.subr.mxu0 0.0
  %4311 = vmatpush1.msra.mxu0 0.0
  %4312 = vmatprep.subr.mxu0 0.0
  %4313 = vmatpush1.msra.mxu0 0.0
  %4314 = vmatprep.subr.mxu0 0.0
  %4315 = vmatpush1.msra.mxu0 0.0
  %4316 = vmatprep.mubr.f32.mxu0 0.0
  %4317 = vmatmul.mubr.f32.gmra.mrb[0].mxu0 %v4250
  %v4318 = vpop.f32.mrb[0].mxu0
  %v4319 = vadd.f32 0.0, %v4318
  %v4320 = vpop.f32.mrb[0].mxu0
  %4321 = vdwg.mxu0
  %v4322 = vadd.f32 %v4243, %v4319
  %s4323 = scalar_lea.vmem %s5, 1024
  %v4324 = vld [vmem:[%s4323] sm:$0xff]
  %v4325 = vld [vmem:[%s4323 + $0x8] sm:$0xff]
  %v4326 = vld [vmem:[%s4323 + $0x10] sm:$0xff]
  %v4327 = vld [vmem:[%s4323 + $0x18] sm:$0xff]
  %v4329 = vsel %vm1698, %v1681, 0
  %4331 = vmatprep.subr.mxu0 0.0
  %4332 = vmatpush1.msra.mxu0 %v4324
  %4333 = vmatprep.subr.mxu0 0.0
  %4334 = vmatpush1.msra.mxu0 %v4325
  %4335 = vmatprep.subr.mxu0 0.0
  %4336 = vmatpush1.msra.mxu0 %v4326
  %4337 = vmatprep.subr.mxu0 0.0
  %4338 = vmatpush1.msra.mxu0 %v4327
  %4339 = vmatprep.subr.mxu0 0.0
  %4340 = vmatpush1.msra.mxu0 0.0
  %4341 = vmatprep.subr.mxu0 0.0
  %4342 = vmatpush1.msra.mxu0 0.0
  %4343 = vmatprep.subr.mxu0 0.0
  %4344 = vmatpush1.msra.mxu0 0.0
  %4345 = vmatprep.subr.mxu0 0.0
  %4346 = vmatpush1.msra.mxu0 0.0
  %4347 = vmatprep.subr.mxu0 0.0
  %4348 = vmatpush1.msra.mxu0 0.0
  %4349 = vmatprep.subr.mxu0 0.0
  %4350 = vmatpush1.msra.mxu0 0.0
  %4351 = vmatprep.subr.mxu0 0.0
  %4352 = vmatpush1.msra.mxu0 0.0
  %4353 = vmatprep.subr.mxu0 0.0
  %4354 = vmatpush1.msra.mxu0 0.0
  %4355 = vmatprep.subr.mxu0 0.0
  %4356 = vmatpush1.msra.mxu0 0.0
  %4357 = vmatprep.subr.mxu0 0.0
  %4358 = vmatpush1.msra.mxu0 0.0
  %4359 = vmatprep.subr.mxu0 0.0
  %4360 = vmatpush1.msra.mxu0 0.0
  %4361 = vmatprep.subr.mxu0 0.0
  %4362 = vmatpush1.msra.mxu0 0.0
  %4363 = vmatprep.subr.mxu0 0.0
  %4364 = vmatpush1.msra.mxu0 0.0
  %4365 = vmatprep.subr.mxu0 0.0
  %4366 = vmatpush1.msra.mxu0 0.0
  %4367 = vmatprep.subr.mxu0 0.0
  %4368 = vmatpush1.msra.mxu0 0.0
  %4369 = vmatprep.subr.mxu0 0.0
  %4370 = vmatpush1.msra.mxu0 0.0
  %4371 = vmatprep.subr.mxu0 0.0
  %4372 = vmatpush1.msra.mxu0 0.0
  %4373 = vmatprep.subr.mxu0 0.0
  %4374 = vmatpush1.msra.mxu0 0.0
  %4375 = vmatprep.subr.mxu0 0.0
  %4376 = vmatpush1.msra.mxu0 0.0
  %4377 = vmatprep.subr.mxu0 0.0
  %4378 = vmatpush1.msra.mxu0 0.0
  %4379 = vmatprep.subr.mxu0 0.0
  %4380 = vmatpush1.msra.mxu0 0.0
  %4381 = vmatprep.subr.mxu0 0.0
  %4382 = vmatpush1.msra.mxu0 0.0
  %4383 = vmatprep.subr.mxu0 0.0
  %4384 = vmatpush1.msra.mxu0 0.0
  %4385 = vmatprep.subr.mxu0 0.0
  %4386 = vmatpush1.msra.mxu0 0.0
  %4387 = vmatprep.subr.mxu0 0.0
  %4388 = vmatpush1.msra.mxu0 0.0
  %4389 = vmatprep.subr.mxu0 0.0
  %4390 = vmatpush1.msra.mxu0 0.0
  %4391 = vmatprep.subr.mxu0 0.0
  %4392 = vmatpush1.msra.mxu0 0.0
  %4393 = vmatprep.subr.mxu0 0.0
  %4394 = vmatpush1.msra.mxu0 0.0
  %4395 = vmatprep.mubr.f32.mxu0 0.0
  %4396 = vmatmul.mubr.f32.gmra.mrb[0].mxu0 %v4329
  %v4397 = vpop.f32.mrb[0].mxu0
  %v4398 = vadd.f32 0.0, %v4397
  %v4399 = vpop.f32.mrb[0].mxu0
  %4400 = vdwg.mxu0
  %v4401 = vadd.f32 %v4322, %v4398
  %s4402 = scalar_lea.vmem %s5, 1056
  %v4403 = vld [vmem:[%s4402] sm:$0xff]
  %v4404 = vld [vmem:[%s4402 + $0x8] sm:$0xff]
  %v4405 = vld [vmem:[%s4402 + $0x10] sm:$0xff]
  %v4406 = vld [vmem:[%s4402 + $0x18] sm:$0xff]
  %v4408 = vsel %vm1698, %v1682, 0
  %4410 = vmatprep.subr.mxu0 0.0
  %4411 = vmatpush1.msra.mxu0 %v4403
  %4412 = vmatprep.subr.mxu0 0.0
  %4413 = vmatpush1.msra.mxu0 %v4404
  %4414 = vmatprep.subr.mxu0 0.0
  %4415 = vmatpush1.msra.mxu0 %v4405
  %4416 = vmatprep.subr.mxu0 0.0
  %4417 = vmatpush1.msra.mxu0 %v4406
  %4418 = vmatprep.subr.mxu0 0.0
  %4419 = vmatpush1.msra.mxu0 0.0
  %4420 = vmatprep.subr.mxu0 0.0
  %4421 = vmatpush1.msra.mxu0 0.0
  %4422 = vmatprep.subr.mxu0 0.0
  %4423 = vmatpush1.msra.mxu0 0.0
  %4424 = vmatprep.subr.mxu0 0.0
  %4425 = vmatpush1.msra.mxu0 0.0
  %4426 = vmatprep.subr.mxu0 0.0
  %4427 = vmatpush1.msra.mxu0 0.0
  %4428 = vmatprep.subr.mxu0 0.0
  %4429 = vmatpush1.msra.mxu0 0.0
  %4430 = vmatprep.subr.mxu0 0.0
  %4431 = vmatpush1.msra.mxu0 0.0
  %4432 = vmatprep.subr.mxu0 0.0
  %4433 = vmatpush1.msra.mxu0 0.0
  %4434 = vmatprep.subr.mxu0 0.0
  %4435 = vmatpush1.msra.mxu0 0.0
  %4436 = vmatprep.subr.mxu0 0.0
  %4437 = vmatpush1.msra.mxu0 0.0
  %4438 = vmatprep.subr.mxu0 0.0
  %4439 = vmatpush1.msra.mxu0 0.0
  %4440 = vmatprep.subr.mxu0 0.0
  %4441 = vmatpush1.msra.mxu0 0.0
  %4442 = vmatprep.subr.mxu0 0.0
  %4443 = vmatpush1.msra.mxu0 0.0
  %4444 = vmatprep.subr.mxu0 0.0
  %4445 = vmatpush1.msra.mxu0 0.0
  %4446 = vmatprep.subr.mxu0 0.0
  %4447 = vmatpush1.msra.mxu0 0.0
  %4448 = vmatprep.subr.mxu0 0.0
  %4449 = vmatpush1.msra.mxu0 0.0
  %4450 = vmatprep.subr.mxu0 0.0
  %4451 = vmatpush1.msra.mxu0 0.0
  %4452 = vmatprep.subr.mxu0 0.0
  %4453 = vmatpush1.msra.mxu0 0.0
  %4454 = vmatprep.subr.mxu0 0.0
  %4455 = vmatpush1.msra.mxu0 0.0
  %4456 = vmatprep.subr.mxu0 0.0
  %4457 = vmatpush1.msra.mxu0 0.0
  %4458 = vmatprep.subr.mxu0 0.0
  %4459 = vmatpush1.msra.mxu0 0.0
  %4460 = vmatprep.subr.mxu0 0.0
  %4461 = vmatpush1.msra.mxu0 0.0
  %4462 = vmatprep.subr.mxu0 0.0
  %4463 = vmatpush1.msra.mxu0 0.0
  %4464 = vmatprep.subr.mxu0 0.0
  %4465 = vmatpush1.msra.mxu0 0.0
  %4466 = vmatprep.subr.mxu0 0.0
  %4467 = vmatpush1.msra.mxu0 0.0
  %4468 = vmatprep.subr.mxu0 0.0
  %4469 = vmatpush1.msra.mxu0 0.0
  %4470 = vmatprep.subr.mxu0 0.0
  %4471 = vmatpush1.msra.mxu0 0.0
  %4472 = vmatprep.subr.mxu0 0.0
  %4473 = vmatpush1.msra.mxu0 0.0
  %4474 = vmatprep.mubr.f32.mxu0 0.0
  %4475 = vmatmul.mubr.f32.gmra.mrb[0].mxu0 %v4408
  %v4476 = vpop.f32.mrb[0].mxu0
  %v4477 = vadd.f32 0.0, %v4476
  %v4478 = vpop.f32.mrb[0].mxu0
  %4479 = vdwg.mxu0
  %v4480 = vadd.f32 %v4401, %v4477
  %s4481 = scalar_lea.vmem %s5, 1088
  %v4482 = vld [vmem:[%s4481] sm:$0xff]
  %v4483 = vld [vmem:[%s4481 + $0x8] sm:$0xff]
  %v4484 = vld [vmem:[%s4481 + $0x10] sm:$0xff]
  %v4485 = vld [vmem:[%s4481 + $0x18] sm:$0xff]
  %v4487 = vsel %vm1698, %v1683, 0
  %4489 = vmatprep.subr.mxu0 0.0
  %4490 = vmatpush1.msra.mxu0 %v4482
  %4491 = vmatprep.subr.mxu0 0.0
  %4492 = vmatpush1.msra.mxu0 %v4483
  %4493 = vmatprep.subr.mxu0 0.0
  %4494 = vmatpush1.msra.mxu0 %v4484
  %4495 = vmatprep.subr.mxu0 0.0
  %4496 = vmatpush1.msra.mxu0 %v4485
  %4497 = vmatprep.subr.mxu0 0.0
  %4498 = vmatpush1.msra.mxu0 0.0
  %4499 = vmatprep.subr.mxu0 0.0
  %4500 = vmatpush1.msra.mxu0 0.0
  %4501 = vmatprep.subr.mxu0 0.0
  %4502 = vmatpush1.msra.mxu0 0.0
  %4503 = vmatprep.subr.mxu0 0.0
  %4504 = vmatpush1.msra.mxu0 0.0
  %4505 = vmatprep.subr.mxu0 0.0
  %4506 = vmatpush1.msra.mxu0 0.0
  %4507 = vmatprep.subr.mxu0 0.0
  %4508 = vmatpush1.msra.mxu0 0.0
  %4509 = vmatprep.subr.mxu0 0.0
  %4510 = vmatpush1.msra.mxu0 0.0
  %4511 = vmatprep.subr.mxu0 0.0
  %4512 = vmatpush1.msra.mxu0 0.0
  %4513 = vmatprep.subr.mxu0 0.0
  %4514 = vmatpush1.msra.mxu0 0.0
  %4515 = vmatprep.subr.mxu0 0.0
  %4516 = vmatpush1.msra.mxu0 0.0
  %4517 = vmatprep.subr.mxu0 0.0
  %4518 = vmatpush1.msra.mxu0 0.0
  %4519 = vmatprep.subr.mxu0 0.0
  %4520 = vmatpush1.msra.mxu0 0.0
  %4521 = vmatprep.subr.mxu0 0.0
  %4522 = vmatpush1.msra.mxu0 0.0
  %4523 = vmatprep.subr.mxu0 0.0
  %4524 = vmatpush1.msra.mxu0 0.0
  %4525 = vmatprep.subr.mxu0 0.0
  %4526 = vmatpush1.msra.mxu0 0.0
  %4527 = vmatprep.subr.mxu0 0.0
  %4528 = vmatpush1.msra.mxu0 0.0
  %4529 = vmatprep.subr.mxu0 0.0
  %4530 = vmatpush1.msra.mxu0 0.0
  %4531 = vmatprep.subr.mxu0 0.0
  %4532 = vmatpush1.msra.mxu0 0.0
  %4533 = vmatprep.subr.mxu0 0.0
  %4534 = vmatpush1.msra.mxu0 0.0
  %4535 = vmatprep.subr.mxu0 0.0
  %4536 = vmatpush1.msra.mxu0 0.0
  %4537 = vmatprep.subr.mxu0 0.0
  %4538 = vmatpush1.msra.mxu0 0.0
  %4539 = vmatprep.subr.mxu0 0.0
  %4540 = vmatpush1.msra.mxu0 0.0
  %4541 = vmatprep.subr.mxu0 0.0
  %4542 = vmatpush1.msra.mxu0 0.0
  %4543 = vmatprep.subr.mxu0 0.0
  %4544 = vmatpush1.msra.mxu0 0.0
  %4545 = vmatprep.subr.mxu0 0.0
  %4546 = vmatpush1.msra.mxu0 0.0
  %4547 = vmatprep.subr.mxu0 0.0
  %4548 = vmatpush1.msra.mxu0 0.0
  %4549 = vmatprep.subr.mxu0 0.0
  %4550 = vmatpush1.msra.mxu0 0.0
  %4551 = vmatprep.subr.mxu0 0.0
  %4552 = vmatpush1.msra.mxu0 0.0
  %4553 = vmatprep.mubr.f32.mxu0 0.0
  %4554 = vmatmul.mubr.f32.gmra.mrb[0].mxu0 %v4487
  %v4555 = vpop.f32.mrb[0].mxu0
  %v4556 = vadd.f32 0.0, %v4555
  %v4557 = vpop.f32.mrb[0].mxu0
  %4558 = vdwg.mxu0
  %v4559 = vadd.f32 %v4480, %v4556
  %s4560 = scalar_lea.vmem %s5, 1120
  %v4561 = vld [vmem:[%s4560] sm:$0xff]
  %v4562 = vld [vmem:[%s4560 + $0x8] sm:$0xff]
  %v4563 = vld [vmem:[%s4560 + $0x10] sm:$0xff]
  %v4564 = vld [vmem:[%s4560 + $0x18] sm:$0xff]
  %v4566 = vsel %vm1698, %v1684, 0
  %4568 = vmatprep.subr.mxu0 0.0
  %4569 = vmatpush1.msra.mxu0 %v4561
  %4570 = vmatprep.subr.mxu0 0.0
  %4571 = vmatpush1.msra.mxu0 %v4562
  %4572 = vmatprep.subr.mxu0 0.0
  %4573 = vmatpush1.msra.mxu0 %v4563
  %4574 = vmatprep.subr.mxu0 0.0
  %4575 = vmatpush1.msra.mxu0 %v4564
  %4576 = vmatprep.subr.mxu0 0.0
  %4577 = vmatpush1.msra.mxu0 0.0
  %4578 = vmatprep.subr.mxu0 0.0
  %4579 = vmatpush1.msra.mxu0 0.0
  %4580 = vmatprep.subr.mxu0 0.0
  %4581 = vmatpush1.msra.mxu0 0.0
  %4582 = vmatprep.subr.mxu0 0.0
  %4583 = vmatpush1.msra.mxu0 0.0
  %4584 = vmatprep.subr.mxu0 0.0
  %4585 = vmatpush1.msra.mxu0 0.0
  %4586 = vmatprep.subr.mxu0 0.0
  %4587 = vmatpush1.msra.mxu0 0.0
  %4588 = vmatprep.subr.mxu0 0.0
  %4589 = vmatpush1.msra.mxu0 0.0
  %4590 = vmatprep.subr.mxu0 0.0
  %4591 = vmatpush1.msra.mxu0 0.0
  %4592 = vmatprep.subr.mxu0 0.0
  %4593 = vmatpush1.msra.mxu0 0.0
  %4594 = vmatprep.subr.mxu0 0.0
  %4595 = vmatpush1.msra.mxu0 0.0
  %4596 = vmatprep.subr.mxu0 0.0
  %4597 = vmatpush1.msra.mxu0 0.0
  %4598 = vmatprep.subr.mxu0 0.0
  %4599 = vmatpush1.msra.mxu0 0.0
  %4600 = vmatprep.subr.mxu0 0.0
  %4601 = vmatpush1.msra.mxu0 0.0
  %4602 = vmatprep.subr.mxu0 0.0
  %4603 = vmatpush1.msra.mxu0 0.0
  %4604 = vmatprep.subr.mxu0 0.0
  %4605 = vmatpush1.msra.mxu0 0.0
  %4606 = vmatprep.subr.mxu0 0.0
  %4607 = vmatpush1.msra.mxu0 0.0
  %4608 = vmatprep.subr.mxu0 0.0
  %4609 = vmatpush1.msra.mxu0 0.0
  %4610 = vmatprep.subr.mxu0 0.0
  %4611 = vmatpush1.msra.mxu0 0.0
  %4612 = vmatprep.subr.mxu0 0.0
  %4613 = vmatpush1.msra.mxu0 0.0
  %4614 = vmatprep.subr.mxu0 0.0
  %4615 = vmatpush1.msra.mxu0 0.0
  %4616 = vmatprep.subr.mxu0 0.0
  %4617 = vmatpush1.msra.mxu0 0.0
  %4618 = vmatprep.subr.mxu0 0.0
  %4619 = vmatpush1.msra.mxu0 0.0
  %4620 = vmatprep.subr.mxu0 0.0
  %4621 = vmatpush1.msra.mxu0 0.0
  %4622 = vmatprep.subr.mxu0 0.0
  %4623 = vmatpush1.msra.mxu0 0.0
  %4624 = vmatprep.subr.mxu0 0.0
  %4625 = vmatpush1.msra.mxu0 0.0
  %4626 = vmatprep.subr.mxu0 0.0
  %4627 = vmatpush1.msra.mxu0 0.0
  %4628 = vmatprep.subr.mxu0 0.0
  %4629 = vmatpush1.msra.mxu0 0.0
  %4630 = vmatprep.subr.mxu0 0.0
  %4631 = vmatpush1.msra.mxu0 0.0
  %4632 = vmatprep.mubr.f32.mxu0 0.0
  %4633 = vmatmul.mubr.f32.gmra.mrb[0].mxu0 %v4566
  %v4634 = vpop.f32.mrb[0].mxu0
  %v4635 = vadd.f32 0.0, %v4634
  %v4636 = vpop.f32.mrb[0].mxu0
  %4637 = vdwg.mxu0
  %v4638 = vadd.f32 %v4559, %v4635
  %s4639 = scalar_lea.vmem %s5, 1152
  %v4640 = vld [vmem:[%s4639] sm:$0xff]
  %v4641 = vld [vmem:[%s4639 + $0x8] sm:$0xff]
  %v4642 = vld [vmem:[%s4639 + $0x10] sm:$0xff]
  %v4643 = vld [vmem:[%s4639 + $0x18] sm:$0xff]
  %v4645 = vsel %vm1698, %v1685, 0
  %4647 = vmatprep.subr.mxu0 0.0
  %4648 = vmatpush1.msra.mxu0 %v4640
  %4649 = vmatprep.subr.mxu0 0.0
  %4650 = vmatpush1.msra.mxu0 %v4641
  %4651 = vmatprep.subr.mxu0 0.0
  %4652 = vmatpush1.msra.mxu0 %v4642
  %4653 = vmatprep.subr.mxu0 0.0
  %4654 = vmatpush1.msra.mxu0 %v4643
  %4655 = vmatprep.subr.mxu0 0.0
  %4656 = vmatpush1.msra.mxu0 0.0
  %4657 = vmatprep.subr.mxu0 0.0
  %4658 = vmatpush1.msra.mxu0 0.0
  %4659 = vmatprep.subr.mxu0 0.0
  %4660 = vmatpush1.msra.mxu0 0.0
  %4661 = vmatprep.subr.mxu0 0.0
  %4662 = vmatpush1.msra.mxu0 0.0
  %4663 = vmatprep.subr.mxu0 0.0
  %4664 = vmatpush1.msra.mxu0 0.0
  %4665 = vmatprep.subr.mxu0 0.0
  %4666 = vmatpush1.msra.mxu0 0.0
  %4667 = vmatprep.subr.mxu0 0.0
  %4668 = vmatpush1.msra.mxu0 0.0
  %4669 = vmatprep.subr.mxu0 0.0
  %4670 = vmatpush1.msra.mxu0 0.0
  %4671 = vmatprep.subr.mxu0 0.0
  %4672 = vmatpush1.msra.mxu0 0.0
  %4673 = vmatprep.subr.mxu0 0.0
  %4674 = vmatpush1.msra.mxu0 0.0
  %4675 = vmatprep.subr.mxu0 0.0
  %4676 = vmatpush1.msra.mxu0 0.0
  %4677 = vmatprep.subr.mxu0 0.0
  %4678 = vmatpush1.msra.mxu0 0.0
  %4679 = vmatprep.subr.mxu0 0.0
  %4680 = vmatpush1.msra.mxu0 0.0
  %4681 = vmatprep.subr.mxu0 0.0
  %4682 = vmatpush1.msra.mxu0 0.0
  %4683 = vmatprep.subr.mxu0 0.0
  %4684 = vmatpush1.msra.mxu0 0.0
  %4685 = vmatprep.subr.mxu0 0.0
  %4686 = vmatpush1.msra.mxu0 0.0
  %4687 = vmatprep.subr.mxu0 0.0
  %4688 = vmatpush1.msra.mxu0 0.0
  %4689 = vmatprep.subr.mxu0 0.0
  %4690 = vmatpush1.msra.mxu0 0.0
  %4691 = vmatprep.subr.mxu0 0.0
  %4692 = vmatpush1.msra.mxu0 0.0
  %4693 = vmatprep.subr.mxu0 0.0
  %4694 = vmatpush1.msra.mxu0 0.0
  %4695 = vmatprep.subr.mxu0 0.0
  %4696 = vmatpush1.msra.mxu0 0.0
  %4697 = vmatprep.subr.mxu0 0.0
  %4698 = vmatpush1.msra.mxu0 0.0
  %4699 = vmatprep.subr.mxu0 0.0
  %4700 = vmatpush1.msra.mxu0 0.0
  %4701 = vmatprep.subr.mxu0 0.0
  %4702 = vmatpush1.msra.mxu0 0.0
  %4703 = vmatprep.subr.mxu0 0.0
  %4704 = vmatpush1.msra.mxu0 0.0
  %4705 = vmatprep.subr.mxu0 0.0
  %4706 = vmatpush1.msra.mxu0 0.0
  %4707 = vmatprep.subr.mxu0 0.0
  %4708 = vmatpush1.msra.mxu0 0.0
  %4709 = vmatprep.subr.mxu0 0.0
  %4710 = vmatpush1.msra.mxu0 0.0
  %4711 = vmatprep.mubr.f32.mxu0 0.0
  %4712 = vmatmul.mubr.f32.gmra.mrb[0].mxu0 %v4645
  %v4713 = vpop.f32.mrb[0].mxu0
  %v4714 = vadd.f32 0.0, %v4713
  %v4715 = vpop.f32.mrb[0].mxu0
  %4716 = vdwg.mxu0
  %v4717 = vadd.f32 %v4638, %v4714
  %s4718 = scalar_lea.vmem %s5, 1184
  %v4719 = vld [vmem:[%s4718] sm:$0xff]
  %v4720 = vld [vmem:[%s4718 + $0x8] sm:$0xff]
  %v4721 = vld [vmem:[%s4718 + $0x10] sm:$0xff]
  %v4722 = vld [vmem:[%s4718 + $0x18] sm:$0xff]
  %v4724 = vsel %vm1698, %v1686, 0
  %4726 = vmatprep.subr.mxu0 0.0
  %4727 = vmatpush1.msra.mxu0 %v4719
  %4728 = vmatprep.subr.mxu0 0.0
  %4729 = vmatpush1.msra.mxu0 %v4720
  %4730 = vmatprep.subr.mxu0 0.0
  %4731 = vmatpush1.msra.mxu0 %v4721
  %4732 = vmatprep.subr.mxu0 0.0
  %4733 = vmatpush1.msra.mxu0 %v4722
  %4734 = vmatprep.subr.mxu0 0.0
  %4735 = vmatpush1.msra.mxu0 0.0
  %4736 = vmatprep.subr.mxu0 0.0
  %4737 = vmatpush1.msra.mxu0 0.0
  %4738 = vmatprep.subr.mxu0 0.0
  %4739 = vmatpush1.msra.mxu0 0.0
  %4740 = vmatprep.subr.mxu0 0.0
  %4741 = vmatpush1.msra.mxu0 0.0
  %4742 = vmatprep.subr.mxu0 0.0
  %4743 = vmatpush1.msra.mxu0 0.0
  %4744 = vmatprep.subr.mxu0 0.0
  %4745 = vmatpush1.msra.mxu0 0.0
  %4746 = vmatprep.subr.mxu0 0.0
  %4747 = vmatpush1.msra.mxu0 0.0
  %4748 = vmatprep.subr.mxu0 0.0
  %4749 = vmatpush1.msra.mxu0 0.0
  %4750 = vmatprep.subr.mxu0 0.0
  %4751 = vmatpush1.msra.mxu0 0.0
  %4752 = vmatprep.subr.mxu0 0.0
  %4753 = vmatpush1.msra.mxu0 0.0
  %4754 = vmatprep.subr.mxu0 0.0
  %4755 = vmatpush1.msra.mxu0 0.0
  %4756 = vmatprep.subr.mxu0 0.0
  %4757 = vmatpush1.msra.mxu0 0.0
  %4758 = vmatprep.subr.mxu0 0.0
  %4759 = vmatpush1.msra.mxu0 0.0
  %4760 = vmatprep.subr.mxu0 0.0
  %4761 = vmatpush1.msra.mxu0 0.0
  %4762 = vmatprep.subr.mxu0 0.0
  %4763 = vmatpush1.msra.mxu0 0.0
  %4764 = vmatprep.subr.mxu0 0.0
  %4765 = vmatpush1.msra.mxu0 0.0
  %4766 = vmatprep.subr.mxu0 0.0
  %4767 = vmatpush1.msra.mxu0 0.0
  %4768 = vmatprep.subr.mxu0 0.0
  %4769 = vmatpush1.msra.mxu0 0.0
  %4770 = vmatprep.subr.mxu0 0.0
  %4771 = vmatpush1.msra.mxu0 0.0
  %4772 = vmatprep.subr.mxu0 0.0
  %4773 = vmatpush1.msra.mxu0 0.0
  %4774 = vmatprep.subr.mxu0 0.0
  %4775 = vmatpush1.msra.mxu0 0.0
  %4776 = vmatprep.subr.mxu0 0.0
  %4777 = vmatpush1.msra.mxu0 0.0
  %4778 = vmatprep.subr.mxu0 0.0
  %4779 = vmatpush1.msra.mxu0 0.0
  %4780 = vmatprep.subr.mxu0 0.0
  %4781 = vmatpush1.msra.mxu0 0.0
  %4782 = vmatprep.subr.mxu0 0.0
  %4783 = vmatpush1.msra.mxu0 0.0
  %4784 = vmatprep.subr.mxu0 0.0
  %4785 = vmatpush1.msra.mxu0 0.0
  %4786 = vmatprep.subr.mxu0 0.0
  %4787 = vmatpush1.msra.mxu0 0.0
  %4788 = vmatprep.subr.mxu0 0.0
  %4789 = vmatpush1.msra.mxu0 0.0
  %4790 = vmatprep.mubr.f32.mxu0 0.0
  %4791 = vmatmul.mubr.f32.gmra.mrb[0].mxu0 %v4724
  %v4792 = vpop.f32.mrb[0].mxu0
  %v4793 = vadd.f32 0.0, %v4792
  %v4794 = vpop.f32.mrb[0].mxu0
  %4795 = vdwg.mxu0
  %v4796 = vadd.f32 %v4717, %v4793
  %s4797 = scalar_lea.vmem %s5, 1216
  %v4798 = vld [vmem:[%s4797] sm:$0xff]
  %v4799 = vld [vmem:[%s4797 + $0x8] sm:$0xff]
  %v4800 = vld [vmem:[%s4797 + $0x10] sm:$0xff]
  %v4801 = vld [vmem:[%s4797 + $0x18] sm:$0xff]
  %v4803 = vsel %vm1698, %v1687, 0
  %4805 = vmatprep.subr.mxu0 0.0
  %4806 = vmatpush1.msra.mxu0 %v4798
  %4807 = vmatprep.subr.mxu0 0.0
  %4808 = vmatpush1.msra.mxu0 %v4799
  %4809 = vmatprep.subr.mxu0 0.0
  %4810 = vmatpush1.msra.mxu0 %v4800
  %4811 = vmatprep.subr.mxu0 0.0
  %4812 = vmatpush1.msra.mxu0 %v4801
  %4813 = vmatprep.subr.mxu0 0.0
  %4814 = vmatpush1.msra.mxu0 0.0
  %4815 = vmatprep.subr.mxu0 0.0
  %4816 = vmatpush1.msra.mxu0 0.0
  %4817 = vmatprep.subr.mxu0 0.0
  %4818 = vmatpush1.msra.mxu0 0.0
  %4819 = vmatprep.subr.mxu0 0.0
  %4820 = vmatpush1.msra.mxu0 0.0
  %4821 = vmatprep.subr.mxu0 0.0
  %4822 = vmatpush1.msra.mxu0 0.0
  %4823 = vmatprep.subr.mxu0 0.0
  %4824 = vmatpush1.msra.mxu0 0.0
  %4825 = vmatprep.subr.mxu0 0.0
  %4826 = vmatpush1.msra.mxu0 0.0
  %4827 = vmatprep.subr.mxu0 0.0
  %4828 = vmatpush1.msra.mxu0 0.0
  %4829 = vmatprep.subr.mxu0 0.0
  %4830 = vmatpush1.msra.mxu0 0.0
  %4831 = vmatprep.subr.mxu0 0.0
  %4832 = vmatpush1.msra.mxu0 0.0
  %4833 = vmatprep.subr.mxu0 0.0
  %4834 = vmatpush1.msra.mxu0 0.0
  %4835 = vmatprep.subr.mxu0 0.0
  %4836 = vmatpush1.msra.mxu0 0.0
  %4837 = vmatprep.subr.mxu0 0.0
  %4838 = vmatpush1.msra.mxu0 0.0
  %4839 = vmatprep.subr.mxu0 0.0
  %4840 = vmatpush1.msra.mxu0 0.0
  %4841 = vmatprep.subr.mxu0 0.0
  %4842 = vmatpush1.msra.mxu0 0.0
  %4843 = vmatprep.subr.mxu0 0.0
  %4844 = vmatpush1.msra.mxu0 0.0
  %4845 = vmatprep.subr.mxu0 0.0
  %4846 = vmatpush1.msra.mxu0 0.0
  %4847 = vmatprep.subr.mxu0 0.0
  %4848 = vmatpush1.msra.mxu0 0.0
  %4849 = vmatprep.subr.mxu0 0.0
  %4850 = vmatpush1.msra.mxu0 0.0
  %4851 = vmatprep.subr.mxu0 0.0
  %4852 = vmatpush1.msra.mxu0 0.0
  %4853 = vmatprep.subr.mxu0 0.0
  %4854 = vmatpush1.msra.mxu0 0.0
  %4855 = vmatprep.subr.mxu0 0.0
  %4856 = vmatpush1.msra.mxu0 0.0
  %4857 = vmatprep.subr.mxu0 0.0
  %4858 = vmatpush1.msra.mxu0 0.0
  %4859 = vmatprep.subr.mxu0 0.0
  %4860 = vmatpush1.msra.mxu0 0.0
  %4861 = vmatprep.subr.mxu0 0.0
  %4862 = vmatpush1.msra.mxu0 0.0
  %4863 = vmatprep.subr.mxu0 0.0
  %4864 = vmatpush1.msra.mxu0 0.0
  %4865 = vmatprep.subr.mxu0 0.0
  %4866 = vmatpush1.msra.mxu0 0.0
  %4867 = vmatprep.subr.mxu0 0.0
  %4868 = vmatpush1.msra.mxu0 0.0
  %4869 = vmatprep.mubr.f32.mxu0 0.0
  %4870 = vmatmul.mubr.f32.gmra.mrb[0].mxu0 %v4803
  %v4871 = vpop.f32.mrb[0].mxu0
  %v4872 = vadd.f32 0.0, %v4871
  %v4873 = vpop.f32.mrb[0].mxu0
  %4874 = vdwg.mxu0
  %v4875 = vadd.f32 %v4796, %v4872
  %s4876 = scalar_lea.vmem %s5, 1248
  %v4877 = vld [vmem:[%s4876] sm:$0xff]
  %v4878 = vld [vmem:[%s4876 + $0x8] sm:$0xff]
  %v4879 = vld [vmem:[%s4876 + $0x10] sm:$0xff]
  %v4880 = vld [vmem:[%s4876 + $0x18] sm:$0xff]
  %v4882 = vsel %vm1698, %v1688, 0
  %4884 = vmatprep.subr.mxu0 0.0
  %4885 = vmatpush1.msra.mxu0 %v4877
  %4886 = vmatprep.subr.mxu0 0.0
  %4887 = vmatpush1.msra.mxu0 %v4878
  %4888 = vmatprep.subr.mxu0 0.0
  %4889 = vmatpush1.msra.mxu0 %v4879
  %4890 = vmatprep.subr.mxu0 0.0
  %4891 = vmatpush1.msra.mxu0 %v4880
  %4892 = vmatprep.subr.mxu0 0.0
  %4893 = vmatpush1.msra.mxu0 0.0
  %4894 = vmatprep.subr.mxu0 0.0
  %4895 = vmatpush1.msra.mxu0 0.0
  %4896 = vmatprep.subr.mxu0 0.0
  %4897 = vmatpush1.msra.mxu0 0.0
  %4898 = vmatprep.subr.mxu0 0.0
  %4899 = vmatpush1.msra.mxu0 0.0
  %4900 = vmatprep.subr.mxu0 0.0
  %4901 = vmatpush1.msra.mxu0 0.0
  %4902 = vmatprep.subr.mxu0 0.0
  %4903 = vmatpush1.msra.mxu0 0.0
  %4904 = vmatprep.subr.mxu0 0.0
  %4905 = vmatpush1.msra.mxu0 0.0
  %4906 = vmatprep.subr.mxu0 0.0
  %4907 = vmatpush1.msra.mxu0 0.0
  %4908 = vmatprep.subr.mxu0 0.0
  %4909 = vmatpush1.msra.mxu0 0.0
  %4910 = vmatprep.subr.mxu0 0.0
  %4911 = vmatpush1.msra.mxu0 0.0
  %4912 = vmatprep.subr.mxu0 0.0
  %4913 = vmatpush1.msra.mxu0 0.0
  %4914 = vmatprep.subr.mxu0 0.0
  %4915 = vmatpush1.msra.mxu0 0.0
  %4916 = vmatprep.subr.mxu0 0.0
  %4917 = vmatpush1.msra.mxu0 0.0
  %4918 = vmatprep.subr.mxu0 0.0
  %4919 = vmatpush1.msra.mxu0 0.0
  %4920 = vmatprep.subr.mxu0 0.0
  %4921 = vmatpush1.msra.mxu0 0.0
  %4922 = vmatprep.subr.mxu0 0.0
  %4923 = vmatpush1.msra.mxu0 0.0
  %4924 = vmatprep.subr.mxu0 0.0
  %4925 = vmatpush1.msra.mxu0 0.0
  %4926 = vmatprep.subr.mxu0 0.0
  %4927 = vmatpush1.msra.mxu0 0.0
  %4928 = vmatprep.subr.mxu0 0.0
  %4929 = vmatpush1.msra.mxu0 0.0
  %4930 = vmatprep.subr.mxu0 0.0
  %4931 = vmatpush1.msra.mxu0 0.0
  %4932 = vmatprep.subr.mxu0 0.0
  %4933 = vmatpush1.msra.mxu0 0.0
  %4934 = vmatprep.subr.mxu0 0.0
  %4935 = vmatpush1.msra.mxu0 0.0
  %4936 = vmatprep.subr.mxu0 0.0
  %4937 = vmatpush1.msra.mxu0 0.0
  %4938 = vmatprep.subr.mxu0 0.0
  %4939 = vmatpush1.msra.mxu0 0.0
  %4940 = vmatprep.subr.mxu0 0.0
  %4941 = vmatpush1.msra.mxu0 0.0
  %4942 = vmatprep.subr.mxu0 0.0
  %4943 = vmatpush1.msra.mxu0 0.0
  %4944 = vmatprep.subr.mxu0 0.0
  %4945 = vmatpush1.msra.mxu0 0.0
  %4946 = vmatprep.subr.mxu0 0.0
  %4947 = vmatpush1.msra.mxu0 0.0
  %4948 = vmatprep.mubr.f32.mxu0 0.0
  %4949 = vmatmul.mubr.f32.gmra.mrb[0].mxu0 %v4882
  %v4950 = vpop.f32.mrb[0].mxu0
  %v4951 = vadd.f32 0.0, %v4950
  %v4952 = vpop.f32.mrb[0].mxu0
  %4953 = vdwg.mxu0
  %v4954 = vadd.f32 %v4875, %v4951
  %s4955 = scalar_lea.vmem %s5, 1280
  %v4956 = vld [vmem:[%s4955] sm:$0xff]
  %v4957 = vld [vmem:[%s4955 + $0x8] sm:$0xff]
  %v4958 = vld [vmem:[%s4955 + $0x10] sm:$0xff]
  %v4959 = vld [vmem:[%s4955 + $0x18] sm:$0xff]
  %v4961 = vsel %vm1698, %v1689, 0
  %4963 = vmatprep.subr.mxu0 0.0
  %4964 = vmatpush1.msra.mxu0 %v4956
  %4965 = vmatprep.subr.mxu0 0.0
  %4966 = vmatpush1.msra.mxu0 %v4957
  %4967 = vmatprep.subr.mxu0 0.0
  %4968 = vmatpush1.msra.mxu0 %v4958
  %4969 = vmatprep.subr.mxu0 0.0
  %4970 = vmatpush1.msra.mxu0 %v4959
  %4971 = vmatprep.subr.mxu0 0.0
  %4972 = vmatpush1.msra.mxu0 0.0
  %4973 = vmatprep.subr.mxu0 0.0
  %4974 = vmatpush1.msra.mxu0 0.0
  %4975 = vmatprep.subr.mxu0 0.0
  %4976 = vmatpush1.msra.mxu0 0.0
  %4977 = vmatprep.subr.mxu0 0.0
  %4978 = vmatpush1.msra.mxu0 0.0
  %4979 = vmatprep.subr.mxu0 0.0
  %4980 = vmatpush1.msra.mxu0 0.0
  %4981 = vmatprep.subr.mxu0 0.0
  %4982 = vmatpush1.msra.mxu0 0.0
  %4983 = vmatprep.subr.mxu0 0.0
  %4984 = vmatpush1.msra.mxu0 0.0
  %4985 = vmatprep.subr.mxu0 0.0
  %4986 = vmatpush1.msra.mxu0 0.0
  %4987 = vmatprep.subr.mxu0 0.0
  %4988 = vmatpush1.msra.mxu0 0.0
  %4989 = vmatprep.subr.mxu0 0.0
  %4990 = vmatpush1.msra.mxu0 0.0
  %4991 = vmatprep.subr.mxu0 0.0
  %4992 = vmatpush1.msra.mxu0 0.0
  %4993 = vmatprep.subr.mxu0 0.0
  %4994 = vmatpush1.msra.mxu0 0.0
  %4995 = vmatprep.subr.mxu0 0.0
  %4996 = vmatpush1.msra.mxu0 0.0
  %4997 = vmatprep.subr.mxu0 0.0
  %4998 = vmatpush1.msra.mxu0 0.0
  %4999 = vmatprep.subr.mxu0 0.0
  %5000 = vmatpush1.msra.mxu0 0.0
  %5001 = vmatprep.subr.mxu0 0.0
  %5002 = vmatpush1.msra.mxu0 0.0
  %5003 = vmatprep.subr.mxu0 0.0
  %5004 = vmatpush1.msra.mxu0 0.0
  %5005 = vmatprep.subr.mxu0 0.0
  %5006 = vmatpush1.msra.mxu0 0.0
  %5007 = vmatprep.subr.mxu0 0.0
  %5008 = vmatpush1.msra.mxu0 0.0
  %5009 = vmatprep.subr.mxu0 0.0
  %5010 = vmatpush1.msra.mxu0 0.0
  %5011 = vmatprep.subr.mxu0 0.0
  %5012 = vmatpush1.msra.mxu0 0.0
  %5013 = vmatprep.subr.mxu0 0.0
  %5014 = vmatpush1.msra.mxu0 0.0
  %5015 = vmatprep.subr.mxu0 0.0
  %5016 = vmatpush1.msra.mxu0 0.0
  %5017 = vmatprep.subr.mxu0 0.0
  %5018 = vmatpush1.msra.mxu0 0.0
  %5019 = vmatprep.subr.mxu0 0.0
  %5020 = vmatpush1.msra.mxu0 0.0
  %5021 = vmatprep.subr.mxu0 0.0
  %5022 = vmatpush1.msra.mxu0 0.0
  %5023 = vmatprep.subr.mxu0 0.0
  %5024 = vmatpush1.msra.mxu0 0.0
  %5025 = vmatprep.subr.mxu0 0.0
  %5026 = vmatpush1.msra.mxu0 0.0
  %5027 = vmatprep.mubr.f32.mxu0 0.0
  %5028 = vmatmul.mubr.f32.gmra.mrb[0].mxu0 %v4961
  %v5029 = vpop.f32.mrb[0].mxu0
  %v5030 = vadd.f32 0.0, %v5029
  %v5031 = vpop.f32.mrb[0].mxu0
  %5032 = vdwg.mxu0
  %v5033 = vadd.f32 %v4954, %v5030
  %s5034 = scalar_lea.vmem %s5, 1312
  %v5035 = vld [vmem:[%s5034] sm:$0xff]
  %v5036 = vld [vmem:[%s5034 + $0x8] sm:$0xff]
  %v5037 = vld [vmem:[%s5034 + $0x10] sm:$0xff]
  %v5038 = vld [vmem:[%s5034 + $0x18] sm:$0xff]
  %v5040 = vsel %vm1698, %v1690, 0
  %5042 = vmatprep.subr.mxu0 0.0
  %5043 = vmatpush1.msra.mxu0 %v5035
  %5044 = vmatprep.subr.mxu0 0.0
  %5045 = vmatpush1.msra.mxu0 %v5036
  %5046 = vmatprep.subr.mxu0 0.0
  %5047 = vmatpush1.msra.mxu0 %v5037
  %5048 = vmatprep.subr.mxu0 0.0
  %5049 = vmatpush1.msra.mxu0 %v5038
  %5050 = vmatprep.subr.mxu0 0.0
  %5051 = vmatpush1.msra.mxu0 0.0
  %5052 = vmatprep.subr.mxu0 0.0
  %5053 = vmatpush1.msra.mxu0 0.0
  %5054 = vmatprep.subr.mxu0 0.0
  %5055 = vmatpush1.msra.mxu0 0.0
  %5056 = vmatprep.subr.mxu0 0.0
  %5057 = vmatpush1.msra.mxu0 0.0
  %5058 = vmatprep.subr.mxu0 0.0
  %5059 = vmatpush1.msra.mxu0 0.0
  %5060 = vmatprep.subr.mxu0 0.0
  %5061 = vmatpush1.msra.mxu0 0.0
  %5062 = vmatprep.subr.mxu0 0.0
  %5063 = vmatpush1.msra.mxu0 0.0
  %5064 = vmatprep.subr.mxu0 0.0
  %5065 = vmatpush1.msra.mxu0 0.0
  %5066 = vmatprep.subr.mxu0 0.0
  %5067 = vmatpush1.msra.mxu0 0.0
  %5068 = vmatprep.subr.mxu0 0.0
  %5069 = vmatpush1.msra.mxu0 0.0
  %5070 = vmatprep.subr.mxu0 0.0
  %5071 = vmatpush1.msra.mxu0 0.0
  %5072 = vmatprep.subr.mxu0 0.0
  %5073 = vmatpush1.msra.mxu0 0.0
  %5074 = vmatprep.subr.mxu0 0.0
  %5075 = vmatpush1.msra.mxu0 0.0
  %5076 = vmatprep.subr.mxu0 0.0
  %5077 = vmatpush1.msra.mxu0 0.0
  %5078 = vmatprep.subr.mxu0 0.0
  %5079 = vmatpush1.msra.mxu0 0.0
  %5080 = vmatprep.subr.mxu0 0.0
  %5081 = vmatpush1.msra.mxu0 0.0
  %5082 = vmatprep.subr.mxu0 0.0
  %5083 = vmatpush1.msra.mxu0 0.0
  %5084 = vmatprep.subr.mxu0 0.0
  %5085 = vmatpush1.msra.mxu0 0.0
  %5086 = vmatprep.subr.mxu0 0.0
  %5087 = vmatpush1.msra.mxu0 0.0
  %5088 = vmatprep.subr.mxu0 0.0
  %5089 = vmatpush1.msra.mxu0 0.0
  %5090 = vmatprep.subr.mxu0 0.0
  %5091 = vmatpush1.msra.mxu0 0.0
  %5092 = vmatprep.subr.mxu0 0.0
  %5093 = vmatpush1.msra.mxu0 0.0
  %5094 = vmatprep.subr.mxu0 0.0
  %5095 = vmatpush1.msra.mxu0 0.0
  %5096 = vmatprep.subr.mxu0 0.0
  %5097 = vmatpush1.msra.mxu0 0.0
  %5098 = vmatprep.subr.mxu0 0.0
  %5099 = vmatpush1.msra.mxu0 0.0
  %5100 = vmatprep.subr.mxu0 0.0
  %5101 = vmatpush1.msra.mxu0 0.0
  %5102 = vmatprep.subr.mxu0 0.0
  %5103 = vmatpush1.msra.mxu0 0.0
  %5104 = vmatprep.subr.mxu0 0.0
  %5105 = vmatpush1.msra.mxu0 0.0
  %5106 = vmatprep.mubr.f32.mxu0 0.0
  %5107 = vmatmul.mubr.f32.gmra.mrb[0].mxu0 %v5040
  %v5108 = vpop.f32.mrb[0].mxu0
  %v5109 = vadd.f32 0.0, %v5108
  %v5110 = vpop.f32.mrb[0].mxu0
  %5111 = vdwg.mxu0
  %v5112 = vadd.f32 %v5033, %v5109
  %s5113 = scalar_lea.vmem %s5, 1344
  %v5114 = vld [vmem:[%s5113] sm:$0xff]
  %v5115 = vld [vmem:[%s5113 + $0x8] sm:$0xff]
  %v5116 = vld [vmem:[%s5113 + $0x10] sm:$0xff]
  %v5117 = vld [vmem:[%s5113 + $0x18] sm:$0xff]
  %v5119 = vsel %vm1698, %v1691, 0
  %5121 = vmatprep.subr.mxu0 0.0
  %5122 = vmatpush1.msra.mxu0 %v5114
  %5123 = vmatprep.subr.mxu0 0.0
  %5124 = vmatpush1.msra.mxu0 %v5115
  %5125 = vmatprep.subr.mxu0 0.0
  %5126 = vmatpush1.msra.mxu0 %v5116
  %5127 = vmatprep.subr.mxu0 0.0
  %5128 = vmatpush1.msra.mxu0 %v5117
  %5129 = vmatprep.subr.mxu0 0.0
  %5130 = vmatpush1.msra.mxu0 0.0
  %5131 = vmatprep.subr.mxu0 0.0
  %5132 = vmatpush1.msra.mxu0 0.0
  %5133 = vmatprep.subr.mxu0 0.0
  %5134 = vmatpush1.msra.mxu0 0.0
  %5135 = vmatprep.subr.mxu0 0.0
  %5136 = vmatpush1.msra.mxu0 0.0
  %5137 = vmatprep.subr.mxu0 0.0
  %5138 = vmatpush1.msra.mxu0 0.0
  %5139 = vmatprep.subr.mxu0 0.0
  %5140 = vmatpush1.msra.mxu0 0.0
  %5141 = vmatprep.subr.mxu0 0.0
  %5142 = vmatpush1.msra.mxu0 0.0
  %5143 = vmatprep.subr.mxu0 0.0
  %5144 = vmatpush1.msra.mxu0 0.0
  %5145 = vmatprep.subr.mxu0 0.0
  %5146 = vmatpush1.msra.mxu0 0.0
  %5147 = vmatprep.subr.mxu0 0.0
  %5148 = vmatpush1.msra.mxu0 0.0
  %5149 = vmatprep.subr.mxu0 0.0
  %5150 = vmatpush1.msra.mxu0 0.0
  %5151 = vmatprep.subr.mxu0 0.0
  %5152 = vmatpush1.msra.mxu0 0.0
  %5153 = vmatprep.subr.mxu0 0.0
  %5154 = vmatpush1.msra.mxu0 0.0
  %5155 = vmatprep.subr.mxu0 0.0
  %5156 = vmatpush1.msra.mxu0 0.0
  %5157 = vmatprep.subr.mxu0 0.0
  %5158 = vmatpush1.msra.mxu0 0.0
  %5159 = vmatprep.subr.mxu0 0.0
  %5160 = vmatpush1.msra.mxu0 0.0
  %5161 = vmatprep.subr.mxu0 0.0
  %5162 = vmatpush1.msra.mxu0 0.0
  %5163 = vmatprep.subr.mxu0 0.0
  %5164 = vmatpush1.msra.mxu0 0.0
  %5165 = vmatprep.subr.mxu0 0.0
  %5166 = vmatpush1.msra.mxu0 0.0
  %5167 = vmatprep.subr.mxu0 0.0
  %5168 = vmatpush1.msra.mxu0 0.0
  %5169 = vmatprep.subr.mxu0 0.0
  %5170 = vmatpush1.msra.mxu0 0.0
  %5171 = vmatprep.subr.mxu0 0.0
  %5172 = vmatpush1.msra.mxu0 0.0
  %5173 = vmatprep.subr.mxu0 0.0
  %5174 = vmatpush1.msra.mxu0 0.0
  %5175 = vmatprep.subr.mxu0 0.0
  %5176 = vmatpush1.msra.mxu0 0.0
  %5177 = vmatprep.subr.mxu0 0.0
  %5178 = vmatpush1.msra.mxu0 0.0
  %5179 = vmatprep.subr.mxu0 0.0
  %5180 = vmatpush1.msra.mxu0 0.0
  %5181 = vmatprep.subr.mxu0 0.0
  %5182 = vmatpush1.msra.mxu0 0.0
  %5183 = vmatprep.subr.mxu0 0.0
  %5184 = vmatpush1.msra.mxu0 0.0
  %5185 = vmatprep.mubr.f32.mxu0 0.0
  %5186 = vmatmul.mubr.f32.gmra.mrb[0].mxu0 %v5119
  %v5187 = vpop.f32.mrb[0].mxu0
  %v5188 = vadd.f32 0.0, %v5187
  %v5189 = vpop.f32.mrb[0].mxu0
  %5190 = vdwg.mxu0
  %v5191 = vadd.f32 %v5112, %v5188
  %s5192 = scalar_lea.vmem %s5, 1376
  %v5193 = vld [vmem:[%s5192] sm:$0xff]
  %v5194 = vld [vmem:[%s5192 + $0x8] sm:$0xff]
  %v5195 = vld [vmem:[%s5192 + $0x10] sm:$0xff]
  %v5196 = vld [vmem:[%s5192 + $0x18] sm:$0xff]
  %v5198 = vsel %vm1698, %v1692, 0
  %5200 = vmatprep.subr.mxu0 0.0
  %5201 = vmatpush1.msra.mxu0 %v5193
  %5202 = vmatprep.subr.mxu0 0.0
  %5203 = vmatpush1.msra.mxu0 %v5194
  %5204 = vmatprep.subr.mxu0 0.0
  %5205 = vmatpush1.msra.mxu0 %v5195
  %5206 = vmatprep.subr.mxu0 0.0
  %5207 = vmatpush1.msra.mxu0 %v5196
  %5208 = vmatprep.subr.mxu0 0.0
  %5209 = vmatpush1.msra.mxu0 0.0
  %5210 = vmatprep.subr.mxu0 0.0
  %5211 = vmatpush1.msra.mxu0 0.0
  %5212 = vmatprep.subr.mxu0 0.0
  %5213 = vmatpush1.msra.mxu0 0.0
  %5214 = vmatprep.subr.mxu0 0.0
  %5215 = vmatpush1.msra.mxu0 0.0
  %5216 = vmatprep.subr.mxu0 0.0
  %5217 = vmatpush1.msra.mxu0 0.0
  %5218 = vmatprep.subr.mxu0 0.0
  %5219 = vmatpush1.msra.mxu0 0.0
  %5220 = vmatprep.subr.mxu0 0.0
  %5221 = vmatpush1.msra.mxu0 0.0
  %5222 = vmatprep.subr.mxu0 0.0
  %5223 = vmatpush1.msra.mxu0 0.0
  %5224 = vmatprep.subr.mxu0 0.0
  %5225 = vmatpush1.msra.mxu0 0.0
  %5226 = vmatprep.subr.mxu0 0.0
  %5227 = vmatpush1.msra.mxu0 0.0
  %5228 = vmatprep.subr.mxu0 0.0
  %5229 = vmatpush1.msra.mxu0 0.0
  %5230 = vmatprep.subr.mxu0 0.0
  %5231 = vmatpush1.msra.mxu0 0.0
  %5232 = vmatprep.subr.mxu0 0.0
  %5233 = vmatpush1.msra.mxu0 0.0
  %5234 = vmatprep.subr.mxu0 0.0
  %5235 = vmatpush1.msra.mxu0 0.0
  %5236 = vmatprep.subr.mxu0 0.0
  %5237 = vmatpush1.msra.mxu0 0.0
  %5238 = vmatprep.subr.mxu0 0.0
  %5239 = vmatpush1.msra.mxu0 0.0
  %5240 = vmatprep.subr.mxu0 0.0
  %5241 = vmatpush1.msra.mxu0 0.0
  %5242 = vmatprep.subr.mxu0 0.0
  %5243 = vmatpush1.msra.mxu0 0.0
  %5244 = vmatprep.subr.mxu0 0.0
  %5245 = vmatpush1.msra.mxu0 0.0
  %5246 = vmatprep.subr.mxu0 0.0
  %5247 = vmatpush1.msra.mxu0 0.0
  %5248 = vmatprep.subr.mxu0 0.0
  %5249 = vmatpush1.msra.mxu0 0.0
  %5250 = vmatprep.subr.mxu0 0.0
  %5251 = vmatpush1.msra.mxu0 0.0
  %5252 = vmatprep.subr.mxu0 0.0
  %5253 = vmatpush1.msra.mxu0 0.0
  %5254 = vmatprep.subr.mxu0 0.0
  %5255 = vmatpush1.msra.mxu0 0.0
  %5256 = vmatprep.subr.mxu0 0.0
  %5257 = vmatpush1.msra.mxu0 0.0
  %5258 = vmatprep.subr.mxu0 0.0
  %5259 = vmatpush1.msra.mxu0 0.0
  %5260 = vmatprep.subr.mxu0 0.0
  %5261 = vmatpush1.msra.mxu0 0.0
  %5262 = vmatprep.subr.mxu0 0.0
  %5263 = vmatpush1.msra.mxu0 0.0
  %5264 = vmatprep.mubr.f32.mxu0 0.0
  %5265 = vmatmul.mubr.f32.gmra.mrb[0].mxu0 %v5198
  %v5266 = vpop.f32.mrb[0].mxu0
  %v5267 = vadd.f32 0.0, %v5266
  %v5268 = vpop.f32.mrb[0].mxu0
  %5269 = vdwg.mxu0
  %v5270 = vadd.f32 %v5191, %v5267
  %s5271 = scalar_lea.vmem %s5, 1408
  %v5272 = vld [vmem:[%s5271] sm:$0xff]
  %v5273 = vld [vmem:[%s5271 + $0x8] sm:$0xff]
  %v5274 = vld [vmem:[%s5271 + $0x10] sm:$0xff]
  %v5275 = vld [vmem:[%s5271 + $0x18] sm:$0xff]
  %v5277 = vsel %vm1698, %v1693, 0
  %5279 = vmatprep.subr.mxu0 0.0
  %5280 = vmatpush1.msra.mxu0 %v5272
  %5281 = vmatprep.subr.mxu0 0.0
  %5282 = vmatpush1.msra.mxu0 %v5273
  %5283 = vmatprep.subr.mxu0 0.0
  %5284 = vmatpush1.msra.mxu0 %v5274
  %5285 = vmatprep.subr.mxu0 0.0
  %5286 = vmatpush1.msra.mxu0 %v5275
  %5287 = vmatprep.subr.mxu0 0.0
  %5288 = vmatpush1.msra.mxu0 0.0
  %5289 = vmatprep.subr.mxu0 0.0
  %5290 = vmatpush1.msra.mxu0 0.0
  %5291 = vmatprep.subr.mxu0 0.0
  %5292 = vmatpush1.msra.mxu0 0.0
  %5293 = vmatprep.subr.mxu0 0.0
  %5294 = vmatpush1.msra.mxu0 0.0
  %5295 = vmatprep.subr.mxu0 0.0
  %5296 = vmatpush1.msra.mxu0 0.0
  %5297 = vmatprep.subr.mxu0 0.0
  %5298 = vmatpush1.msra.mxu0 0.0
  %5299 = vmatprep.subr.mxu0 0.0
  %5300 = vmatpush1.msra.mxu0 0.0
  %5301 = vmatprep.subr.mxu0 0.0
  %5302 = vmatpush1.msra.mxu0 0.0
  %5303 = vmatprep.subr.mxu0 0.0
  %5304 = vmatpush1.msra.mxu0 0.0
  %5305 = vmatprep.subr.mxu0 0.0
  %5306 = vmatpush1.msra.mxu0 0.0
  %5307 = vmatprep.subr.mxu0 0.0
  %5308 = vmatpush1.msra.mxu0 0.0
  %5309 = vmatprep.subr.mxu0 0.0
  %5310 = vmatpush1.msra.mxu0 0.0
  %5311 = vmatprep.subr.mxu0 0.0
  %5312 = vmatpush1.msra.mxu0 0.0
  %5313 = vmatprep.subr.mxu0 0.0
  %5314 = vmatpush1.msra.mxu0 0.0
  %5315 = vmatprep.subr.mxu0 0.0
  %5316 = vmatpush1.msra.mxu0 0.0
  %5317 = vmatprep.subr.mxu0 0.0
  %5318 = vmatpush1.msra.mxu0 0.0
  %5319 = vmatprep.subr.mxu0 0.0
  %5320 = vmatpush1.msra.mxu0 0.0
  %5321 = vmatprep.subr.mxu0 0.0
  %5322 = vmatpush1.msra.mxu0 0.0
  %5323 = vmatprep.subr.mxu0 0.0
  %5324 = vmatpush1.msra.mxu0 0.0
  %5325 = vmatprep.subr.mxu0 0.0
  %5326 = vmatpush1.msra.mxu0 0.0
  %5327 = vmatprep.subr.mxu0 0.0
  %5328 = vmatpush1.msra.mxu0 0.0
  %5329 = vmatprep.subr.mxu0 0.0
  %5330 = vmatpush1.msra.mxu0 0.0
  %5331 = vmatprep.subr.mxu0 0.0
  %5332 = vmatpush1.msra.mxu0 0.0
  %5333 = vmatprep.subr.mxu0 0.0
  %5334 = vmatpush1.msra.mxu0 0.0
  %5335 = vmatprep.subr.mxu0 0.0
  %5336 = vmatpush1.msra.mxu0 0.0
  %5337 = vmatprep.subr.mxu0 0.0
  %5338 = vmatpush1.msra.mxu0 0.0
  %5339 = vmatprep.subr.mxu0 0.0
  %5340 = vmatpush1.msra.mxu0 0.0
  %5341 = vmatprep.subr.mxu0 0.0
  %5342 = vmatpush1.msra.mxu0 0.0
  %5343 = vmatprep.mubr.f32.mxu0 0.0
  %5344 = vmatmul.mubr.f32.gmra.mrb[0].mxu0 %v5277
  %v5345 = vpop.f32.mrb[0].mxu0
  %v5346 = vadd.f32 0.0, %v5345
  %v5347 = vpop.f32.mrb[0].mxu0
  %5348 = vdwg.mxu0
  %v5349 = vadd.f32 %v5270, %v5346
  %s5350 = scalar_lea.vmem %s5, 1440
  %v5351 = vld [vmem:[%s5350] sm:$0xff]
  %v5352 = vld [vmem:[%s5350 + $0x8] sm:$0xff]
  %v5353 = vld [vmem:[%s5350 + $0x10] sm:$0xff]
  %v5354 = vld [vmem:[%s5350 + $0x18] sm:$0xff]
  %v5356 = vsel %vm1698, %v1694, 0
  %5358 = vmatprep.subr.mxu0 0.0
  %5359 = vmatpush1.msra.mxu0 %v5351
  %5360 = vmatprep.subr.mxu0 0.0
  %5361 = vmatpush1.msra.mxu0 %v5352
  %5362 = vmatprep.subr.mxu0 0.0
  %5363 = vmatpush1.msra.mxu0 %v5353
  %5364 = vmatprep.subr.mxu0 0.0
  %5365 = vmatpush1.msra.mxu0 %v5354
  %5366 = vmatprep.subr.mxu0 0.0
  %5367 = vmatpush1.msra.mxu0 0.0
  %5368 = vmatprep.subr.mxu0 0.0
  %5369 = vmatpush1.msra.mxu0 0.0
  %5370 = vmatprep.subr.mxu0 0.0
  %5371 = vmatpush1.msra.mxu0 0.0
  %5372 = vmatprep.subr.mxu0 0.0
  %5373 = vmatpush1.msra.mxu0 0.0
  %5374 = vmatprep.subr.mxu0 0.0
  %5375 = vmatpush1.msra.mxu0 0.0
  %5376 = vmatprep.subr.mxu0 0.0
  %5377 = vmatpush1.msra.mxu0 0.0
  %5378 = vmatprep.subr.mxu0 0.0
  %5379 = vmatpush1.msra.mxu0 0.0
  %5380 = vmatprep.subr.mxu0 0.0
  %5381 = vmatpush1.msra.mxu0 0.0
  %5382 = vmatprep.subr.mxu0 0.0
  %5383 = vmatpush1.msra.mxu0 0.0
  %5384 = vmatprep.subr.mxu0 0.0
  %5385 = vmatpush1.msra.mxu0 0.0
  %5386 = vmatprep.subr.mxu0 0.0
  %5387 = vmatpush1.msra.mxu0 0.0
  %5388 = vmatprep.subr.mxu0 0.0
  %5389 = vmatpush1.msra.mxu0 0.0
  %5390 = vmatprep.subr.mxu0 0.0
  %5391 = vmatpush1.msra.mxu0 0.0
  %5392 = vmatprep.subr.mxu0 0.0
  %5393 = vmatpush1.msra.mxu0 0.0
  %5394 = vmatprep.subr.mxu0 0.0
  %5395 = vmatpush1.msra.mxu0 0.0
  %5396 = vmatprep.subr.mxu0 0.0
  %5397 = vmatpush1.msra.mxu0 0.0
  %5398 = vmatprep.subr.mxu0 0.0
  %5399 = vmatpush1.msra.mxu0 0.0
  %5400 = vmatprep.subr.mxu0 0.0
  %5401 = vmatpush1.msra.mxu0 0.0
  %5402 = vmatprep.subr.mxu0 0.0
  %5403 = vmatpush1.msra.mxu0 0.0
  %5404 = vmatprep.subr.mxu0 0.0
  %5405 = vmatpush1.msra.mxu0 0.0
  %5406 = vmatprep.subr.mxu0 0.0
  %5407 = vmatpush1.msra.mxu0 0.0
  %5408 = vmatprep.subr.mxu0 0.0
  %5409 = vmatpush1.msra.mxu0 0.0
  %5410 = vmatprep.subr.mxu0 0.0
  %5411 = vmatpush1.msra.mxu0 0.0
  %5412 = vmatprep.subr.mxu0 0.0
  %5413 = vmatpush1.msra.mxu0 0.0
  %5414 = vmatprep.subr.mxu0 0.0
  %5415 = vmatpush1.msra.mxu0 0.0
  %5416 = vmatprep.subr.mxu0 0.0
  %5417 = vmatpush1.msra.mxu0 0.0
  %5418 = vmatprep.subr.mxu0 0.0
  %5419 = vmatpush1.msra.mxu0 0.0
  %5420 = vmatprep.subr.mxu0 0.0
  %5421 = vmatpush1.msra.mxu0 0.0
  %5422 = vmatprep.mubr.f32.mxu0 0.0
  %5423 = vmatmul.mubr.f32.gmra.mrb[0].mxu0 %v5356
  %v5424 = vpop.f32.mrb[0].mxu0
  %v5425 = vadd.f32 0.0, %v5424
  %v5426 = vpop.f32.mrb[0].mxu0
  %5427 = vdwg.mxu0
  %v5428 = vadd.f32 %v5349, %v5425
  %s5429 = scalar_lea.vmem %s5, 1472
  %v5430 = vld [vmem:[%s5429] sm:$0xff]
  %v5431 = vld [vmem:[%s5429 + $0x8] sm:$0xff]
  %v5432 = vld [vmem:[%s5429 + $0x10] sm:$0xff]
  %v5433 = vld [vmem:[%s5429 + $0x18] sm:$0xff]
  %v5435 = vsel %vm1698, %v1695, 0
  %5437 = vmatprep.subr.mxu0 0.0
  %5438 = vmatpush1.msra.mxu0 %v5430
  %5439 = vmatprep.subr.mxu0 0.0
  %5440 = vmatpush1.msra.mxu0 %v5431
  %5441 = vmatprep.subr.mxu0 0.0
  %5442 = vmatpush1.msra.mxu0 %v5432
  %5443 = vmatprep.subr.mxu0 0.0
  %5444 = vmatpush1.msra.mxu0 %v5433
  %5445 = vmatprep.subr.mxu0 0.0
  %5446 = vmatpush1.msra.mxu0 0.0
  %5447 = vmatprep.subr.mxu0 0.0
  %5448 = vmatpush1.msra.mxu0 0.0
  %5449 = vmatprep.subr.mxu0 0.0
  %5450 = vmatpush1.msra.mxu0 0.0
  %5451 = vmatprep.subr.mxu0 0.0
  %5452 = vmatpush1.msra.mxu0 0.0
  %5453 = vmatprep.subr.mxu0 0.0
  %5454 = vmatpush1.msra.mxu0 0.0
  %5455 = vmatprep.subr.mxu0 0.0
  %5456 = vmatpush1.msra.mxu0 0.0
  %5457 = vmatprep.subr.mxu0 0.0
  %5458 = vmatpush1.msra.mxu0 0.0
  %5459 = vmatprep.subr.mxu0 0.0
  %5460 = vmatpush1.msra.mxu0 0.0
  %5461 = vmatprep.subr.mxu0 0.0
  %5462 = vmatpush1.msra.mxu0 0.0
  %5463 = vmatprep.subr.mxu0 0.0
  %5464 = vmatpush1.msra.mxu0 0.0
  %5465 = vmatprep.subr.mxu0 0.0
  %5466 = vmatpush1.msra.mxu0 0.0
  %5467 = vmatprep.subr.mxu0 0.0
  %5468 = vmatpush1.msra.mxu0 0.0
  %5469 = vmatprep.subr.mxu0 0.0
  %5470 = vmatpush1.msra.mxu0 0.0
  %5471 = vmatprep.subr.mxu0 0.0
  %5472 = vmatpush1.msra.mxu0 0.0
  %5473 = vmatprep.subr.mxu0 0.0
  %5474 = vmatpush1.msra.mxu0 0.0
  %5475 = vmatprep.subr.mxu0 0.0
  %5476 = vmatpush1.msra.mxu0 0.0
  %5477 = vmatprep.subr.mxu0 0.0
  %5478 = vmatpush1.msra.mxu0 0.0
  %5479 = vmatprep.subr.mxu0 0.0
  %5480 = vmatpush1.msra.mxu0 0.0
  %5481 = vmatprep.subr.mxu0 0.0
  %5482 = vmatpush1.msra.mxu0 0.0
  %5483 = vmatprep.subr.mxu0 0.0
  %5484 = vmatpush1.msra.mxu0 0.0
  %5485 = vmatprep.subr.mxu0 0.0
  %5486 = vmatpush1.msra.mxu0 0.0
  %5487 = vmatprep.subr.mxu0 0.0
  %5488 = vmatpush1.msra.mxu0 0.0
  %5489 = vmatprep.subr.mxu0 0.0
  %5490 = vmatpush1.msra.mxu0 0.0
  %5491 = vmatprep.subr.mxu0 0.0
  %5492 = vmatpush1.msra.mxu0 0.0
  %5493 = vmatprep.subr.mxu0 0.0
  %5494 = vmatpush1.msra.mxu0 0.0
  %5495 = vmatprep.subr.mxu0 0.0
  %5496 = vmatpush1.msra.mxu0 0.0
  %5497 = vmatprep.subr.mxu0 0.0
  %5498 = vmatpush1.msra.mxu0 0.0
  %5499 = vmatprep.subr.mxu0 0.0
  %5500 = vmatpush1.msra.mxu0 0.0
  %5501 = vmatprep.mubr.f32.mxu0 0.0
  %5502 = vmatmul.mubr.f32.gmra.mrb[0].mxu0 %v5435
  %v5503 = vpop.f32.mrb[0].mxu0
  %v5504 = vadd.f32 0.0, %v5503
  %v5505 = vpop.f32.mrb[0].mxu0
  %5506 = vdwg.mxu0
  %v5507 = vadd.f32 %v5428, %v5504
  %s5508 = scalar_lea.vmem %s5, 1504
  %v5509 = vld [vmem:[%s5508] sm:$0xff]
  %v5510 = vld [vmem:[%s5508 + $0x8] sm:$0xff]
  %v5511 = vld [vmem:[%s5508 + $0x10] sm:$0xff]
  %v5512 = vld [vmem:[%s5508 + $0x18] sm:$0xff]
  %v5514 = vsel %vm1698, %v1696, 0
  %5516 = vmatprep.subr.mxu0 0.0
  %5517 = vmatpush1.msra.mxu0 %v5509
  %5518 = vmatprep.subr.mxu0 0.0
  %5519 = vmatpush1.msra.mxu0 %v5510
  %5520 = vmatprep.subr.mxu0 0.0
  %5521 = vmatpush1.msra.mxu0 %v5511
  %5522 = vmatprep.subr.mxu0 0.0
  %5523 = vmatpush1.msra.mxu0 %v5512
  %5524 = vmatprep.subr.mxu0 0.0
  %5525 = vmatpush1.msra.mxu0 0.0
  %5526 = vmatprep.subr.mxu0 0.0
  %5527 = vmatpush1.msra.mxu0 0.0
  %5528 = vmatprep.subr.mxu0 0.0
  %5529 = vmatpush1.msra.mxu0 0.0
  %5530 = vmatprep.subr.mxu0 0.0
  %5531 = vmatpush1.msra.mxu0 0.0
  %5532 = vmatprep.subr.mxu0 0.0
  %5533 = vmatpush1.msra.mxu0 0.0
  %5534 = vmatprep.subr.mxu0 0.0
  %5535 = vmatpush1.msra.mxu0 0.0
  %5536 = vmatprep.subr.mxu0 0.0
  %5537 = vmatpush1.msra.mxu0 0.0
  %5538 = vmatprep.subr.mxu0 0.0
  %5539 = vmatpush1.msra.mxu0 0.0
  %5540 = vmatprep.subr.mxu0 0.0
  %5541 = vmatpush1.msra.mxu0 0.0
  %5542 = vmatprep.subr.mxu0 0.0
  %5543 = vmatpush1.msra.mxu0 0.0
  %5544 = vmatprep.subr.mxu0 0.0
  %5545 = vmatpush1.msra.mxu0 0.0
  %5546 = vmatprep.subr.mxu0 0.0
  %5547 = vmatpush1.msra.mxu0 0.0
  %5548 = vmatprep.subr.mxu0 0.0
  %5549 = vmatpush1.msra.mxu0 0.0
  %5550 = vmatprep.subr.mxu0 0.0
  %5551 = vmatpush1.msra.mxu0 0.0
  %5552 = vmatprep.subr.mxu0 0.0
  %5553 = vmatpush1.msra.mxu0 0.0
  %5554 = vmatprep.subr.mxu0 0.0
  %5555 = vmatpush1.msra.mxu0 0.0
  %5556 = vmatprep.subr.mxu0 0.0
  %5557 = vmatpush1.msra.mxu0 0.0
  %5558 = vmatprep.subr.mxu0 0.0
  %5559 = vmatpush1.msra.mxu0 0.0
  %5560 = vmatprep.subr.mxu0 0.0
  %5561 = vmatpush1.msra.mxu0 0.0
  %5562 = vmatprep.subr.mxu0 0.0
  %5563 = vmatpush1.msra.mxu0 0.0
  %5564 = vmatprep.subr.mxu0 0.0
  %5565 = vmatpush1.msra.mxu0 0.0
  %5566 = vmatprep.subr.mxu0 0.0
  %5567 = vmatpush1.msra.mxu0 0.0
  %5568 = vmatprep.subr.mxu0 0.0
  %5569 = vmatpush1.msra.mxu0 0.0
  %5570 = vmatprep.subr.mxu0 0.0
  %5571 = vmatpush1.msra.mxu0 0.0
  %5572 = vmatprep.subr.mxu0 0.0
  %5573 = vmatpush1.msra.mxu0 0.0
  %5574 = vmatprep.subr.mxu0 0.0
  %5575 = vmatpush1.msra.mxu0 0.0
  %5576 = vmatprep.subr.mxu0 0.0
  %5577 = vmatpush1.msra.mxu0 0.0
  %5578 = vmatprep.subr.mxu0 0.0
  %5579 = vmatpush1.msra.mxu0 0.0
  %5580 = vmatprep.mubr.f32.mxu0 0.0
  %5581 = vmatmul.mubr.f32.gmra.mrb[0].mxu0 %v5514
  %v5582 = vpop.f32.mrb[0].mxu0
  %v5583 = vadd.f32 0.0, %v5582
  %v5584 = vpop.f32.mrb[0].mxu0
  %5585 = vdwg.mxu0
  %v5586 = vadd.f32 %v5507, %v5583
  %s5587 = scalar_lea.vmem %s5, 1536
  %v5588 = vld [vmem:[%s5587] sm:$0xff]
  %v5589 = vld [vmem:[%s5587 + $0x8] sm:$0xff]
  %v5590 = vld [vmem:[%s5587 + $0x10] sm:$0xff]
  %v5591 = vld [vmem:[%s5587 + $0x18] sm:$0xff]
  %v5593 = vsel %vm1698, %v1697, 0
  %5595 = vmatprep.subr.mxu0 0.0
  %5596 = vmatpush1.msra.mxu0 %v5588
  %5597 = vmatprep.subr.mxu0 0.0
  %5598 = vmatpush1.msra.mxu0 %v5589
  %5599 = vmatprep.subr.mxu0 0.0
  %5600 = vmatpush1.msra.mxu0 %v5590
  %5601 = vmatprep.subr.mxu0 0.0
  %5602 = vmatpush1.msra.mxu0 %v5591
  %5603 = vmatprep.subr.mxu0 0.0
  %5604 = vmatpush1.msra.mxu0 0.0
  %5605 = vmatprep.subr.mxu0 0.0
  %5606 = vmatpush1.msra.mxu0 0.0
  %5607 = vmatprep.subr.mxu0 0.0
  %5608 = vmatpush1.msra.mxu0 0.0
  %5609 = vmatprep.subr.mxu0 0.0
  %5610 = vmatpush1.msra.mxu0 0.0
  %5611 = vmatprep.subr.mxu0 0.0
  %5612 = vmatpush1.msra.mxu0 0.0
  %5613 = vmatprep.subr.mxu0 0.0
  %5614 = vmatpush1.msra.mxu0 0.0
  %5615 = vmatprep.subr.mxu0 0.0
  %5616 = vmatpush1.msra.mxu0 0.0
  %5617 = vmatprep.subr.mxu0 0.0
  %5618 = vmatpush1.msra.mxu0 0.0
  %5619 = vmatprep.subr.mxu0 0.0
  %5620 = vmatpush1.msra.mxu0 0.0
  %5621 = vmatprep.subr.mxu0 0.0
  %5622 = vmatpush1.msra.mxu0 0.0
  %5623 = vmatprep.subr.mxu0 0.0
  %5624 = vmatpush1.msra.mxu0 0.0
  %5625 = vmatprep.subr.mxu0 0.0
  %5626 = vmatpush1.msra.mxu0 0.0
  %5627 = vmatprep.subr.mxu0 0.0
  %5628 = vmatpush1.msra.mxu0 0.0
  %5629 = vmatprep.subr.mxu0 0.0
  %5630 = vmatpush1.msra.mxu0 0.0
  %5631 = vmatprep.subr.mxu0 0.0
  %5632 = vmatpush1.msra.mxu0 0.0
  %5633 = vmatprep.subr.mxu0 0.0
  %5634 = vmatpush1.msra.mxu0 0.0
  %5635 = vmatprep.subr.mxu0 0.0
  %5636 = vmatpush1.msra.mxu0 0.0
  %5637 = vmatprep.subr.mxu0 0.0
  %5638 = vmatpush1.msra.mxu0 0.0
  %5639 = vmatprep.subr.mxu0 0.0
  %5640 = vmatpush1.msra.mxu0 0.0
  %5641 = vmatprep.subr.mxu0 0.0
  %5642 = vmatpush1.msra.mxu0 0.0
  %5643 = vmatprep.subr.mxu0 0.0
  %5644 = vmatpush1.msra.mxu0 0.0
  %5645 = vmatprep.subr.mxu0 0.0
  %5646 = vmatpush1.msra.mxu0 0.0
  %5647 = vmatprep.subr.mxu0 0.0
  %5648 = vmatpush1.msra.mxu0 0.0
  %5649 = vmatprep.subr.mxu0 0.0
  %5650 = vmatpush1.msra.mxu0 0.0
  %5651 = vmatprep.subr.mxu0 0.0
  %5652 = vmatpush1.msra.mxu0 0.0
  %5653 = vmatprep.subr.mxu0 0.0
  %5654 = vmatpush1.msra.mxu0 0.0
  %5655 = vmatprep.subr.mxu0 0.0
  %5656 = vmatpush1.msra.mxu0 0.0
  %5657 = vmatprep.subr.mxu0 0.0
  %5658 = vmatpush1.msra.mxu0 0.0
  %5659 = vmatprep.mubr.f32.mxu0 0.0
  %5660 = vmatmul.mubr.f32.gmra.mrb[0].mxu0 %v5593
  %v5661 = vpop.f32.mrb[0].mxu0
  %v5662 = vadd.f32 0.0, %v5661
  %v5663 = vpop.f32.mrb[0].mxu0
  %5664 = vdwg.mxu0
  %v5665 = vadd.f32 %v5586, %v5662
  %v5666 = vld [vmem:[%s6] sm:$0x1]
  %v5668 = vlaneseq
  %v5669 = vshrl.u32 %v5668, 7
  %v5670 = vsub.s32 0, %v5669
  %v5671 = vrot.slane %v5666, %v5670
  %v5673 = vmul.f32 %v5665, %v5671
  %v5674 = vld [vmem:[%s7] sm:$0x1]
  %v5676 = vlaneseq
  %v5677 = vshrl.u32 %v5676, 7
  %v5678 = vsub.s32 0, %v5677
  %v5679 = vrot.slane %v5674, %v5678
  %v5681 = vadd.f32 %v5673, %v5679
  %v5682 = vmax.f32 %v5681, 0.0
  %vm5691 = vcmask 1041409
  %v5692 = vsel %vm5691, %v880, %v879
  %vm5693 = vcmask 1042434
  %v5694 = vsel %vm5693, %v881, %v5692
  %vm5695 = vcmask 1043459
  %v5696 = vsel %vm5695, %v882, %v5694
  %vm5697 = vcmask 1044484
  %v5698 = vsel %vm5697, %v883, %v5696
  %vm5699 = vcmask 1045509
  %v5700 = vsel %vm5699, %v884, %v5698
  %vm5701 = vcmask 1046534
  %v5702 = vsel %vm5701, %v885, %v5700
  %vm5703 = vcmask 1047559
  %v5704 = vsel %vm5703, %v886, %v5702
  %5707 = vrot.lane.b32.xlu0 %v1797, 16
  %v5708 = vpop.permute.xlu0 %5707
  %5711 = vrot.lane.b32.xlu0 %v5682, 48
  %v5712 = vpop.permute.xlu0 %5711
  %v5714 = vsel %vm436, %v5704, %v5708
  %vm5715 = vcmask 392192
  %v5716 = vsel %vm5715, %v5714, %v5712
  %v5717 = vld [vmem:[%s8] sm:$0xff]
  %v5718 = vld [vmem:[%s8 + $0x8] sm:$0xff]
  %v5719 = vld [vmem:[%s8 + $0x10] sm:$0xff]
  %v5720 = vld [vmem:[%s8 + $0x18] sm:$0xff]
  %v5721 = vld [vmem:[%s8 + $0x20] sm:$0xff]
  %v5722 = vld [vmem:[%s8 + $0x28] sm:$0xff]
  %v5723 = vld [vmem:[%s8 + $0x30] sm:$0xff]
  %v5724 = vld [vmem:[%s8 + $0x38] sm:$0xff]
  %v5725 = vld [vmem:[%s8 + $0x40] sm:$0xff]
  %v5726 = vld [vmem:[%s8 + $0x48] sm:$0xff]
  %v5727 = vld [vmem:[%s9] sm:$0x1]
  %v5729 = vlaneseq
  %v5730 = vshrl.u32 %v5729, 7
  %v5731 = vsub.s32 0, %v5730
  %v5732 = vrot.slane %v5727, %v5731
  %vm5734 = vcmask 654336
  %v5736 = vsel %vm5734, %v5716, 0
  %5738 = vmatprep.subr.mxu0 0.0
  %5739 = vmatpush1.msra.mxu0 %v5717
  %5740 = vmatprep.subr.mxu0 0.0
  %5741 = vmatpush1.msra.mxu0 %v5718
  %5742 = vmatprep.subr.mxu0 0.0
  %5743 = vmatpush1.msra.mxu0 %v5719
  %5744 = vmatprep.subr.mxu0 0.0
  %5745 = vmatpush1.msra.mxu0 %v5720
  %5746 = vmatprep.subr.mxu0 0.0
  %5747 = vmatpush1.msra.mxu0 %v5721
  %5748 = vmatprep.subr.mxu0 0.0
  %5749 = vmatpush1.msra.mxu0 %v5722
  %5750 = vmatprep.subr.mxu0 0.0
  %5751 = vmatpush1.msra.mxu0 %v5723
  %5752 = vmatprep.subr.mxu0 0.0
  %5753 = vmatpush1.msra.mxu0 %v5724
  %5754 = vmatprep.subr.mxu0 0.0
  %5755 = vmatpush1.msra.mxu0 %v5725
  %5756 = vmatprep.subr.mxu0 0.0
  %5757 = vmatpush1.msra.mxu0 %v5726
  %5758 = vmatprep.subr.mxu0 0.0
  %5759 = vmatpush1.msra.mxu0 0.0
  %5760 = vmatprep.subr.mxu0 0.0
  %5761 = vmatpush1.msra.mxu0 0.0
  %5762 = vmatprep.subr.mxu0 0.0
  %5763 = vmatpush1.msra.mxu0 0.0
  %5764 = vmatprep.subr.mxu0 0.0
  %5765 = vmatpush1.msra.mxu0 0.0
  %5766 = vmatprep.subr.mxu0 0.0
  %5767 = vmatpush1.msra.mxu0 0.0
  %5768 = vmatprep.subr.mxu0 0.0
  %5769 = vmatpush1.msra.mxu0 0.0
  %5770 = vmatprep.subr.mxu0 0.0
  %5771 = vmatpush1.msra.mxu0 0.0
  %5772 = vmatprep.subr.mxu0 0.0
  %5773 = vmatpush1.msra.mxu0 0.0
  %5774 = vmatprep.subr.mxu0 0.0
  %5775 = vmatpush1.msra.mxu0 0.0
  %5776 = vmatprep.subr.mxu0 0.0
  %5777 = vmatpush1.msra.mxu0 0.0
  %5778 = vmatprep.subr.mxu0 0.0
  %5779 = vmatpush1.msra.mxu0 0.0
  %5780 = vmatprep.subr.mxu0 0.0
  %5781 = vmatpush1.msra.mxu0 0.0
  %5782 = vmatprep.subr.mxu0 0.0
  %5783 = vmatpush1.msra.mxu0 0.0
  %5784 = vmatprep.subr.mxu0 0.0
  %5785 = vmatpush1.msra.mxu0 0.0
  %5786 = vmatprep.subr.mxu0 0.0
  %5787 = vmatpush1.msra.mxu0 0.0
  %5788 = vmatprep.subr.mxu0 0.0
  %5789 = vmatpush1.msra.mxu0 0.0
  %5790 = vmatprep.subr.mxu0 0.0
  %5791 = vmatpush1.msra.mxu0 0.0
  %5792 = vmatprep.subr.mxu0 0.0
  %5793 = vmatpush1.msra.mxu0 0.0
  %5794 = vmatprep.subr.mxu0 0.0
  %5795 = vmatpush1.msra.mxu0 0.0
  %5796 = vmatprep.subr.mxu0 0.0
  %5797 = vmatpush1.msra.mxu0 0.0
  %5798 = vmatprep.subr.mxu0 0.0
  %5799 = vmatpush1.msra.mxu0 0.0
  %5800 = vmatprep.subr.mxu0 0.0
  %5801 = vmatpush1.msra.mxu0 0.0
  %5802 = vmatprep.mubr.f32.mxu0 0.0
  %5803 = vmatmul.mubr.f32.gmra.mrb[0].mxu0 %v5736
  %v5804 = vpop.f32.mrb[0].mxu0
  %v5805 = vadd.f32 %v5732, %v5804
  %v5806 = vpop.f32.mrb[0].mxu0
  %5807 = vdwg.mxu0
  %vm5808 = vcmask 15360
  %5809 = vst.msk [vmem:[%s10] sm:$0xff] %vm5808, %v5805
  // Predicated region
  $region42: #{tpu_custom_call.1} parent=0 // pred_check
    _
  $region43: #{tpu_custom_call.1} parent=0 // pred_check_branch
    %5811 = sbr.rel (0) target = $region45
  $region44: #{tpu_custom_call.1} parent=0 // pred_region
    _
  $region45: #{tpu_custom_call.1} parent=0 // pred_fallthru
    _
  // Predicated region
  $region46: #{tpu_custom_call.1} parent=0 // pred_check
    _
  $region47: #{tpu_custom_call.1} parent=0 // pred_check_branch
    %5813 = sbr.rel (0) target = $region49
  $region48: #{tpu_custom_call.1} parent=0 // pred_region
    _
  $region49: #{tpu_custom_call.1} parent=0 // pred_fallthru
    _

</llo_original>
